<compile_context>
chip_gen: v7x
topology: tpu7x:2x2x1
jax: 0.10.0
libtpu: 0.0.40
codegen_flags: <defaults>
</compile_context>

<pallas_src>
import functools

import jax
import jax.numpy as jnp
from jax.experimental import pallas as pl
from jax.experimental.pallas import tpu as pltpu

EPS = 1e-5
NEG_INF = -1e30

_PACK_ORDER = ('patch_w', 'gvec', 'zadd', 'sym_wq', 'sym_tmpl', 'libfold',
               'wh', 'wo_heads', 'wrel', 'w1', 'w2', 'lvec', 'final_w')


# ------------------------- in-kernel math helpers (traced) -------------------------
def _layernorm(x, g, b):
    mu = jnp.mean(x, axis=-1, keepdims=True)
    xc = x - mu
    var = jnp.mean(xc * xc, axis=-1, keepdims=True)
    return xc * jax.lax.rsqrt(var + EPS) * g + b


def _softmax(x):
    m = jnp.max(x, axis=-1, keepdims=True)
    e = jnp.exp(x - m)
    return e * pl.reciprocal(jnp.sum(e, axis=-1, keepdims=True), approx=True)


# ----------------------------------- fused kernel ----------------------------------
def fused_vit_kernel(p_ref, pw_ref, gvec_ref, zadd_ref, swq_ref, stmpl_ref,
                     libf_ref, wh_ref, woh_ref, wrel_ref, w1_ref, w2_ref,
                     lvec_ref, fw_ref, out_ref, *,
                     n_layers, n_sa, n_ra, n_symh, seq_valid, activation):
    Bt, S, Pd = p_ref.shape                  # Bt images per grid step, padded seq S
    M = Bt * S                               # matmul M dimension (batch folded in)
    D = zadd_ref.shape[1]
    dff = w1_ref.shape[2]
    Cp = fw_ref.shape[1]                     # lane-padded class count
    H = n_sa + n_ra
    hd = D // H
    n_rel = n_ra
    sym_hd = D // n_symh
    SV = seq_valid

    gvec = gvec_ref[...]
    p_ln1_g = gvec[0:1, :Pd]
    p_ln1_b = gvec[1:2, :Pd]
    p_b     = gvec[2:3, :D]
    p_ln2_g = gvec[3:4, :D]
    p_ln2_b = gvec[4:5, :D]
    sym_bq  = gvec[5:6, :D]
    f_ln_g  = gvec[6:7, :D]
    f_ln_b  = gvec[7:8, :D]
    f_b     = gvec[8:9, :Cp]

    # ---- patch embedding on the flattened (Bt*S, Pd) slab: LN -> Linear -> LN ----
    e = _layernorm(p_ref[...].reshape(M, Pd), p_ln1_g, p_ln1_b)
    e = jnp.dot(e, pw_ref[...], preferred_element_type=jnp.float32) + p_b
    e = _layernorm(e, p_ln2_g, p_ln2_b)                               # (M, D)

    # row 0 of each image = CLS slot, rows >= SV = sequence padding
    row = jax.lax.broadcasted_iota(jnp.int32, (Bt, S, 1), 1)
    patch_rows = jnp.where(jnp.logical_and(row >= 1, row < SV), 1.0, 0.0)
    # zadd: row0 = cls_token + pos[0], rows 1..SV-1 = pos, pad rows = 0
    z = (e.reshape(Bt, S, D) * patch_rows + zadd_ref[...]).reshape(M, D)

    kcol = jax.lax.broadcasted_iota(jnp.int32, (1, 1, S), 2)
    kmask = jnp.where(kcol < SV, 0.0, NEG_INF)                        # mask padded keys

    swq = swq_ref[...]
    stmpl = stmpl_ref[...]

    def scores(q3, k3):
        # (Bt,S,hd) x (Bt,S,hd) -> (Bt,S,S); contracts last dims, no explicit transpose
        return jnp.einsum('bqd,bkd->bqk', q3, k3, preferred_element_type=jnp.float32)

    for l in range(n_layers):
        lvec = lvec_ref[l]
        ln1_g = lvec[0:1, :D]; ln1_b = lvec[1:2, :D]
        ln2_g = lvec[2:3, :D]; ln2_b = lvec[3:4, :D]
        b1 = lvec[4:5, :dff];  b2 = lvec[5:6, :D]

        # ---- symbol retrieval (SymbolicAttention; library @ ra_wv pre-folded) ----
        # scale folded into sym_wq / sym_bq at pack time
        q_sym = jnp.dot(z, swq, preferred_element_type=jnp.float32) + sym_bq
        sv = None                                                      # symbols @ ra_wv
        for hh in range(n_symh):
            qh = q_sym[:, hh * sym_hd:(hh + 1) * sym_hd]
            kh = stmpl[:, hh * sym_hd:(hh + 1) * sym_hd]
            a = _softmax(jax.lax.dot_general(qh, kh, (((1,), (1,)), ((), ())),
                                             preferred_element_type=jnp.float32))
            t = jnp.dot(a, libf_ref[l, hh], preferred_element_type=jnp.float32)
            sv = t if sv is None else sv + t                           # (M, n_ra*hd)

        # ---- dual attention (pre-norm); all h-projections in one (D,128) matmul ----
        h = _layernorm(z, ln1_g, ln1_b)
        proj = jnp.dot(h, wh_ref[l], preferred_element_type=jnp.float32)
        o_q = 0
        o_k = n_sa * hd
        o_v = 2 * n_sa * hd
        o_qa = 3 * n_sa * hd
        o_ka = o_qa + n_ra * hd
        o_qr = o_ka + n_ra * hd
        o_kr = o_qr + n_rel * hd

        def head3(off, i):
            return proj[:, off + i * hd: off + (i + 1) * hd].reshape(Bt, S, hd)

        # relations r(x_i, x_j) (identity activation), shared across RA heads
        rels = [scores(head3(o_qr, r), head3(o_kr, r)) for r in range(n_rel)]

        attn_out = None
        # self-attention heads: (a @ v) folded straight into their wo rows (no scratch)
        for i in range(n_sa):
            a = _softmax(scores(head3(o_q, i), head3(o_k, i)) + kmask)
            oi = jnp.einsum('bqk,bkd->bqd', a, head3(o_v, i),
                            preferred_element_type=jnp.float32).reshape(M, hd)
            t = jnp.dot(oi, woh_ref[l, i], preferred_element_type=jnp.float32)
            attn_out = t if attn_out is None else attn_out + t

        # relational heads: symbols as values; relational readout batched into one matmul
        att_cols = []
        for i in range(n_ra):
            a = _softmax(scores(head3(o_qa, i), head3(o_ka, i)) + kmask)
            svi = sv[:, i * hd:(i + 1) * hd].reshape(Bt, S, hd)
            oi = jnp.einsum('bqk,bkd->bqd', a, svi,
                            preferred_element_type=jnp.float32).reshape(M, hd)
            t = jnp.dot(oi, woh_ref[l, n_sa + i], preferred_element_type=jnp.float32)
            attn_out = t if attn_out is None else attn_out + t
            for r in range(n_rel):
                att_cols.append(jnp.sum(a * rels[r], axis=-1, keepdims=True))  # (Bt,S,1)

        att_mat = jnp.concatenate(att_cols, axis=-1).reshape(M, n_ra * n_rel)
        rel_out = jnp.dot(att_mat, wrel_ref[l], preferred_element_type=jnp.float32)

        z = z + attn_out + rel_out                                     # residual 1

        # ---- feedforward (pre-norm) ----
        h2 = _layernorm(z, ln2_g, ln2_b)
        f = jnp.dot(h2, w1_ref[l], preferred_element_type=jnp.float32) + b1
        if activation == 'relu':
            f = jnp.maximum(f, 0.0)
        elif activation == 'gelu':
            f = jax.nn.gelu(f)
        else:
            raise ValueError(f"unsupported activation {activation}")
        f = jnp.dot(f, w2_ref[l], preferred_element_type=jnp.float32) + b2
        z = z + f                                                      # residual 2

    # ---- final LayerNorm + Linear head on the CLS row of each image (pool='cls') ----
    cls = jnp.concatenate([z[b * S:b * S + 1, :] for b in range(Bt)], axis=0)  # (Bt, D)
    cls = _layernorm(cls, f_ln_g, f_ln_b)
    out_ref[0] = jnp.dot(cls, fw_ref[...],
                         preferred_element_type=jnp.float32) + f_b    # (Bt, Cp) lane-dense


# ------------------------------- pallas_call wrapper --------------------------------
def _full_spec(shape):
    nd = len(shape)
    return pl.BlockSpec(shape, lambda g, _nd=nd: (0,) * _nd)


def forward(x, packed, cfg):
    # layout: x is NCHW (B, C, H, W)
    B, Cc, Hh, Ww = x.shape
    ph, pw_ = cfg['patch_size']
    N = cfg['num_patches']
    Pd = cfg['patch_dim']
    C = cfg['num_classes']
    Cp = cfg['num_classes_pad']
    SV = N + 1
    SP = cfg['seq_pad']

    # Rearrange 'b c (h p1) (w p2) -> b (h w) (p1 p2 c)'   (plain-JAX glue)
    p = x.reshape(B, Cc, Hh // ph, ph, Ww // pw_, pw_)
    p = p.transpose(0, 2, 4, 3, 5, 1).reshape(B, N, Pd)
    # row 0 reserved for CLS token, trailing rows = sequence padding
    p = jnp.pad(p, ((0, 0), (1, SP - SV), (0, 0)))                    # (B, SP, Pd)

    # Batch tiling: fold Bt images into the matmul M dimension (target M >= 256),
    # but keep >= 2 grid steps when B >= 2 so both v7x TensorCores get work.
    bt_target = max(1, -(-256 // SP))
    Bt = int(max(1, min(bt_target, -(-B // 2))))
    G = -(-B // Bt)
    Bpad = G * Bt
    if Bpad != B:
        p = jnp.pad(p, ((0, Bpad - B), (0, 0), (0, 0)))

    kernel = functools.partial(
        fused_vit_kernel,
        n_layers=cfg['n_layers'], n_sa=cfg['n_heads_sa'], n_ra=cfg['n_heads_ra'],
        n_symh=cfg['n_heads_symbolic'], seq_valid=SV, activation=cfg['activation'])

    in_specs = [pl.BlockSpec((Bt, SP, Pd), lambda g: (g, 0, 0))]
    in_specs += [_full_spec(packed[k].shape) for k in _PACK_ORDER]

    out = pl.pallas_call(
        kernel,
        out_shape=jax.ShapeDtypeStruct((G, Bt, Cp), jnp.float32),
        grid=(G,),
        in_specs=in_specs,
        out_specs=pl.BlockSpec((1, Bt, Cp), lambda g: (g, 0, 0)),
        compiler_params=pltpu.CompilerParams(dimension_semantics=("parallel",)),
    )(p, *[packed[k] for k in _PACK_ORDER])
    return out.reshape(Bpad, Cp)[:B, :C]


# ------------------------------ host-side weight packing ----------------------------
def pack_params(params, cfg):
    D = cfg['d_model']; Pd = cfg['patch_dim']; N = cfg['num_patches']
    n_sa = cfg['n_heads_sa']; n_ra = cfg['n_heads_ra']
    H = n_sa + n_ra; hd = D // H; n_rel = n_ra
    n_symh = cfg['n_heads_symbolic']; sym_hd = D // n_symh
    C = cfg['num_classes']; Cp = cfg['num_classes_pad']; dff = cfg['dff']
    SV = N + 1; SP = cfg['seq_pad']
    scale = 1.0 / (hd ** 0.5)
    sym_scale = 1.0 / (sym_hd ** 0.5)

    def rows(vectors, width):
        out = []
        for v in vectors:
            v = jnp.asarray(v).reshape(-1)
            out.append(jnp.pad(v, (0, width - v.shape[0])))
        return jnp.stack(out, axis=0)

    pp, sp, fp = params['patch'], params['symbol'], params['final']

    gw = max(Pd, D, Cp)
    gvec = rows([pp['ln1_g'], pp['ln1_b'], pp['b'], pp['ln2_g'], pp['ln2_b'],
                 sp['bq'] * sym_scale, fp['ln_g'], fp['ln_b'], fp['b']], gw)

    pos = params['pos_embedding'][0, :SV]                             # (SV, D)
    zadd = pos.at[0].add(params['cls_token'][0, 0])
    zadd = jnp.pad(zadd, ((0, SP - SV), (0, 0)))                      # (SP, D)

    wh_width = 3 * n_sa * hd + 4 * n_ra * hd
    wh_pad = -(-wh_width // 128) * 128

    wh_l, woh_l, wrel_l, libf_l, w1_l, w2_l, lvec_l = [], [], [], [], [], [], []
    for lp in params['layers']:
        # fused h-projection (attention scales folded into q weights)
        wh = jnp.concatenate(
            [lp['sa_wq'] * scale, lp['sa_wk'], lp['sa_wv'],
             lp['ra_wq_attn'] * scale, lp['ra_wk_attn'],
             lp['ra_wq_rel'] * scale, lp['ra_wk_rel']], axis=1)
        wh_l.append(jnp.pad(wh, ((0, 0), (0, wh_pad - wh_width))))

        # per-head output-projection rows: block-diag [sa_wo | ra_wo] split by head
        woh = jnp.zeros((H, hd, D), jnp.float32)
        for i in range(n_sa):
            woh = woh.at[i, :, :n_sa * hd].set(lp['sa_wo'][i * hd:(i + 1) * hd, :])
        for j in range(n_ra):
            woh = woh.at[n_sa + j, :, n_sa * hd:].set(lp['ra_wo'][j * hd:(j + 1) * hd, :])
        woh_l.append(woh)

        # wr folded through ra_wo: row (i, r) -> wr[i,:,r] @ ra_wo[i*hd:(i+1)*hd, :]
        wrel = jnp.zeros((n_ra * n_rel, D), jnp.float32)
        for i in range(n_ra):
            for r in range(n_rel):
                vrow = lp['ra_wr'][i, :, r] @ lp['ra_wo'][i * hd:(i + 1) * hd, :]
                wrel = wrel.at[i * n_rel + r, n_sa * hd:].set(vrow)
        wrel_l.append(wrel)

        # symbol library folded through ra_wv (symbols only enter RA as values)
        libf_l.append(jnp.stack(
            [sp['library'][:, hh * sym_hd:(hh + 1) * sym_hd]
             @ lp['ra_wv'][hh * sym_hd:(hh + 1) * sym_hd, :] for hh in range(n_symh)]))

        w1_l.append(lp['w1']); w2_l.append(lp['w2'])
        lvec_l.append(rows([lp['ln1_g'], lp['ln1_b'], lp['ln2_g'], lp['ln2_b'],
                            lp['b1'], lp['b2']], max(D, dff)))

    packed = dict(
        patch_w=pp['w'],
        gvec=gvec,
        zadd=zadd,
        sym_wq=sp['wq'] * sym_scale,
        sym_tmpl=sp['templates'],
        libfold=jnp.stack(libf_l),          # (L, n_symh, n_sym, n_ra*hd)
        wh=jnp.stack(wh_l),                 # (L, D, 128)
        wo_heads=jnp.stack(woh_l),          # (L, H, hd, D)
        wrel=jnp.stack(wrel_l),             # (L, n_ra*n_rel, D)
        w1=jnp.stack(w1_l),                 # (L, D, dff)
        w2=jnp.stack(w2_l),                 # (L, dff, D)
        lvec=jnp.stack(lvec_l),             # (L, 6, max(D, dff))
        final_w=jnp.pad(fp['w'], ((0, 0), (0, Cp - C))),   # (D, Cp) lane-dense head
    )
    return {k: jnp.asarray(v, jnp.float32) for k, v in packed.items()}


# --------------------------------- parameter init -----------------------------------
def init_params(key, cfg):
    D = cfg['d_model']
    Pd = cfg['patch_dim']
    N = cfg['num_patches']
    n_sa, n_ra = cfg['n_heads_sa'], cfg['n_heads_ra']
    hd = D // (n_sa + n_ra)
    kd = hd
    n_sym = cfg['n_symbols']
    keys = iter(jax.random.split(key, 256))

    def w(shape, std=0.02):
        return (std * jax.random.normal(next(keys), shape)).astype(jnp.float32)

    def ones(shape):
        return jnp.ones(shape, jnp.float32)

    def zeros(shape):
        return jnp.zeros(shape, jnp.float32)

    params = dict(
        patch=dict(ln1_g=ones((1, Pd)), ln1_b=zeros((1, Pd)),
                   w=w((Pd, D)), b=zeros((1, D)),
                   ln2_g=ones((1, D)), ln2_b=zeros((1, D))),
        pos_embedding=w((1, N + 1, D), std=1.0),
        cls_token=w((1, 1, D), std=1.0),
        symbol=dict(wq=w((D, D)), bq=zeros((1, D)),
                    templates=w((n_sym, D), std=1.0),
                    library=w((n_sym, D), std=1.0)),
        layers=[],
        final=dict(ln_g=ones((1, D)), ln_b=zeros((1, D)),
                   w=w((D, cfg['num_classes'])), b=zeros((1, cfg['num_classes']))),
    )
    for _ in range(cfg['n_layers']):
        params['layers'].append(dict(
            ln1_g=ones((1, D)), ln1_b=zeros((1, D)),
            sa_wq=w((D, n_sa * kd)), sa_wk=w((D, n_sa * kd)), sa_wv=w((D, n_sa * hd)),
            sa_wo=w((n_sa * hd, n_sa * hd)),
            ra_wq_attn=w((D, n_ra * kd)), ra_wk_attn=w((D, n_ra * kd)),
            ra_wq_rel=w((D, n_ra * kd)), ra_wk_rel=w((D, n_ra * kd)),
            ra_wv=w((D, n_ra * hd)), ra_wr=w((n_ra, hd, n_ra)),
            ra_wo=w((n_ra * hd, n_ra * hd)),
            ln2_g=ones((1, D)), ln2_b=zeros((1, D)),
            w1=w((D, cfg['dff'])), b1=zeros((1, cfg['dff'])),
            w2=w((cfg['dff'], D)), b2=zeros((1, D)),
        ))
    return params


# --------------------------------------- main ---------------------------------------
if __name__ == "__main__":
    cfg = dict(
        image_shape=(4, 16, 16),      # (channels, width, height)
        patch_size=(4, 4),
        num_classes=10,
        d_model=32,
        n_layers=2,
        n_heads_sa=2,
        n_heads_ra=2,
        dff=64,
        dropout_rate=0.0,
        activation='relu',
        norm_first=True,
        n_symbols=8,
        n_heads_symbolic=2,
        pool='cls',
    )
    cfg['num_patches'] = (cfg['image_shape'][1] // cfg['patch_size'][0]) * \
                         (cfg['image_shape'][2] // cfg['patch_size'][1])
    cfg['patch_dim'] = cfg['patch_size'][0] * cfg['patch_size'][1] * cfg['image_shape'][0]
    cfg['seq_pad'] = ((cfg['num_patches'] + 1 + 7) // 8) * 8            # 17 -> 24
    cfg['num_classes_pad'] = ((cfg['num_classes'] + 127) // 128) * 128  # 10 -> 128

    root = jax.random.PRNGKey(0)
    k_x, k_p = jax.random.split(root)
    x = jax.random.normal(k_x, (2, cfg['image_shape'][0],
                                cfg['image_shape'][1], cfg['image_shape'][2]),
                          dtype=jnp.float32)
    params = init_params(k_p, cfg)
    packed = pack_params(params, cfg)

    logits = forward(x, packed, cfg)
    logits = jax.block_until_ready(logits)

    assert logits.shape == (2, cfg['num_classes']), logits.shape
    assert bool(jnp.all(jnp.isfinite(logits)))
    print("KERNEL_OK")
</pallas_src>

<mosaic_0001>
module attributes {stable_mosaic.version = 11 : i64} {
  func.func @fused_vit_kernel(%arg0: i32, %arg1: memref<1x24x64xf32, #tpu.memory_space<vmem>>, %arg2: memref<64x32xf32, #tpu.memory_space<vmem>>, %arg3: memref<9x128xf32, #tpu.memory_space<vmem>>, %arg4: memref<24x32xf32, #tpu.memory_space<vmem>>, %arg5: memref<32x32xf32, #tpu.memory_space<vmem>>, %arg6: memref<8x32xf32, #tpu.memory_space<vmem>>, %arg7: memref<2x2x8x16xf32, #tpu.memory_space<vmem>>, %arg8: memref<2x32x128xf32, #tpu.memory_space<vmem>>, %arg9: memref<2x4x8x32xf32, #tpu.memory_space<vmem>>, %arg10: memref<2x4x32xf32, #tpu.memory_space<vmem>>, %arg11: memref<2x32x64xf32, #tpu.memory_space<vmem>>, %arg12: memref<2x64x32xf32, #tpu.memory_space<vmem>>, %arg13: memref<2x6x64xf32, #tpu.memory_space<vmem>>, %arg14: memref<32x128xf32, #tpu.memory_space<vmem>>, %arg15: memref<1x1x128xf32, #tpu.memory_space<vmem>>) attributes {dimension_semantics = [#tpu.dimension_semantics<parallel>], iteration_bounds = array<i64: 2>, scalar_prefetch = 0 : i64, scratch_operands = 0 : i64, tpu.core_type = #tpu.core_type<tc>, window_params = [{transform_indices = @transform_0, window_bounds = array<i64: 1, 24, 64>}, {pipeline_mode = #tpu.pipeline_mode<synchronous>, transform_indices = @transform_1, window_bounds = array<i64: 64, 32>}, {pipeline_mode = #tpu.pipeline_mode<synchronous>, transform_indices = @transform_2, window_bounds = array<i64: 9, 128>}, {pipeline_mode = #tpu.pipeline_mode<synchronous>, transform_indices = @transform_3, window_bounds = array<i64: 24, 32>}, {pipeline_mode = #tpu.pipeline_mode<synchronous>, transform_indices = @transform_4, window_bounds = array<i64: 32, 32>}, {pipeline_mode = #tpu.pipeline_mode<synchronous>, transform_indices = @transform_5, window_bounds = array<i64: 8, 32>}, {pipeline_mode = #tpu.pipeline_mode<synchronous>, transform_indices = @transform_6, window_bounds = array<i64: 2, 2, 8, 16>}, {pipeline_mode = #tpu.pipeline_mode<synchronous>, transform_indices = @transform_7, window_bounds = array<i64: 2, 32, 128>}, {pipeline_mode = #tpu.pipeline_mode<synchronous>, transform_indices = @transform_8, window_bounds = array<i64: 2, 4, 8, 32>}, {pipeline_mode = #tpu.pipeline_mode<synchronous>, transform_indices = @transform_9, window_bounds = array<i64: 2, 4, 32>}, {pipeline_mode = #tpu.pipeline_mode<synchronous>, transform_indices = @transform_10, window_bounds = array<i64: 2, 32, 64>}, {pipeline_mode = #tpu.pipeline_mode<synchronous>, transform_indices = @transform_11, window_bounds = array<i64: 2, 64, 32>}, {pipeline_mode = #tpu.pipeline_mode<synchronous>, transform_indices = @transform_12, window_bounds = array<i64: 2, 6, 64>}, {pipeline_mode = #tpu.pipeline_mode<synchronous>, transform_indices = @transform_13, window_bounds = array<i64: 32, 128>}, {transform_indices = @transform_14, window_bounds = array<i64: 1, 1, 128>}]} {
    %c0 = arith.constant 0 : index
    %c0_0 = arith.constant 0 : index
    %0 = vector.load %arg3[%c0, %c0_0] : memref<9x128xf32, #tpu.memory_space<vmem>>, vector<9x128xf32>
    %1 = vector.extract_strided_slice %0 {offsets = [0, 0], sizes = [1, 64], strides = [1, 1]} : vector<9x128xf32> to vector<1x64xf32>
    %2 = vector.extract_strided_slice %0 {offsets = [1, 0], sizes = [1, 64], strides = [1, 1]} : vector<9x128xf32> to vector<1x64xf32>
    %3 = vector.extract_strided_slice %0 {offsets = [2, 0], sizes = [1, 32], strides = [1, 1]} : vector<9x128xf32> to vector<1x32xf32>
    %4 = vector.extract_strided_slice %0 {offsets = [3, 0], sizes = [1, 32], strides = [1, 1]} : vector<9x128xf32> to vector<1x32xf32>
    %5 = vector.extract_strided_slice %0 {offsets = [4, 0], sizes = [1, 32], strides = [1, 1]} : vector<9x128xf32> to vector<1x32xf32>
    %6 = vector.extract_strided_slice %0 {offsets = [5, 0], sizes = [1, 32], strides = [1, 1]} : vector<9x128xf32> to vector<1x32xf32>
    %7 = vector.extract_strided_slice %0 {offsets = [6, 0], sizes = [1, 32], strides = [1, 1]} : vector<9x128xf32> to vector<1x32xf32>
    %8 = vector.extract_strided_slice %0 {offsets = [7, 0], sizes = [1, 32], strides = [1, 1]} : vector<9x128xf32> to vector<1x32xf32>
    %9 = vector.extract_strided_slice %0 {offsets = [8, 0], sizes = [1, 128], strides = [1, 1]} : vector<9x128xf32> to vector<1x128xf32>
    %c0_1 = arith.constant 0 : index
    %c0_2 = arith.constant 0 : index
    %c0_3 = arith.constant 0 : index
    %10 = vector.load %arg1[%c0_1, %c0_2, %c0_3] : memref<1x24x64xf32, #tpu.memory_space<vmem>>, vector<1x24x64xf32>
    %11 = vector.shape_cast %10 : vector<1x24x64xf32> to vector<24x64xf32>
    %cst = arith.constant dense<0.000000e+00> : vector<24xf32>
    %12 = vector.multi_reduction <add>, %11, %cst [1] : vector<24x64xf32> to vector<24xf32>
    %13 = vector.shape_cast %12 : vector<24xf32> to vector<24x1xf32>
    %cst_4 = arith.constant 6.400000e+01 : f32
    %14 = vector.broadcast %cst_4 : f32 to vector<24x1xf32>
    %15 = arith.divf %13, %14 : vector<24x1xf32>
    %16 = vector.broadcast %15 : vector<24x1xf32> to vector<24x64xf32>
    %17 = arith.subf %11, %16 : vector<24x64xf32>
    %18 = arith.mulf %17, %17 : vector<24x64xf32>
    %cst_5 = arith.constant dense<0.000000e+00> : vector<24xf32>
    %19 = vector.multi_reduction <add>, %18, %cst_5 [1] : vector<24x64xf32> to vector<24xf32>
    %20 = vector.shape_cast %19 : vector<24xf32> to vector<24x1xf32>
    %cst_6 = arith.constant 6.400000e+01 : f32
    %21 = vector.broadcast %cst_6 : f32 to vector<24x1xf32>
    %22 = arith.divf %20, %21 : vector<24x1xf32>
    %cst_7 = arith.constant 9.99999974E-6 : f32
    %23 = vector.broadcast %cst_7 : f32 to vector<24x1xf32>
    %24 = arith.addf %22, %23 : vector<24x1xf32>
    %25 = math.rsqrt %24 : vector<24x1xf32>
    %26 = vector.broadcast %25 : vector<24x1xf32> to vector<24x64xf32>
    %27 = arith.mulf %17, %26 : vector<24x64xf32>
    %28 = vector.broadcast %1 : vector<1x64xf32> to vector<24x64xf32>
    %29 = arith.mulf %27, %28 : vector<24x64xf32>
    %30 = vector.broadcast %2 : vector<1x64xf32> to vector<24x64xf32>
    %31 = arith.addf %29, %30 : vector<24x64xf32>
    %c0_8 = arith.constant 0 : index
    %c0_9 = arith.constant 0 : index
    %32 = vector.load %arg2[%c0_8, %c0_9] : memref<64x32xf32, #tpu.memory_space<vmem>>, vector<64x32xf32>
    %cst_10 = arith.constant dense<0.000000e+00> : vector<24x32xf32>
    %33 = tpu.matmul %31, %32, %cst_10 {dimension_numbers = #tpu.dot_dimension_numbers<[1], [0], [0], [1], [0, 0, 1, 1], [], []>} : vector<24x64xf32>, vector<64x32xf32>, vector<24x32xf32> -> vector<24x32xf32>
    %34 = vector.broadcast %3 : vector<1x32xf32> to vector<24x32xf32>
    %35 = arith.addf %33, %34 : vector<24x32xf32>
    %cst_11 = arith.constant dense<0.000000e+00> : vector<24xf32>
    %36 = vector.multi_reduction <add>, %35, %cst_11 [1] : vector<24x32xf32> to vector<24xf32>
    %37 = vector.shape_cast %36 : vector<24xf32> to vector<24x1xf32>
    %cst_12 = arith.constant 3.200000e+01 : f32
    %38 = vector.broadcast %cst_12 : f32 to vector<24x1xf32>
    %39 = arith.divf %37, %38 : vector<24x1xf32>
    %40 = vector.broadcast %39 : vector<24x1xf32> to vector<24x32xf32>
    %41 = arith.subf %35, %40 : vector<24x32xf32>
    %42 = arith.mulf %41, %41 : vector<24x32xf32>
    %cst_13 = arith.constant dense<0.000000e+00> : vector<24xf32>
    %43 = vector.multi_reduction <add>, %42, %cst_13 [1] : vector<24x32xf32> to vector<24xf32>
    %44 = vector.shape_cast %43 : vector<24xf32> to vector<24x1xf32>
    %cst_14 = arith.constant 3.200000e+01 : f32
    %45 = vector.broadcast %cst_14 : f32 to vector<24x1xf32>
    %46 = arith.divf %44, %45 : vector<24x1xf32>
    %cst_15 = arith.constant 9.99999974E-6 : f32
    %47 = vector.broadcast %cst_15 : f32 to vector<24x1xf32>
    %48 = arith.addf %46, %47 : vector<24x1xf32>
    %49 = math.rsqrt %48 : vector<24x1xf32>
    %50 = vector.broadcast %49 : vector<24x1xf32> to vector<24x32xf32>
    %51 = arith.mulf %41, %50 : vector<24x32xf32>
    %52 = vector.broadcast %4 : vector<1x32xf32> to vector<24x32xf32>
    %53 = arith.mulf %51, %52 : vector<24x32xf32>
    %54 = vector.broadcast %5 : vector<1x32xf32> to vector<24x32xf32>
    %55 = arith.addf %53, %54 : vector<24x32xf32>
    %56 = tpu.iota {dimensions = array<i32: 1>} : vector<1x24x1xi32>
    %c1_i32 = arith.constant 1 : i32
    %57 = vector.broadcast %c1_i32 : i32 to vector<1x24x1xi32>
    %58 = arith.cmpi sge, %56, %57 : vector<1x24x1xi32>
    %c17_i32 = arith.constant 17 : i32
    %59 = vector.broadcast %c17_i32 : i32 to vector<1x24x1xi32>
    %60 = arith.cmpi slt, %56, %59 : vector<1x24x1xi32>
    %61 = arith.andi %58, %60 : vector<1x24x1xi1>
    %cst_16 = arith.constant 1.000000e+00 : f32
    %cst_17 = arith.constant 0.000000e+00 : f32
    %62 = vector.broadcast %cst_16 : f32 to vector<1x24x1xf32>
    %63 = vector.broadcast %cst_17 : f32 to vector<1x24x1xf32>
    %64 = arith.select %61, %62, %63 : vector<1x24x1xi1>, vector<1x24x1xf32>
    %65 = vector.shape_cast %55 : vector<24x32xf32> to vector<1x24x32xf32>
    %66 = vector.broadcast %64 : vector<1x24x1xf32> to vector<1x24x32xf32>
    %67 = arith.mulf %65, %66 : vector<1x24x32xf32>
    %c0_18 = arith.constant 0 : index
    %c0_19 = arith.constant 0 : index
    %68 = vector.load %arg4[%c0_18, %c0_19] : memref<24x32xf32, #tpu.memory_space<vmem>>, vector<24x32xf32>
    %69 = vector.shape_cast %68 : vector<24x32xf32> to vector<1x24x32xf32>
    %70 = arith.addf %67, %69 : vector<1x24x32xf32>
    %71 = vector.shape_cast %70 : vector<1x24x32xf32> to vector<24x32xf32>
    %72 = tpu.iota {dimensions = array<i32: 2>} : vector<1x1x24xi32>
    %c17_i32_20 = arith.constant 17 : i32
    %73 = vector.broadcast %c17_i32_20 : i32 to vector<1x1x24xi32>
    %74 = arith.cmpi slt, %72, %73 : vector<1x1x24xi32>
    %cst_21 = arith.constant 0.000000e+00 : f32
    %cst_22 = arith.constant -1.000000e+30 : f32
    %75 = vector.broadcast %cst_21 : f32 to vector<1x1x24xf32>
    %76 = vector.broadcast %cst_22 : f32 to vector<1x1x24xf32>
    %77 = arith.select %74, %75, %76 : vector<1x1x24xi1>, vector<1x1x24xf32>
    %c0_23 = arith.constant 0 : index
    %c0_24 = arith.constant 0 : index
    %78 = vector.load %arg5[%c0_23, %c0_24] : memref<32x32xf32, #tpu.memory_space<vmem>>, vector<32x32xf32>
    %c0_25 = arith.constant 0 : index
    %c0_26 = arith.constant 0 : index
    %79 = vector.load %arg6[%c0_25, %c0_26] : memref<8x32xf32, #tpu.memory_space<vmem>>, vector<8x32xf32>
    %c0_27 = arith.constant 0 : index
    %c0_28 = arith.constant 0 : index
    %c0_29 = arith.constant 0 : index
    %80 = vector.load %arg13[%c0_27, %c0_28, %c0_29] : memref<2x6x64xf32, #tpu.memory_space<vmem>>, vector<1x6x64xf32>
    %81 = vector.shape_cast %80 : vector<1x6x64xf32> to vector<6x64xf32>
    %82 = vector.extract_strided_slice %81 {offsets = [0, 0], sizes = [1, 32], strides = [1, 1]} : vector<6x64xf32> to vector<1x32xf32>
    %83 = vector.extract_strided_slice %81 {offsets = [1, 0], sizes = [1, 32], strides = [1, 1]} : vector<6x64xf32> to vector<1x32xf32>
    %84 = vector.extract_strided_slice %81 {offsets = [2, 0], sizes = [1, 32], strides = [1, 1]} : vector<6x64xf32> to vector<1x32xf32>
    %85 = vector.extract_strided_slice %81 {offsets = [3, 0], sizes = [1, 32], strides = [1, 1]} : vector<6x64xf32> to vector<1x32xf32>
    %86 = vector.extract_strided_slice %81 {offsets = [4, 0], sizes = [1, 64], strides = [1, 1]} : vector<6x64xf32> to vector<1x64xf32>
    %87 = vector.extract_strided_slice %81 {offsets = [5, 0], sizes = [1, 32], strides = [1, 1]} : vector<6x64xf32> to vector<1x32xf32>
    %cst_30 = arith.constant dense<0.000000e+00> : vector<24x32xf32>
    %88 = tpu.matmul %71, %78, %cst_30 {dimension_numbers = #tpu.dot_dimension_numbers<[1], [0], [0], [1], [0, 0, 1, 1], [], []>} : vector<24x32xf32>, vector<32x32xf32>, vector<24x32xf32> -> vector<24x32xf32>
    %89 = vector.broadcast %6 : vector<1x32xf32> to vector<24x32xf32>
    %90 = arith.addf %88, %89 : vector<24x32xf32>
    %91 = vector.extract_strided_slice %90 {offsets = [0, 0], sizes = [24, 16], strides = [1, 1]} : vector<24x32xf32> to vector<24x16xf32>
    %92 = vector.extract_strided_slice %79 {offsets = [0, 0], sizes = [8, 16], strides = [1, 1]} : vector<8x32xf32> to vector<8x16xf32>
    %cst_31 = arith.constant dense<0.000000e+00> : vector<24x8xf32>
    %93 = tpu.matmul %91, %92, %cst_31 {dimension_numbers = #tpu.dot_dimension_numbers<[1], [1], [0], [0], [0, 0, 1, 0], [], []>} : vector<24x16xf32>, vector<8x16xf32>, vector<24x8xf32> -> vector<24x8xf32>
    %cst_32 = arith.constant dense<0xFF800000> : vector<24xf32>
    %94 = vector.multi_reduction <maximumf>, %93, %cst_32 [1] : vector<24x8xf32> to vector<24xf32>
    %95 = vector.shape_cast %94 : vector<24xf32> to vector<24x1xf32>
    %96 = vector.broadcast %95 : vector<24x1xf32> to vector<24x8xf32>
    %97 = arith.subf %93, %96 : vector<24x8xf32>
    %98 = math.exp %97 : vector<24x8xf32>
    %cst_33 = arith.constant dense<0.000000e+00> : vector<24xf32>
    %99 = vector.multi_reduction <add>, %98, %cst_33 [1] : vector<24x8xf32> to vector<24xf32>
    %100 = vector.shape_cast %99 : vector<24xf32> to vector<24x1xf32>
    %101 = tpu.reciprocal %100 {approx = true} : vector<24x1xf32> -> vector<24x1xf32>
    %102 = vector.broadcast %101 : vector<24x1xf32> to vector<24x8xf32>
    %103 = arith.mulf %98, %102 : vector<24x8xf32>
    %c0_34 = arith.constant 0 : index
    %c0_35 = arith.constant 0 : index
    %c0_36 = arith.constant 0 : index
    %c0_37 = arith.constant 0 : index
    %104 = vector.load %arg7[%c0_34, %c0_35, %c0_36, %c0_37] : memref<2x2x8x16xf32, #tpu.memory_space<vmem>>, vector<1x1x8x16xf32>
    %105 = vector.shape_cast %104 : vector<1x1x8x16xf32> to vector<8x16xf32>
    %cst_38 = arith.constant dense<0.000000e+00> : vector<24x16xf32>
    %106 = tpu.matmul %103, %105, %cst_38 {dimension_numbers = #tpu.dot_dimension_numbers<[1], [0], [0], [1], [0, 0, 1, 1], [], []>} : vector<24x8xf32>, vector<8x16xf32>, vector<24x16xf32> -> vector<24x16xf32>
    %107 = vector.extract_strided_slice %90 {offsets = [0, 16], sizes = [24, 16], strides = [1, 1]} : vector<24x32xf32> to vector<24x16xf32>
    %108 = vector.extract_strided_slice %79 {offsets = [0, 16], sizes = [8, 16], strides = [1, 1]} : vector<8x32xf32> to vector<8x16xf32>
    %cst_39 = arith.constant dense<0.000000e+00> : vector<24x8xf32>
    %109 = tpu.matmul %107, %108, %cst_39 {dimension_numbers = #tpu.dot_dimension_numbers<[1], [1], [0], [0], [0, 0, 1, 0], [], []>} : vector<24x16xf32>, vector<8x16xf32>, vector<24x8xf32> -> vector<24x8xf32>
    %cst_40 = arith.constant dense<0xFF800000> : vector<24xf32>
    %110 = vector.multi_reduction <maximumf>, %109, %cst_40 [1] : vector<24x8xf32> to vector<24xf32>
    %111 = vector.shape_cast %110 : vector<24xf32> to vector<24x1xf32>
    %112 = vector.broadcast %111 : vector<24x1xf32> to vector<24x8xf32>
    %113 = arith.subf %109, %112 : vector<24x8xf32>
    %114 = math.exp %113 : vector<24x8xf32>
    %cst_41 = arith.constant dense<0.000000e+00> : vector<24xf32>
    %115 = vector.multi_reduction <add>, %114, %cst_41 [1] : vector<24x8xf32> to vector<24xf32>
    %116 = vector.shape_cast %115 : vector<24xf32> to vector<24x1xf32>
    %117 = tpu.reciprocal %116 {approx = true} : vector<24x1xf32> -> vector<24x1xf32>
    %118 = vector.broadcast %117 : vector<24x1xf32> to vector<24x8xf32>
    %119 = arith.mulf %114, %118 : vector<24x8xf32>
    %c0_42 = arith.constant 0 : index
    %c1 = arith.constant 1 : index
    %c0_43 = arith.constant 0 : index
    %c0_44 = arith.constant 0 : index
    %120 = vector.load %arg7[%c0_42, %c1, %c0_43, %c0_44] : memref<2x2x8x16xf32, #tpu.memory_space<vmem>>, vector<1x1x8x16xf32>
    %121 = vector.shape_cast %120 : vector<1x1x8x16xf32> to vector<8x16xf32>
    %cst_45 = arith.constant dense<0.000000e+00> : vector<24x16xf32>
    %122 = tpu.matmul %119, %121, %cst_45 {dimension_numbers = #tpu.dot_dimension_numbers<[1], [0], [0], [1], [0, 0, 1, 1], [], []>} : vector<24x8xf32>, vector<8x16xf32>, vector<24x16xf32> -> vector<24x16xf32>
    %123 = arith.addf %106, %122 : vector<24x16xf32>
    %cst_46 = arith.constant dense<0.000000e+00> : vector<24xf32>
    %124 = vector.multi_reduction <add>, %71, %cst_46 [1] : vector<24x32xf32> to vector<24xf32>
    %125 = vector.shape_cast %124 : vector<24xf32> to vector<24x1xf32>
    %cst_47 = arith.constant 3.200000e+01 : f32
    %126 = vector.broadcast %cst_47 : f32 to vector<24x1xf32>
    %127 = arith.divf %125, %126 : vector<24x1xf32>
    %128 = vector.broadcast %127 : vector<24x1xf32> to vector<24x32xf32>
    %129 = arith.subf %71, %128 : vector<24x32xf32>
    %130 = arith.mulf %129, %129 : vector<24x32xf32>
    %cst_48 = arith.constant dense<0.000000e+00> : vector<24xf32>
    %131 = vector.multi_reduction <add>, %130, %cst_48 [1] : vector<24x32xf32> to vector<24xf32>
    %132 = vector.shape_cast %131 : vector<24xf32> to vector<24x1xf32>
    %cst_49 = arith.constant 3.200000e+01 : f32
    %133 = vector.broadcast %cst_49 : f32 to vector<24x1xf32>
    %134 = arith.divf %132, %133 : vector<24x1xf32>
    %cst_50 = arith.constant 9.99999974E-6 : f32
    %135 = vector.broadcast %cst_50 : f32 to vector<24x1xf32>
    %136 = arith.addf %134, %135 : vector<24x1xf32>
    %137 = math.rsqrt %136 : vector<24x1xf32>
    %138 = vector.broadcast %137 : vector<24x1xf32> to vector<24x32xf32>
    %139 = arith.mulf %129, %138 : vector<24x32xf32>
    %140 = vector.broadcast %82 : vector<1x32xf32> to vector<24x32xf32>
    %141 = arith.mulf %139, %140 : vector<24x32xf32>
    %142 = vector.broadcast %83 : vector<1x32xf32> to vector<24x32xf32>
    %143 = arith.addf %141, %142 : vector<24x32xf32>
    %c0_51 = arith.constant 0 : index
    %c0_52 = arith.constant 0 : index
    %c0_53 = arith.constant 0 : index
    %144 = vector.load %arg8[%c0_51, %c0_52, %c0_53] : memref<2x32x128xf32, #tpu.memory_space<vmem>>, vector<1x32x128xf32>
    %145 = vector.shape_cast %144 : vector<1x32x128xf32> to vector<32x128xf32>
    %cst_54 = arith.constant dense<0.000000e+00> : vector<24x128xf32>
    %146 = tpu.matmul %143, %145, %cst_54 {dimension_numbers = #tpu.dot_dimension_numbers<[1], [0], [0], [1], [0, 0, 1, 1], [], []>} : vector<24x32xf32>, vector<32x128xf32>, vector<24x128xf32> -> vector<24x128xf32>
    %147 = vector.extract_strided_slice %146 {offsets = [0, 80], sizes = [24, 8], strides = [1, 1]} : vector<24x128xf32> to vector<24x8xf32>
    %148 = vector.shape_cast %147 : vector<24x8xf32> to vector<1x24x8xf32>
    %149 = vector.extract_strided_slice %146 {offsets = [0, 96], sizes = [24, 8], strides = [1, 1]} : vector<24x128xf32> to vector<24x8xf32>
    %150 = vector.shape_cast %149 : vector<24x8xf32> to vector<1x24x8xf32>
    "tpu.trace_start"() <{level = 10 : i32, message = "bqd,bkd->bqk"}> : () -> ()
    %cst_55 = arith.constant dense<0.000000e+00> : vector<1x24x24xf32>
    %151 = tpu.matmul %148, %150, %cst_55 {dimension_numbers = #tpu.dot_dimension_numbers<[2], [2], [1], [1], [0, 0, 0, 1, 1, 1], [0], [0]>} : vector<1x24x8xf32>, vector<1x24x8xf32>, vector<1x24x24xf32> -> vector<1x24x24xf32>
    "tpu.trace_stop"() : () -> ()
    %152 = vector.extract_strided_slice %146 {offsets = [0, 88], sizes = [24, 8], strides = [1, 1]} : vector<24x128xf32> to vector<24x8xf32>
    %153 = vector.shape_cast %152 : vector<24x8xf32> to vector<1x24x8xf32>
    %154 = vector.extract_strided_slice %146 {offsets = [0, 104], sizes = [24, 8], strides = [1, 1]} : vector<24x128xf32> to vector<24x8xf32>
    %155 = vector.shape_cast %154 : vector<24x8xf32> to vector<1x24x8xf32>
    "tpu.trace_start"() <{level = 10 : i32, message = "bqd,bkd->bqk"}> : () -> ()
    %cst_56 = arith.constant dense<0.000000e+00> : vector<1x24x24xf32>
    %156 = tpu.matmul %153, %155, %cst_56 {dimension_numbers = #tpu.dot_dimension_numbers<[2], [2], [1], [1], [0, 0, 0, 1, 1, 1], [0], [0]>} : vector<1x24x8xf32>, vector<1x24x8xf32>, vector<1x24x24xf32> -> vector<1x24x24xf32>
    "tpu.trace_stop"() : () -> ()
    %157 = vector.extract_strided_slice %146 {offsets = [0, 0], sizes = [24, 8], strides = [1, 1]} : vector<24x128xf32> to vector<24x8xf32>
    %158 = vector.shape_cast %157 : vector<24x8xf32> to vector<1x24x8xf32>
    %159 = vector.extract_strided_slice %146 {offsets = [0, 16], sizes = [24, 8], strides = [1, 1]} : vector<24x128xf32> to vector<24x8xf32>
    %160 = vector.shape_cast %159 : vector<24x8xf32> to vector<1x24x8xf32>
    "tpu.trace_start"() <{level = 10 : i32, message = "bqd,bkd->bqk"}> : () -> ()
    %cst_57 = arith.constant dense<0.000000e+00> : vector<1x24x24xf32>
    %161 = tpu.matmul %158, %160, %cst_57 {dimension_numbers = #tpu.dot_dimension_numbers<[2], [2], [1], [1], [0, 0, 0, 1, 1, 1], [0], [0]>} : vector<1x24x8xf32>, vector<1x24x8xf32>, vector<1x24x24xf32> -> vector<1x24x24xf32>
    "tpu.trace_stop"() : () -> ()
    %162 = vector.broadcast %77 : vector<1x1x24xf32> to vector<1x24x24xf32>
    %163 = arith.addf %161, %162 : vector<1x24x24xf32>
    %cst_58 = arith.constant dense<0xFF800000> : vector<1x24xf32>
    %164 = vector.multi_reduction <maximumf>, %163, %cst_58 [2] : vector<1x24x24xf32> to vector<1x24xf32>
    %165 = vector.shape_cast %164 : vector<1x24xf32> to vector<1x24x1xf32>
    %166 = vector.broadcast %165 : vector<1x24x1xf32> to vector<1x24x24xf32>
    %167 = arith.subf %163, %166 : vector<1x24x24xf32>
    %168 = math.exp %167 : vector<1x24x24xf32>
    %cst_59 = arith.constant dense<0.000000e+00> : vector<1x24xf32>
    %169 = vector.multi_reduction <add>, %168, %cst_59 [2] : vector<1x24x24xf32> to vector<1x24xf32>
    %170 = vector.shape_cast %169 : vector<1x24xf32> to vector<1x24x1xf32>
    %171 = tpu.reciprocal %170 {approx = true} : vector<1x24x1xf32> -> vector<1x24x1xf32>
    %172 = vector.broadcast %171 : vector<1x24x1xf32> to vector<1x24x24xf32>
    %173 = arith.mulf %168, %172 : vector<1x24x24xf32>
    %174 = vector.extract_strided_slice %146 {offsets = [0, 32], sizes = [24, 8], strides = [1, 1]} : vector<24x128xf32> to vector<24x8xf32>
    %175 = vector.shape_cast %174 : vector<24x8xf32> to vector<1x24x8xf32>
    "tpu.trace_start"() <{level = 10 : i32, message = "bqk,bkd->bqd"}> : () -> ()
    %cst_60 = arith.constant dense<0.000000e+00> : vector<1x24x8xf32>
    %176 = tpu.matmul %173, %175, %cst_60 {dimension_numbers = #tpu.dot_dimension_numbers<[2], [1], [1], [2], [0, 0, 0, 1, 1, 2], [0], [0]>} : vector<1x24x24xf32>, vector<1x24x8xf32>, vector<1x24x8xf32> -> vector<1x24x8xf32>
    "tpu.trace_stop"() : () -> ()
    %177 = vector.shape_cast %176 : vector<1x24x8xf32> to vector<24x8xf32>
    %c0_61 = arith.constant 0 : index
    %c0_62 = arith.constant 0 : index
    %c0_63 = arith.constant 0 : index
    %c0_64 = arith.constant 0 : index
    %178 = vector.load %arg9[%c0_61, %c0_62, %c0_63, %c0_64] : memref<2x4x8x32xf32, #tpu.memory_space<vmem>>, vector<1x1x8x32xf32>
    %179 = vector.shape_cast %178 : vector<1x1x8x32xf32> to vector<8x32xf32>
    %cst_65 = arith.constant dense<0.000000e+00> : vector<24x32xf32>
    %180 = tpu.matmul %177, %179, %cst_65 {dimension_numbers = #tpu.dot_dimension_numbers<[1], [0], [0], [1], [0, 0, 1, 1], [], []>} : vector<24x8xf32>, vector<8x32xf32>, vector<24x32xf32> -> vector<24x32xf32>
    %181 = vector.extract_strided_slice %146 {offsets = [0, 8], sizes = [24, 8], strides = [1, 1]} : vector<24x128xf32> to vector<24x8xf32>
    %182 = vector.shape_cast %181 : vector<24x8xf32> to vector<1x24x8xf32>
    %183 = vector.extract_strided_slice %146 {offsets = [0, 24], sizes = [24, 8], strides = [1, 1]} : vector<24x128xf32> to vector<24x8xf32>
    %184 = vector.shape_cast %183 : vector<24x8xf32> to vector<1x24x8xf32>
    "tpu.trace_start"() <{level = 10 : i32, message = "bqd,bkd->bqk"}> : () -> ()
    %cst_66 = arith.constant dense<0.000000e+00> : vector<1x24x24xf32>
    %185 = tpu.matmul %182, %184, %cst_66 {dimension_numbers = #tpu.dot_dimension_numbers<[2], [2], [1], [1], [0, 0, 0, 1, 1, 1], [0], [0]>} : vector<1x24x8xf32>, vector<1x24x8xf32>, vector<1x24x24xf32> -> vector<1x24x24xf32>
    "tpu.trace_stop"() : () -> ()
    %186 = vector.broadcast %77 : vector<1x1x24xf32> to vector<1x24x24xf32>
    %187 = arith.addf %185, %186 : vector<1x24x24xf32>
    %cst_67 = arith.constant dense<0xFF800000> : vector<1x24xf32>
    %188 = vector.multi_reduction <maximumf>, %187, %cst_67 [2] : vector<1x24x24xf32> to vector<1x24xf32>
    %189 = vector.shape_cast %188 : vector<1x24xf32> to vector<1x24x1xf32>
    %190 = vector.broadcast %189 : vector<1x24x1xf32> to vector<1x24x24xf32>
    %191 = arith.subf %187, %190 : vector<1x24x24xf32>
    %192 = math.exp %191 : vector<1x24x24xf32>
    %cst_68 = arith.constant dense<0.000000e+00> : vector<1x24xf32>
    %193 = vector.multi_reduction <add>, %192, %cst_68 [2] : vector<1x24x24xf32> to vector<1x24xf32>
    %194 = vector.shape_cast %193 : vector<1x24xf32> to vector<1x24x1xf32>
    %195 = tpu.reciprocal %194 {approx = true} : vector<1x24x1xf32> -> vector<1x24x1xf32>
    %196 = vector.broadcast %195 : vector<1x24x1xf32> to vector<1x24x24xf32>
    %197 = arith.mulf %192, %196 : vector<1x24x24xf32>
    %198 = vector.extract_strided_slice %146 {offsets = [0, 40], sizes = [24, 8], strides = [1, 1]} : vector<24x128xf32> to vector<24x8xf32>
    %199 = vector.shape_cast %198 : vector<24x8xf32> to vector<1x24x8xf32>
    "tpu.trace_start"() <{level = 10 : i32, message = "bqk,bkd->bqd"}> : () -> ()
    %cst_69 = arith.constant dense<0.000000e+00> : vector<1x24x8xf32>
    %200 = tpu.matmul %197, %199, %cst_69 {dimension_numbers = #tpu.dot_dimension_numbers<[2], [1], [1], [2], [0, 0, 0, 1, 1, 2], [0], [0]>} : vector<1x24x24xf32>, vector<1x24x8xf32>, vector<1x24x8xf32> -> vector<1x24x8xf32>
    "tpu.trace_stop"() : () -> ()
    %201 = vector.shape_cast %200 : vector<1x24x8xf32> to vector<24x8xf32>
    %c0_70 = arith.constant 0 : index
    %c1_71 = arith.constant 1 : index
    %c0_72 = arith.constant 0 : index
    %c0_73 = arith.constant 0 : index
    %202 = vector.load %arg9[%c0_70, %c1_71, %c0_72, %c0_73] : memref<2x4x8x32xf32, #tpu.memory_space<vmem>>, vector<1x1x8x32xf32>
    %203 = vector.shape_cast %202 : vector<1x1x8x32xf32> to vector<8x32xf32>
    %cst_74 = arith.constant dense<0.000000e+00> : vector<24x32xf32>
    %204 = tpu.matmul %201, %203, %cst_74 {dimension_numbers = #tpu.dot_dimension_numbers<[1], [0], [0], [1], [0, 0, 1, 1], [], []>} : vector<24x8xf32>, vector<8x32xf32>, vector<24x32xf32> -> vector<24x32xf32>
    %205 = arith.addf %180, %204 : vector<24x32xf32>
    %206 = vector.extract_strided_slice %146 {offsets = [0, 48], sizes = [24, 8], strides = [1, 1]} : vector<24x128xf32> to vector<24x8xf32>
    %207 = vector.shape_cast %206 : vector<24x8xf32> to vector<1x24x8xf32>
    %208 = vector.extract_strided_slice %146 {offsets = [0, 64], sizes = [24, 8], strides = [1, 1]} : vector<24x128xf32> to vector<24x8xf32>
    %209 = vector.shape_cast %208 : vector<24x8xf32> to vector<1x24x8xf32>
    "tpu.trace_start"() <{level = 10 : i32, message = "bqd,bkd->bqk"}> : () -> ()
    %cst_75 = arith.constant dense<0.000000e+00> : vector<1x24x24xf32>
    %210 = tpu.matmul %207, %209, %cst_75 {dimension_numbers = #tpu.dot_dimension_numbers<[2], [2], [1], [1], [0, 0, 0, 1, 1, 1], [0], [0]>} : vector<1x24x8xf32>, vector<1x24x8xf32>, vector<1x24x24xf32> -> vector<1x24x24xf32>
    "tpu.trace_stop"() : () -> ()
    %211 = vector.broadcast %77 : vector<1x1x24xf32> to vector<1x24x24xf32>
    %212 = arith.addf %210, %211 : vector<1x24x24xf32>
    %cst_76 = arith.constant dense<0xFF800000> : vector<1x24xf32>
    %213 = vector.multi_reduction <maximumf>, %212, %cst_76 [2] : vector<1x24x24xf32> to vector<1x24xf32>
    %214 = vector.shape_cast %213 : vector<1x24xf32> to vector<1x24x1xf32>
    %215 = vector.broadcast %214 : vector<1x24x1xf32> to vector<1x24x24xf32>
    %216 = arith.subf %212, %215 : vector<1x24x24xf32>
    %217 = math.exp %216 : vector<1x24x24xf32>
    %cst_77 = arith.constant dense<0.000000e+00> : vector<1x24xf32>
    %218 = vector.multi_reduction <add>, %217, %cst_77 [2] : vector<1x24x24xf32> to vector<1x24xf32>
    %219 = vector.shape_cast %218 : vector<1x24xf32> to vector<1x24x1xf32>
    %220 = tpu.reciprocal %219 {approx = true} : vector<1x24x1xf32> -> vector<1x24x1xf32>
    %221 = vector.broadcast %220 : vector<1x24x1xf32> to vector<1x24x24xf32>
    %222 = arith.mulf %217, %221 : vector<1x24x24xf32>
    %223 = vector.extract_strided_slice %123 {offsets = [0, 0], sizes = [24, 8], strides = [1, 1]} : vector<24x16xf32> to vector<24x8xf32>
    %224 = vector.shape_cast %223 : vector<24x8xf32> to vector<1x24x8xf32>
    "tpu.trace_start"() <{level = 10 : i32, message = "bqk,bkd->bqd"}> : () -> ()
    %cst_78 = arith.constant dense<0.000000e+00> : vector<1x24x8xf32>
    %225 = tpu.matmul %222, %224, %cst_78 {dimension_numbers = #tpu.dot_dimension_numbers<[2], [1], [1], [2], [0, 0, 0, 1, 1, 2], [0], [0]>} : vector<1x24x24xf32>, vector<1x24x8xf32>, vector<1x24x8xf32> -> vector<1x24x8xf32>
    "tpu.trace_stop"() : () -> ()
    %226 = vector.shape_cast %225 : vector<1x24x8xf32> to vector<24x8xf32>
    %c0_79 = arith.constant 0 : index
    %c2 = arith.constant 2 : index
    %c0_80 = arith.constant 0 : index
    %c0_81 = arith.constant 0 : index
    %227 = vector.load %arg9[%c0_79, %c2, %c0_80, %c0_81] : memref<2x4x8x32xf32, #tpu.memory_space<vmem>>, vector<1x1x8x32xf32>
    %228 = vector.shape_cast %227 : vector<1x1x8x32xf32> to vector<8x32xf32>
    %cst_82 = arith.constant dense<0.000000e+00> : vector<24x32xf32>
    %229 = tpu.matmul %226, %228, %cst_82 {dimension_numbers = #tpu.dot_dimension_numbers<[1], [0], [0], [1], [0, 0, 1, 1], [], []>} : vector<24x8xf32>, vector<8x32xf32>, vector<24x32xf32> -> vector<24x32xf32>
    %230 = arith.addf %205, %229 : vector<24x32xf32>
    %231 = arith.mulf %222, %151 : vector<1x24x24xf32>
    %cst_83 = arith.constant dense<0.000000e+00> : vector<1x24xf32>
    %232 = vector.multi_reduction <add>, %231, %cst_83 [2] : vector<1x24x24xf32> to vector<1x24xf32>
    %233 = vector.shape_cast %232 : vector<1x24xf32> to vector<1x24x1xf32>
    %234 = arith.mulf %222, %156 : vector<1x24x24xf32>
    %cst_84 = arith.constant dense<0.000000e+00> : vector<1x24xf32>
    %235 = vector.multi_reduction <add>, %234, %cst_84 [2] : vector<1x24x24xf32> to vector<1x24xf32>
    %236 = vector.shape_cast %235 : vector<1x24xf32> to vector<1x24x1xf32>
    %237 = vector.extract_strided_slice %146 {offsets = [0, 56], sizes = [24, 8], strides = [1, 1]} : vector<24x128xf32> to vector<24x8xf32>
    %238 = vector.shape_cast %237 : vector<24x8xf32> to vector<1x24x8xf32>
    %239 = vector.extract_strided_slice %146 {offsets = [0, 72], sizes = [24, 8], strides = [1, 1]} : vector<24x128xf32> to vector<24x8xf32>
    %240 = vector.shape_cast %239 : vector<24x8xf32> to vector<1x24x8xf32>
    "tpu.trace_start"() <{level = 10 : i32, message = "bqd,bkd->bqk"}> : () -> ()
    %cst_85 = arith.constant dense<0.000000e+00> : vector<1x24x24xf32>
    %241 = tpu.matmul %238, %240, %cst_85 {dimension_numbers = #tpu.dot_dimension_numbers<[2], [2], [1], [1], [0, 0, 0, 1, 1, 1], [0], [0]>} : vector<1x24x8xf32>, vector<1x24x8xf32>, vector<1x24x24xf32> -> vector<1x24x24xf32>
    "tpu.trace_stop"() : () -> ()
    %242 = vector.broadcast %77 : vector<1x1x24xf32> to vector<1x24x24xf32>
    %243 = arith.addf %241, %242 : vector<1x24x24xf32>
    %cst_86 = arith.constant dense<0xFF800000> : vector<1x24xf32>
    %244 = vector.multi_reduction <maximumf>, %243, %cst_86 [2] : vector<1x24x24xf32> to vector<1x24xf32>
    %245 = vector.shape_cast %244 : vector<1x24xf32> to vector<1x24x1xf32>
    %246 = vector.broadcast %245 : vector<1x24x1xf32> to vector<1x24x24xf32>
    %247 = arith.subf %243, %246 : vector<1x24x24xf32>
    %248 = math.exp %247 : vector<1x24x24xf32>
    %cst_87 = arith.constant dense<0.000000e+00> : vector<1x24xf32>
    %249 = vector.multi_reduction <add>, %248, %cst_87 [2] : vector<1x24x24xf32> to vector<1x24xf32>
    %250 = vector.shape_cast %249 : vector<1x24xf32> to vector<1x24x1xf32>
    %251 = tpu.reciprocal %250 {approx = true} : vector<1x24x1xf32> -> vector<1x24x1xf32>
    %252 = vector.broadcast %251 : vector<1x24x1xf32> to vector<1x24x24xf32>
    %253 = arith.mulf %248, %252 : vector<1x24x24xf32>
    %254 = vector.extract_strided_slice %123 {offsets = [0, 8], sizes = [24, 8], strides = [1, 1]} : vector<24x16xf32> to vector<24x8xf32>
    %255 = vector.shape_cast %254 : vector<24x8xf32> to vector<1x24x8xf32>
    "tpu.trace_start"() <{level = 10 : i32, message = "bqk,bkd->bqd"}> : () -> ()
    %cst_88 = arith.constant dense<0.000000e+00> : vector<1x24x8xf32>
    %256 = tpu.matmul %253, %255, %cst_88 {dimension_numbers = #tpu.dot_dimension_numbers<[2], [1], [1], [2], [0, 0, 0, 1, 1, 2], [0], [0]>} : vector<1x24x24xf32>, vector<1x24x8xf32>, vector<1x24x8xf32> -> vector<1x24x8xf32>
    "tpu.trace_stop"() : () -> ()
    %257 = vector.shape_cast %256 : vector<1x24x8xf32> to vector<24x8xf32>
    %c0_89 = arith.constant 0 : index
    %c3 = arith.constant 3 : index
    %c0_90 = arith.constant 0 : index
    %c0_91 = arith.constant 0 : index
    %258 = vector.load %arg9[%c0_89, %c3, %c0_90, %c0_91] : memref<2x4x8x32xf32, #tpu.memory_space<vmem>>, vector<1x1x8x32xf32>
    %259 = vector.shape_cast %258 : vector<1x1x8x32xf32> to vector<8x32xf32>
    %cst_92 = arith.constant dense<0.000000e+00> : vector<24x32xf32>
    %260 = tpu.matmul %257, %259, %cst_92 {dimension_numbers = #tpu.dot_dimension_numbers<[1], [0], [0], [1], [0, 0, 1, 1], [], []>} : vector<24x8xf32>, vector<8x32xf32>, vector<24x32xf32> -> vector<24x32xf32>
    %261 = arith.addf %230, %260 : vector<24x32xf32>
    %262 = arith.mulf %253, %151 : vector<1x24x24xf32>
    %cst_93 = arith.constant dense<0.000000e+00> : vector<1x24xf32>
    %263 = vector.multi_reduction <add>, %262, %cst_93 [2] : vector<1x24x24xf32> to vector<1x24xf32>
    %264 = vector.shape_cast %263 : vector<1x24xf32> to vector<1x24x1xf32>
    %265 = arith.mulf %253, %156 : vector<1x24x24xf32>
    %cst_94 = arith.constant dense<0.000000e+00> : vector<1x24xf32>
    %266 = vector.multi_reduction <add>, %265, %cst_94 [2] : vector<1x24x24xf32> to vector<1x24xf32>
    %267 = vector.shape_cast %266 : vector<1x24xf32> to vector<1x24x1xf32>
    %268 = tpu.concatenate %233, %236, %264, %267 in 2 : vector<1x24x1xf32>, vector<1x24x1xf32>, vector<1x24x1xf32>, vector<1x24x1xf32> -> vector<1x24x4xf32>
    %269 = vector.shape_cast %268 : vector<1x24x4xf32> to vector<24x4xf32>
    %c0_95 = arith.constant 0 : index
    %c0_96 = arith.constant 0 : index
    %c0_97 = arith.constant 0 : index
    %270 = vector.load %arg10[%c0_95, %c0_96, %c0_97] : memref<2x4x32xf32, #tpu.memory_space<vmem>>, vector<1x4x32xf32>
    %271 = vector.shape_cast %270 : vector<1x4x32xf32> to vector<4x32xf32>
    %cst_98 = arith.constant dense<0.000000e+00> : vector<24x32xf32>
    %272 = tpu.matmul %269, %271, %cst_98 {dimension_numbers = #tpu.dot_dimension_numbers<[1], [0], [0], [1], [0, 0, 1, 1], [], []>} : vector<24x4xf32>, vector<4x32xf32>, vector<24x32xf32> -> vector<24x32xf32>
    %273 = arith.addf %71, %261 : vector<24x32xf32>
    %274 = arith.addf %273, %272 : vector<24x32xf32>
    %cst_99 = arith.constant dense<0.000000e+00> : vector<24xf32>
    %275 = vector.multi_reduction <add>, %274, %cst_99 [1] : vector<24x32xf32> to vector<24xf32>
    %276 = vector.shape_cast %275 : vector<24xf32> to vector<24x1xf32>
    %cst_100 = arith.constant 3.200000e+01 : f32
    %277 = vector.broadcast %cst_100 : f32 to vector<24x1xf32>
    %278 = arith.divf %276, %277 : vector<24x1xf32>
    %279 = vector.broadcast %278 : vector<24x1xf32> to vector<24x32xf32>
    %280 = arith.subf %274, %279 : vector<24x32xf32>
    %281 = arith.mulf %280, %280 : vector<24x32xf32>
    %cst_101 = arith.constant dense<0.000000e+00> : vector<24xf32>
    %282 = vector.multi_reduction <add>, %281, %cst_101 [1] : vector<24x32xf32> to vector<24xf32>
    %283 = vector.shape_cast %282 : vector<24xf32> to vector<24x1xf32>
    %cst_102 = arith.constant 3.200000e+01 : f32
    %284 = vector.broadcast %cst_102 : f32 to vector<24x1xf32>
    %285 = arith.divf %283, %284 : vector<24x1xf32>
    %cst_103 = arith.constant 9.99999974E-6 : f32
    %286 = vector.broadcast %cst_103 : f32 to vector<24x1xf32>
    %287 = arith.addf %285, %286 : vector<24x1xf32>
    %288 = math.rsqrt %287 : vector<24x1xf32>
    %289 = vector.broadcast %288 : vector<24x1xf32> to vector<24x32xf32>
    %290 = arith.mulf %280, %289 : vector<24x32xf32>
    %291 = vector.broadcast %84 : vector<1x32xf32> to vector<24x32xf32>
    %292 = arith.mulf %290, %291 : vector<24x32xf32>
    %293 = vector.broadcast %85 : vector<1x32xf32> to vector<24x32xf32>
    %294 = arith.addf %292, %293 : vector<24x32xf32>
    %c0_104 = arith.constant 0 : index
    %c0_105 = arith.constant 0 : index
    %c0_106 = arith.constant 0 : index
    %295 = vector.load %arg11[%c0_104, %c0_105, %c0_106] : memref<2x32x64xf32, #tpu.memory_space<vmem>>, vector<1x32x64xf32>
    %296 = vector.shape_cast %295 : vector<1x32x64xf32> to vector<32x64xf32>
    %cst_107 = arith.constant dense<0.000000e+00> : vector<24x64xf32>
    %297 = tpu.matmul %294, %296, %cst_107 {dimension_numbers = #tpu.dot_dimension_numbers<[1], [0], [0], [1], [0, 0, 1, 1], [], []>} : vector<24x32xf32>, vector<32x64xf32>, vector<24x64xf32> -> vector<24x64xf32>
    %298 = vector.broadcast %86 : vector<1x64xf32> to vector<24x64xf32>
    %299 = arith.addf %297, %298 : vector<24x64xf32>
    %cst_108 = arith.constant 0.000000e+00 : f32
    %300 = vector.broadcast %cst_108 : f32 to vector<24x64xf32>
    %301 = arith.maximumf %299, %300 : vector<24x64xf32>
    %c0_109 = arith.constant 0 : index
    %c0_110 = arith.constant 0 : index
    %c0_111 = arith.constant 0 : index
    %302 = vector.load %arg12[%c0_109, %c0_110, %c0_111] : memref<2x64x32xf32, #tpu.memory_space<vmem>>, vector<1x64x32xf32>
    %303 = vector.shape_cast %302 : vector<1x64x32xf32> to vector<64x32xf32>
    %cst_112 = arith.constant dense<0.000000e+00> : vector<24x32xf32>
    %304 = tpu.matmul %301, %303, %cst_112 {dimension_numbers = #tpu.dot_dimension_numbers<[1], [0], [0], [1], [0, 0, 1, 1], [], []>} : vector<24x64xf32>, vector<64x32xf32>, vector<24x32xf32> -> vector<24x32xf32>
    %305 = vector.broadcast %87 : vector<1x32xf32> to vector<24x32xf32>
    %306 = arith.addf %304, %305 : vector<24x32xf32>
    %307 = arith.addf %274, %306 : vector<24x32xf32>
    %c1_113 = arith.constant 1 : index
    %c0_114 = arith.constant 0 : index
    %c0_115 = arith.constant 0 : index
    %308 = vector.load %arg13[%c1_113, %c0_114, %c0_115] : memref<2x6x64xf32, #tpu.memory_space<vmem>>, vector<1x6x64xf32>
    %309 = vector.shape_cast %308 : vector<1x6x64xf32> to vector<6x64xf32>
    %310 = vector.extract_strided_slice %309 {offsets = [0, 0], sizes = [1, 32], strides = [1, 1]} : vector<6x64xf32> to vector<1x32xf32>
    %311 = vector.extract_strided_slice %309 {offsets = [1, 0], sizes = [1, 32], strides = [1, 1]} : vector<6x64xf32> to vector<1x32xf32>
    %312 = vector.extract_strided_slice %309 {offsets = [2, 0], sizes = [1, 32], strides = [1, 1]} : vector<6x64xf32> to vector<1x32xf32>
    %313 = vector.extract_strided_slice %309 {offsets = [3, 0], sizes = [1, 32], strides = [1, 1]} : vector<6x64xf32> to vector<1x32xf32>
    %314 = vector.extract_strided_slice %309 {offsets = [4, 0], sizes = [1, 64], strides = [1, 1]} : vector<6x64xf32> to vector<1x64xf32>
    %315 = vector.extract_strided_slice %309 {offsets = [5, 0], sizes = [1, 32], strides = [1, 1]} : vector<6x64xf32> to vector<1x32xf32>
    %cst_116 = arith.constant dense<0.000000e+00> : vector<24x32xf32>
    %316 = tpu.matmul %307, %78, %cst_116 {dimension_numbers = #tpu.dot_dimension_numbers<[1], [0], [0], [1], [0, 0, 1, 1], [], []>} : vector<24x32xf32>, vector<32x32xf32>, vector<24x32xf32> -> vector<24x32xf32>
    %317 = vector.broadcast %6 : vector<1x32xf32> to vector<24x32xf32>
    %318 = arith.addf %316, %317 : vector<24x32xf32>
    %319 = vector.extract_strided_slice %318 {offsets = [0, 0], sizes = [24, 16], strides = [1, 1]} : vector<24x32xf32> to vector<24x16xf32>
    %320 = vector.extract_strided_slice %79 {offsets = [0, 0], sizes = [8, 16], strides = [1, 1]} : vector<8x32xf32> to vector<8x16xf32>
    %cst_117 = arith.constant dense<0.000000e+00> : vector<24x8xf32>
    %321 = tpu.matmul %319, %320, %cst_117 {dimension_numbers = #tpu.dot_dimension_numbers<[1], [1], [0], [0], [0, 0, 1, 0], [], []>} : vector<24x16xf32>, vector<8x16xf32>, vector<24x8xf32> -> vector<24x8xf32>
    %cst_118 = arith.constant dense<0xFF800000> : vector<24xf32>
    %322 = vector.multi_reduction <maximumf>, %321, %cst_118 [1] : vector<24x8xf32> to vector<24xf32>
    %323 = vector.shape_cast %322 : vector<24xf32> to vector<24x1xf32>
    %324 = vector.broadcast %323 : vector<24x1xf32> to vector<24x8xf32>
    %325 = arith.subf %321, %324 : vector<24x8xf32>
    %326 = math.exp %325 : vector<24x8xf32>
    %cst_119 = arith.constant dense<0.000000e+00> : vector<24xf32>
    %327 = vector.multi_reduction <add>, %326, %cst_119 [1] : vector<24x8xf32> to vector<24xf32>
    %328 = vector.shape_cast %327 : vector<24xf32> to vector<24x1xf32>
    %329 = tpu.reciprocal %328 {approx = true} : vector<24x1xf32> -> vector<24x1xf32>
    %330 = vector.broadcast %329 : vector<24x1xf32> to vector<24x8xf32>
    %331 = arith.mulf %326, %330 : vector<24x8xf32>
    %c1_120 = arith.constant 1 : index
    %c0_121 = arith.constant 0 : index
    %c0_122 = arith.constant 0 : index
    %c0_123 = arith.constant 0 : index
    %332 = vector.load %arg7[%c1_120, %c0_121, %c0_122, %c0_123] : memref<2x2x8x16xf32, #tpu.memory_space<vmem>>, vector<1x1x8x16xf32>
    %333 = vector.shape_cast %332 : vector<1x1x8x16xf32> to vector<8x16xf32>
    %cst_124 = arith.constant dense<0.000000e+00> : vector<24x16xf32>
    %334 = tpu.matmul %331, %333, %cst_124 {dimension_numbers = #tpu.dot_dimension_numbers<[1], [0], [0], [1], [0, 0, 1, 1], [], []>} : vector<24x8xf32>, vector<8x16xf32>, vector<24x16xf32> -> vector<24x16xf32>
    %335 = vector.extract_strided_slice %318 {offsets = [0, 16], sizes = [24, 16], strides = [1, 1]} : vector<24x32xf32> to vector<24x16xf32>
    %336 = vector.extract_strided_slice %79 {offsets = [0, 16], sizes = [8, 16], strides = [1, 1]} : vector<8x32xf32> to vector<8x16xf32>
    %cst_125 = arith.constant dense<0.000000e+00> : vector<24x8xf32>
    %337 = tpu.matmul %335, %336, %cst_125 {dimension_numbers = #tpu.dot_dimension_numbers<[1], [1], [0], [0], [0, 0, 1, 0], [], []>} : vector<24x16xf32>, vector<8x16xf32>, vector<24x8xf32> -> vector<24x8xf32>
    %cst_126 = arith.constant dense<0xFF800000> : vector<24xf32>
    %338 = vector.multi_reduction <maximumf>, %337, %cst_126 [1] : vector<24x8xf32> to vector<24xf32>
    %339 = vector.shape_cast %338 : vector<24xf32> to vector<24x1xf32>
    %340 = vector.broadcast %339 : vector<24x1xf32> to vector<24x8xf32>
    %341 = arith.subf %337, %340 : vector<24x8xf32>
    %342 = math.exp %341 : vector<24x8xf32>
    %cst_127 = arith.constant dense<0.000000e+00> : vector<24xf32>
    %343 = vector.multi_reduction <add>, %342, %cst_127 [1] : vector<24x8xf32> to vector<24xf32>
    %344 = vector.shape_cast %343 : vector<24xf32> to vector<24x1xf32>
    %345 = tpu.reciprocal %344 {approx = true} : vector<24x1xf32> -> vector<24x1xf32>
    %346 = vector.broadcast %345 : vector<24x1xf32> to vector<24x8xf32>
    %347 = arith.mulf %342, %346 : vector<24x8xf32>
    %c1_128 = arith.constant 1 : index
    %c1_129 = arith.constant 1 : index
    %c0_130 = arith.constant 0 : index
    %c0_131 = arith.constant 0 : index
    %348 = vector.load %arg7[%c1_128, %c1_129, %c0_130, %c0_131] : memref<2x2x8x16xf32, #tpu.memory_space<vmem>>, vector<1x1x8x16xf32>
    %349 = vector.shape_cast %348 : vector<1x1x8x16xf32> to vector<8x16xf32>
    %cst_132 = arith.constant dense<0.000000e+00> : vector<24x16xf32>
    %350 = tpu.matmul %347, %349, %cst_132 {dimension_numbers = #tpu.dot_dimension_numbers<[1], [0], [0], [1], [0, 0, 1, 1], [], []>} : vector<24x8xf32>, vector<8x16xf32>, vector<24x16xf32> -> vector<24x16xf32>
    %351 = arith.addf %334, %350 : vector<24x16xf32>
    %cst_133 = arith.constant dense<0.000000e+00> : vector<24xf32>
    %352 = vector.multi_reduction <add>, %307, %cst_133 [1] : vector<24x32xf32> to vector<24xf32>
    %353 = vector.shape_cast %352 : vector<24xf32> to vector<24x1xf32>
    %cst_134 = arith.constant 3.200000e+01 : f32
    %354 = vector.broadcast %cst_134 : f32 to vector<24x1xf32>
    %355 = arith.divf %353, %354 : vector<24x1xf32>
    %356 = vector.broadcast %355 : vector<24x1xf32> to vector<24x32xf32>
    %357 = arith.subf %307, %356 : vector<24x32xf32>
    %358 = arith.mulf %357, %357 : vector<24x32xf32>
    %cst_135 = arith.constant dense<0.000000e+00> : vector<24xf32>
    %359 = vector.multi_reduction <add>, %358, %cst_135 [1] : vector<24x32xf32> to vector<24xf32>
    %360 = vector.shape_cast %359 : vector<24xf32> to vector<24x1xf32>
    %cst_136 = arith.constant 3.200000e+01 : f32
    %361 = vector.broadcast %cst_136 : f32 to vector<24x1xf32>
    %362 = arith.divf %360, %361 : vector<24x1xf32>
    %cst_137 = arith.constant 9.99999974E-6 : f32
    %363 = vector.broadcast %cst_137 : f32 to vector<24x1xf32>
    %364 = arith.addf %362, %363 : vector<24x1xf32>
    %365 = math.rsqrt %364 : vector<24x1xf32>
    %366 = vector.broadcast %365 : vector<24x1xf32> to vector<24x32xf32>
    %367 = arith.mulf %357, %366 : vector<24x32xf32>
    %368 = vector.broadcast %310 : vector<1x32xf32> to vector<24x32xf32>
    %369 = arith.mulf %367, %368 : vector<24x32xf32>
    %370 = vector.broadcast %311 : vector<1x32xf32> to vector<24x32xf32>
    %371 = arith.addf %369, %370 : vector<24x32xf32>
    %c1_138 = arith.constant 1 : index
    %c0_139 = arith.constant 0 : index
    %c0_140 = arith.constant 0 : index
    %372 = vector.load %arg8[%c1_138, %c0_139, %c0_140] : memref<2x32x128xf32, #tpu.memory_space<vmem>>, vector<1x32x128xf32>
    %373 = vector.shape_cast %372 : vector<1x32x128xf32> to vector<32x128xf32>
    %cst_141 = arith.constant dense<0.000000e+00> : vector<24x128xf32>
    %374 = tpu.matmul %371, %373, %cst_141 {dimension_numbers = #tpu.dot_dimension_numbers<[1], [0], [0], [1], [0, 0, 1, 1], [], []>} : vector<24x32xf32>, vector<32x128xf32>, vector<24x128xf32> -> vector<24x128xf32>
    %375 = vector.extract_strided_slice %374 {offsets = [0, 80], sizes = [24, 8], strides = [1, 1]} : vector<24x128xf32> to vector<24x8xf32>
    %376 = vector.shape_cast %375 : vector<24x8xf32> to vector<1x24x8xf32>
    %377 = vector.extract_strided_slice %374 {offsets = [0, 96], sizes = [24, 8], strides = [1, 1]} : vector<24x128xf32> to vector<24x8xf32>
    %378 = vector.shape_cast %377 : vector<24x8xf32> to vector<1x24x8xf32>
    "tpu.trace_start"() <{level = 10 : i32, message = "bqd,bkd->bqk"}> : () -> ()
    %cst_142 = arith.constant dense<0.000000e+00> : vector<1x24x24xf32>
    %379 = tpu.matmul %376, %378, %cst_142 {dimension_numbers = #tpu.dot_dimension_numbers<[2], [2], [1], [1], [0, 0, 0, 1, 1, 1], [0], [0]>} : vector<1x24x8xf32>, vector<1x24x8xf32>, vector<1x24x24xf32> -> vector<1x24x24xf32>
    "tpu.trace_stop"() : () -> ()
    %380 = vector.extract_strided_slice %374 {offsets = [0, 88], sizes = [24, 8], strides = [1, 1]} : vector<24x128xf32> to vector<24x8xf32>
    %381 = vector.shape_cast %380 : vector<24x8xf32> to vector<1x24x8xf32>
    %382 = vector.extract_strided_slice %374 {offsets = [0, 104], sizes = [24, 8], strides = [1, 1]} : vector<24x128xf32> to vector<24x8xf32>
    %383 = vector.shape_cast %382 : vector<24x8xf32> to vector<1x24x8xf32>
    "tpu.trace_start"() <{level = 10 : i32, message = "bqd,bkd->bqk"}> : () -> ()
    %cst_143 = arith.constant dense<0.000000e+00> : vector<1x24x24xf32>
    %384 = tpu.matmul %381, %383, %cst_143 {dimension_numbers = #tpu.dot_dimension_numbers<[2], [2], [1], [1], [0, 0, 0, 1, 1, 1], [0], [0]>} : vector<1x24x8xf32>, vector<1x24x8xf32>, vector<1x24x24xf32> -> vector<1x24x24xf32>
    "tpu.trace_stop"() : () -> ()
    %385 = vector.extract_strided_slice %374 {offsets = [0, 0], sizes = [24, 8], strides = [1, 1]} : vector<24x128xf32> to vector<24x8xf32>
    %386 = vector.shape_cast %385 : vector<24x8xf32> to vector<1x24x8xf32>
    %387 = vector.extract_strided_slice %374 {offsets = [0, 16], sizes = [24, 8], strides = [1, 1]} : vector<24x128xf32> to vector<24x8xf32>
    %388 = vector.shape_cast %387 : vector<24x8xf32> to vector<1x24x8xf32>
    "tpu.trace_start"() <{level = 10 : i32, message = "bqd,bkd->bqk"}> : () -> ()
    %cst_144 = arith.constant dense<0.000000e+00> : vector<1x24x24xf32>
    %389 = tpu.matmul %386, %388, %cst_144 {dimension_numbers = #tpu.dot_dimension_numbers<[2], [2], [1], [1], [0, 0, 0, 1, 1, 1], [0], [0]>} : vector<1x24x8xf32>, vector<1x24x8xf32>, vector<1x24x24xf32> -> vector<1x24x24xf32>
    "tpu.trace_stop"() : () -> ()
    %390 = vector.broadcast %77 : vector<1x1x24xf32> to vector<1x24x24xf32>
    %391 = arith.addf %389, %390 : vector<1x24x24xf32>
    %cst_145 = arith.constant dense<0xFF800000> : vector<1x24xf32>
    %392 = vector.multi_reduction <maximumf>, %391, %cst_145 [2] : vector<1x24x24xf32> to vector<1x24xf32>
    %393 = vector.shape_cast %392 : vector<1x24xf32> to vector<1x24x1xf32>
    %394 = vector.broadcast %393 : vector<1x24x1xf32> to vector<1x24x24xf32>
    %395 = arith.subf %391, %394 : vector<1x24x24xf32>
    %396 = math.exp %395 : vector<1x24x24xf32>
    %cst_146 = arith.constant dense<0.000000e+00> : vector<1x24xf32>
    %397 = vector.multi_reduction <add>, %396, %cst_146 [2] : vector<1x24x24xf32> to vector<1x24xf32>
    %398 = vector.shape_cast %397 : vector<1x24xf32> to vector<1x24x1xf32>
    %399 = tpu.reciprocal %398 {approx = true} : vector<1x24x1xf32> -> vector<1x24x1xf32>
    %400 = vector.broadcast %399 : vector<1x24x1xf32> to vector<1x24x24xf32>
    %401 = arith.mulf %396, %400 : vector<1x24x24xf32>
    %402 = vector.extract_strided_slice %374 {offsets = [0, 32], sizes = [24, 8], strides = [1, 1]} : vector<24x128xf32> to vector<24x8xf32>
    %403 = vector.shape_cast %402 : vector<24x8xf32> to vector<1x24x8xf32>
    "tpu.trace_start"() <{level = 10 : i32, message = "bqk,bkd->bqd"}> : () -> ()
    %cst_147 = arith.constant dense<0.000000e+00> : vector<1x24x8xf32>
    %404 = tpu.matmul %401, %403, %cst_147 {dimension_numbers = #tpu.dot_dimension_numbers<[2], [1], [1], [2], [0, 0, 0, 1, 1, 2], [0], [0]>} : vector<1x24x24xf32>, vector<1x24x8xf32>, vector<1x24x8xf32> -> vector<1x24x8xf32>
    "tpu.trace_stop"() : () -> ()
    %405 = vector.shape_cast %404 : vector<1x24x8xf32> to vector<24x8xf32>
    %c1_148 = arith.constant 1 : index
    %c0_149 = arith.constant 0 : index
    %c0_150 = arith.constant 0 : index
    %c0_151 = arith.constant 0 : index
    %406 = vector.load %arg9[%c1_148, %c0_149, %c0_150, %c0_151] : memref<2x4x8x32xf32, #tpu.memory_space<vmem>>, vector<1x1x8x32xf32>
    %407 = vector.shape_cast %406 : vector<1x1x8x32xf32> to vector<8x32xf32>
    %cst_152 = arith.constant dense<0.000000e+00> : vector<24x32xf32>
    %408 = tpu.matmul %405, %407, %cst_152 {dimension_numbers = #tpu.dot_dimension_numbers<[1], [0], [0], [1], [0, 0, 1, 1], [], []>} : vector<24x8xf32>, vector<8x32xf32>, vector<24x32xf32> -> vector<24x32xf32>
    %409 = vector.extract_strided_slice %374 {offsets = [0, 8], sizes = [24, 8], strides = [1, 1]} : vector<24x128xf32> to vector<24x8xf32>
    %410 = vector.shape_cast %409 : vector<24x8xf32> to vector<1x24x8xf32>
    %411 = vector.extract_strided_slice %374 {offsets = [0, 24], sizes = [24, 8], strides = [1, 1]} : vector<24x128xf32> to vector<24x8xf32>
    %412 = vector.shape_cast %411 : vector<24x8xf32> to vector<1x24x8xf32>
    "tpu.trace_start"() <{level = 10 : i32, message = "bqd,bkd->bqk"}> : () -> ()
    %cst_153 = arith.constant dense<0.000000e+00> : vector<1x24x24xf32>
    %413 = tpu.matmul %410, %412, %cst_153 {dimension_numbers = #tpu.dot_dimension_numbers<[2], [2], [1], [1], [0, 0, 0, 1, 1, 1], [0], [0]>} : vector<1x24x8xf32>, vector<1x24x8xf32>, vector<1x24x24xf32> -> vector<1x24x24xf32>
    "tpu.trace_stop"() : () -> ()
    %414 = vector.broadcast %77 : vector<1x1x24xf32> to vector<1x24x24xf32>
    %415 = arith.addf %413, %414 : vector<1x24x24xf32>
    %cst_154 = arith.constant dense<0xFF800000> : vector<1x24xf32>
    %416 = vector.multi_reduction <maximumf>, %415, %cst_154 [2] : vector<1x24x24xf32> to vector<1x24xf32>
    %417 = vector.shape_cast %416 : vector<1x24xf32> to vector<1x24x1xf32>
    %418 = vector.broadcast %417 : vector<1x24x1xf32> to vector<1x24x24xf32>
    %419 = arith.subf %415, %418 : vector<1x24x24xf32>
    %420 = math.exp %419 : vector<1x24x24xf32>
    %cst_155 = arith.constant dense<0.000000e+00> : vector<1x24xf32>
    %421 = vector.multi_reduction <add>, %420, %cst_155 [2] : vector<1x24x24xf32> to vector<1x24xf32>
    %422 = vector.shape_cast %421 : vector<1x24xf32> to vector<1x24x1xf32>
    %423 = tpu.reciprocal %422 {approx = true} : vector<1x24x1xf32> -> vector<1x24x1xf32>
    %424 = vector.broadcast %423 : vector<1x24x1xf32> to vector<1x24x24xf32>
    %425 = arith.mulf %420, %424 : vector<1x24x24xf32>
    %426 = vector.extract_strided_slice %374 {offsets = [0, 40], sizes = [24, 8], strides = [1, 1]} : vector<24x128xf32> to vector<24x8xf32>
    %427 = vector.shape_cast %426 : vector<24x8xf32> to vector<1x24x8xf32>
    "tpu.trace_start"() <{level = 10 : i32, message = "bqk,bkd->bqd"}> : () -> ()
    %cst_156 = arith.constant dense<0.000000e+00> : vector<1x24x8xf32>
    %428 = tpu.matmul %425, %427, %cst_156 {dimension_numbers = #tpu.dot_dimension_numbers<[2], [1], [1], [2], [0, 0, 0, 1, 1, 2], [0], [0]>} : vector<1x24x24xf32>, vector<1x24x8xf32>, vector<1x24x8xf32> -> vector<1x24x8xf32>
    "tpu.trace_stop"() : () -> ()
    %429 = vector.shape_cast %428 : vector<1x24x8xf32> to vector<24x8xf32>
    %c1_157 = arith.constant 1 : index
    %c1_158 = arith.constant 1 : index
    %c0_159 = arith.constant 0 : index
    %c0_160 = arith.constant 0 : index
    %430 = vector.load %arg9[%c1_157, %c1_158, %c0_159, %c0_160] : memref<2x4x8x32xf32, #tpu.memory_space<vmem>>, vector<1x1x8x32xf32>
    %431 = vector.shape_cast %430 : vector<1x1x8x32xf32> to vector<8x32xf32>
    %cst_161 = arith.constant dense<0.000000e+00> : vector<24x32xf32>
    %432 = tpu.matmul %429, %431, %cst_161 {dimension_numbers = #tpu.dot_dimension_numbers<[1], [0], [0], [1], [0, 0, 1, 1], [], []>} : vector<24x8xf32>, vector<8x32xf32>, vector<24x32xf32> -> vector<24x32xf32>
    %433 = arith.addf %408, %432 : vector<24x32xf32>
    %434 = vector.extract_strided_slice %374 {offsets = [0, 48], sizes = [24, 8], strides = [1, 1]} : vector<24x128xf32> to vector<24x8xf32>
    %435 = vector.shape_cast %434 : vector<24x8xf32> to vector<1x24x8xf32>
    %436 = vector.extract_strided_slice %374 {offsets = [0, 64], sizes = [24, 8], strides = [1, 1]} : vector<24x128xf32> to vector<24x8xf32>
    %437 = vector.shape_cast %436 : vector<24x8xf32> to vector<1x24x8xf32>
    "tpu.trace_start"() <{level = 10 : i32, message = "bqd,bkd->bqk"}> : () -> ()
    %cst_162 = arith.constant dense<0.000000e+00> : vector<1x24x24xf32>
    %438 = tpu.matmul %435, %437, %cst_162 {dimension_numbers = #tpu.dot_dimension_numbers<[2], [2], [1], [1], [0, 0, 0, 1, 1, 1], [0], [0]>} : vector<1x24x8xf32>, vector<1x24x8xf32>, vector<1x24x24xf32> -> vector<1x24x24xf32>
    "tpu.trace_stop"() : () -> ()
    %439 = vector.broadcast %77 : vector<1x1x24xf32> to vector<1x24x24xf32>
    %440 = arith.addf %438, %439 : vector<1x24x24xf32>
    %cst_163 = arith.constant dense<0xFF800000> : vector<1x24xf32>
    %441 = vector.multi_reduction <maximumf>, %440, %cst_163 [2] : vector<1x24x24xf32> to vector<1x24xf32>
    %442 = vector.shape_cast %441 : vector<1x24xf32> to vector<1x24x1xf32>
    %443 = vector.broadcast %442 : vector<1x24x1xf32> to vector<1x24x24xf32>
    %444 = arith.subf %440, %443 : vector<1x24x24xf32>
    %445 = math.exp %444 : vector<1x24x24xf32>
    %cst_164 = arith.constant dense<0.000000e+00> : vector<1x24xf32>
    %446 = vector.multi_reduction <add>, %445, %cst_164 [2] : vector<1x24x24xf32> to vector<1x24xf32>
    %447 = vector.shape_cast %446 : vector<1x24xf32> to vector<1x24x1xf32>
    %448 = tpu.reciprocal %447 {approx = true} : vector<1x24x1xf32> -> vector<1x24x1xf32>
    %449 = vector.broadcast %448 : vector<1x24x1xf32> to vector<1x24x24xf32>
    %450 = arith.mulf %445, %449 : vector<1x24x24xf32>
    %451 = vector.extract_strided_slice %351 {offsets = [0, 0], sizes = [24, 8], strides = [1, 1]} : vector<24x16xf32> to vector<24x8xf32>
    %452 = vector.shape_cast %451 : vector<24x8xf32> to vector<1x24x8xf32>
    "tpu.trace_start"() <{level = 10 : i32, message = "bqk,bkd->bqd"}> : () -> ()
    %cst_165 = arith.constant dense<0.000000e+00> : vector<1x24x8xf32>
    %453 = tpu.matmul %450, %452, %cst_165 {dimension_numbers = #tpu.dot_dimension_numbers<[2], [1], [1], [2], [0, 0, 0, 1, 1, 2], [0], [0]>} : vector<1x24x24xf32>, vector<1x24x8xf32>, vector<1x24x8xf32> -> vector<1x24x8xf32>
    "tpu.trace_stop"() : () -> ()
    %454 = vector.shape_cast %453 : vector<1x24x8xf32> to vector<24x8xf32>
    %c1_166 = arith.constant 1 : index
    %c2_167 = arith.constant 2 : index
    %c0_168 = arith.constant 0 : index
    %c0_169 = arith.constant 0 : index
    %455 = vector.load %arg9[%c1_166, %c2_167, %c0_168, %c0_169] : memref<2x4x8x32xf32, #tpu.memory_space<vmem>>, vector<1x1x8x32xf32>
    %456 = vector.shape_cast %455 : vector<1x1x8x32xf32> to vector<8x32xf32>
    %cst_170 = arith.constant dense<0.000000e+00> : vector<24x32xf32>
    %457 = tpu.matmul %454, %456, %cst_170 {dimension_numbers = #tpu.dot_dimension_numbers<[1], [0], [0], [1], [0, 0, 1, 1], [], []>} : vector<24x8xf32>, vector<8x32xf32>, vector<24x32xf32> -> vector<24x32xf32>
    %458 = arith.addf %433, %457 : vector<24x32xf32>
    %459 = arith.mulf %450, %379 : vector<1x24x24xf32>
    %cst_171 = arith.constant dense<0.000000e+00> : vector<1x24xf32>
    %460 = vector.multi_reduction <add>, %459, %cst_171 [2] : vector<1x24x24xf32> to vector<1x24xf32>
    %461 = vector.shape_cast %460 : vector<1x24xf32> to vector<1x24x1xf32>
    %462 = arith.mulf %450, %384 : vector<1x24x24xf32>
    %cst_172 = arith.constant dense<0.000000e+00> : vector<1x24xf32>
    %463 = vector.multi_reduction <add>, %462, %cst_172 [2] : vector<1x24x24xf32> to vector<1x24xf32>
    %464 = vector.shape_cast %463 : vector<1x24xf32> to vector<1x24x1xf32>
    %465 = vector.extract_strided_slice %374 {offsets = [0, 56], sizes = [24, 8], strides = [1, 1]} : vector<24x128xf32> to vector<24x8xf32>
    %466 = vector.shape_cast %465 : vector<24x8xf32> to vector<1x24x8xf32>
    %467 = vector.extract_strided_slice %374 {offsets = [0, 72], sizes = [24, 8], strides = [1, 1]} : vector<24x128xf32> to vector<24x8xf32>
    %468 = vector.shape_cast %467 : vector<24x8xf32> to vector<1x24x8xf32>
    "tpu.trace_start"() <{level = 10 : i32, message = "bqd,bkd->bqk"}> : () -> ()
    %cst_173 = arith.constant dense<0.000000e+00> : vector<1x24x24xf32>
    %469 = tpu.matmul %466, %468, %cst_173 {dimension_numbers = #tpu.dot_dimension_numbers<[2], [2], [1], [1], [0, 0, 0, 1, 1, 1], [0], [0]>} : vector<1x24x8xf32>, vector<1x24x8xf32>, vector<1x24x24xf32> -> vector<1x24x24xf32>
    "tpu.trace_stop"() : () -> ()
    %470 = vector.broadcast %77 : vector<1x1x24xf32> to vector<1x24x24xf32>
    %471 = arith.addf %469, %470 : vector<1x24x24xf32>
    %cst_174 = arith.constant dense<0xFF800000> : vector<1x24xf32>
    %472 = vector.multi_reduction <maximumf>, %471, %cst_174 [2] : vector<1x24x24xf32> to vector<1x24xf32>
    %473 = vector.shape_cast %472 : vector<1x24xf32> to vector<1x24x1xf32>
    %474 = vector.broadcast %473 : vector<1x24x1xf32> to vector<1x24x24xf32>
    %475 = arith.subf %471, %474 : vector<1x24x24xf32>
    %476 = math.exp %475 : vector<1x24x24xf32>
    %cst_175 = arith.constant dense<0.000000e+00> : vector<1x24xf32>
    %477 = vector.multi_reduction <add>, %476, %cst_175 [2] : vector<1x24x24xf32> to vector<1x24xf32>
    %478 = vector.shape_cast %477 : vector<1x24xf32> to vector<1x24x1xf32>
    %479 = tpu.reciprocal %478 {approx = true} : vector<1x24x1xf32> -> vector<1x24x1xf32>
    %480 = vector.broadcast %479 : vector<1x24x1xf32> to vector<1x24x24xf32>
    %481 = arith.mulf %476, %480 : vector<1x24x24xf32>
    %482 = vector.extract_strided_slice %351 {offsets = [0, 8], sizes = [24, 8], strides = [1, 1]} : vector<24x16xf32> to vector<24x8xf32>
    %483 = vector.shape_cast %482 : vector<24x8xf32> to vector<1x24x8xf32>
    "tpu.trace_start"() <{level = 10 : i32, message = "bqk,bkd->bqd"}> : () -> ()
    %cst_176 = arith.constant dense<0.000000e+00> : vector<1x24x8xf32>
    %484 = tpu.matmul %481, %483, %cst_176 {dimension_numbers = #tpu.dot_dimension_numbers<[2], [1], [1], [2], [0, 0, 0, 1, 1, 2], [0], [0]>} : vector<1x24x24xf32>, vector<1x24x8xf32>, vector<1x24x8xf32> -> vector<1x24x8xf32>
    "tpu.trace_stop"() : () -> ()
    %485 = vector.shape_cast %484 : vector<1x24x8xf32> to vector<24x8xf32>
    %c1_177 = arith.constant 1 : index
    %c3_178 = arith.constant 3 : index
    %c0_179 = arith.constant 0 : index
    %c0_180 = arith.constant 0 : index
    %486 = vector.load %arg9[%c1_177, %c3_178, %c0_179, %c0_180] : memref<2x4x8x32xf32, #tpu.memory_space<vmem>>, vector<1x1x8x32xf32>
    %487 = vector.shape_cast %486 : vector<1x1x8x32xf32> to vector<8x32xf32>
    %cst_181 = arith.constant dense<0.000000e+00> : vector<24x32xf32>
    %488 = tpu.matmul %485, %487, %cst_181 {dimension_numbers = #tpu.dot_dimension_numbers<[1], [0], [0], [1], [0, 0, 1, 1], [], []>} : vector<24x8xf32>, vector<8x32xf32>, vector<24x32xf32> -> vector<24x32xf32>
    %489 = arith.addf %458, %488 : vector<24x32xf32>
    %490 = arith.mulf %481, %379 : vector<1x24x24xf32>
    %cst_182 = arith.constant dense<0.000000e+00> : vector<1x24xf32>
    %491 = vector.multi_reduction <add>, %490, %cst_182 [2] : vector<1x24x24xf32> to vector<1x24xf32>
    %492 = vector.shape_cast %491 : vector<1x24xf32> to vector<1x24x1xf32>
    %493 = arith.mulf %481, %384 : vector<1x24x24xf32>
    %cst_183 = arith.constant dense<0.000000e+00> : vector<1x24xf32>
    %494 = vector.multi_reduction <add>, %493, %cst_183 [2] : vector<1x24x24xf32> to vector<1x24xf32>
    %495 = vector.shape_cast %494 : vector<1x24xf32> to vector<1x24x1xf32>
    %496 = tpu.concatenate %461, %464, %492, %495 in 2 : vector<1x24x1xf32>, vector<1x24x1xf32>, vector<1x24x1xf32>, vector<1x24x1xf32> -> vector<1x24x4xf32>
    %497 = vector.shape_cast %496 : vector<1x24x4xf32> to vector<24x4xf32>
    %c1_184 = arith.constant 1 : index
    %c0_185 = arith.constant 0 : index
    %c0_186 = arith.constant 0 : index
    %498 = vector.load %arg10[%c1_184, %c0_185, %c0_186] : memref<2x4x32xf32, #tpu.memory_space<vmem>>, vector<1x4x32xf32>
    %499 = vector.shape_cast %498 : vector<1x4x32xf32> to vector<4x32xf32>
    %cst_187 = arith.constant dense<0.000000e+00> : vector<24x32xf32>
    %500 = tpu.matmul %497, %499, %cst_187 {dimension_numbers = #tpu.dot_dimension_numbers<[1], [0], [0], [1], [0, 0, 1, 1], [], []>} : vector<24x4xf32>, vector<4x32xf32>, vector<24x32xf32> -> vector<24x32xf32>
    %501 = arith.addf %307, %489 : vector<24x32xf32>
    %502 = arith.addf %501, %500 : vector<24x32xf32>
    %cst_188 = arith.constant dense<0.000000e+00> : vector<24xf32>
    %503 = vector.multi_reduction <add>, %502, %cst_188 [1] : vector<24x32xf32> to vector<24xf32>
    %504 = vector.shape_cast %503 : vector<24xf32> to vector<24x1xf32>
    %cst_189 = arith.constant 3.200000e+01 : f32
    %505 = vector.broadcast %cst_189 : f32 to vector<24x1xf32>
    %506 = arith.divf %504, %505 : vector<24x1xf32>
    %507 = vector.broadcast %506 : vector<24x1xf32> to vector<24x32xf32>
    %508 = arith.subf %502, %507 : vector<24x32xf32>
    %509 = arith.mulf %508, %508 : vector<24x32xf32>
    %cst_190 = arith.constant dense<0.000000e+00> : vector<24xf32>
    %510 = vector.multi_reduction <add>, %509, %cst_190 [1] : vector<24x32xf32> to vector<24xf32>
    %511 = vector.shape_cast %510 : vector<24xf32> to vector<24x1xf32>
    %cst_191 = arith.constant 3.200000e+01 : f32
    %512 = vector.broadcast %cst_191 : f32 to vector<24x1xf32>
    %513 = arith.divf %511, %512 : vector<24x1xf32>
    %cst_192 = arith.constant 9.99999974E-6 : f32
    %514 = vector.broadcast %cst_192 : f32 to vector<24x1xf32>
    %515 = arith.addf %513, %514 : vector<24x1xf32>
    %516 = math.rsqrt %515 : vector<24x1xf32>
    %517 = vector.broadcast %516 : vector<24x1xf32> to vector<24x32xf32>
    %518 = arith.mulf %508, %517 : vector<24x32xf32>
    %519 = vector.broadcast %312 : vector<1x32xf32> to vector<24x32xf32>
    %520 = arith.mulf %518, %519 : vector<24x32xf32>
    %521 = vector.broadcast %313 : vector<1x32xf32> to vector<24x32xf32>
    %522 = arith.addf %520, %521 : vector<24x32xf32>
    %c1_193 = arith.constant 1 : index
    %c0_194 = arith.constant 0 : index
    %c0_195 = arith.constant 0 : index
    %523 = vector.load %arg11[%c1_193, %c0_194, %c0_195] : memref<2x32x64xf32, #tpu.memory_space<vmem>>, vector<1x32x64xf32>
    %524 = vector.shape_cast %523 : vector<1x32x64xf32> to vector<32x64xf32>
    %cst_196 = arith.constant dense<0.000000e+00> : vector<24x64xf32>
    %525 = tpu.matmul %522, %524, %cst_196 {dimension_numbers = #tpu.dot_dimension_numbers<[1], [0], [0], [1], [0, 0, 1, 1], [], []>} : vector<24x32xf32>, vector<32x64xf32>, vector<24x64xf32> -> vector<24x64xf32>
    %526 = vector.broadcast %314 : vector<1x64xf32> to vector<24x64xf32>
    %527 = arith.addf %525, %526 : vector<24x64xf32>
    %cst_197 = arith.constant 0.000000e+00 : f32
    %528 = vector.broadcast %cst_197 : f32 to vector<24x64xf32>
    %529 = arith.maximumf %527, %528 : vector<24x64xf32>
    %c1_198 = arith.constant 1 : index
    %c0_199 = arith.constant 0 : index
    %c0_200 = arith.constant 0 : index
    %530 = vector.load %arg12[%c1_198, %c0_199, %c0_200] : memref<2x64x32xf32, #tpu.memory_space<vmem>>, vector<1x64x32xf32>
    %531 = vector.shape_cast %530 : vector<1x64x32xf32> to vector<64x32xf32>
    %cst_201 = arith.constant dense<0.000000e+00> : vector<24x32xf32>
    %532 = tpu.matmul %529, %531, %cst_201 {dimension_numbers = #tpu.dot_dimension_numbers<[1], [0], [0], [1], [0, 0, 1, 1], [], []>} : vector<24x64xf32>, vector<64x32xf32>, vector<24x32xf32> -> vector<24x32xf32>
    %533 = vector.broadcast %315 : vector<1x32xf32> to vector<24x32xf32>
    %534 = arith.addf %532, %533 : vector<24x32xf32>
    %535 = arith.addf %502, %534 : vector<24x32xf32>
    %536 = vector.extract_strided_slice %535 {offsets = [0, 0], sizes = [1, 32], strides = [1, 1]} : vector<24x32xf32> to vector<1x32xf32>
    %cst_202 = arith.constant dense<0.000000e+00> : vector<1xf32>
    %537 = vector.multi_reduction <add>, %536, %cst_202 [1] : vector<1x32xf32> to vector<1xf32>
    %538 = vector.shape_cast %537 : vector<1xf32> to vector<1x1xf32>
    %cst_203 = arith.constant 3.200000e+01 : f32
    %539 = vector.broadcast %cst_203 : f32 to vector<1x1xf32>
    %540 = arith.divf %538, %539 : vector<1x1xf32>
    %541 = vector.broadcast %540 : vector<1x1xf32> to vector<1x32xf32>
    %542 = arith.subf %536, %541 : vector<1x32xf32>
    %543 = arith.mulf %542, %542 : vector<1x32xf32>
    %cst_204 = arith.constant dense<0.000000e+00> : vector<1xf32>
    %544 = vector.multi_reduction <add>, %543, %cst_204 [1] : vector<1x32xf32> to vector<1xf32>
    %545 = vector.shape_cast %544 : vector<1xf32> to vector<1x1xf32>
    %cst_205 = arith.constant 3.200000e+01 : f32
    %546 = vector.broadcast %cst_205 : f32 to vector<1x1xf32>
    %547 = arith.divf %545, %546 : vector<1x1xf32>
    %cst_206 = arith.constant 9.99999974E-6 : f32
    %548 = vector.broadcast %cst_206 : f32 to vector<1x1xf32>
    %549 = arith.addf %547, %548 : vector<1x1xf32>
    %550 = math.rsqrt %549 : vector<1x1xf32>
    %551 = vector.broadcast %550 : vector<1x1xf32> to vector<1x32xf32>
    %552 = arith.mulf %542, %551 : vector<1x32xf32>
    %553 = arith.mulf %552, %7 : vector<1x32xf32>
    %554 = arith.addf %553, %8 : vector<1x32xf32>
    %c0_207 = arith.constant 0 : index
    %c0_208 = arith.constant 0 : index
    %555 = vector.load %arg14[%c0_207, %c0_208] : memref<32x128xf32, #tpu.memory_space<vmem>>, vector<32x128xf32>
    %cst_209 = arith.constant dense<0.000000e+00> : vector<1x128xf32>
    %556 = tpu.matmul %554, %555, %cst_209 {dimension_numbers = #tpu.dot_dimension_numbers<[1], [0], [0], [1], [0, 0, 1, 1], [], []>} : vector<1x32xf32>, vector<32x128xf32>, vector<1x128xf32> -> vector<1x128xf32>
    %557 = arith.addf %556, %9 : vector<1x128xf32>
    %c0_210 = arith.constant 0 : index
    %c0_211 = arith.constant 0 : index
    %c0_212 = arith.constant 0 : index
    %558 = vector.load %arg15[%c0_210, %c0_211, %c0_212] : memref<1x1x128xf32, #tpu.memory_space<vmem>>, vector<1x1x128xf32>
    %559 = vector.shape_cast %558 : vector<1x1x128xf32> to vector<1x128xf32>
    %560 = vector.shape_cast %557 : vector<1x128xf32> to vector<1x1x128xf32>
    tpu.vector_store %arg15[%c0_210, %c0_211, %c0_212], %560 {strides = array<i32>} : memref<1x1x128xf32, #tpu.memory_space<vmem>>, vector<1x1x128xf32>,
    return
  }
  func.func @transform_0(%arg0: i32) -> (i32, i32, i32) {
    %c0_i32 = arith.constant 0 : i32
    %c0_i32_0 = arith.constant 0 : i32
    %c0_i32_1 = arith.constant 0 : i32
    return %arg0, %c0_i32, %c0_i32_0 : i32, i32, i32
  }
  func.func @transform_1(%arg0: i32) -> (i32, i32) {
    %c0_i32 = arith.constant 0 : i32
    %c0_i32_0 = arith.constant 0 : i32
    %c0_i32_1 = arith.constant 0 : i32
    return %c0_i32, %c0_i32_0 : i32, i32
  }
  func.func @transform_2(%arg0: i32) -> (i32, i32) {
    %c0_i32 = arith.constant 0 : i32
    %c0_i32_0 = arith.constant 0 : i32
    %c0_i32_1 = arith.constant 0 : i32
    return %c0_i32, %c0_i32_0 : i32, i32
  }
  func.func @transform_3(%arg0: i32) -> (i32, i32) {
    %c0_i32 = arith.constant 0 : i32
    %c0_i32_0 = arith.constant 0 : i32
    %c0_i32_1 = arith.constant 0 : i32
    return %c0_i32, %c0_i32_0 : i32, i32
  }
  func.func @transform_4(%arg0: i32) -> (i32, i32) {
    %c0_i32 = arith.constant 0 : i32
    %c0_i32_0 = arith.constant 0 : i32
    %c0_i32_1 = arith.constant 0 : i32
    return %c0_i32, %c0_i32_0 : i32, i32
  }
  func.func @transform_5(%arg0: i32) -> (i32, i32) {
    %c0_i32 = arith.constant 0 : i32
    %c0_i32_0 = arith.constant 0 : i32
    %c0_i32_1 = arith.constant 0 : i32
    return %c0_i32, %c0_i32_0 : i32, i32
  }
  func.func @transform_6(%arg0: i32) -> (i32, i32, i32, i32) {
    %c0_i32 = arith.constant 0 : i32
    %c0_i32_0 = arith.constant 0 : i32
    %c0_i32_1 = arith.constant 0 : i32
    %c0_i32_2 = arith.constant 0 : i32
    %c0_i32_3 = arith.constant 0 : i32
    return %c0_i32, %c0_i32_0, %c0_i32_1, %c0_i32_2 : i32, i32, i32, i32
  }
  func.func @transform_7(%arg0: i32) -> (i32, i32, i32) {
    %c0_i32 = arith.constant 0 : i32
    %c0_i32_0 = arith.constant 0 : i32
    %c0_i32_1 = arith.constant 0 : i32
    %c0_i32_2 = arith.constant 0 : i32
    return %c0_i32, %c0_i32_0, %c0_i32_1 : i32, i32, i32
  }
  func.func @transform_8(%arg0: i32) -> (i32, i32, i32, i32) {
    %c0_i32 = arith.constant 0 : i32
    %c0_i32_0 = arith.constant 0 : i32
    %c0_i32_1 = arith.constant 0 : i32
    %c0_i32_2 = arith.constant 0 : i32
    %c0_i32_3 = arith.constant 0 : i32
    return %c0_i32, %c0_i32_0, %c0_i32_1, %c0_i32_2 : i32, i32, i32, i32
  }
  func.func @transform_9(%arg0: i32) -> (i32, i32, i32) {
    %c0_i32 = arith.constant 0 : i32
    %c0_i32_0 = arith.constant 0 : i32
    %c0_i32_1 = arith.constant 0 : i32
    %c0_i32_2 = arith.constant 0 : i32
    return %c0_i32, %c0_i32_0, %c0_i32_1 : i32, i32, i32
  }
  func.func @transform_10(%arg0: i32) -> (i32, i32, i32) {
    %c0_i32 = arith.constant 0 : i32
    %c0_i32_0 = arith.constant 0 : i32
    %c0_i32_1 = arith.constant 0 : i32
    %c0_i32_2 = arith.constant 0 : i32
    return %c0_i32, %c0_i32_0, %c0_i32_1 : i32, i32, i32
  }
  func.func @transform_11(%arg0: i32) -> (i32, i32, i32) {
    %c0_i32 = arith.constant 0 : i32
    %c0_i32_0 = arith.constant 0 : i32
    %c0_i32_1 = arith.constant 0 : i32
    %c0_i32_2 = arith.constant 0 : i32
    return %c0_i32, %c0_i32_0, %c0_i32_1 : i32, i32, i32
  }
  func.func @transform_12(%arg0: i32) -> (i32, i32, i32) {
    %c0_i32 = arith.constant 0 : i32
    %c0_i32_0 = arith.constant 0 : i32
    %c0_i32_1 = arith.constant 0 : i32
    %c0_i32_2 = arith.constant 0 : i32
    return %c0_i32, %c0_i32_0, %c0_i32_1 : i32, i32, i32
  }
  func.func @transform_13(%arg0: i32) -> (i32, i32) {
    %c0_i32 = arith.constant 0 : i32
    %c0_i32_0 = arith.constant 0 : i32
    %c0_i32_1 = arith.constant 0 : i32
    return %c0_i32, %c0_i32_0 : i32, i32
  }
  func.func @transform_14(%arg0: i32) -> (i32, i32, i32) {
    %c0_i32 = arith.constant 0 : i32
    %c0_i32_0 = arith.constant 0 : i32
    %c0_i32_1 = arith.constant 0 : i32
    return %arg0, %c0_i32, %c0_i32_0 : i32, i32, i32
  }
}

</mosaic_0001>

<llo_original>
// kernel: tpu_custom_call.1
$region0: #{tpu_custom_call.1}
  #allocation0 [shape = 'u32[]', space=smem, size = 0x4, offset = 0x4, fixed_abs, tag = 'smem constant byte address 0x4 - core index']
  #allocation1 [shape = 'u32[144,128]{1,0:T(1,128)}', space=vmem, size = 0x12000, scoped, tag = 'internal scratch']
  %s0 = inlined_call_operand.vmem [shape: f32[2,24,64], index: 0, kind: input, shape index: {}]
  %s1 = inlined_call_operand.vmem [shape: f32[64,32], index: 1, kind: input, shape index: {}]
  %s2 = inlined_call_operand.hbm [shape: f32[9,128], index: 2, kind: input, shape index: {}]
  %s3 = inlined_call_operand.hbm [shape: f32[24,32], index: 3, kind: input, shape index: {}]
  %s4 = inlined_call_operand.hbm [shape: f32[32,32], index: 4, kind: input, shape index: {}]
  %s5 = inlined_call_operand.hbm [shape: f32[8,32], index: 5, kind: input, shape index: {}]
  %s6 = inlined_call_operand.vmem [shape: f32[2,2,8,16], index: 6, kind: input, shape index: {}]
  %s7 = inlined_call_operand.vmem [shape: f32[2,32,128], index: 7, kind: input, shape index: {}]
  %s8 = inlined_call_operand.vmem [shape: f32[2,4,8,32], index: 8, kind: input, shape index: {}]
  %s9 = inlined_call_operand.hbm [shape: f32[2,4,32], index: 9, kind: input, shape index: {}]
  %s10 = inlined_call_operand.vmem [shape: f32[2,32,64], index: 10, kind: input, shape index: {}]
  %s11 = inlined_call_operand.vmem [shape: f32[2,64,32], index: 11, kind: input, shape index: {}]
  %s12 = inlined_call_operand.vmem [shape: f32[2,6,64], index: 12, kind: input, shape index: {}]
  %s13 = inlined_call_operand.hbm [shape: f32[32,128], index: 13, kind: input, shape index: {}]
  %s14 = inlined_call_operand.hbm [shape: f32[2,1,128], index: 14, kind: output, shape index: {}]
  %s15 = sld [smem:[#allocation0]]
  $region113: #{tpu_custom_call.1} parent=0
    _
  %s17 = ssub.s32 1, %s15
  %s18 = scalar_select 0, %s17, %s15
  $region1: #{tpu_custom_call.1} parent=0
    #allocation2 [shape = 'u8[8192]{0}', space=vmem, size = 0x2000, scoped, tag = 'input window, operand 2, single buffered']
    #allocation3 [shape = 's32[2]{0}', space=sflag, size = 0x8, scoped, tag = 'scoped memory for tpu_custom_call.1']
    #allocation4 [shape = 's32[2]{0}', space=sflag, size = 0x8, scoped, tag = 'scoped memory for tpu_custom_call.1']
    #allocation5 [shape = 'u8[12288]{0}', space=vmem, size = 0x3000, scoped, tag = 'input window, operand 3, single buffered']
    #allocation6 [shape = 's32[1]{0}', space=sflag, size = 0x4, scoped, tag = 'scoped memory for tpu_custom_call.1']
    #allocation7 [shape = 'u8[16384]{0}', space=vmem, size = 0x4000, scoped, tag = 'input window, operand 4, single buffered']
    #allocation8 [shape = 'u8[4096]{0}', space=vmem, size = 0x1000, scoped, tag = 'input window, operand 5, single buffered']
    #allocation9 [shape = 's32[1]{0}', space=sflag, size = 0x4, scoped, tag = 'scoped memory for tpu_custom_call.1']
    #allocation10 [shape = 'u8[4096]{0}', space=vmem, size = 0x1000, scoped, tag = 'input window, operand 9, single buffered']
    #allocation11 [shape = 'u8[16384]{0}', space=vmem, size = 0x4000, scoped, tag = 'input window, operand 13, single buffered']
    #allocation12 [shape = 's32[1]{0}', space=sflag, size = 0x4, scoped, tag = 'scoped memory for tpu_custom_call.1']
    #allocation13 [shape = 'u8[1024]{0}', space=vmem, size = 0x400, scoped, tag = 'output window, operand 0']
    %19 = vsyncpa [#allocation3], 0
    %20 = vsyncpa [#allocation6], 0
    %21 = vsyncpa [#allocation9], 0
    %22 = vsyncpa [#allocation12], 0
    %23 = vsyncpa [#allocation4], 0
    %s24 = scalar_lea.sflag [#allocation4], 1
    %25 = vsyncpa %s24, 0
    loop: start=0, step=1, limit=4
    $region2: #{tpu_custom_call.1} parent=1 // loop_pre_header
      _
    $region3: #{tpu_custom_call.1} parent=1 // loop_header
      %s27 = sphi 0, %s31
      %p28 = scmp.ge.s32.totalorder %s27, 4
      %s37 = sphi 0, %s39
      %s40 = sphi 0, %s37
      %s41 = sphi 0, %s40
      %s57 = sphi 0, %s41
      %s61 = sphi 0, %s61
      %s63 = sphi 0, %s61
      %s64 = sphi 0, %s63
      %s78 = sphi 0, %s64
      %s82 = sphi 0, %s82
      %s84 = sphi 0, %s82
      %s85 = sphi 0, %s84
      %s99 = sphi 0, %s85
      %s103 = sphi 0, %s103
      %s105 = sphi 0, %s103
      %s106 = sphi 0, %s105
      %s120 = sphi 0, %s106
      %s124 = sphi 0, %s124
      %s126 = sphi 0, %s124
      %s127 = sphi 0, %s126
      %s141 = sphi 0, %s127
      %s145 = sphi 0, %s145
      %s147 = sphi 0, %s145
      %s148 = sphi 0, %s147
      %s162 = sphi 0, %s148
      %s166 = sphi 0, %s166
      %s168 = sphi 0, %s166
      %s169 = sphi 0, %s168
      %s183 = sphi 0, %s169
      %s187 = sphi 0, %s187
      %s189 = sphi 0, %s187
      %s190 = sphi 0, %s189
      %s204 = sphi 0, %s190
      %s208 = sphi 0, %s208
      %s210 = sphi 0, %s208
      %s211 = sphi 0, %s210
      %s225 = sphi 0, %s211
      %s229 = sphi 0, %s229
      %s231 = sphi 0, %s229
      %s232 = sphi 0, %s231
      %s246 = sphi 0, %s232
      %s250 = sphi 0, %s250
      %s252 = sphi 0, %s250
      %s253 = sphi 0, %s252
      %s267 = sphi 0, %s253
      %s271 = sphi 0, %s271
      %s273 = sphi 0, %s271
      %s274 = sphi 0, %s273
      %s288 = sphi 0, %s274
      %s292 = sphi 0, %s292
      %s294 = sphi 0, %s292
      %s295 = sphi 0, %s294
      %s309 = sphi 0, %s295
      %s313 = sphi 0, %s313
      %s315 = sphi 0, %s313
      %s316 = sphi 0, %s315
      %s330 = sphi 0, %s316
      %s336 = sphi 0, %s338
      %s339 = sphi 0, %s336
      %s340 = sphi 0, %s339
      %s356 = sphi 0, %s340
    $region4: #{tpu_custom_call.1} parent=1 // loop_header_branch
      %30 = sbr.rel (%p28) target = $region8
    $region5: #{tpu_custom_call.1} parent=1 // loop_body
      %s32 = ssub.s32 %s27, 1
      %s33 = ssub.s32 %s27, 2
      %s34 = sadd.s32 %s27, 1
      %s35 = ssub.s32 %s27, %s34
      %p36 = scmp.eq.s32.totalorder %s35, 0
      %s38 = sadd.s32 %s37, 1
      %s39 = scalar_select %p36, %s37, %s38
      %p42 = pneg %p36
      %p43 = scmp.eq.s32.totalorder %s27, 1
      %p44 = por %p42, %p43
      %p45 = scmp.ne.s32.totalorder %s37, %s40
      %p46 = scmp.eq.s32.totalorder %s27, 0
      %p47 = por %p45, %p46
      %p48 = scmp.ne.s32.totalorder %s37, %s40
      %p49 = scmp.eq.s32.totalorder %s32, 1
      %p50 = por %p48, %p49
      %p51 = scmp.ne.s32.totalorder %s40, %s41
      %p52 = scmp.eq.s32.totalorder %s32, 0
      %p53 = por %p51, %p52
      %p54 = scmp.ne.s32.totalorder %s40, %s41
      %p55 = scmp.eq.s32.totalorder %s33, 1
      %p56 = por %p54, %p55
      %p58 = scmp.ne.s32.totalorder %s41, %s57
      %p59 = scmp.eq.s32.totalorder %s33, 0
      %p60 = por %p58, %p59
      %s62 = sadd.s32 %s61, 1
      %p65 = scmp.eq.s32.totalorder %s27, 1
      %p66 = scmp.ne.s32.totalorder %s61, %s63
      %p67 = scmp.eq.s32.totalorder %s27, 0
      %p68 = por %p66, %p67
      %p69 = scmp.ne.s32.totalorder %s61, %s63
      %p70 = scmp.eq.s32.totalorder %s32, 1
      %p71 = por %p69, %p70
      %p72 = scmp.ne.s32.totalorder %s63, %s64
      %p73 = scmp.eq.s32.totalorder %s32, 0
      %p74 = por %p72, %p73
      %p75 = scmp.ne.s32.totalorder %s63, %s64
      %p76 = scmp.eq.s32.totalorder %s33, 1
      %p77 = por %p75, %p76
      %p79 = scmp.ne.s32.totalorder %s64, %s78
      %p80 = scmp.eq.s32.totalorder %s33, 0
      %p81 = por %p79, %p80
      %s83 = sadd.s32 %s82, 1
      %p86 = scmp.eq.s32.totalorder %s27, 1
      %p87 = scmp.ne.s32.totalorder %s82, %s84
      %p88 = scmp.eq.s32.totalorder %s27, 0
      %p89 = por %p87, %p88
      %p90 = scmp.ne.s32.totalorder %s82, %s84
      %p91 = scmp.eq.s32.totalorder %s32, 1
      %p92 = por %p90, %p91
      %p93 = scmp.ne.s32.totalorder %s84, %s85
      %p94 = scmp.eq.s32.totalorder %s32, 0
      %p95 = por %p93, %p94
      %p96 = scmp.ne.s32.totalorder %s84, %s85
      %p97 = scmp.eq.s32.totalorder %s33, 1
      %p98 = por %p96, %p97
      %p100 = scmp.ne.s32.totalorder %s85, %s99
      %p101 = scmp.eq.s32.totalorder %s33, 0
      %p102 = por %p100, %p101
      %s104 = sadd.s32 %s103, 1
      %p107 = scmp.eq.s32.totalorder %s27, 1
      %p108 = scmp.ne.s32.totalorder %s103, %s105
      %p109 = scmp.eq.s32.totalorder %s27, 0
      %p110 = por %p108, %p109
      %p111 = scmp.ne.s32.totalorder %s103, %s105
      %p112 = scmp.eq.s32.totalorder %s32, 1
      %p113 = por %p111, %p112
      %p114 = scmp.ne.s32.totalorder %s105, %s106
      %p115 = scmp.eq.s32.totalorder %s32, 0
      %p116 = por %p114, %p115
      %p117 = scmp.ne.s32.totalorder %s105, %s106
      %p118 = scmp.eq.s32.totalorder %s33, 1
      %p119 = por %p117, %p118
      %p121 = scmp.ne.s32.totalorder %s106, %s120
      %p122 = scmp.eq.s32.totalorder %s33, 0
      %p123 = por %p121, %p122
      %s125 = sadd.s32 %s124, 1
      %p128 = scmp.eq.s32.totalorder %s27, 1
      %p129 = scmp.ne.s32.totalorder %s124, %s126
      %p130 = scmp.eq.s32.totalorder %s27, 0
      %p131 = por %p129, %p130
      %p132 = scmp.ne.s32.totalorder %s124, %s126
      %p133 = scmp.eq.s32.totalorder %s32, 1
      %p134 = por %p132, %p133
      %p135 = scmp.ne.s32.totalorder %s126, %s127
      %p136 = scmp.eq.s32.totalorder %s32, 0
      %p137 = por %p135, %p136
      %p138 = scmp.ne.s32.totalorder %s126, %s127
      %p139 = scmp.eq.s32.totalorder %s33, 1
      %p140 = por %p138, %p139
      %p142 = scmp.ne.s32.totalorder %s127, %s141
      %p143 = scmp.eq.s32.totalorder %s33, 0
      %p144 = por %p142, %p143
      %s146 = sadd.s32 %s145, 1
      %p149 = scmp.eq.s32.totalorder %s27, 1
      %p150 = scmp.ne.s32.totalorder %s145, %s147
      %p151 = scmp.eq.s32.totalorder %s27, 0
      %p152 = por %p150, %p151
      %p153 = scmp.ne.s32.totalorder %s145, %s147
      %p154 = scmp.eq.s32.totalorder %s32, 1
      %p155 = por %p153, %p154
      %p156 = scmp.ne.s32.totalorder %s147, %s148
      %p157 = scmp.eq.s32.totalorder %s32, 0
      %p158 = por %p156, %p157
      %p159 = scmp.ne.s32.totalorder %s147, %s148
      %p160 = scmp.eq.s32.totalorder %s33, 1
      %p161 = por %p159, %p160
      %p163 = scmp.ne.s32.totalorder %s148, %s162
      %p164 = scmp.eq.s32.totalorder %s33, 0
      %p165 = por %p163, %p164
      %s167 = sadd.s32 %s166, 1
      %p170 = scmp.eq.s32.totalorder %s27, 1
      %p171 = scmp.ne.s32.totalorder %s166, %s168
      %p172 = scmp.eq.s32.totalorder %s27, 0
      %p173 = por %p171, %p172
      %p174 = scmp.ne.s32.totalorder %s166, %s168
      %p175 = scmp.eq.s32.totalorder %s32, 1
      %p176 = por %p174, %p175
      %p177 = scmp.ne.s32.totalorder %s168, %s169
      %p178 = scmp.eq.s32.totalorder %s32, 0
      %p179 = por %p177, %p178
      %p180 = scmp.ne.s32.totalorder %s168, %s169
      %p181 = scmp.eq.s32.totalorder %s33, 1
      %p182 = por %p180, %p181
      %p184 = scmp.ne.s32.totalorder %s169, %s183
      %p185 = scmp.eq.s32.totalorder %s33, 0
      %p186 = por %p184, %p185
      %s188 = sadd.s32 %s187, 1
      %p191 = scmp.eq.s32.totalorder %s27, 1
      %p192 = scmp.ne.s32.totalorder %s187, %s189
      %p193 = scmp.eq.s32.totalorder %s27, 0
      %p194 = por %p192, %p193
      %p195 = scmp.ne.s32.totalorder %s187, %s189
      %p196 = scmp.eq.s32.totalorder %s32, 1
      %p197 = por %p195, %p196
      %p198 = scmp.ne.s32.totalorder %s189, %s190
      %p199 = scmp.eq.s32.totalorder %s32, 0
      %p200 = por %p198, %p199
      %p201 = scmp.ne.s32.totalorder %s189, %s190
      %p202 = scmp.eq.s32.totalorder %s33, 1
      %p203 = por %p201, %p202
      %p205 = scmp.ne.s32.totalorder %s190, %s204
      %p206 = scmp.eq.s32.totalorder %s33, 0
      %p207 = por %p205, %p206
      %s209 = sadd.s32 %s208, 1
      %p212 = scmp.eq.s32.totalorder %s27, 1
      %p213 = scmp.ne.s32.totalorder %s208, %s210
      %p214 = scmp.eq.s32.totalorder %s27, 0
      %p215 = por %p213, %p214
      %p216 = scmp.ne.s32.totalorder %s208, %s210
      %p217 = scmp.eq.s32.totalorder %s32, 1
      %p218 = por %p216, %p217
      %p219 = scmp.ne.s32.totalorder %s210, %s211
      %p220 = scmp.eq.s32.totalorder %s32, 0
      %p221 = por %p219, %p220
      %p222 = scmp.ne.s32.totalorder %s210, %s211
      %p223 = scmp.eq.s32.totalorder %s33, 1
      %p224 = por %p222, %p223
      %p226 = scmp.ne.s32.totalorder %s211, %s225
      %p227 = scmp.eq.s32.totalorder %s33, 0
      %p228 = por %p226, %p227
      %s230 = sadd.s32 %s229, 1
      %p233 = scmp.eq.s32.totalorder %s27, 1
      %p234 = scmp.ne.s32.totalorder %s229, %s231
      %p235 = scmp.eq.s32.totalorder %s27, 0
      %p236 = por %p234, %p235
      %p237 = scmp.ne.s32.totalorder %s229, %s231
      %p238 = scmp.eq.s32.totalorder %s32, 1
      %p239 = por %p237, %p238
      %p240 = scmp.ne.s32.totalorder %s231, %s232
      %p241 = scmp.eq.s32.totalorder %s32, 0
      %p242 = por %p240, %p241
      %p243 = scmp.ne.s32.totalorder %s231, %s232
      %p244 = scmp.eq.s32.totalorder %s33, 1
      %p245 = por %p243, %p244
      %p247 = scmp.ne.s32.totalorder %s232, %s246
      %p248 = scmp.eq.s32.totalorder %s33, 0
      %p249 = por %p247, %p248
      %s251 = sadd.s32 %s250, 1
      %p254 = scmp.eq.s32.totalorder %s27, 1
      %p255 = scmp.ne.s32.totalorder %s250, %s252
      %p256 = scmp.eq.s32.totalorder %s27, 0
      %p257 = por %p255, %p256
      %p258 = scmp.ne.s32.totalorder %s250, %s252
      %p259 = scmp.eq.s32.totalorder %s32, 1
      %p260 = por %p258, %p259
      %p261 = scmp.ne.s32.totalorder %s252, %s253
      %p262 = scmp.eq.s32.totalorder %s32, 0
      %p263 = por %p261, %p262
      %p264 = scmp.ne.s32.totalorder %s252, %s253
      %p265 = scmp.eq.s32.totalorder %s33, 1
      %p266 = por %p264, %p265
      %p268 = scmp.ne.s32.totalorder %s253, %s267
      %p269 = scmp.eq.s32.totalorder %s33, 0
      %p270 = por %p268, %p269
      %s272 = sadd.s32 %s271, 1
      %p275 = scmp.eq.s32.totalorder %s27, 1
      %p276 = scmp.ne.s32.totalorder %s271, %s273
      %p277 = scmp.eq.s32.totalorder %s27, 0
      %p278 = por %p276, %p277
      %p279 = scmp.ne.s32.totalorder %s271, %s273
      %p280 = scmp.eq.s32.totalorder %s32, 1
      %p281 = por %p279, %p280
      %p282 = scmp.ne.s32.totalorder %s273, %s274
      %p283 = scmp.eq.s32.totalorder %s32, 0
      %p284 = por %p282, %p283
      %p285 = scmp.ne.s32.totalorder %s273, %s274
      %p286 = scmp.eq.s32.totalorder %s33, 1
      %p287 = por %p285, %p286
      %p289 = scmp.ne.s32.totalorder %s274, %s288
      %p290 = scmp.eq.s32.totalorder %s33, 0
      %p291 = por %p289, %p290
      %s293 = sadd.s32 %s292, 1
      %p296 = scmp.eq.s32.totalorder %s27, 1
      %p297 = scmp.ne.s32.totalorder %s292, %s294
      %p298 = scmp.eq.s32.totalorder %s27, 0
      %p299 = por %p297, %p298
      %p300 = scmp.ne.s32.totalorder %s292, %s294
      %p301 = scmp.eq.s32.totalorder %s32, 1
      %p302 = por %p300, %p301
      %p303 = scmp.ne.s32.totalorder %s294, %s295
      %p304 = scmp.eq.s32.totalorder %s32, 0
      %p305 = por %p303, %p304
      %p306 = scmp.ne.s32.totalorder %s294, %s295
      %p307 = scmp.eq.s32.totalorder %s33, 1
      %p308 = por %p306, %p307
      %p310 = scmp.ne.s32.totalorder %s295, %s309
      %p311 = scmp.eq.s32.totalorder %s33, 0
      %p312 = por %p310, %p311
      %s314 = sadd.s32 %s313, 1
      %p317 = scmp.eq.s32.totalorder %s27, 1
      %p318 = scmp.ne.s32.totalorder %s313, %s315
      %p319 = scmp.eq.s32.totalorder %s27, 0
      %p320 = por %p318, %p319
      %p321 = scmp.ne.s32.totalorder %s313, %s315
      %p322 = scmp.eq.s32.totalorder %s32, 1
      %p323 = por %p321, %p322
      %p324 = scmp.ne.s32.totalorder %s315, %s316
      %p325 = scmp.eq.s32.totalorder %s32, 0
      %p326 = por %p324, %p325
      %p327 = scmp.ne.s32.totalorder %s315, %s316
      %p328 = scmp.eq.s32.totalorder %s33, 1
      %p329 = por %p327, %p328
      %p331 = scmp.ne.s32.totalorder %s316, %s330
      %p332 = scmp.eq.s32.totalorder %s33, 0
      %p333 = por %p331, %p332
      %s334 = ssub.s32 %s27, %s34
      %p335 = scmp.eq.s32.totalorder %s334, 0
      %s337 = sadd.s32 %s336, 1
      %s338 = scalar_select %p335, %s336, %s337
      %p341 = pneg %p335
      %p342 = scmp.eq.s32.totalorder %s27, 1
      %p343 = por %p341, %p342
      %p344 = scmp.ne.s32.totalorder %s336, %s339
      %p345 = scmp.eq.s32.totalorder %s27, 0
      %p346 = por %p344, %p345
      %p347 = scmp.ne.s32.totalorder %s336, %s339
      %p348 = scmp.eq.s32.totalorder %s32, 1
      %p349 = por %p347, %p348
      %p350 = scmp.ne.s32.totalorder %s339, %s340
      %p351 = scmp.eq.s32.totalorder %s32, 0
      %p352 = por %p350, %p351
      %p353 = scmp.ne.s32.totalorder %s339, %s340
      %p354 = scmp.eq.s32.totalorder %s33, 1
      %p355 = por %p353, %p354
      %p357 = scmp.ne.s32.totalorder %s340, %s356
      %p358 = scmp.eq.s32.totalorder %s33, 0
      %p359 = por %p357, %p358
      %p360 = scmp.le.s32.totalorder 1, %s27
      %p361 = scmp.lt.s32.totalorder %s27, 3
      %p362 = pnand %p360, %p361
      %p363 = pneg %p362
      // Predicated region
      $region9: #{tpu_custom_call.1} parent=5 // pred_check
        _
      $region10: #{tpu_custom_call.1} parent=5 // pred_check_branch
        %365 = sbr.rel (%p362) target = $region12
      $region11: #{tpu_custom_call.1} parent=5 // pred_region
        %s366 = ssub.s32 %s27, 1
        // Predicated region
        $region13: #{tpu_custom_call.1} parent=11 // pred_check
          %p367 = pneg %p74
        $region14: #{tpu_custom_call.1} parent=11 // pred_check_branch
          %369 = sbr.rel (%p367) target = $region16
        $region15: #{tpu_custom_call.1} parent=11 // pred_region
          _
        $region16: #{tpu_custom_call.1} parent=11 // pred_fallthru
          _
        // Predicated region
        $region17: #{tpu_custom_call.1} parent=11 // pred_check
          %p370 = pneg %p95
        $region18: #{tpu_custom_call.1} parent=11 // pred_check_branch
          %372 = sbr.rel (%p370) target = $region20
        $region19: #{tpu_custom_call.1} parent=11 // pred_region
          %s374 = ssub.s32 256, 256
          %375 = vsyncadd [#allocation3], %s374
          %s376 = sshll.u32 [#allocation2], 4
          %s377 = int_to_ptr.vmem [resolvable:$true] %s376
          %382 = dma.hbm_to_vmem [thread:$0]  %s2, 256, %s377, [#allocation3], 128, 128, 8
        $region20: #{tpu_custom_call.1} parent=11 // pred_fallthru
          _
        // Predicated region
        $region21: #{tpu_custom_call.1} parent=11 // pred_check
          %p383 = pneg %p116
        $region22: #{tpu_custom_call.1} parent=11 // pred_check_branch
          %385 = sbr.rel (%p383) target = $region24
        $region23: #{tpu_custom_call.1} parent=11 // pred_region
          %s387 = ssub.s32 384, 384
          %388 = vsyncadd [#allocation6], %s387
          %s389 = sshll.u32 [#allocation5], 4
          %s390 = int_to_ptr.vmem [resolvable:$true] %s389
          %395 = dma.hbm_to_vmem [thread:$0]  %s3, 384, %s390, [#allocation6], 128, 128, 8
        $region24: #{tpu_custom_call.1} parent=11 // pred_fallthru
          _
        // Predicated region
        $region25: #{tpu_custom_call.1} parent=11 // pred_check
          %p396 = pneg %p137
        $region26: #{tpu_custom_call.1} parent=11 // pred_check_branch
          %398 = sbr.rel (%p396) target = $region28
        $region27: #{tpu_custom_call.1} parent=11 // pred_region
          %s400 = ssub.s32 512, 512
          %401 = vsyncadd [#allocation6], %s400
          %s402 = sshll.u32 [#allocation7], 4
          %s403 = int_to_ptr.vmem [resolvable:$true] %s402
          %408 = dma.hbm_to_vmem [thread:$0]  %s4, 512, %s403, [#allocation6], 128, 128, 8
        $region28: #{tpu_custom_call.1} parent=11 // pred_fallthru
          _
        // Predicated region
        $region29: #{tpu_custom_call.1} parent=11 // pred_check
          %p409 = pneg %p158
        $region30: #{tpu_custom_call.1} parent=11 // pred_check_branch
          %411 = sbr.rel (%p409) target = $region32
        $region31: #{tpu_custom_call.1} parent=11 // pred_region
          %s413 = ssub.s32 128, 128
          %414 = vsyncadd [#allocation9], %s413
          %s416 = sshll.u32 [#allocation8], 4
          %s417 = int_to_ptr.vmem [resolvable:$true] %s416
          %419 = dma.hbm_to_vmem [thread:$0]  %s5, 128, %s417, [#allocation9]
        $region32: #{tpu_custom_call.1} parent=11 // pred_fallthru
          _
        // Predicated region
        $region33: #{tpu_custom_call.1} parent=11 // pred_check
          %p420 = pneg %p179
        $region34: #{tpu_custom_call.1} parent=11 // pred_check_branch
          %422 = sbr.rel (%p420) target = $region36
        $region35: #{tpu_custom_call.1} parent=11 // pred_region
          _
        $region36: #{tpu_custom_call.1} parent=11 // pred_fallthru
          _
        // Predicated region
        $region37: #{tpu_custom_call.1} parent=11 // pred_check
          %p423 = pneg %p200
        $region38: #{tpu_custom_call.1} parent=11 // pred_check_branch
          %425 = sbr.rel (%p423) target = $region40
        $region39: #{tpu_custom_call.1} parent=11 // pred_region
          _
        $region40: #{tpu_custom_call.1} parent=11 // pred_fallthru
          _
        // Predicated region
        $region41: #{tpu_custom_call.1} parent=11 // pred_check
          %p426 = pneg %p221
        $region42: #{tpu_custom_call.1} parent=11 // pred_check_branch
          %428 = sbr.rel (%p426) target = $region44
        $region43: #{tpu_custom_call.1} parent=11 // pred_region
          _
        $region44: #{tpu_custom_call.1} parent=11 // pred_fallthru
          _
        // Predicated region
        $region45: #{tpu_custom_call.1} parent=11 // pred_check
          %p429 = pneg %p242
        $region46: #{tpu_custom_call.1} parent=11 // pred_check_branch
          %431 = sbr.rel (%p429) target = $region48
        $region47: #{tpu_custom_call.1} parent=11 // pred_region
          %s433 = ssub.s32 128, 128
          %434 = vsyncadd [#allocation9], %s433
          %s435 = sshll.u32 [#allocation10], 4
          %s436 = int_to_ptr.vmem [resolvable:$true] %s435
          %441 = dma.hbm_to_vmem [thread:$0]  %s9, 128, %s436, [#allocation9], 64, 64, 4
        $region48: #{tpu_custom_call.1} parent=11 // pred_fallthru
          _
        // Predicated region
        $region49: #{tpu_custom_call.1} parent=11 // pred_check
          %p442 = pneg %p263
        $region50: #{tpu_custom_call.1} parent=11 // pred_check_branch
          %444 = sbr.rel (%p442) target = $region52
        $region51: #{tpu_custom_call.1} parent=11 // pred_region
          _
        $region52: #{tpu_custom_call.1} parent=11 // pred_fallthru
          _
        // Predicated region
        $region53: #{tpu_custom_call.1} parent=11 // pred_check
          %p445 = pneg %p284
        $region54: #{tpu_custom_call.1} parent=11 // pred_check_branch
          %447 = sbr.rel (%p445) target = $region56
        $region55: #{tpu_custom_call.1} parent=11 // pred_region
          _
        $region56: #{tpu_custom_call.1} parent=11 // pred_fallthru
          _
        // Predicated region
        $region57: #{tpu_custom_call.1} parent=11 // pred_check
          %p448 = pneg %p305
        $region58: #{tpu_custom_call.1} parent=11 // pred_check_branch
          %450 = sbr.rel (%p448) target = $region60
        $region59: #{tpu_custom_call.1} parent=11 // pred_region
          _
        $region60: #{tpu_custom_call.1} parent=11 // pred_fallthru
          _
        // Predicated region
        $region61: #{tpu_custom_call.1} parent=11 // pred_check
          %p451 = pneg %p326
        $region62: #{tpu_custom_call.1} parent=11 // pred_check_branch
          %453 = sbr.rel (%p451) target = $region64
        $region63: #{tpu_custom_call.1} parent=11 // pred_region
          %s455 = ssub.s32 512, 512
          %456 = vsyncadd [#allocation12], %s455
          %s457 = sshll.u32 [#allocation11], 4
          %s458 = int_to_ptr.vmem [resolvable:$true] %s457
          %463 = dma.hbm_to_vmem [thread:$0]  %s13, 512, %s458, [#allocation12], 128, 128, 8
        $region64: #{tpu_custom_call.1} parent=11 // pred_fallthru
          _
      $region12: #{tpu_custom_call.1} parent=5 // pred_fallthru
        _
      %p464 = scmp.lt.s32.totalorder %s27, 2
      // Predicated region
      $region65: #{tpu_custom_call.1} parent=5 // pred_check
        %p465 = pneg %p464
      $region66: #{tpu_custom_call.1} parent=5 // pred_check_branch
        %467 = sbr.rel (%p465) target = $region68
      $region67: #{tpu_custom_call.1} parent=5 // pred_region
        // Predicated region
        $region69: #{tpu_custom_call.1} parent=67 // pred_check
          %p468 = pneg %p47
        $region70: #{tpu_custom_call.1} parent=67 // pred_check_branch
          %470 = sbr.rel (%p468) target = $region72
        $region71: #{tpu_custom_call.1} parent=67 // pred_region
          %p471 = scmp.lt.s32.totalorder %s27, 1
          %s472 = scalar_select %p471, %s27, 1
          %s473 = smul.addr %s472, 3
          %s474 = smul.addr %s473, 8
          %s475 = scalar_lea.vmem %s0, %s474
        $region72: #{tpu_custom_call.1} parent=67 // pred_fallthru
          _
      $region68: #{tpu_custom_call.1} parent=5 // pred_fallthru
        _
      %p476 = scmp.le.s32.totalorder 1, %s27
      %p477 = scmp.lt.s32.totalorder %s27, 3
      %p478 = pnand %p476, %p477
      %p479 = pneg %p478
      // Predicated region
      $region73: #{tpu_custom_call.1} parent=5 // pred_check
        _
      $region74: #{tpu_custom_call.1} parent=5 // pred_check_branch
        %481 = sbr.rel (%p478) target = $region76
      $region75: #{tpu_custom_call.1} parent=5 // pred_region
        %s482 = ssub.s32 %s27, 1
        // Predicated region
        $region77: #{tpu_custom_call.1} parent=75 // pred_check
          %p483 = pneg %p95
        $region78: #{tpu_custom_call.1} parent=75 // pred_check_branch
          %485 = sbr.rel (%p483) target = $region80
        $region79: #{tpu_custom_call.1} parent=75 // pred_region
          %486 = dma.done [#allocation3], 256
        $region80: #{tpu_custom_call.1} parent=75 // pred_fallthru
          _
        // Predicated region
        $region81: #{tpu_custom_call.1} parent=75 // pred_check
          %p487 = pneg %p116
        $region82: #{tpu_custom_call.1} parent=75 // pred_check_branch
          %489 = sbr.rel (%p487) target = $region84
        $region83: #{tpu_custom_call.1} parent=75 // pred_region
          %490 = dma.done [#allocation6], 384
        $region84: #{tpu_custom_call.1} parent=75 // pred_fallthru
          _
        // Predicated region
        $region85: #{tpu_custom_call.1} parent=75 // pred_check
          %p491 = pneg %p137
        $region86: #{tpu_custom_call.1} parent=75 // pred_check_branch
          %493 = sbr.rel (%p491) target = $region88
        $region87: #{tpu_custom_call.1} parent=75 // pred_region
          %494 = dma.done [#allocation6], 512
        $region88: #{tpu_custom_call.1} parent=75 // pred_fallthru
          _
        // Predicated region
        $region89: #{tpu_custom_call.1} parent=75 // pred_check
          %p495 = pneg %p158
        $region90: #{tpu_custom_call.1} parent=75 // pred_check_branch
          %497 = sbr.rel (%p495) target = $region92
        $region91: #{tpu_custom_call.1} parent=75 // pred_region
          %498 = dma.done [#allocation9], 128
        $region92: #{tpu_custom_call.1} parent=75 // pred_fallthru
          _
        // Predicated region
        $region93: #{tpu_custom_call.1} parent=75 // pred_check
          %p499 = pneg %p242
        $region94: #{tpu_custom_call.1} parent=75 // pred_check_branch
          %501 = sbr.rel (%p499) target = $region96
        $region95: #{tpu_custom_call.1} parent=75 // pred_region
          %502 = dma.done [#allocation9], 128
        $region96: #{tpu_custom_call.1} parent=75 // pred_fallthru
          _
        // Predicated region
        $region97: #{tpu_custom_call.1} parent=75 // pred_check
          %p503 = pneg %p326
        $region98: #{tpu_custom_call.1} parent=75 // pred_check_branch
          %505 = sbr.rel (%p503) target = $region100
        $region99: #{tpu_custom_call.1} parent=75 // pred_region
          %506 = dma.done [#allocation12], 512
        $region100: #{tpu_custom_call.1} parent=75 // pred_fallthru
          _
        %p507 = scmp.lt.s32.totalorder %s32, 1
        %s508 = scalar_select %p507, %s32, 1
        %s509 = smul.addr %s508, 3
        %s510 = smul.addr %s509, 8
        %s511 = scalar_lea.vmem %s0, %s510
        %p512 = pneg %p53
        %p513 = pneg %p50
        %p514 = pneg %p74
        %p515 = pneg %p71
        %p516 = pneg %p95
        %p517 = pneg %p92
        %p518 = pneg %p116
        %p519 = pneg %p113
        %p520 = pneg %p137
        %p521 = pneg %p134
        %p522 = pneg %p158
        %p523 = pneg %p155
        %p524 = pneg %p179
        %p525 = pneg %p176
        %p526 = pneg %p200
        %p527 = pneg %p197
        %p528 = pneg %p221
        %p529 = pneg %p218
        %p530 = pneg %p242
        %p531 = pneg %p239
        %p532 = pneg %p263
        %p533 = pneg %p260
        %p534 = pneg %p284
        %p535 = pneg %p281
        %p536 = pneg %p305
        %p537 = pneg %p302
        %p538 = pneg %p326
        %p539 = pneg %p323
        %p540 = pneg %p352
        %p541 = pneg %p349
        %s542 = sand.u32 %s339, 1
        %s543 = scalar_lea.sflag [#allocation4], %s542
        %s544 = sand.u32 %s339, 1
        %s545 = scalar_lea.vmem [#allocation13], %s544
        %p546 = scmp.lt.s32.totalorder %s32, 1
        %s547 = scalar_select %p546, %s32, 1
        %s548 = smul.addr %s547, 3
        %s549 = smul.addr %s548, 8
        %s550 = scalar_lea.vmem %s0, %s549
        %v551 = vld [vmem:[#allocation2] sm:$0xff]
        %v552 = vld [vmem:[#allocation2 + $0x8] sm:$0x1]
        %v553 = vld [vmem:[%s550] sm:$0xff]
        %v554 = vld [vmem:[%s550 + $0x8] sm:$0xff]
        %v555 = vld [vmem:[%s550 + $0x10] sm:$0xff]
        %vm556 = vcmask 523264
        %v557 = vsel %vm556, %v553, 0.0
        %558 = vadd.xlane.f32.xlu0 %v557
        %v559 = vpop.xlane.xlu0 %558
        %v560 = vsel %vm556, %v554, 0.0
        %561 = vadd.xlane.f32.xlu0 %v560
        %v562 = vpop.xlane.xlu0 %561
        %v563 = vsel %vm556, %v555, 0.0
        %564 = vadd.xlane.f32.xlu0 %v563
        %v565 = vpop.xlane.xlu0 %564
        %v566 = vrcp.pop 64.0
        %v567 = vmul.f32 %v559, %v566
        %v568 = vmul.f32 %v562, %v566
        %v569 = vmul.f32 %v565, %v566
        %v570 = vsub.f32 %v553, %v567
        %v571 = vsub.f32 %v554, %v568
        %v572 = vsub.f32 %v555, %v569
        %v573 = vmul.f32 %v570, %v570
        %v574 = vmul.f32 %v571, %v571
        %v575 = vmul.f32 %v572, %v572
        %v576 = vsel %vm556, %v573, 0.0
        %577 = vadd.xlane.f32.xlu0 %v576
        %v578 = vpop.xlane.xlu0 %577
        %v579 = vsel %vm556, %v574, 0.0
        %580 = vadd.xlane.f32.xlu0 %v579
        %v581 = vpop.xlane.xlu0 %580
        %v582 = vsel %vm556, %v575, 0.0
        %583 = vadd.xlane.f32.xlu0 %v582
        %v584 = vpop.xlane.xlu0 %583
        %v585 = vmul.f32 %v578, %v566
        %v586 = vmul.f32 %v581, %v566
        %v587 = vmul.f32 %v584, %v566
        %v588 = vadd.f32 %v585, 1e-05
        %v589 = vadd.f32 %v586, 1e-05
        %v590 = vadd.f32 %v587, 1e-05
        %v591 = vrsqrt.pop %v588
        %v592 = vrsqrt.pop %v589
        %v593 = vrsqrt.pop %v590
        %v594 = vmul.f32 %v570, %v591
        %v595 = vmul.f32 %v571, %v592
        %v596 = vmul.f32 %v572, %v593
        %v597 = vlaneseq
        %v598 = vshrl.u32 %v597, 7
        %v599 = vsub.s32 0, %v598
        %v600 = vrot.slane %v551, %v599
        %v601 = vmul.f32 %v594, %v600
        %v602 = vmul.f32 %v595, %v600
        %v603 = vmul.f32 %v596, %v600
        %v604 = vlaneseq
        %v605 = vshrl.u32 %v604, 7
        %v606 = vsub.s32 1, %v605
        %v607 = vrot.slane %v551, %v606
        %v608 = vadd.f32 %v601, %v607
        %v609 = vadd.f32 %v602, %v607
        %v610 = vadd.f32 %v603, %v607
        %v611 = vld [vmem:[%s1] sm:$0xff]
        %v612 = vld [vmem:[%s1 + $0x8] sm:$0xff]
        %v613 = vld [vmem:[%s1 + $0x10] sm:$0xff]
        %v614 = vld [vmem:[%s1 + $0x18] sm:$0xff]
        %v615 = vld [vmem:[%s1 + $0x20] sm:$0xff]
        %v616 = vld [vmem:[%s1 + $0x28] sm:$0xff]
        %v617 = vld [vmem:[%s1 + $0x30] sm:$0xff]
        %v618 = vld [vmem:[%s1 + $0x38] sm:$0xff]
        %v619 = vlaneseq
        %v620 = vshrl.u32 %v619, 7
        %v621 = vsub.s32 2, %v620
        %v622 = vrot.slane %v551, %v621
        %v624 = vsel %vm556, %v608, 0
        %v627 = vsel %vm556, %v609, 0
        %v630 = vsel %vm556, %v610, 0
        %632 = vmatprep.subr.mxu0 0.0
        %633 = vmatpush1.msra.mxu0 %v611
        %634 = vmatprep.subr.mxu0 0.0
        %635 = vmatpush1.msra.mxu0 %v612
        %636 = vmatprep.subr.mxu0 0.0
        %637 = vmatpush1.msra.mxu0 %v613
        %638 = vmatprep.subr.mxu0 0.0
        %639 = vmatpush1.msra.mxu0 %v614
        %640 = vmatprep.subr.mxu0 0.0
        %641 = vmatpush1.msra.mxu0 %v615
        %642 = vmatprep.subr.mxu0 0.0
        %643 = vmatpush1.msra.mxu0 %v616
        %644 = vmatprep.subr.mxu0 0.0
        %645 = vmatpush1.msra.mxu0 %v617
        %646 = vmatprep.subr.mxu0 0.0
        %647 = vmatpush1.msra.mxu0 %v618
        %648 = vmatprep.subr.mxu0 0.0
        %649 = vmatpush1.msra.mxu0 0.0
        %650 = vmatprep.subr.mxu0 0.0
        %651 = vmatpush1.msra.mxu0 0.0
        %652 = vmatprep.subr.mxu0 0.0
        %653 = vmatpush1.msra.mxu0 0.0
        %654 = vmatprep.subr.mxu0 0.0
        %655 = vmatpush1.msra.mxu0 0.0
        %656 = vmatprep.subr.mxu0 0.0
        %657 = vmatpush1.msra.mxu0 0.0
        %658 = vmatprep.subr.mxu0 0.0
        %659 = vmatpush1.msra.mxu0 0.0
        %660 = vmatprep.subr.mxu0 0.0
        %661 = vmatpush1.msra.mxu0 0.0
        %662 = vmatprep.subr.mxu0 0.0
        %663 = vmatpush1.msra.mxu0 0.0
        %664 = vmatprep.subr.mxu0 0.0
        %665 = vmatpush1.msra.mxu0 0.0
        %666 = vmatprep.subr.mxu0 0.0
        %667 = vmatpush1.msra.mxu0 0.0
        %668 = vmatprep.subr.mxu0 0.0
        %669 = vmatpush1.msra.mxu0 0.0
        %670 = vmatprep.subr.mxu0 0.0
        %671 = vmatpush1.msra.mxu0 0.0
        %672 = vmatprep.subr.mxu0 0.0
        %673 = vmatpush1.msra.mxu0 0.0
        %674 = vmatprep.subr.mxu0 0.0
        %675 = vmatpush1.msra.mxu0 0.0
        %676 = vmatprep.subr.mxu0 0.0
        %677 = vmatpush1.msra.mxu0 0.0
        %678 = vmatprep.subr.mxu0 0.0
        %679 = vmatpush1.msra.mxu0 0.0
        %680 = vmatprep.subr.mxu0 0.0
        %681 = vmatpush1.msra.mxu0 0.0
        %682 = vmatprep.subr.mxu0 0.0
        %683 = vmatpush1.msra.mxu0 0.0
        %684 = vmatprep.subr.mxu0 0.0
        %685 = vmatpush1.msra.mxu0 0.0
        %686 = vmatprep.subr.mxu0 0.0
        %687 = vmatpush1.msra.mxu0 0.0
        %688 = vmatprep.subr.mxu0 0.0
        %689 = vmatpush1.msra.mxu0 0.0
        %690 = vmatprep.subr.mxu0 0.0
        %691 = vmatpush1.msra.mxu0 0.0
        %692 = vmatprep.subr.mxu0 0.0
        %693 = vmatpush1.msra.mxu0 0.0
        %694 = vmatprep.subr.mxu0 0.0
        %695 = vmatpush1.msra.mxu0 0.0
        %696 = vmatprep.mubr.f32.mxu0 0.0
        %697 = vmatmul.mubr.f32.gmra.mrb[0].mxu0 %v624
        %v698 = vpop.f32.mrb[0].mxu0
        %v699 = vadd.f32 %v622, %v698
        %v700 = vpop.f32.mrb[0].mxu0
        %701 = vmatprep.mubr.f32.mxu0 0.0
        %702 = vmatmul.mubr.f32.gmra.mrb[0].mxu0 %v627
        %v703 = vpop.f32.mrb[0].mxu0
        %v704 = vadd.f32 %v622, %v703
        %v705 = vpop.f32.mrb[0].mxu0
        %706 = vmatprep.mubr.f32.mxu0 0.0
        %707 = vmatmul.mubr.f32.gmra.mrb[0].mxu0 %v630
        %v708 = vpop.f32.mrb[0].mxu0
        %v709 = vadd.f32 %v622, %v708
        %v710 = vpop.f32.mrb[0].mxu0
        %711 = vdwg.mxu0
        %vm712 = vcmask 261120
        %v713 = vsel %vm712, %v699, 0.0
        %714 = vadd.xlane.f32.xlu0 %v713
        %v715 = vpop.xlane.xlu0 %714
        %v716 = vsel %vm712, %v704, 0.0
        %717 = vadd.xlane.f32.xlu0 %v716
        %v718 = vpop.xlane.xlu0 %717
        %v719 = vsel %vm712, %v709, 0.0
        %720 = vadd.xlane.f32.xlu0 %v719
        %v721 = vpop.xlane.xlu0 %720
        %v722 = vrcp.pop 32.0
        %v723 = vmul.f32 %v715, %v722
        %v724 = vmul.f32 %v718, %v722
        %v725 = vmul.f32 %v721, %v722
        %v726 = vsub.f32 %v699, %v723
        %v727 = vsub.f32 %v704, %v724
        %v728 = vsub.f32 %v709, %v725
        %v729 = vmul.f32 %v726, %v726
        %v730 = vmul.f32 %v727, %v727
        %v731 = vmul.f32 %v728, %v728
        %v732 = vsel %vm712, %v729, 0.0
        %733 = vadd.xlane.f32.xlu0 %v732
        %v734 = vpop.xlane.xlu0 %733
        %v735 = vsel %vm712, %v730, 0.0
        %736 = vadd.xlane.f32.xlu0 %v735
        %v737 = vpop.xlane.xlu0 %736
        %v738 = vsel %vm712, %v731, 0.0
        %739 = vadd.xlane.f32.xlu0 %v738
        %v740 = vpop.xlane.xlu0 %739
        %v741 = vmul.f32 %v734, %v722
        %v742 = vmul.f32 %v737, %v722
        %v743 = vmul.f32 %v740, %v722
        %v744 = vadd.f32 %v741, 1e-05
        %v745 = vadd.f32 %v742, 1e-05
        %v746 = vadd.f32 %v743, 1e-05
        %v747 = vrsqrt.pop %v744
        %v748 = vrsqrt.pop %v745
        %v749 = vrsqrt.pop %v746
        %v750 = vmul.f32 %v726, %v747
        %v751 = vmul.f32 %v727, %v748
        %v752 = vmul.f32 %v728, %v749
        %v753 = vlaneseq
        %v754 = vshrl.u32 %v753, 7
        %v755 = vsub.s32 3, %v754
        %v756 = vrot.slane %v551, %v755
        %v757 = vmul.f32 %v750, %v756
        %v758 = vmul.f32 %v751, %v756
        %v759 = vmul.f32 %v752, %v756
        %v760 = vlaneseq
        %v761 = vshrl.u32 %v760, 7
        %v762 = vsub.s32 4, %v761
        %v763 = vrot.slane %v551, %v762
        %v764 = vadd.f32 %v757, %v763
        %v765 = vadd.f32 %v758, %v763
        %v766 = vadd.f32 %v759, %v763
        %v767 = vlaneseq
        %v768 = vshrl.u32 %v767, 7
        %v769 = vadd.s32 %v768, 8
        %v770 = vadd.s32 %v768, 16
        %vm771 = vcmp.ge.s32.totalorder %v768, 1
        %vm772 = vcmp.ge.s32.totalorder %v769, 1
        %vm773 = vcmp.ge.s32.totalorder %v770, 1
        %vm774 = vcmp.lt.s32.totalorder %v768, 17
        %vm775 = vcmp.lt.s32.totalorder %v769, 17
        %vm776 = vcmp.lt.s32.totalorder %v770, 17
        %vm777 = vmand %vm771, %vm774
        %vm778 = vmand %vm772, %vm775
        %vm779 = vmand %vm773, %vm776
        %v780 = vsel %vm777, 1.0, 0.0
        %v781 = vsel %vm778, 1.0, 0.0
        %v782 = vsel %vm779, 1.0, 0.0
        %v783 = vmul.f32 %v764, %v780
        %v784 = vmul.f32 %v765, %v781
        %v785 = vmul.f32 %v766, %v782
        %v786 = vld [vmem:[#allocation5] sm:$0xff]
        %v787 = vld [vmem:[#allocation5 + $0x8] sm:$0xff]
        %v788 = vld [vmem:[#allocation5 + $0x10] sm:$0xff]
        %v789 = vadd.f32 %v783, %v786
        %v790 = vadd.f32 %v784, %v787
        %v791 = vadd.f32 %v785, %v788
        %v792 = vlaneseq
        %v793 = vand.u32 %v792, 127
        %vm794 = vcmp.lt.s32.totalorder %v793, 17
        %v795 = vsel %vm794, 0.0, -1e+30
        %v796 = vld [vmem:[#allocation7] sm:$0xff]
        %v797 = vld [vmem:[#allocation7 + $0x8] sm:$0xff]
        %v798 = vld [vmem:[#allocation7 + $0x10] sm:$0xff]
        %v799 = vld [vmem:[#allocation7 + $0x18] sm:$0xff]
        %v800 = vld [vmem:[#allocation8] sm:$0xff]
        %v801 = vld [vmem:[%s12] sm:$0x3f]
        %v802 = vlaneseq
        %v803 = vshrl.u32 %v802, 7
        %v804 = vsub.s32 5, %v803
        %v805 = vrot.slane %v551, %v804
        %v807 = vsel %vm712, %v789, 0
        %v810 = vsel %vm712, %v790, 0
        %v813 = vsel %vm712, %v791, 0
        %815 = vmatprep.subr.mxu0 0.0
        %816 = vmatpush1.msra.mxu0 %v796
        %817 = vmatprep.subr.mxu0 0.0
        %818 = vmatpush1.msra.mxu0 %v797
        %819 = vmatprep.subr.mxu0 0.0
        %820 = vmatpush1.msra.mxu0 %v798
        %821 = vmatprep.subr.mxu0 0.0
        %822 = vmatpush1.msra.mxu0 %v799
        %823 = vmatprep.subr.mxu0 0.0
        %824 = vmatpush1.msra.mxu0 0.0
        %825 = vmatprep.subr.mxu0 0.0
        %826 = vmatpush1.msra.mxu0 0.0
        %827 = vmatprep.subr.mxu0 0.0
        %828 = vmatpush1.msra.mxu0 0.0
        %829 = vmatprep.subr.mxu0 0.0
        %830 = vmatpush1.msra.mxu0 0.0
        %831 = vmatprep.subr.mxu0 0.0
        %832 = vmatpush1.msra.mxu0 0.0
        %833 = vmatprep.subr.mxu0 0.0
        %834 = vmatpush1.msra.mxu0 0.0
        %835 = vmatprep.subr.mxu0 0.0
        %836 = vmatpush1.msra.mxu0 0.0
        %837 = vmatprep.subr.mxu0 0.0
        %838 = vmatpush1.msra.mxu0 0.0
        %839 = vmatprep.subr.mxu0 0.0
        %840 = vmatpush1.msra.mxu0 0.0
        %841 = vmatprep.subr.mxu0 0.0
        %842 = vmatpush1.msra.mxu0 0.0
        %843 = vmatprep.subr.mxu0 0.0
        %844 = vmatpush1.msra.mxu0 0.0
        %845 = vmatprep.subr.mxu0 0.0
        %846 = vmatpush1.msra.mxu0 0.0
        %847 = vmatprep.subr.mxu0 0.0
        %848 = vmatpush1.msra.mxu0 0.0
        %849 = vmatprep.subr.mxu0 0.0
        %850 = vmatpush1.msra.mxu0 0.0
        %851 = vmatprep.subr.mxu0 0.0
        %852 = vmatpush1.msra.mxu0 0.0
        %853 = vmatprep.subr.mxu0 0.0
        %854 = vmatpush1.msra.mxu0 0.0
        %855 = vmatprep.subr.mxu0 0.0
        %856 = vmatpush1.msra.mxu0 0.0
        %857 = vmatprep.subr.mxu0 0.0
        %858 = vmatpush1.msra.mxu0 0.0
        %859 = vmatprep.subr.mxu0 0.0
        %860 = vmatpush1.msra.mxu0 0.0
        %861 = vmatprep.subr.mxu0 0.0
        %862 = vmatpush1.msra.mxu0 0.0
        %863 = vmatprep.subr.mxu0 0.0
        %864 = vmatpush1.msra.mxu0 0.0
        %865 = vmatprep.subr.mxu0 0.0
        %866 = vmatpush1.msra.mxu0 0.0
        %867 = vmatprep.subr.mxu0 0.0
        %868 = vmatpush1.msra.mxu0 0.0
        %869 = vmatprep.subr.mxu0 0.0
        %870 = vmatpush1.msra.mxu0 0.0
        %871 = vmatprep.subr.mxu0 0.0
        %872 = vmatpush1.msra.mxu0 0.0
        %873 = vmatprep.subr.mxu0 0.0
        %874 = vmatpush1.msra.mxu0 0.0
        %875 = vmatprep.subr.mxu0 0.0
        %876 = vmatpush1.msra.mxu0 0.0
        %877 = vmatprep.subr.mxu0 0.0
        %878 = vmatpush1.msra.mxu0 0.0
        %879 = vmatprep.mubr.f32.mxu0 0.0
        %880 = vmatmul.mubr.f32.gmra.mrb[0].mxu0 %v807
        %v881 = vpop.f32.mrb[0].mxu0
        %v882 = vadd.f32 %v805, %v881
        %v883 = vpop.f32.mrb[0].mxu0
        %884 = vmatprep.mubr.f32.mxu0 0.0
        %885 = vmatmul.mubr.f32.gmra.mrb[0].mxu0 %v810
        %v886 = vpop.f32.mrb[0].mxu0
        %v887 = vadd.f32 %v805, %v886
        %v888 = vpop.f32.mrb[0].mxu0
        %889 = vmatprep.mubr.f32.mxu0 0.0
        %890 = vmatmul.mubr.f32.gmra.mrb[0].mxu0 %v813
        %v891 = vpop.f32.mrb[0].mxu0
        %v892 = vadd.f32 %v805, %v891
        %v893 = vpop.f32.mrb[0].mxu0
        %894 = vdwg.mxu0
        %vm895 = vcmask 130048
        %v897 = vsel %vm895, %v882, 0
        %v900 = vsel %vm895, %v887, 0
        %v903 = vsel %vm895, %v892, 0
        %v906 = vsel %vm895, %v800, 0
        %908 = vmatprep.subr.mxu0 0.0
        %909 = vmatpush1.xpose.msra.mxu0 %v906
        %910 = vmatprep.subr.mxu0 0.0
        %911 = vmatpush1.xpose.msra.mxu0 0.0
        %912 = vmatprep.subr.mxu0 0.0
        %913 = vmatpush1.xpose.msra.mxu0 0.0
        %914 = vmatprep.subr.mxu0 0.0
        %915 = vmatpush1.xpose.msra.mxu0 0.0
        %916 = vmatprep.subr.mxu0 0.0
        %917 = vmatpush1.xpose.msra.mxu0 0.0
        %918 = vmatprep.subr.mxu0 0.0
        %919 = vmatpush1.xpose.msra.mxu0 0.0
        %920 = vmatprep.subr.mxu0 0.0
        %921 = vmatpush1.xpose.msra.mxu0 0.0
        %922 = vmatprep.subr.mxu0 0.0
        %923 = vmatpush1.xpose.msra.mxu0 0.0
        %924 = vmatprep.subr.mxu0 0.0
        %925 = vmatpush1.xpose.msra.mxu0 0.0
        %926 = vmatprep.subr.mxu0 0.0
        %927 = vmatpush1.xpose.msra.mxu0 0.0
        %928 = vmatprep.subr.mxu0 0.0
        %929 = vmatpush1.xpose.msra.mxu0 0.0
        %930 = vmatprep.subr.mxu0 0.0
        %931 = vmatpush1.xpose.msra.mxu0 0.0
        %932 = vmatprep.subr.mxu0 0.0
        %933 = vmatpush1.xpose.msra.mxu0 0.0
        %934 = vmatprep.subr.mxu0 0.0
        %935 = vmatpush1.xpose.msra.mxu0 0.0
        %936 = vmatprep.subr.mxu0 0.0
        %937 = vmatpush1.xpose.msra.mxu0 0.0
        %938 = vmatprep.subr.mxu0 0.0
        %939 = vmatpush1.xpose.msra.mxu0 0.0
        %940 = vmatprep.subr.mxu0 0.0
        %941 = vmatpush1.xpose.msra.mxu0 0.0
        %942 = vmatprep.subr.mxu0 0.0
        %943 = vmatpush1.xpose.msra.mxu0 0.0
        %944 = vmatprep.subr.mxu0 0.0
        %945 = vmatpush1.xpose.msra.mxu0 0.0
        %946 = vmatprep.subr.mxu0 0.0
        %947 = vmatpush1.xpose.msra.mxu0 0.0
        %948 = vmatprep.subr.mxu0 0.0
        %949 = vmatpush1.xpose.msra.mxu0 0.0
        %950 = vmatprep.subr.mxu0 0.0
        %951 = vmatpush1.xpose.msra.mxu0 0.0
        %952 = vmatprep.subr.mxu0 0.0
        %953 = vmatpush1.xpose.msra.mxu0 0.0
        %954 = vmatprep.subr.mxu0 0.0
        %955 = vmatpush1.xpose.msra.mxu0 0.0
        %956 = vmatprep.subr.mxu0 0.0
        %957 = vmatpush1.xpose.msra.mxu0 0.0
        %958 = vmatprep.subr.mxu0 0.0
        %959 = vmatpush1.xpose.msra.mxu0 0.0
        %960 = vmatprep.subr.mxu0 0.0
        %961 = vmatpush1.xpose.msra.mxu0 0.0
        %962 = vmatprep.subr.mxu0 0.0
        %963 = vmatpush1.xpose.msra.mxu0 0.0
        %964 = vmatprep.subr.mxu0 0.0
        %965 = vmatpush1.xpose.msra.mxu0 0.0
        %966 = vmatprep.subr.mxu0 0.0
        %967 = vmatpush1.xpose.msra.mxu0 0.0
        %968 = vmatprep.subr.mxu0 0.0
        %969 = vmatpush1.xpose.msra.mxu0 0.0
        %970 = vmatprep.subr.mxu0 0.0
        %971 = vmatpush1.xpose.msra.mxu0 0.0
        %972 = vmatprep.mubr.f32.mxu0 0.0
        %973 = vmatmul.mubr.f32.gmra.mrb[0].mxu0 %v897
        %v974 = vpop.f32.mrb[0].mxu0
        %v975 = vadd.f32 0.0, %v974
        %v976 = vpop.f32.mrb[0].mxu0
        %977 = vmatprep.mubr.f32.mxu0 0.0
        %978 = vmatmul.mubr.f32.gmra.mrb[0].mxu0 %v900
        %v979 = vpop.f32.mrb[0].mxu0
        %v980 = vadd.f32 0.0, %v979
        %v981 = vpop.f32.mrb[0].mxu0
        %982 = vmatprep.mubr.f32.mxu0 0.0
        %983 = vmatmul.mubr.f32.gmra.mrb[0].mxu0 %v903
        %v984 = vpop.f32.mrb[0].mxu0
        %v985 = vadd.f32 0.0, %v984
        %v986 = vpop.f32.mrb[0].mxu0
        %987 = vdwg.mxu0
        %vm988 = vcmask 64512
        %v989 = vsel %vm988, %v975, -inf
        %990 = vmax.xlane.f32.xlu0 %v989
        %v991 = vpop.xlane.xlu0 %990
        %v992 = vsel %vm988, %v980, -inf
        %993 = vmax.xlane.f32.xlu0 %v992
        %v994 = vpop.xlane.xlu0 %993
        %v995 = vsel %vm988, %v985, -inf
        %996 = vmax.xlane.f32.xlu0 %v995
        %v997 = vpop.xlane.xlu0 %996
        %v998 = vsub.f32 %v975, %v991
        %v999 = vsub.f32 %v980, %v994
        %v1000 = vsub.f32 %v985, %v997
        %v1001 = vmul.f32 %v998, 1.442695
        %v1002 = vpow.pop %v1001
        %v1003 = vmul.f32 %v999, 1.442695
        %v1004 = vpow.pop %v1003
        %v1005 = vmul.f32 %v1000, 1.442695
        %v1006 = vpow.pop %v1005
        %v1007 = vsel %vm988, %v1002, 0.0
        %1008 = vadd.xlane.f32.xlu0 %v1007
        %v1009 = vpop.xlane.xlu0 %1008
        %v1010 = vsel %vm988, %v1004, 0.0
        %1011 = vadd.xlane.f32.xlu0 %v1010
        %v1012 = vpop.xlane.xlu0 %1011
        %v1013 = vsel %vm988, %v1006, 0.0
        %1014 = vadd.xlane.f32.xlu0 %v1013
        %v1015 = vpop.xlane.xlu0 %1014
        %v1016 = vrcp.pop %v1009
        %v1017 = vrcp.pop %v1012
        %v1018 = vrcp.pop %v1015
        %v1019 = vmul.f32 %v1002, %v1016
        %v1020 = vmul.f32 %v1004, %v1017
        %v1021 = vmul.f32 %v1006, %v1018
        %v1022 = vld [vmem:[%s6] sm:$0xff]
        %1023 = vrot.lane.b32.xlu0 %v882, 112
        %v1024 = vpop.permute.xlu0 %1023
        %1025 = vrot.lane.b32.xlu0 %v887, 112
        %v1026 = vpop.permute.xlu0 %1025
        %1027 = vrot.lane.b32.xlu0 %v892, 112
        %v1028 = vpop.permute.xlu0 %1027
        %1029 = vrot.lane.b32.xlu0 %v800, 112
        %v1030 = vpop.permute.xlu0 %1029
        %v1031 = vsel %vm895, %v1024, 0
        %v1033 = vsel %vm895, %v1026, 0
        %v1035 = vsel %vm895, %v1028, 0
        %v1037 = vsel %vm895, %v1030, 0
        %1039 = vmatprep.subr.mxu0 0.0
        %1040 = vmatpush1.xpose.msra.mxu0 %v1037
        %1041 = vmatprep.subr.mxu0 0.0
        %1042 = vmatpush1.xpose.msra.mxu0 0.0
        %1043 = vmatprep.subr.mxu0 0.0
        %1044 = vmatpush1.xpose.msra.mxu0 0.0
        %1045 = vmatprep.subr.mxu0 0.0
        %1046 = vmatpush1.xpose.msra.mxu0 0.0
        %1047 = vmatprep.subr.mxu0 0.0
        %1048 = vmatpush1.xpose.msra.mxu0 0.0
        %1049 = vmatprep.subr.mxu0 0.0
        %1050 = vmatpush1.xpose.msra.mxu0 0.0
        %1051 = vmatprep.subr.mxu0 0.0
        %1052 = vmatpush1.xpose.msra.mxu0 0.0
        %1053 = vmatprep.subr.mxu0 0.0
        %1054 = vmatpush1.xpose.msra.mxu0 0.0
        %1055 = vmatprep.subr.mxu0 0.0
        %1056 = vmatpush1.xpose.msra.mxu0 0.0
        %1057 = vmatprep.subr.mxu0 0.0
        %1058 = vmatpush1.xpose.msra.mxu0 0.0
        %1059 = vmatprep.subr.mxu0 0.0
        %1060 = vmatpush1.xpose.msra.mxu0 0.0
        %1061 = vmatprep.subr.mxu0 0.0
        %1062 = vmatpush1.xpose.msra.mxu0 0.0
        %1063 = vmatprep.subr.mxu0 0.0
        %1064 = vmatpush1.xpose.msra.mxu0 0.0
        %1065 = vmatprep.subr.mxu0 0.0
        %1066 = vmatpush1.xpose.msra.mxu0 0.0
        %1067 = vmatprep.subr.mxu0 0.0
        %1068 = vmatpush1.xpose.msra.mxu0 0.0
        %1069 = vmatprep.subr.mxu0 0.0
        %1070 = vmatpush1.xpose.msra.mxu0 0.0
        %1071 = vmatprep.subr.mxu0 0.0
        %1072 = vmatpush1.xpose.msra.mxu0 0.0
        %1073 = vmatprep.subr.mxu0 0.0
        %1074 = vmatpush1.xpose.msra.mxu0 0.0
        %1075 = vmatprep.subr.mxu0 0.0
        %1076 = vmatpush1.xpose.msra.mxu0 0.0
        %1077 = vmatprep.subr.mxu0 0.0
        %1078 = vmatpush1.xpose.msra.mxu0 0.0
        %1079 = vmatprep.subr.mxu0 0.0
        %1080 = vmatpush1.xpose.msra.mxu0 0.0
        %1081 = vmatprep.subr.mxu0 0.0
        %1082 = vmatpush1.xpose.msra.mxu0 0.0
        %1083 = vmatprep.subr.mxu0 0.0
        %1084 = vmatpush1.xpose.msra.mxu0 0.0
        %1085 = vmatprep.subr.mxu0 0.0
        %1086 = vmatpush1.xpose.msra.mxu0 0.0
        %1087 = vmatprep.subr.mxu0 0.0
        %1088 = vmatpush1.xpose.msra.mxu0 0.0
        %1089 = vmatprep.subr.mxu0 0.0
        %1090 = vmatpush1.xpose.msra.mxu0 0.0
        %1091 = vmatprep.subr.mxu0 0.0
        %1092 = vmatpush1.xpose.msra.mxu0 0.0
        %1093 = vmatprep.subr.mxu0 0.0
        %1094 = vmatpush1.xpose.msra.mxu0 0.0
        %1095 = vmatprep.subr.mxu0 0.0
        %1096 = vmatpush1.xpose.msra.mxu0 0.0
        %1097 = vmatprep.subr.mxu0 0.0
        %1098 = vmatpush1.xpose.msra.mxu0 0.0
        %1099 = vmatprep.subr.mxu0 0.0
        %1100 = vmatpush1.xpose.msra.mxu0 0.0
        %1101 = vmatprep.subr.mxu0 0.0
        %1102 = vmatpush1.xpose.msra.mxu0 0.0
        %1103 = vmatprep.mubr.f32.mxu0 0.0
        %1104 = vmatmul.mubr.f32.gmra.mrb[0].mxu0 %v1031
        %v1105 = vpop.f32.mrb[0].mxu0
        %v1106 = vadd.f32 0.0, %v1105
        %v1107 = vpop.f32.mrb[0].mxu0
        %1108 = vmatprep.mubr.f32.mxu0 0.0
        %1109 = vmatmul.mubr.f32.gmra.mrb[0].mxu0 %v1033
        %v1110 = vpop.f32.mrb[0].mxu0
        %v1111 = vadd.f32 0.0, %v1110
        %v1112 = vpop.f32.mrb[0].mxu0
        %1113 = vmatprep.mubr.f32.mxu0 0.0
        %1114 = vmatmul.mubr.f32.gmra.mrb[0].mxu0 %v1035
        %v1115 = vpop.f32.mrb[0].mxu0
        %v1116 = vadd.f32 0.0, %v1115
        %v1117 = vpop.f32.mrb[0].mxu0
        %1118 = vdwg.mxu0
        %v1119 = vsel %vm988, %v1106, -inf
        %1120 = vmax.xlane.f32.xlu0 %v1119
        %v1121 = vpop.xlane.xlu0 %1120
        %v1122 = vsel %vm988, %v1111, -inf
        %1123 = vmax.xlane.f32.xlu0 %v1122
        %v1124 = vpop.xlane.xlu0 %1123
        %v1125 = vsel %vm988, %v1116, -inf
        %1126 = vmax.xlane.f32.xlu0 %v1125
        %v1127 = vpop.xlane.xlu0 %1126
        %v1128 = vsub.f32 %v1106, %v1121
        %v1129 = vsub.f32 %v1111, %v1124
        %v1130 = vsub.f32 %v1116, %v1127
        %v1131 = vmul.f32 %v1128, 1.442695
        %v1132 = vpow.pop %v1131
        %v1133 = vmul.f32 %v1129, 1.442695
        %v1134 = vpow.pop %v1133
        %v1135 = vmul.f32 %v1130, 1.442695
        %v1136 = vpow.pop %v1135
        %v1137 = vsel %vm988, %v1132, 0.0
        %1138 = vadd.xlane.f32.xlu0 %v1137
        %v1139 = vpop.xlane.xlu0 %1138
        %v1140 = vsel %vm988, %v1134, 0.0
        %1141 = vadd.xlane.f32.xlu0 %v1140
        %v1142 = vpop.xlane.xlu0 %1141
        %v1143 = vsel %vm988, %v1136, 0.0
        %1144 = vadd.xlane.f32.xlu0 %v1143
        %v1145 = vpop.xlane.xlu0 %1144
        %v1146 = vrcp.pop %v1139
        %v1147 = vrcp.pop %v1142
        %v1148 = vrcp.pop %v1145
        %v1149 = vmul.f32 %v1132, %v1146
        %v1150 = vmul.f32 %v1134, %v1147
        %v1151 = vmul.f32 %v1136, %v1148
        %s1152 = scalar_lea.vmem %s6, 8
        %v1153 = vld [vmem:[%s1152] sm:$0xff]
        %v1155 = vsel %vm988, %v1149, 0
        %v1158 = vsel %vm988, %v1150, 0
        %v1161 = vsel %vm988, %v1151, 0
        %1163 = vmatprep.subr.mxu0 0.0
        %1164 = vmatpush1.msra.mxu0 %v1153
        %1165 = vmatprep.subr.mxu0 0.0
        %1166 = vmatpush1.msra.mxu0 0.0
        %1167 = vmatprep.subr.mxu0 0.0
        %1168 = vmatpush1.msra.mxu0 0.0
        %1169 = vmatprep.subr.mxu0 0.0
        %1170 = vmatpush1.msra.mxu0 0.0
        %1171 = vmatprep.subr.mxu0 0.0
        %1172 = vmatpush1.msra.mxu0 0.0
        %1173 = vmatprep.subr.mxu0 0.0
        %1174 = vmatpush1.msra.mxu0 0.0
        %1175 = vmatprep.subr.mxu0 0.0
        %1176 = vmatpush1.msra.mxu0 0.0
        %1177 = vmatprep.subr.mxu0 0.0
        %1178 = vmatpush1.msra.mxu0 0.0
        %1179 = vmatprep.subr.mxu0 0.0
        %1180 = vmatpush1.msra.mxu0 0.0
        %1181 = vmatprep.subr.mxu0 0.0
        %1182 = vmatpush1.msra.mxu0 0.0
        %1183 = vmatprep.subr.mxu0 0.0
        %1184 = vmatpush1.msra.mxu0 0.0
        %1185 = vmatprep.subr.mxu0 0.0
        %1186 = vmatpush1.msra.mxu0 0.0
        %1187 = vmatprep.subr.mxu0 0.0
        %1188 = vmatpush1.msra.mxu0 0.0
        %1189 = vmatprep.subr.mxu0 0.0
        %1190 = vmatpush1.msra.mxu0 0.0
        %1191 = vmatprep.subr.mxu0 0.0
        %1192 = vmatpush1.msra.mxu0 0.0
        %1193 = vmatprep.subr.mxu0 0.0
        %1194 = vmatpush1.msra.mxu0 0.0
        %1195 = vmatprep.subr.mxu0 0.0
        %1196 = vmatpush1.msra.mxu0 0.0
        %1197 = vmatprep.subr.mxu0 0.0
        %1198 = vmatpush1.msra.mxu0 0.0
        %1199 = vmatprep.subr.mxu0 0.0
        %1200 = vmatpush1.msra.mxu0 0.0
        %1201 = vmatprep.subr.mxu0 0.0
        %1202 = vmatpush1.msra.mxu0 0.0
        %1203 = vmatprep.subr.mxu0 0.0
        %1204 = vmatpush1.msra.mxu0 0.0
        %1205 = vmatprep.subr.mxu0 0.0
        %1206 = vmatpush1.msra.mxu0 0.0
        %1207 = vmatprep.subr.mxu0 0.0
        %1208 = vmatpush1.msra.mxu0 0.0
        %1209 = vmatprep.subr.mxu0 0.0
        %1210 = vmatpush1.msra.mxu0 0.0
        %1211 = vmatprep.subr.mxu0 0.0
        %1212 = vmatpush1.msra.mxu0 0.0
        %1213 = vmatprep.subr.mxu0 0.0
        %1214 = vmatpush1.msra.mxu0 0.0
        %1215 = vmatprep.subr.mxu0 0.0
        %1216 = vmatpush1.msra.mxu0 0.0
        %1217 = vmatprep.subr.mxu0 0.0
        %1218 = vmatpush1.msra.mxu0 0.0
        %1219 = vmatprep.subr.mxu0 0.0
        %1220 = vmatpush1.msra.mxu0 0.0
        %1221 = vmatprep.subr.mxu0 0.0
        %1222 = vmatpush1.msra.mxu0 0.0
        %1223 = vmatprep.subr.mxu0 0.0
        %1224 = vmatpush1.msra.mxu0 0.0
        %1225 = vmatprep.subr.mxu0 0.0
        %1226 = vmatpush1.msra.mxu0 0.0
        %1227 = vmatprep.mubr.f32.mxu0 0.0
        %1228 = vmatmul.mubr.f32.gmra.mrb[0].mxu0 %v1155
        %v1229 = vpop.f32.mrb[0].mxu0
        %v1230 = vadd.f32 0.0, %v1229
        %v1231 = vpop.f32.mrb[0].mxu0
        %1232 = vmatprep.mubr.f32.mxu0 0.0
        %1233 = vmatmul.mubr.f32.gmra.mrb[0].mxu0 %v1158
        %v1234 = vpop.f32.mrb[0].mxu0
        %v1235 = vadd.f32 0.0, %v1234
        %v1236 = vpop.f32.mrb[0].mxu0
        %1237 = vmatprep.mubr.f32.mxu0 0.0
        %1238 = vmatmul.mubr.f32.gmra.mrb[0].mxu0 %v1161
        %v1239 = vpop.f32.mrb[0].mxu0
        %v1240 = vadd.f32 0.0, %v1239
        %v1241 = vpop.f32.mrb[0].mxu0
        %1242 = vdwg.mxu0
        %v1244 = vsel %vm988, %v1019, 0
        %v1247 = vsel %vm988, %v1020, 0
        %v1250 = vsel %vm988, %v1021, 0
        %1252 = vmatprep.subr.mxu0 0.0
        %1253 = vmatpush1.msra.mxu0 %v1022
        %1254 = vmatprep.subr.mxu0 0.0
        %1255 = vmatpush1.msra.mxu0 0.0
        %1256 = vmatprep.subr.mxu0 0.0
        %1257 = vmatpush1.msra.mxu0 0.0
        %1258 = vmatprep.subr.mxu0 0.0
        %1259 = vmatpush1.msra.mxu0 0.0
        %1260 = vmatprep.subr.mxu0 0.0
        %1261 = vmatpush1.msra.mxu0 0.0
        %1262 = vmatprep.subr.mxu0 0.0
        %1263 = vmatpush1.msra.mxu0 0.0
        %1264 = vmatprep.subr.mxu0 0.0
        %1265 = vmatpush1.msra.mxu0 0.0
        %1266 = vmatprep.subr.mxu0 0.0
        %1267 = vmatpush1.msra.mxu0 0.0
        %1268 = vmatprep.subr.mxu0 0.0
        %1269 = vmatpush1.msra.mxu0 0.0
        %1270 = vmatprep.subr.mxu0 0.0
        %1271 = vmatpush1.msra.mxu0 0.0
        %1272 = vmatprep.subr.mxu0 0.0
        %1273 = vmatpush1.msra.mxu0 0.0
        %1274 = vmatprep.subr.mxu0 0.0
        %1275 = vmatpush1.msra.mxu0 0.0
        %1276 = vmatprep.subr.mxu0 0.0
        %1277 = vmatpush1.msra.mxu0 0.0
        %1278 = vmatprep.subr.mxu0 0.0
        %1279 = vmatpush1.msra.mxu0 0.0
        %1280 = vmatprep.subr.mxu0 0.0
        %1281 = vmatpush1.msra.mxu0 0.0
        %1282 = vmatprep.subr.mxu0 0.0
        %1283 = vmatpush1.msra.mxu0 0.0
        %1284 = vmatprep.subr.mxu0 0.0
        %1285 = vmatpush1.msra.mxu0 0.0
        %1286 = vmatprep.subr.mxu0 0.0
        %1287 = vmatpush1.msra.mxu0 0.0
        %1288 = vmatprep.subr.mxu0 0.0
        %1289 = vmatpush1.msra.mxu0 0.0
        %1290 = vmatprep.subr.mxu0 0.0
        %1291 = vmatpush1.msra.mxu0 0.0
        %1292 = vmatprep.subr.mxu0 0.0
        %1293 = vmatpush1.msra.mxu0 0.0
        %1294 = vmatprep.subr.mxu0 0.0
        %1295 = vmatpush1.msra.mxu0 0.0
        %1296 = vmatprep.subr.mxu0 0.0
        %1297 = vmatpush1.msra.mxu0 0.0
        %1298 = vmatprep.subr.mxu0 0.0
        %1299 = vmatpush1.msra.mxu0 0.0
        %1300 = vmatprep.subr.mxu0 0.0
        %1301 = vmatpush1.msra.mxu0 0.0
        %1302 = vmatprep.subr.mxu0 0.0
        %1303 = vmatpush1.msra.mxu0 0.0
        %1304 = vmatprep.subr.mxu0 0.0
        %1305 = vmatpush1.msra.mxu0 0.0
        %1306 = vmatprep.subr.mxu0 0.0
        %1307 = vmatpush1.msra.mxu0 0.0
        %1308 = vmatprep.subr.mxu0 0.0
        %1309 = vmatpush1.msra.mxu0 0.0
        %1310 = vmatprep.subr.mxu0 0.0
        %1311 = vmatpush1.msra.mxu0 0.0
        %1312 = vmatprep.subr.mxu0 0.0
        %1313 = vmatpush1.msra.mxu0 0.0
        %1314 = vmatprep.subr.mxu0 0.0
        %1315 = vmatpush1.msra.mxu0 0.0
        %1316 = vmatprep.mubr.f32.mxu0 0.0
        %1317 = vmatmul.mubr.f32.gmra.mrb[0].mxu0 %v1244
        %v1318 = vpop.f32.mrb[0].mxu0
        %v1319 = vadd.f32 %v1230, %v1318
        %v1320 = vpop.f32.mrb[0].mxu0
        %1321 = vmatprep.mubr.f32.mxu0 0.0
        %1322 = vmatmul.mubr.f32.gmra.mrb[0].mxu0 %v1247
        %v1323 = vpop.f32.mrb[0].mxu0
        %v1324 = vadd.f32 %v1235, %v1323
        %v1325 = vpop.f32.mrb[0].mxu0
        %1326 = vmatprep.mubr.f32.mxu0 0.0
        %1327 = vmatmul.mubr.f32.gmra.mrb[0].mxu0 %v1250
        %v1328 = vpop.f32.mrb[0].mxu0
        %v1329 = vadd.f32 %v1240, %v1328
        %v1330 = vpop.f32.mrb[0].mxu0
        %1331 = vdwg.mxu0
        %v1332 = vsel %vm712, %v789, 0.0
        %1333 = vadd.xlane.f32.xlu0 %v1332
        %v1334 = vpop.xlane.xlu0 %1333
        %v1335 = vsel %vm712, %v790, 0.0
        %1336 = vadd.xlane.f32.xlu0 %v1335
        %v1337 = vpop.xlane.xlu0 %1336
        %v1338 = vsel %vm712, %v791, 0.0
        %1339 = vadd.xlane.f32.xlu0 %v1338
        %v1340 = vpop.xlane.xlu0 %1339
        %v1341 = vmul.f32 %v1334, %v722
        %v1342 = vmul.f32 %v1337, %v722
        %v1343 = vmul.f32 %v1340, %v722
        %v1344 = vsub.f32 %v789, %v1341
        %v1345 = vsub.f32 %v790, %v1342
        %v1346 = vsub.f32 %v791, %v1343
        %v1347 = vmul.f32 %v1344, %v1344
        %v1348 = vmul.f32 %v1345, %v1345
        %v1349 = vmul.f32 %v1346, %v1346
        %v1350 = vsel %vm712, %v1347, 0.0
        %1351 = vadd.xlane.f32.xlu0 %v1350
        %v1352 = vpop.xlane.xlu0 %1351
        %v1353 = vsel %vm712, %v1348, 0.0
        %1354 = vadd.xlane.f32.xlu0 %v1353
        %v1355 = vpop.xlane.xlu0 %1354
        %v1356 = vsel %vm712, %v1349, 0.0
        %1357 = vadd.xlane.f32.xlu0 %v1356
        %v1358 = vpop.xlane.xlu0 %1357
        %v1359 = vmul.f32 %v1352, %v722
        %v1360 = vmul.f32 %v1355, %v722
        %v1361 = vmul.f32 %v1358, %v722
        %v1362 = vadd.f32 %v1359, 1e-05
        %v1363 = vadd.f32 %v1360, 1e-05
        %v1364 = vadd.f32 %v1361, 1e-05
        %v1365 = vrsqrt.pop %v1362
        %v1366 = vrsqrt.pop %v1363
        %v1367 = vrsqrt.pop %v1364
        %v1368 = vmul.f32 %v1344, %v1365
        %v1369 = vmul.f32 %v1345, %v1366
        %v1370 = vmul.f32 %v1346, %v1367
        %v1371 = vlaneseq
        %v1372 = vshrl.u32 %v1371, 7
        %v1373 = vsub.s32 0, %v1372
        %v1374 = vrot.slane %v801, %v1373
        %v1375 = vmul.f32 %v1368, %v1374
        %v1376 = vmul.f32 %v1369, %v1374
        %v1377 = vmul.f32 %v1370, %v1374
        %v1378 = vlaneseq
        %v1379 = vshrl.u32 %v1378, 7
        %v1380 = vsub.s32 1, %v1379
        %v1381 = vrot.slane %v801, %v1380
        %v1382 = vadd.f32 %v1375, %v1381
        %v1383 = vadd.f32 %v1376, %v1381
        %v1384 = vadd.f32 %v1377, %v1381
        %v1385 = vld [vmem:[%s7] sm:$0xff]
        %v1386 = vld [vmem:[%s7 + $0x8] sm:$0xff]
        %v1387 = vld [vmem:[%s7 + $0x10] sm:$0xff]
        %v1388 = vld [vmem:[%s7 + $0x18] sm:$0xff]
        %v1390 = vsel %vm712, %v1382, 0
        %v1393 = vsel %vm712, %v1383, 0
        %v1396 = vsel %vm712, %v1384, 0
        %1398 = vmatprep.subr.mxu0 0.0
        %1399 = vmatpush1.msra.mxu0 %v1385
        %1400 = vmatprep.subr.mxu0 0.0
        %1401 = vmatpush1.msra.mxu0 %v1386
        %1402 = vmatprep.subr.mxu0 0.0
        %1403 = vmatpush1.msra.mxu0 %v1387
        %1404 = vmatprep.subr.mxu0 0.0
        %1405 = vmatpush1.msra.mxu0 %v1388
        %1406 = vmatprep.subr.mxu0 0.0
        %1407 = vmatpush1.msra.mxu0 0.0
        %1408 = vmatprep.subr.mxu0 0.0
        %1409 = vmatpush1.msra.mxu0 0.0
        %1410 = vmatprep.subr.mxu0 0.0
        %1411 = vmatpush1.msra.mxu0 0.0
        %1412 = vmatprep.subr.mxu0 0.0
        %1413 = vmatpush1.msra.mxu0 0.0
        %1414 = vmatprep.subr.mxu0 0.0
        %1415 = vmatpush1.msra.mxu0 0.0
        %1416 = vmatprep.subr.mxu0 0.0
        %1417 = vmatpush1.msra.mxu0 0.0
        %1418 = vmatprep.subr.mxu0 0.0
        %1419 = vmatpush1.msra.mxu0 0.0
        %1420 = vmatprep.subr.mxu0 0.0
        %1421 = vmatpush1.msra.mxu0 0.0
        %1422 = vmatprep.subr.mxu0 0.0
        %1423 = vmatpush1.msra.mxu0 0.0
        %1424 = vmatprep.subr.mxu0 0.0
        %1425 = vmatpush1.msra.mxu0 0.0
        %1426 = vmatprep.subr.mxu0 0.0
        %1427 = vmatpush1.msra.mxu0 0.0
        %1428 = vmatprep.subr.mxu0 0.0
        %1429 = vmatpush1.msra.mxu0 0.0
        %1430 = vmatprep.subr.mxu0 0.0
        %1431 = vmatpush1.msra.mxu0 0.0
        %1432 = vmatprep.subr.mxu0 0.0
        %1433 = vmatpush1.msra.mxu0 0.0
        %1434 = vmatprep.subr.mxu0 0.0
        %1435 = vmatpush1.msra.mxu0 0.0
        %1436 = vmatprep.subr.mxu0 0.0
        %1437 = vmatpush1.msra.mxu0 0.0
        %1438 = vmatprep.subr.mxu0 0.0
        %1439 = vmatpush1.msra.mxu0 0.0
        %1440 = vmatprep.subr.mxu0 0.0
        %1441 = vmatpush1.msra.mxu0 0.0
        %1442 = vmatprep.subr.mxu0 0.0
        %1443 = vmatpush1.msra.mxu0 0.0
        %1444 = vmatprep.subr.mxu0 0.0
        %1445 = vmatpush1.msra.mxu0 0.0
        %1446 = vmatprep.subr.mxu0 0.0
        %1447 = vmatpush1.msra.mxu0 0.0
        %1448 = vmatprep.subr.mxu0 0.0
        %1449 = vmatpush1.msra.mxu0 0.0
        %1450 = vmatprep.subr.mxu0 0.0
        %1451 = vmatpush1.msra.mxu0 0.0
        %1452 = vmatprep.subr.mxu0 0.0
        %1453 = vmatpush1.msra.mxu0 0.0
        %1454 = vmatprep.subr.mxu0 0.0
        %1455 = vmatpush1.msra.mxu0 0.0
        %1456 = vmatprep.subr.mxu0 0.0
        %1457 = vmatpush1.msra.mxu0 0.0
        %1458 = vmatprep.subr.mxu0 0.0
        %1459 = vmatpush1.msra.mxu0 0.0
        %1460 = vmatprep.subr.mxu0 0.0
        %1461 = vmatpush1.msra.mxu0 0.0
        %1462 = vmatprep.mubr.f32.mxu0 0.0
        %1463 = vmatmul.mubr.f32.gmra.mrb[0].mxu0 %v1390
        %v1464 = vpop.f32.mrb[0].mxu0
        %v1465 = vadd.f32 0.0, %v1464
        %v1466 = vpop.f32.mrb[0].mxu0
        %1467 = vmatprep.mubr.f32.mxu0 0.0
        %1468 = vmatmul.mubr.f32.gmra.mrb[0].mxu0 %v1393
        %v1469 = vpop.f32.mrb[0].mxu0
        %v1470 = vadd.f32 0.0, %v1469
        %v1471 = vpop.f32.mrb[0].mxu0
        %1472 = vmatprep.mubr.f32.mxu0 0.0
        %1473 = vmatmul.mubr.f32.gmra.mrb[0].mxu0 %v1396
        %v1474 = vpop.f32.mrb[0].mxu0
        %v1475 = vadd.f32 0.0, %v1474
        %v1476 = vpop.f32.mrb[0].mxu0
        %1477 = vdwg.mxu0
        %1481 = vrot.lane.b32.xlu0 %v1465, 48
        %v1482 = vpop.permute.xlu0 %1481
        %1483 = vrot.lane.b32.xlu0 %v1470, 48
        %v1484 = vpop.permute.xlu0 %1483
        %1485 = vrot.lane.b32.xlu0 %v1475, 48
        %v1486 = vpop.permute.xlu0 %1485
        %1487 = vrot.lane.b32.xlu0 %v1465, 32
        %v1488 = vpop.permute.xlu0 %1487
        %1489 = vrot.lane.b32.xlu0 %v1470, 32
        %v1490 = vpop.permute.xlu0 %1489
        %1491 = vrot.lane.b32.xlu0 %v1475, 32
        %v1492 = vpop.permute.xlu0 %1491
        %v1493 = vsel %vm988, %v1482, 0
        %v1495 = vsel %vm988, %v1484, 0
        %v1497 = vsel %vm988, %v1486, 0
        %v1499 = vsel %vm988, %v1488, 0
        %v1501 = vsel %vm988, %v1490, 0
        %v1503 = vsel %vm988, %v1492, 0
        %1505 = vmatprep.subr.mxu0 0.0
        %1506 = vmatpush1.xpose.msra.mxu0 %v1499
        %1507 = vmatprep.subr.mxu0 0.0
        %1508 = vmatpush1.xpose.msra.mxu0 %v1501
        %1509 = vmatprep.subr.mxu0 0.0
        %1510 = vmatpush1.xpose.msra.mxu0 %v1503
        %1511 = vmatprep.subr.mxu0 0.0
        %1512 = vmatpush1.xpose.msra.mxu0 0.0
        %1513 = vmatprep.subr.mxu0 0.0
        %1514 = vmatpush1.xpose.msra.mxu0 0.0
        %1515 = vmatprep.subr.mxu0 0.0
        %1516 = vmatpush1.xpose.msra.mxu0 0.0
        %1517 = vmatprep.subr.mxu0 0.0
        %1518 = vmatpush1.xpose.msra.mxu0 0.0
        %1519 = vmatprep.subr.mxu0 0.0
        %1520 = vmatpush1.xpose.msra.mxu0 0.0
        %1521 = vmatprep.subr.mxu0 0.0
        %1522 = vmatpush1.xpose.msra.mxu0 0.0
        %1523 = vmatprep.subr.mxu0 0.0
        %1524 = vmatpush1.xpose.msra.mxu0 0.0
        %1525 = vmatprep.subr.mxu0 0.0
        %1526 = vmatpush1.xpose.msra.mxu0 0.0
        %1527 = vmatprep.subr.mxu0 0.0
        %1528 = vmatpush1.xpose.msra.mxu0 0.0
        %1529 = vmatprep.subr.mxu0 0.0
        %1530 = vmatpush1.xpose.msra.mxu0 0.0
        %1531 = vmatprep.subr.mxu0 0.0
        %1532 = vmatpush1.xpose.msra.mxu0 0.0
        %1533 = vmatprep.subr.mxu0 0.0
        %1534 = vmatpush1.xpose.msra.mxu0 0.0
        %1535 = vmatprep.subr.mxu0 0.0
        %1536 = vmatpush1.xpose.msra.mxu0 0.0
        %1537 = vmatprep.subr.mxu0 0.0
        %1538 = vmatpush1.xpose.msra.mxu0 0.0
        %1539 = vmatprep.subr.mxu0 0.0
        %1540 = vmatpush1.xpose.msra.mxu0 0.0
        %1541 = vmatprep.subr.mxu0 0.0
        %1542 = vmatpush1.xpose.msra.mxu0 0.0
        %1543 = vmatprep.subr.mxu0 0.0
        %1544 = vmatpush1.xpose.msra.mxu0 0.0
        %1545 = vmatprep.subr.mxu0 0.0
        %1546 = vmatpush1.xpose.msra.mxu0 0.0
        %1547 = vmatprep.subr.mxu0 0.0
        %1548 = vmatpush1.xpose.msra.mxu0 0.0
        %1549 = vmatprep.subr.mxu0 0.0
        %1550 = vmatpush1.xpose.msra.mxu0 0.0
        %1551 = vmatprep.subr.mxu0 0.0
        %1552 = vmatpush1.xpose.msra.mxu0 0.0
        %1553 = vmatprep.subr.mxu0 0.0
        %1554 = vmatpush1.xpose.msra.mxu0 0.0
        %1555 = vmatprep.subr.mxu0 0.0
        %1556 = vmatpush1.xpose.msra.mxu0 0.0
        %1557 = vmatprep.subr.mxu0 0.0
        %1558 = vmatpush1.xpose.msra.mxu0 0.0
        %1559 = vmatprep.subr.mxu0 0.0
        %1560 = vmatpush1.xpose.msra.mxu0 0.0
        %1561 = vmatprep.subr.mxu0 0.0
        %1562 = vmatpush1.xpose.msra.mxu0 0.0
        %1563 = vmatprep.subr.mxu0 0.0
        %1564 = vmatpush1.xpose.msra.mxu0 0.0
        %1565 = vmatprep.subr.mxu0 0.0
        %1566 = vmatpush1.xpose.msra.mxu0 0.0
        %1567 = vmatprep.subr.mxu0 0.0
        %1568 = vmatpush1.xpose.msra.mxu0 0.0
        %1569 = vmatprep.mubr.f32.mxu0 0.0
        %1570 = vmatmul.mubr.f32.gmra.mrb[0].mxu0 %v1493
        %v1571 = vpop.f32.mrb[0].mxu0
        %v1572 = vadd.f32 0.0, %v1571
        %v1573 = vpop.f32.mrb[0].mxu0
        %1574 = vmatprep.mubr.f32.mxu0 0.0
        %1575 = vmatmul.mubr.f32.gmra.mrb[0].mxu0 %v1495
        %v1576 = vpop.f32.mrb[0].mxu0
        %v1577 = vadd.f32 0.0, %v1576
        %v1578 = vpop.f32.mrb[0].mxu0
        %1579 = vmatprep.mubr.f32.mxu0 0.0
        %1580 = vmatmul.mubr.f32.gmra.mrb[0].mxu0 %v1497
        %v1581 = vpop.f32.mrb[0].mxu0
        %v1582 = vadd.f32 0.0, %v1581
        %v1583 = vpop.f32.mrb[0].mxu0
        %1584 = vdwg.mxu0
        %1585 = vrot.lane.b32.xlu0 %v1465, 40
        %v1586 = vpop.permute.xlu0 %1585
        %1587 = vrot.lane.b32.xlu0 %v1470, 40
        %v1588 = vpop.permute.xlu0 %1587
        %1589 = vrot.lane.b32.xlu0 %v1475, 40
        %v1590 = vpop.permute.xlu0 %1589
        %1591 = vrot.lane.b32.xlu0 %v1465, 24
        %v1592 = vpop.permute.xlu0 %1591
        %1593 = vrot.lane.b32.xlu0 %v1470, 24
        %v1594 = vpop.permute.xlu0 %1593
        %1595 = vrot.lane.b32.xlu0 %v1475, 24
        %v1596 = vpop.permute.xlu0 %1595
        %v1597 = vsel %vm988, %v1586, 0
        %v1599 = vsel %vm988, %v1588, 0
        %v1601 = vsel %vm988, %v1590, 0
        %v1603 = vsel %vm988, %v1592, 0
        %v1605 = vsel %vm988, %v1594, 0
        %v1607 = vsel %vm988, %v1596, 0
        %1609 = vmatprep.subr.mxu0 0.0
        %1610 = vmatpush1.xpose.msra.mxu0 %v1603
        %1611 = vmatprep.subr.mxu0 0.0
        %1612 = vmatpush1.xpose.msra.mxu0 %v1605
        %1613 = vmatprep.subr.mxu0 0.0
        %1614 = vmatpush1.xpose.msra.mxu0 %v1607
        %1615 = vmatprep.subr.mxu0 0.0
        %1616 = vmatpush1.xpose.msra.mxu0 0.0
        %1617 = vmatprep.subr.mxu0 0.0
        %1618 = vmatpush1.xpose.msra.mxu0 0.0
        %1619 = vmatprep.subr.mxu0 0.0
        %1620 = vmatpush1.xpose.msra.mxu0 0.0
        %1621 = vmatprep.subr.mxu0 0.0
        %1622 = vmatpush1.xpose.msra.mxu0 0.0
        %1623 = vmatprep.subr.mxu0 0.0
        %1624 = vmatpush1.xpose.msra.mxu0 0.0
        %1625 = vmatprep.subr.mxu0 0.0
        %1626 = vmatpush1.xpose.msra.mxu0 0.0
        %1627 = vmatprep.subr.mxu0 0.0
        %1628 = vmatpush1.xpose.msra.mxu0 0.0
        %1629 = vmatprep.subr.mxu0 0.0
        %1630 = vmatpush1.xpose.msra.mxu0 0.0
        %1631 = vmatprep.subr.mxu0 0.0
        %1632 = vmatpush1.xpose.msra.mxu0 0.0
        %1633 = vmatprep.subr.mxu0 0.0
        %1634 = vmatpush1.xpose.msra.mxu0 0.0
        %1635 = vmatprep.subr.mxu0 0.0
        %1636 = vmatpush1.xpose.msra.mxu0 0.0
        %1637 = vmatprep.subr.mxu0 0.0
        %1638 = vmatpush1.xpose.msra.mxu0 0.0
        %1639 = vmatprep.subr.mxu0 0.0
        %1640 = vmatpush1.xpose.msra.mxu0 0.0
        %1641 = vmatprep.subr.mxu0 0.0
        %1642 = vmatpush1.xpose.msra.mxu0 0.0
        %1643 = vmatprep.subr.mxu0 0.0
        %1644 = vmatpush1.xpose.msra.mxu0 0.0
        %1645 = vmatprep.subr.mxu0 0.0
        %1646 = vmatpush1.xpose.msra.mxu0 0.0
        %1647 = vmatprep.subr.mxu0 0.0
        %1648 = vmatpush1.xpose.msra.mxu0 0.0
        %1649 = vmatprep.subr.mxu0 0.0
        %1650 = vmatpush1.xpose.msra.mxu0 0.0
        %1651 = vmatprep.subr.mxu0 0.0
        %1652 = vmatpush1.xpose.msra.mxu0 0.0
        %1653 = vmatprep.subr.mxu0 0.0
        %1654 = vmatpush1.xpose.msra.mxu0 0.0
        %1655 = vmatprep.subr.mxu0 0.0
        %1656 = vmatpush1.xpose.msra.mxu0 0.0
        %1657 = vmatprep.subr.mxu0 0.0
        %1658 = vmatpush1.xpose.msra.mxu0 0.0
        %1659 = vmatprep.subr.mxu0 0.0
        %1660 = vmatpush1.xpose.msra.mxu0 0.0
        %1661 = vmatprep.subr.mxu0 0.0
        %1662 = vmatpush1.xpose.msra.mxu0 0.0
        %1663 = vmatprep.subr.mxu0 0.0
        %1664 = vmatpush1.xpose.msra.mxu0 0.0
        %1665 = vmatprep.subr.mxu0 0.0
        %1666 = vmatpush1.xpose.msra.mxu0 0.0
        %1667 = vmatprep.subr.mxu0 0.0
        %1668 = vmatpush1.xpose.msra.mxu0 0.0
        %1669 = vmatprep.subr.mxu0 0.0
        %1670 = vmatpush1.xpose.msra.mxu0 0.0
        %1671 = vmatprep.subr.mxu0 0.0
        %1672 = vmatpush1.xpose.msra.mxu0 0.0
        %1673 = vmatprep.mubr.f32.mxu0 0.0
        %1674 = vmatmul.mubr.f32.gmra.mrb[0].mxu0 %v1597
        %v1675 = vpop.f32.mrb[0].mxu0
        %v1676 = vadd.f32 0.0, %v1675
        %v1677 = vpop.f32.mrb[0].mxu0
        %1678 = vmatprep.mubr.f32.mxu0 0.0
        %1679 = vmatmul.mubr.f32.gmra.mrb[0].mxu0 %v1599
        %v1680 = vpop.f32.mrb[0].mxu0
        %v1681 = vadd.f32 0.0, %v1680
        %v1682 = vpop.f32.mrb[0].mxu0
        %1683 = vmatprep.mubr.f32.mxu0 0.0
        %1684 = vmatmul.mubr.f32.gmra.mrb[0].mxu0 %v1601
        %v1685 = vpop.f32.mrb[0].mxu0
        %v1686 = vadd.f32 0.0, %v1685
        %v1687 = vpop.f32.mrb[0].mxu0
        %1688 = vdwg.mxu0
        %1689 = vrot.lane.b32.xlu0 %v1465, 112
        %v1690 = vpop.permute.xlu0 %1689
        %1691 = vrot.lane.b32.xlu0 %v1470, 112
        %v1692 = vpop.permute.xlu0 %1691
        %1693 = vrot.lane.b32.xlu0 %v1475, 112
        %v1694 = vpop.permute.xlu0 %1693
        %v1695 = vsel %vm988, %v1465, 0
        %v1697 = vsel %vm988, %v1470, 0
        %v1699 = vsel %vm988, %v1475, 0
        %v1701 = vsel %vm988, %v1690, 0
        %v1703 = vsel %vm988, %v1692, 0
        %v1705 = vsel %vm988, %v1694, 0
        %1707 = vmatprep.subr.mxu0 0.0
        %1708 = vmatpush1.xpose.msra.mxu0 %v1701
        %1709 = vmatprep.subr.mxu0 0.0
        %1710 = vmatpush1.xpose.msra.mxu0 %v1703
        %1711 = vmatprep.subr.mxu0 0.0
        %1712 = vmatpush1.xpose.msra.mxu0 %v1705
        %1713 = vmatprep.subr.mxu0 0.0
        %1714 = vmatpush1.xpose.msra.mxu0 0.0
        %1715 = vmatprep.subr.mxu0 0.0
        %1716 = vmatpush1.xpose.msra.mxu0 0.0
        %1717 = vmatprep.subr.mxu0 0.0
        %1718 = vmatpush1.xpose.msra.mxu0 0.0
        %1719 = vmatprep.subr.mxu0 0.0
        %1720 = vmatpush1.xpose.msra.mxu0 0.0
        %1721 = vmatprep.subr.mxu0 0.0
        %1722 = vmatpush1.xpose.msra.mxu0 0.0
        %1723 = vmatprep.subr.mxu0 0.0
        %1724 = vmatpush1.xpose.msra.mxu0 0.0
        %1725 = vmatprep.subr.mxu0 0.0
        %1726 = vmatpush1.xpose.msra.mxu0 0.0
        %1727 = vmatprep.subr.mxu0 0.0
        %1728 = vmatpush1.xpose.msra.mxu0 0.0
        %1729 = vmatprep.subr.mxu0 0.0
        %1730 = vmatpush1.xpose.msra.mxu0 0.0
        %1731 = vmatprep.subr.mxu0 0.0
        %1732 = vmatpush1.xpose.msra.mxu0 0.0
        %1733 = vmatprep.subr.mxu0 0.0
        %1734 = vmatpush1.xpose.msra.mxu0 0.0
        %1735 = vmatprep.subr.mxu0 0.0
        %1736 = vmatpush1.xpose.msra.mxu0 0.0
        %1737 = vmatprep.subr.mxu0 0.0
        %1738 = vmatpush1.xpose.msra.mxu0 0.0
        %1739 = vmatprep.subr.mxu0 0.0
        %1740 = vmatpush1.xpose.msra.mxu0 0.0
        %1741 = vmatprep.subr.mxu0 0.0
        %1742 = vmatpush1.xpose.msra.mxu0 0.0
        %1743 = vmatprep.subr.mxu0 0.0
        %1744 = vmatpush1.xpose.msra.mxu0 0.0
        %1745 = vmatprep.subr.mxu0 0.0
        %1746 = vmatpush1.xpose.msra.mxu0 0.0
        %1747 = vmatprep.subr.mxu0 0.0
        %1748 = vmatpush1.xpose.msra.mxu0 0.0
        %1749 = vmatprep.subr.mxu0 0.0
        %1750 = vmatpush1.xpose.msra.mxu0 0.0
        %1751 = vmatprep.subr.mxu0 0.0
        %1752 = vmatpush1.xpose.msra.mxu0 0.0
        %1753 = vmatprep.subr.mxu0 0.0
        %1754 = vmatpush1.xpose.msra.mxu0 0.0
        %1755 = vmatprep.subr.mxu0 0.0
        %1756 = vmatpush1.xpose.msra.mxu0 0.0
        %1757 = vmatprep.subr.mxu0 0.0
        %1758 = vmatpush1.xpose.msra.mxu0 0.0
        %1759 = vmatprep.subr.mxu0 0.0
        %1760 = vmatpush1.xpose.msra.mxu0 0.0
        %1761 = vmatprep.subr.mxu0 0.0
        %1762 = vmatpush1.xpose.msra.mxu0 0.0
        %1763 = vmatprep.subr.mxu0 0.0
        %1764 = vmatpush1.xpose.msra.mxu0 0.0
        %1765 = vmatprep.subr.mxu0 0.0
        %1766 = vmatpush1.xpose.msra.mxu0 0.0
        %1767 = vmatprep.subr.mxu0 0.0
        %1768 = vmatpush1.xpose.msra.mxu0 0.0
        %1769 = vmatprep.subr.mxu0 0.0
        %1770 = vmatpush1.xpose.msra.mxu0 0.0
        %1771 = vmatprep.mubr.f32.mxu0 0.0
        %1772 = vmatmul.mubr.f32.gmra.mrb[0].mxu0 %v1695
        %v1773 = vpop.f32.mrb[0].mxu0
        %v1774 = vadd.f32 %v795, %v1773
        %v1775 = vpop.f32.mrb[0].mxu0
        %1776 = vmatprep.mubr.f32.mxu0 0.0
        %1777 = vmatmul.mubr.f32.gmra.mrb[0].mxu0 %v1697
        %v1778 = vpop.f32.mrb[0].mxu0
        %v1779 = vadd.f32 %v795, %v1778
        %v1780 = vpop.f32.mrb[0].mxu0
        %1781 = vmatprep.mubr.f32.mxu0 0.0
        %1782 = vmatmul.mubr.f32.gmra.mrb[0].mxu0 %v1699
        %v1783 = vpop.f32.mrb[0].mxu0
        %v1784 = vadd.f32 %v795, %v1783
        %v1785 = vpop.f32.mrb[0].mxu0
        %1786 = vdwg.mxu0
        %vm1787 = vcmask 195584
        %v1788 = vsel %vm1787, %v1774, -inf
        %1789 = vmax.xlane.f32.xlu0 %v1788
        %v1790 = vpop.xlane.xlu0 %1789
        %v1791 = vsel %vm1787, %v1779, -inf
        %1792 = vmax.xlane.f32.xlu0 %v1791
        %v1793 = vpop.xlane.xlu0 %1792
        %v1794 = vsel %vm1787, %v1784, -inf
        %1795 = vmax.xlane.f32.xlu0 %v1794
        %v1796 = vpop.xlane.xlu0 %1795
        %v1797 = vsub.f32 %v1774, %v1790
        %v1798 = vsub.f32 %v1779, %v1793
        %v1799 = vsub.f32 %v1784, %v1796
        %v1800 = vmul.f32 %v1797, 1.442695
        %v1801 = vpow.pop %v1800
        %v1802 = vmul.f32 %v1798, 1.442695
        %v1803 = vpow.pop %v1802
        %v1804 = vmul.f32 %v1799, 1.442695
        %v1805 = vpow.pop %v1804
        %v1806 = vsel %vm1787, %v1801, 0.0
        %1807 = vadd.xlane.f32.xlu0 %v1806
        %v1808 = vpop.xlane.xlu0 %1807
        %v1809 = vsel %vm1787, %v1803, 0.0
        %1810 = vadd.xlane.f32.xlu0 %v1809
        %v1811 = vpop.xlane.xlu0 %1810
        %v1812 = vsel %vm1787, %v1805, 0.0
        %1813 = vadd.xlane.f32.xlu0 %v1812
        %v1814 = vpop.xlane.xlu0 %1813
        %v1815 = vrcp.pop %v1808
        %v1816 = vrcp.pop %v1811
        %v1817 = vrcp.pop %v1814
        %v1818 = vmul.f32 %v1801, %v1815
        %v1819 = vmul.f32 %v1803, %v1816
        %v1820 = vmul.f32 %v1805, %v1817
        %1821 = vrot.lane.b32.xlu0 %v1465, 96
        %v1822 = vpop.permute.xlu0 %1821
        %1823 = vrot.lane.b32.xlu0 %v1470, 96
        %v1824 = vpop.permute.xlu0 %1823
        %1825 = vrot.lane.b32.xlu0 %v1475, 96
        %v1826 = vpop.permute.xlu0 %1825
        %v1831 = vsel %vm1787, %v1818, 0
        %v1834 = vsel %vm1787, %v1819, 0
        %v1837 = vsel %vm1787, %v1820, 0
        %1839 = vmatprep.subr.mxu0 0.0
        %1840 = vmatpush1.msra.mxu0 %v1822
        %1841 = vmatprep.subr.mxu0 0.0
        %1842 = vmatpush1.msra.mxu0 %v1824
        %1843 = vmatprep.subr.mxu0 0.0
        %1844 = vmatpush1.msra.mxu0 %v1826
        %1845 = vmatprep.subr.mxu0 0.0
        %1846 = vmatpush1.msra.mxu0 0.0
        %1847 = vmatprep.subr.mxu0 0.0
        %1848 = vmatpush1.msra.mxu0 0.0
        %1849 = vmatprep.subr.mxu0 0.0
        %1850 = vmatpush1.msra.mxu0 0.0
        %1851 = vmatprep.subr.mxu0 0.0
        %1852 = vmatpush1.msra.mxu0 0.0
        %1853 = vmatprep.subr.mxu0 0.0
        %1854 = vmatpush1.msra.mxu0 0.0
        %1855 = vmatprep.subr.mxu0 0.0
        %1856 = vmatpush1.msra.mxu0 0.0
        %1857 = vmatprep.subr.mxu0 0.0
        %1858 = vmatpush1.msra.mxu0 0.0
        %1859 = vmatprep.subr.mxu0 0.0
        %1860 = vmatpush1.msra.mxu0 0.0
        %1861 = vmatprep.subr.mxu0 0.0
        %1862 = vmatpush1.msra.mxu0 0.0
        %1863 = vmatprep.subr.mxu0 0.0
        %1864 = vmatpush1.msra.mxu0 0.0
        %1865 = vmatprep.subr.mxu0 0.0
        %1866 = vmatpush1.msra.mxu0 0.0
        %1867 = vmatprep.subr.mxu0 0.0
        %1868 = vmatpush1.msra.mxu0 0.0
        %1869 = vmatprep.subr.mxu0 0.0
        %1870 = vmatpush1.msra.mxu0 0.0
        %1871 = vmatprep.subr.mxu0 0.0
        %1872 = vmatpush1.msra.mxu0 0.0
        %1873 = vmatprep.subr.mxu0 0.0
        %1874 = vmatpush1.msra.mxu0 0.0
        %1875 = vmatprep.subr.mxu0 0.0
        %1876 = vmatpush1.msra.mxu0 0.0
        %1877 = vmatprep.subr.mxu0 0.0
        %1878 = vmatpush1.msra.mxu0 0.0
        %1879 = vmatprep.subr.mxu0 0.0
        %1880 = vmatpush1.msra.mxu0 0.0
        %1881 = vmatprep.subr.mxu0 0.0
        %1882 = vmatpush1.msra.mxu0 0.0
        %1883 = vmatprep.subr.mxu0 0.0
        %1884 = vmatpush1.msra.mxu0 0.0
        %1885 = vmatprep.subr.mxu0 0.0
        %1886 = vmatpush1.msra.mxu0 0.0
        %1887 = vmatprep.subr.mxu0 0.0
        %1888 = vmatpush1.msra.mxu0 0.0
        %1889 = vmatprep.subr.mxu0 0.0
        %1890 = vmatpush1.msra.mxu0 0.0
        %1891 = vmatprep.subr.mxu0 0.0
        %1892 = vmatpush1.msra.mxu0 0.0
        %1893 = vmatprep.subr.mxu0 0.0
        %1894 = vmatpush1.msra.mxu0 0.0
        %1895 = vmatprep.subr.mxu0 0.0
        %1896 = vmatpush1.msra.mxu0 0.0
        %1897 = vmatprep.subr.mxu0 0.0
        %1898 = vmatpush1.msra.mxu0 0.0
        %1899 = vmatprep.subr.mxu0 0.0
        %1900 = vmatpush1.msra.mxu0 0.0
        %1901 = vmatprep.subr.mxu0 0.0
        %1902 = vmatpush1.msra.mxu0 0.0
        %1903 = vmatprep.mubr.f32.mxu0 0.0
        %1904 = vmatmul.mubr.f32.gmra.mrb[0].mxu0 %v1831
        %v1905 = vpop.f32.mrb[0].mxu0
        %v1906 = vadd.f32 0.0, %v1905
        %v1907 = vpop.f32.mrb[0].mxu0
        %1908 = vmatprep.mubr.f32.mxu0 0.0
        %1909 = vmatmul.mubr.f32.gmra.mrb[0].mxu0 %v1834
        %v1910 = vpop.f32.mrb[0].mxu0
        %v1911 = vadd.f32 0.0, %v1910
        %v1912 = vpop.f32.mrb[0].mxu0
        %1913 = vmatprep.mubr.f32.mxu0 0.0
        %1914 = vmatmul.mubr.f32.gmra.mrb[0].mxu0 %v1837
        %v1915 = vpop.f32.mrb[0].mxu0
        %v1916 = vadd.f32 0.0, %v1915
        %v1917 = vpop.f32.mrb[0].mxu0
        %1918 = vdwg.mxu0
        %v1919 = vld [vmem:[%s8] sm:$0xff]
        %1920 = vrot.lane.b32.xlu0 %v1465, 120
        %v1921 = vpop.permute.xlu0 %1920
        %1922 = vrot.lane.b32.xlu0 %v1470, 120
        %v1923 = vpop.permute.xlu0 %1922
        %1924 = vrot.lane.b32.xlu0 %v1475, 120
        %v1925 = vpop.permute.xlu0 %1924
        %1926 = vrot.lane.b32.xlu0 %v1465, 104
        %v1927 = vpop.permute.xlu0 %1926
        %1928 = vrot.lane.b32.xlu0 %v1470, 104
        %v1929 = vpop.permute.xlu0 %1928
        %1930 = vrot.lane.b32.xlu0 %v1475, 104
        %v1931 = vpop.permute.xlu0 %1930
        %v1932 = vsel %vm988, %v1921, 0
        %v1934 = vsel %vm988, %v1923, 0
        %v1936 = vsel %vm988, %v1925, 0
        %v1938 = vsel %vm988, %v1927, 0
        %v1940 = vsel %vm988, %v1929, 0
        %v1942 = vsel %vm988, %v1931, 0
        %1944 = vmatprep.subr.mxu0 0.0
        %1945 = vmatpush1.xpose.msra.mxu0 %v1938
        %1946 = vmatprep.subr.mxu0 0.0
        %1947 = vmatpush1.xpose.msra.mxu0 %v1940
        %1948 = vmatprep.subr.mxu0 0.0
        %1949 = vmatpush1.xpose.msra.mxu0 %v1942
        %1950 = vmatprep.subr.mxu0 0.0
        %1951 = vmatpush1.xpose.msra.mxu0 0.0
        %1952 = vmatprep.subr.mxu0 0.0
        %1953 = vmatpush1.xpose.msra.mxu0 0.0
        %1954 = vmatprep.subr.mxu0 0.0
        %1955 = vmatpush1.xpose.msra.mxu0 0.0
        %1956 = vmatprep.subr.mxu0 0.0
        %1957 = vmatpush1.xpose.msra.mxu0 0.0
        %1958 = vmatprep.subr.mxu0 0.0
        %1959 = vmatpush1.xpose.msra.mxu0 0.0
        %1960 = vmatprep.subr.mxu0 0.0
        %1961 = vmatpush1.xpose.msra.mxu0 0.0
        %1962 = vmatprep.subr.mxu0 0.0
        %1963 = vmatpush1.xpose.msra.mxu0 0.0
        %1964 = vmatprep.subr.mxu0 0.0
        %1965 = vmatpush1.xpose.msra.mxu0 0.0
        %1966 = vmatprep.subr.mxu0 0.0
        %1967 = vmatpush1.xpose.msra.mxu0 0.0
        %1968 = vmatprep.subr.mxu0 0.0
        %1969 = vmatpush1.xpose.msra.mxu0 0.0
        %1970 = vmatprep.subr.mxu0 0.0
        %1971 = vmatpush1.xpose.msra.mxu0 0.0
        %1972 = vmatprep.subr.mxu0 0.0
        %1973 = vmatpush1.xpose.msra.mxu0 0.0
        %1974 = vmatprep.subr.mxu0 0.0
        %1975 = vmatpush1.xpose.msra.mxu0 0.0
        %1976 = vmatprep.subr.mxu0 0.0
        %1977 = vmatpush1.xpose.msra.mxu0 0.0
        %1978 = vmatprep.subr.mxu0 0.0
        %1979 = vmatpush1.xpose.msra.mxu0 0.0
        %1980 = vmatprep.subr.mxu0 0.0
        %1981 = vmatpush1.xpose.msra.mxu0 0.0
        %1982 = vmatprep.subr.mxu0 0.0
        %1983 = vmatpush1.xpose.msra.mxu0 0.0
        %1984 = vmatprep.subr.mxu0 0.0
        %1985 = vmatpush1.xpose.msra.mxu0 0.0
        %1986 = vmatprep.subr.mxu0 0.0
        %1987 = vmatpush1.xpose.msra.mxu0 0.0
        %1988 = vmatprep.subr.mxu0 0.0
        %1989 = vmatpush1.xpose.msra.mxu0 0.0
        %1990 = vmatprep.subr.mxu0 0.0
        %1991 = vmatpush1.xpose.msra.mxu0 0.0
        %1992 = vmatprep.subr.mxu0 0.0
        %1993 = vmatpush1.xpose.msra.mxu0 0.0
        %1994 = vmatprep.subr.mxu0 0.0
        %1995 = vmatpush1.xpose.msra.mxu0 0.0
        %1996 = vmatprep.subr.mxu0 0.0
        %1997 = vmatpush1.xpose.msra.mxu0 0.0
        %1998 = vmatprep.subr.mxu0 0.0
        %1999 = vmatpush1.xpose.msra.mxu0 0.0
        %2000 = vmatprep.subr.mxu0 0.0
        %2001 = vmatpush1.xpose.msra.mxu0 0.0
        %2002 = vmatprep.subr.mxu0 0.0
        %2003 = vmatpush1.xpose.msra.mxu0 0.0
        %2004 = vmatprep.subr.mxu0 0.0
        %2005 = vmatpush1.xpose.msra.mxu0 0.0
        %2006 = vmatprep.subr.mxu0 0.0
        %2007 = vmatpush1.xpose.msra.mxu0 0.0
        %2008 = vmatprep.mubr.f32.mxu0 0.0
        %2009 = vmatmul.mubr.f32.gmra.mrb[0].mxu0 %v1932
        %v2010 = vpop.f32.mrb[0].mxu0
        %v2011 = vadd.f32 %v795, %v2010
        %v2012 = vpop.f32.mrb[0].mxu0
        %2013 = vmatprep.mubr.f32.mxu0 0.0
        %2014 = vmatmul.mubr.f32.gmra.mrb[0].mxu0 %v1934
        %v2015 = vpop.f32.mrb[0].mxu0
        %v2016 = vadd.f32 %v795, %v2015
        %v2017 = vpop.f32.mrb[0].mxu0
        %2018 = vmatprep.mubr.f32.mxu0 0.0
        %2019 = vmatmul.mubr.f32.gmra.mrb[0].mxu0 %v1936
        %v2020 = vpop.f32.mrb[0].mxu0
        %v2021 = vadd.f32 %v795, %v2020
        %v2022 = vpop.f32.mrb[0].mxu0
        %2023 = vdwg.mxu0
        %v2024 = vsel %vm1787, %v2011, -inf
        %2025 = vmax.xlane.f32.xlu0 %v2024
        %v2026 = vpop.xlane.xlu0 %2025
        %v2027 = vsel %vm1787, %v2016, -inf
        %2028 = vmax.xlane.f32.xlu0 %v2027
        %v2029 = vpop.xlane.xlu0 %2028
        %v2030 = vsel %vm1787, %v2021, -inf
        %2031 = vmax.xlane.f32.xlu0 %v2030
        %v2032 = vpop.xlane.xlu0 %2031
        %v2033 = vsub.f32 %v2011, %v2026
        %v2034 = vsub.f32 %v2016, %v2029
        %v2035 = vsub.f32 %v2021, %v2032
        %v2036 = vmul.f32 %v2033, 1.442695
        %v2037 = vpow.pop %v2036
        %v2038 = vmul.f32 %v2034, 1.442695
        %v2039 = vpow.pop %v2038
        %v2040 = vmul.f32 %v2035, 1.442695
        %v2041 = vpow.pop %v2040
        %v2042 = vsel %vm1787, %v2037, 0.0
        %2043 = vadd.xlane.f32.xlu0 %v2042
        %v2044 = vpop.xlane.xlu0 %2043
        %v2045 = vsel %vm1787, %v2039, 0.0
        %2046 = vadd.xlane.f32.xlu0 %v2045
        %v2047 = vpop.xlane.xlu0 %2046
        %v2048 = vsel %vm1787, %v2041, 0.0
        %2049 = vadd.xlane.f32.xlu0 %v2048
        %v2050 = vpop.xlane.xlu0 %2049
        %v2051 = vrcp.pop %v2044
        %v2052 = vrcp.pop %v2047
        %v2053 = vrcp.pop %v2050
        %v2054 = vmul.f32 %v2037, %v2051
        %v2055 = vmul.f32 %v2039, %v2052
        %v2056 = vmul.f32 %v2041, %v2053
        %2057 = vrot.lane.b32.xlu0 %v1465, 88
        %v2058 = vpop.permute.xlu0 %2057
        %2059 = vrot.lane.b32.xlu0 %v1470, 88
        %v2060 = vpop.permute.xlu0 %2059
        %2061 = vrot.lane.b32.xlu0 %v1475, 88
        %v2062 = vpop.permute.xlu0 %2061
        %v2067 = vsel %vm1787, %v2054, 0
        %v2070 = vsel %vm1787, %v2055, 0
        %v2073 = vsel %vm1787, %v2056, 0
        %2075 = vmatprep.subr.mxu0 0.0
        %2076 = vmatpush1.msra.mxu0 %v2058
        %2077 = vmatprep.subr.mxu0 0.0
        %2078 = vmatpush1.msra.mxu0 %v2060
        %2079 = vmatprep.subr.mxu0 0.0
        %2080 = vmatpush1.msra.mxu0 %v2062
        %2081 = vmatprep.subr.mxu0 0.0
        %2082 = vmatpush1.msra.mxu0 0.0
        %2083 = vmatprep.subr.mxu0 0.0
        %2084 = vmatpush1.msra.mxu0 0.0
        %2085 = vmatprep.subr.mxu0 0.0
        %2086 = vmatpush1.msra.mxu0 0.0
        %2087 = vmatprep.subr.mxu0 0.0
        %2088 = vmatpush1.msra.mxu0 0.0
        %2089 = vmatprep.subr.mxu0 0.0
        %2090 = vmatpush1.msra.mxu0 0.0
        %2091 = vmatprep.subr.mxu0 0.0
        %2092 = vmatpush1.msra.mxu0 0.0
        %2093 = vmatprep.subr.mxu0 0.0
        %2094 = vmatpush1.msra.mxu0 0.0
        %2095 = vmatprep.subr.mxu0 0.0
        %2096 = vmatpush1.msra.mxu0 0.0
        %2097 = vmatprep.subr.mxu0 0.0
        %2098 = vmatpush1.msra.mxu0 0.0
        %2099 = vmatprep.subr.mxu0 0.0
        %2100 = vmatpush1.msra.mxu0 0.0
        %2101 = vmatprep.subr.mxu0 0.0
        %2102 = vmatpush1.msra.mxu0 0.0
        %2103 = vmatprep.subr.mxu0 0.0
        %2104 = vmatpush1.msra.mxu0 0.0
        %2105 = vmatprep.subr.mxu0 0.0
        %2106 = vmatpush1.msra.mxu0 0.0
        %2107 = vmatprep.subr.mxu0 0.0
        %2108 = vmatpush1.msra.mxu0 0.0
        %2109 = vmatprep.subr.mxu0 0.0
        %2110 = vmatpush1.msra.mxu0 0.0
        %2111 = vmatprep.subr.mxu0 0.0
        %2112 = vmatpush1.msra.mxu0 0.0
        %2113 = vmatprep.subr.mxu0 0.0
        %2114 = vmatpush1.msra.mxu0 0.0
        %2115 = vmatprep.subr.mxu0 0.0
        %2116 = vmatpush1.msra.mxu0 0.0
        %2117 = vmatprep.subr.mxu0 0.0
        %2118 = vmatpush1.msra.mxu0 0.0
        %2119 = vmatprep.subr.mxu0 0.0
        %2120 = vmatpush1.msra.mxu0 0.0
        %2121 = vmatprep.subr.mxu0 0.0
        %2122 = vmatpush1.msra.mxu0 0.0
        %2123 = vmatprep.subr.mxu0 0.0
        %2124 = vmatpush1.msra.mxu0 0.0
        %2125 = vmatprep.subr.mxu0 0.0
        %2126 = vmatpush1.msra.mxu0 0.0
        %2127 = vmatprep.subr.mxu0 0.0
        %2128 = vmatpush1.msra.mxu0 0.0
        %2129 = vmatprep.subr.mxu0 0.0
        %2130 = vmatpush1.msra.mxu0 0.0
        %2131 = vmatprep.subr.mxu0 0.0
        %2132 = vmatpush1.msra.mxu0 0.0
        %2133 = vmatprep.subr.mxu0 0.0
        %2134 = vmatpush1.msra.mxu0 0.0
        %2135 = vmatprep.subr.mxu0 0.0
        %2136 = vmatpush1.msra.mxu0 0.0
        %2137 = vmatprep.subr.mxu0 0.0
        %2138 = vmatpush1.msra.mxu0 0.0
        %2139 = vmatprep.mubr.f32.mxu0 0.0
        %2140 = vmatmul.mubr.f32.gmra.mrb[0].mxu0 %v2067
        %v2141 = vpop.f32.mrb[0].mxu0
        %v2142 = vadd.f32 0.0, %v2141
        %v2143 = vpop.f32.mrb[0].mxu0
        %2144 = vmatprep.mubr.f32.mxu0 0.0
        %2145 = vmatmul.mubr.f32.gmra.mrb[0].mxu0 %v2070
        %v2146 = vpop.f32.mrb[0].mxu0
        %v2147 = vadd.f32 0.0, %v2146
        %v2148 = vpop.f32.mrb[0].mxu0
        %2149 = vmatprep.mubr.f32.mxu0 0.0
        %2150 = vmatmul.mubr.f32.gmra.mrb[0].mxu0 %v2073
        %v2151 = vpop.f32.mrb[0].mxu0
        %v2152 = vadd.f32 0.0, %v2151
        %v2153 = vpop.f32.mrb[0].mxu0
        %2154 = vdwg.mxu0
        %s2155 = scalar_lea.vmem %s8, 8
        %v2156 = vld [vmem:[%s2155] sm:$0xff]
        %v2158 = vsel %vm988, %v2142, 0
        %v2161 = vsel %vm988, %v2147, 0
        %v2164 = vsel %vm988, %v2152, 0
        %2166 = vmatprep.subr.mxu0 0.0
        %2167 = vmatpush1.msra.mxu0 %v2156
        %2168 = vmatprep.subr.mxu0 0.0
        %2169 = vmatpush1.msra.mxu0 0.0
        %2170 = vmatprep.subr.mxu0 0.0
        %2171 = vmatpush1.msra.mxu0 0.0
        %2172 = vmatprep.subr.mxu0 0.0
        %2173 = vmatpush1.msra.mxu0 0.0
        %2174 = vmatprep.subr.mxu0 0.0
        %2175 = vmatpush1.msra.mxu0 0.0
        %2176 = vmatprep.subr.mxu0 0.0
        %2177 = vmatpush1.msra.mxu0 0.0
        %2178 = vmatprep.subr.mxu0 0.0
        %2179 = vmatpush1.msra.mxu0 0.0
        %2180 = vmatprep.subr.mxu0 0.0
        %2181 = vmatpush1.msra.mxu0 0.0
        %2182 = vmatprep.subr.mxu0 0.0
        %2183 = vmatpush1.msra.mxu0 0.0
        %2184 = vmatprep.subr.mxu0 0.0
        %2185 = vmatpush1.msra.mxu0 0.0
        %2186 = vmatprep.subr.mxu0 0.0
        %2187 = vmatpush1.msra.mxu0 0.0
        %2188 = vmatprep.subr.mxu0 0.0
        %2189 = vmatpush1.msra.mxu0 0.0
        %2190 = vmatprep.subr.mxu0 0.0
        %2191 = vmatpush1.msra.mxu0 0.0
        %2192 = vmatprep.subr.mxu0 0.0
        %2193 = vmatpush1.msra.mxu0 0.0
        %2194 = vmatprep.subr.mxu0 0.0
        %2195 = vmatpush1.msra.mxu0 0.0
        %2196 = vmatprep.subr.mxu0 0.0
        %2197 = vmatpush1.msra.mxu0 0.0
        %2198 = vmatprep.subr.mxu0 0.0
        %2199 = vmatpush1.msra.mxu0 0.0
        %2200 = vmatprep.subr.mxu0 0.0
        %2201 = vmatpush1.msra.mxu0 0.0
        %2202 = vmatprep.subr.mxu0 0.0
        %2203 = vmatpush1.msra.mxu0 0.0
        %2204 = vmatprep.subr.mxu0 0.0
        %2205 = vmatpush1.msra.mxu0 0.0
        %2206 = vmatprep.subr.mxu0 0.0
        %2207 = vmatpush1.msra.mxu0 0.0
        %2208 = vmatprep.subr.mxu0 0.0
        %2209 = vmatpush1.msra.mxu0 0.0
        %2210 = vmatprep.subr.mxu0 0.0
        %2211 = vmatpush1.msra.mxu0 0.0
        %2212 = vmatprep.subr.mxu0 0.0
        %2213 = vmatpush1.msra.mxu0 0.0
        %2214 = vmatprep.subr.mxu0 0.0
        %2215 = vmatpush1.msra.mxu0 0.0
        %2216 = vmatprep.subr.mxu0 0.0
        %2217 = vmatpush1.msra.mxu0 0.0
        %2218 = vmatprep.subr.mxu0 0.0
        %2219 = vmatpush1.msra.mxu0 0.0
        %2220 = vmatprep.subr.mxu0 0.0
        %2221 = vmatpush1.msra.mxu0 0.0
        %2222 = vmatprep.subr.mxu0 0.0
        %2223 = vmatpush1.msra.mxu0 0.0
        %2224 = vmatprep.subr.mxu0 0.0
        %2225 = vmatpush1.msra.mxu0 0.0
        %2226 = vmatprep.subr.mxu0 0.0
        %2227 = vmatpush1.msra.mxu0 0.0
        %2228 = vmatprep.subr.mxu0 0.0
        %2229 = vmatpush1.msra.mxu0 0.0
        %2230 = vmatprep.mubr.f32.mxu0 0.0
        %2231 = vmatmul.mubr.f32.gmra.mrb[0].mxu0 %v2158
        %v2232 = vpop.f32.mrb[0].mxu0
        %v2233 = vadd.f32 0.0, %v2232
        %v2234 = vpop.f32.mrb[0].mxu0
        %2235 = vmatprep.mubr.f32.mxu0 0.0
        %2236 = vmatmul.mubr.f32.gmra.mrb[0].mxu0 %v2161
        %v2237 = vpop.f32.mrb[0].mxu0
        %v2238 = vadd.f32 0.0, %v2237
        %v2239 = vpop.f32.mrb[0].mxu0
        %2240 = vmatprep.mubr.f32.mxu0 0.0
        %2241 = vmatmul.mubr.f32.gmra.mrb[0].mxu0 %v2164
        %v2242 = vpop.f32.mrb[0].mxu0
        %v2243 = vadd.f32 0.0, %v2242
        %v2244 = vpop.f32.mrb[0].mxu0
        %2245 = vdwg.mxu0
        %v2247 = vsel %vm988, %v1906, 0
        %v2250 = vsel %vm988, %v1911, 0
        %v2253 = vsel %vm988, %v1916, 0
        %2255 = vmatprep.subr.mxu0 0.0
        %2256 = vmatpush1.msra.mxu0 %v1919
        %2257 = vmatprep.subr.mxu0 0.0
        %2258 = vmatpush1.msra.mxu0 0.0
        %2259 = vmatprep.subr.mxu0 0.0
        %2260 = vmatpush1.msra.mxu0 0.0
        %2261 = vmatprep.subr.mxu0 0.0
        %2262 = vmatpush1.msra.mxu0 0.0
        %2263 = vmatprep.subr.mxu0 0.0
        %2264 = vmatpush1.msra.mxu0 0.0
        %2265 = vmatprep.subr.mxu0 0.0
        %2266 = vmatpush1.msra.mxu0 0.0
        %2267 = vmatprep.subr.mxu0 0.0
        %2268 = vmatpush1.msra.mxu0 0.0
        %2269 = vmatprep.subr.mxu0 0.0
        %2270 = vmatpush1.msra.mxu0 0.0
        %2271 = vmatprep.subr.mxu0 0.0
        %2272 = vmatpush1.msra.mxu0 0.0
        %2273 = vmatprep.subr.mxu0 0.0
        %2274 = vmatpush1.msra.mxu0 0.0
        %2275 = vmatprep.subr.mxu0 0.0
        %2276 = vmatpush1.msra.mxu0 0.0
        %2277 = vmatprep.subr.mxu0 0.0
        %2278 = vmatpush1.msra.mxu0 0.0
        %2279 = vmatprep.subr.mxu0 0.0
        %2280 = vmatpush1.msra.mxu0 0.0
        %2281 = vmatprep.subr.mxu0 0.0
        %2282 = vmatpush1.msra.mxu0 0.0
        %2283 = vmatprep.subr.mxu0 0.0
        %2284 = vmatpush1.msra.mxu0 0.0
        %2285 = vmatprep.subr.mxu0 0.0
        %2286 = vmatpush1.msra.mxu0 0.0
        %2287 = vmatprep.subr.mxu0 0.0
        %2288 = vmatpush1.msra.mxu0 0.0
        %2289 = vmatprep.subr.mxu0 0.0
        %2290 = vmatpush1.msra.mxu0 0.0
        %2291 = vmatprep.subr.mxu0 0.0
        %2292 = vmatpush1.msra.mxu0 0.0
        %2293 = vmatprep.subr.mxu0 0.0
        %2294 = vmatpush1.msra.mxu0 0.0
        %2295 = vmatprep.subr.mxu0 0.0
        %2296 = vmatpush1.msra.mxu0 0.0
        %2297 = vmatprep.subr.mxu0 0.0
        %2298 = vmatpush1.msra.mxu0 0.0
        %2299 = vmatprep.subr.mxu0 0.0
        %2300 = vmatpush1.msra.mxu0 0.0
        %2301 = vmatprep.subr.mxu0 0.0
        %2302 = vmatpush1.msra.mxu0 0.0
        %2303 = vmatprep.subr.mxu0 0.0
        %2304 = vmatpush1.msra.mxu0 0.0
        %2305 = vmatprep.subr.mxu0 0.0
        %2306 = vmatpush1.msra.mxu0 0.0
        %2307 = vmatprep.subr.mxu0 0.0
        %2308 = vmatpush1.msra.mxu0 0.0
        %2309 = vmatprep.subr.mxu0 0.0
        %2310 = vmatpush1.msra.mxu0 0.0
        %2311 = vmatprep.subr.mxu0 0.0
        %2312 = vmatpush1.msra.mxu0 0.0
        %2313 = vmatprep.subr.mxu0 0.0
        %2314 = vmatpush1.msra.mxu0 0.0
        %2315 = vmatprep.subr.mxu0 0.0
        %2316 = vmatpush1.msra.mxu0 0.0
        %2317 = vmatprep.subr.mxu0 0.0
        %2318 = vmatpush1.msra.mxu0 0.0
        %2319 = vmatprep.mubr.f32.mxu0 0.0
        %2320 = vmatmul.mubr.f32.gmra.mrb[0].mxu0 %v2247
        %v2321 = vpop.f32.mrb[0].mxu0
        %v2322 = vadd.f32 %v2233, %v2321
        %v2323 = vpop.f32.mrb[0].mxu0
        %2324 = vmatprep.mubr.f32.mxu0 0.0
        %2325 = vmatmul.mubr.f32.gmra.mrb[0].mxu0 %v2250
        %v2326 = vpop.f32.mrb[0].mxu0
        %v2327 = vadd.f32 %v2238, %v2326
        %v2328 = vpop.f32.mrb[0].mxu0
        %2329 = vmatprep.mubr.f32.mxu0 0.0
        %2330 = vmatmul.mubr.f32.gmra.mrb[0].mxu0 %v2253
        %v2331 = vpop.f32.mrb[0].mxu0
        %v2332 = vadd.f32 %v2243, %v2331
        %v2333 = vpop.f32.mrb[0].mxu0
        %2334 = vdwg.mxu0
        %2335 = vrot.lane.b32.xlu0 %v1465, 80
        %v2336 = vpop.permute.xlu0 %2335
        %2337 = vrot.lane.b32.xlu0 %v1470, 80
        %v2338 = vpop.permute.xlu0 %2337
        %2339 = vrot.lane.b32.xlu0 %v1475, 80
        %v2340 = vpop.permute.xlu0 %2339
        %2341 = vrot.lane.b32.xlu0 %v1465, 64
        %v2342 = vpop.permute.xlu0 %2341
        %2343 = vrot.lane.b32.xlu0 %v1470, 64
        %v2344 = vpop.permute.xlu0 %2343
        %2345 = vrot.lane.b32.xlu0 %v1475, 64
        %v2346 = vpop.permute.xlu0 %2345
        %v2347 = vsel %vm988, %v2336, 0
        %v2349 = vsel %vm988, %v2338, 0
        %v2351 = vsel %vm988, %v2340, 0
        %v2353 = vsel %vm988, %v2342, 0
        %v2355 = vsel %vm988, %v2344, 0
        %v2357 = vsel %vm988, %v2346, 0
        %2359 = vmatprep.subr.mxu0 0.0
        %2360 = vmatpush1.xpose.msra.mxu0 %v2353
        %2361 = vmatprep.subr.mxu0 0.0
        %2362 = vmatpush1.xpose.msra.mxu0 %v2355
        %2363 = vmatprep.subr.mxu0 0.0
        %2364 = vmatpush1.xpose.msra.mxu0 %v2357
        %2365 = vmatprep.subr.mxu0 0.0
        %2366 = vmatpush1.xpose.msra.mxu0 0.0
        %2367 = vmatprep.subr.mxu0 0.0
        %2368 = vmatpush1.xpose.msra.mxu0 0.0
        %2369 = vmatprep.subr.mxu0 0.0
        %2370 = vmatpush1.xpose.msra.mxu0 0.0
        %2371 = vmatprep.subr.mxu0 0.0
        %2372 = vmatpush1.xpose.msra.mxu0 0.0
        %2373 = vmatprep.subr.mxu0 0.0
        %2374 = vmatpush1.xpose.msra.mxu0 0.0
        %2375 = vmatprep.subr.mxu0 0.0
        %2376 = vmatpush1.xpose.msra.mxu0 0.0
        %2377 = vmatprep.subr.mxu0 0.0
        %2378 = vmatpush1.xpose.msra.mxu0 0.0
        %2379 = vmatprep.subr.mxu0 0.0
        %2380 = vmatpush1.xpose.msra.mxu0 0.0
        %2381 = vmatprep.subr.mxu0 0.0
        %2382 = vmatpush1.xpose.msra.mxu0 0.0
        %2383 = vmatprep.subr.mxu0 0.0
        %2384 = vmatpush1.xpose.msra.mxu0 0.0
        %2385 = vmatprep.subr.mxu0 0.0
        %2386 = vmatpush1.xpose.msra.mxu0 0.0
        %2387 = vmatprep.subr.mxu0 0.0
        %2388 = vmatpush1.xpose.msra.mxu0 0.0
        %2389 = vmatprep.subr.mxu0 0.0
        %2390 = vmatpush1.xpose.msra.mxu0 0.0
        %2391 = vmatprep.subr.mxu0 0.0
        %2392 = vmatpush1.xpose.msra.mxu0 0.0
        %2393 = vmatprep.subr.mxu0 0.0
        %2394 = vmatpush1.xpose.msra.mxu0 0.0
        %2395 = vmatprep.subr.mxu0 0.0
        %2396 = vmatpush1.xpose.msra.mxu0 0.0
        %2397 = vmatprep.subr.mxu0 0.0
        %2398 = vmatpush1.xpose.msra.mxu0 0.0
        %2399 = vmatprep.subr.mxu0 0.0
        %2400 = vmatpush1.xpose.msra.mxu0 0.0
        %2401 = vmatprep.subr.mxu0 0.0
        %2402 = vmatpush1.xpose.msra.mxu0 0.0
        %2403 = vmatprep.subr.mxu0 0.0
        %2404 = vmatpush1.xpose.msra.mxu0 0.0
        %2405 = vmatprep.subr.mxu0 0.0
        %2406 = vmatpush1.xpose.msra.mxu0 0.0
        %2407 = vmatprep.subr.mxu0 0.0
        %2408 = vmatpush1.xpose.msra.mxu0 0.0
        %2409 = vmatprep.subr.mxu0 0.0
        %2410 = vmatpush1.xpose.msra.mxu0 0.0
        %2411 = vmatprep.subr.mxu0 0.0
        %2412 = vmatpush1.xpose.msra.mxu0 0.0
        %2413 = vmatprep.subr.mxu0 0.0
        %2414 = vmatpush1.xpose.msra.mxu0 0.0
        %2415 = vmatprep.subr.mxu0 0.0
        %2416 = vmatpush1.xpose.msra.mxu0 0.0
        %2417 = vmatprep.subr.mxu0 0.0
        %2418 = vmatpush1.xpose.msra.mxu0 0.0
        %2419 = vmatprep.subr.mxu0 0.0
        %2420 = vmatpush1.xpose.msra.mxu0 0.0
        %2421 = vmatprep.subr.mxu0 0.0
        %2422 = vmatpush1.xpose.msra.mxu0 0.0
        %2423 = vmatprep.mubr.f32.mxu0 0.0
        %2424 = vmatmul.mubr.f32.gmra.mrb[0].mxu0 %v2347
        %v2425 = vpop.f32.mrb[0].mxu0
        %v2426 = vadd.f32 %v795, %v2425
        %v2427 = vpop.f32.mrb[0].mxu0
        %2428 = vmatprep.mubr.f32.mxu0 0.0
        %2429 = vmatmul.mubr.f32.gmra.mrb[0].mxu0 %v2349
        %v2430 = vpop.f32.mrb[0].mxu0
        %v2431 = vadd.f32 %v795, %v2430
        %v2432 = vpop.f32.mrb[0].mxu0
        %2433 = vmatprep.mubr.f32.mxu0 0.0
        %2434 = vmatmul.mubr.f32.gmra.mrb[0].mxu0 %v2351
        %v2435 = vpop.f32.mrb[0].mxu0
        %v2436 = vadd.f32 %v795, %v2435
        %v2437 = vpop.f32.mrb[0].mxu0
        %2438 = vdwg.mxu0
        %v2439 = vsel %vm1787, %v2426, -inf
        %2440 = vmax.xlane.f32.xlu0 %v2439
        %v2441 = vpop.xlane.xlu0 %2440
        %v2442 = vsel %vm1787, %v2431, -inf
        %2443 = vmax.xlane.f32.xlu0 %v2442
        %v2444 = vpop.xlane.xlu0 %2443
        %v2445 = vsel %vm1787, %v2436, -inf
        %2446 = vmax.xlane.f32.xlu0 %v2445
        %v2447 = vpop.xlane.xlu0 %2446
        %v2448 = vsub.f32 %v2426, %v2441
        %v2449 = vsub.f32 %v2431, %v2444
        %v2450 = vsub.f32 %v2436, %v2447
        %v2451 = vmul.f32 %v2448, 1.442695
        %v2452 = vpow.pop %v2451
        %v2453 = vmul.f32 %v2449, 1.442695
        %v2454 = vpow.pop %v2453
        %v2455 = vmul.f32 %v2450, 1.442695
        %v2456 = vpow.pop %v2455
        %v2457 = vsel %vm1787, %v2452, 0.0
        %2458 = vadd.xlane.f32.xlu0 %v2457
        %v2459 = vpop.xlane.xlu0 %2458
        %v2460 = vsel %vm1787, %v2454, 0.0
        %2461 = vadd.xlane.f32.xlu0 %v2460
        %v2462 = vpop.xlane.xlu0 %2461
        %v2463 = vsel %vm1787, %v2456, 0.0
        %2464 = vadd.xlane.f32.xlu0 %v2463
        %v2465 = vpop.xlane.xlu0 %2464
        %v2466 = vrcp.pop %v2459
        %v2467 = vrcp.pop %v2462
        %v2468 = vrcp.pop %v2465
        %v2469 = vmul.f32 %v2452, %v2466
        %v2470 = vmul.f32 %v2454, %v2467
        %v2471 = vmul.f32 %v2456, %v2468
        %v2473 = vsel %vm1787, %v2469, 0
        %v2476 = vsel %vm1787, %v2470, 0
        %v2479 = vsel %vm1787, %v2471, 0
        %2481 = vmatprep.subr.mxu0 0.0
        %2482 = vmatpush1.msra.mxu0 %v1319
        %2483 = vmatprep.subr.mxu0 0.0
        %2484 = vmatpush1.msra.mxu0 %v1324
        %2485 = vmatprep.subr.mxu0 0.0
        %2486 = vmatpush1.msra.mxu0 %v1329
        %2487 = vmatprep.subr.mxu0 0.0
        %2488 = vmatpush1.msra.mxu0 0.0
        %2489 = vmatprep.subr.mxu0 0.0
        %2490 = vmatpush1.msra.mxu0 0.0
        %2491 = vmatprep.subr.mxu0 0.0
        %2492 = vmatpush1.msra.mxu0 0.0
        %2493 = vmatprep.subr.mxu0 0.0
        %2494 = vmatpush1.msra.mxu0 0.0
        %2495 = vmatprep.subr.mxu0 0.0
        %2496 = vmatpush1.msra.mxu0 0.0
        %2497 = vmatprep.subr.mxu0 0.0
        %2498 = vmatpush1.msra.mxu0 0.0
        %2499 = vmatprep.subr.mxu0 0.0
        %2500 = vmatpush1.msra.mxu0 0.0
        %2501 = vmatprep.subr.mxu0 0.0
        %2502 = vmatpush1.msra.mxu0 0.0
        %2503 = vmatprep.subr.mxu0 0.0
        %2504 = vmatpush1.msra.mxu0 0.0
        %2505 = vmatprep.subr.mxu0 0.0
        %2506 = vmatpush1.msra.mxu0 0.0
        %2507 = vmatprep.subr.mxu0 0.0
        %2508 = vmatpush1.msra.mxu0 0.0
        %2509 = vmatprep.subr.mxu0 0.0
        %2510 = vmatpush1.msra.mxu0 0.0
        %2511 = vmatprep.subr.mxu0 0.0
        %2512 = vmatpush1.msra.mxu0 0.0
        %2513 = vmatprep.subr.mxu0 0.0
        %2514 = vmatpush1.msra.mxu0 0.0
        %2515 = vmatprep.subr.mxu0 0.0
        %2516 = vmatpush1.msra.mxu0 0.0
        %2517 = vmatprep.subr.mxu0 0.0
        %2518 = vmatpush1.msra.mxu0 0.0
        %2519 = vmatprep.subr.mxu0 0.0
        %2520 = vmatpush1.msra.mxu0 0.0
        %2521 = vmatprep.subr.mxu0 0.0
        %2522 = vmatpush1.msra.mxu0 0.0
        %2523 = vmatprep.subr.mxu0 0.0
        %2524 = vmatpush1.msra.mxu0 0.0
        %2525 = vmatprep.subr.mxu0 0.0
        %2526 = vmatpush1.msra.mxu0 0.0
        %2527 = vmatprep.subr.mxu0 0.0
        %2528 = vmatpush1.msra.mxu0 0.0
        %2529 = vmatprep.subr.mxu0 0.0
        %2530 = vmatpush1.msra.mxu0 0.0
        %2531 = vmatprep.subr.mxu0 0.0
        %2532 = vmatpush1.msra.mxu0 0.0
        %2533 = vmatprep.subr.mxu0 0.0
        %2534 = vmatpush1.msra.mxu0 0.0
        %2535 = vmatprep.subr.mxu0 0.0
        %2536 = vmatpush1.msra.mxu0 0.0
        %2537 = vmatprep.subr.mxu0 0.0
        %2538 = vmatpush1.msra.mxu0 0.0
        %2539 = vmatprep.subr.mxu0 0.0
        %2540 = vmatpush1.msra.mxu0 0.0
        %2541 = vmatprep.subr.mxu0 0.0
        %2542 = vmatpush1.msra.mxu0 0.0
        %2543 = vmatprep.subr.mxu0 0.0
        %2544 = vmatpush1.msra.mxu0 0.0
        %2545 = vmatprep.mubr.f32.mxu0 0.0
        %2546 = vmatmul.mubr.f32.gmra.mrb[0].mxu0 %v2473
        %v2547 = vpop.f32.mrb[0].mxu0
        %v2548 = vadd.f32 0.0, %v2547
        %v2549 = vpop.f32.mrb[0].mxu0
        %2550 = vmatprep.mubr.f32.mxu0 0.0
        %2551 = vmatmul.mubr.f32.gmra.mrb[0].mxu0 %v2476
        %v2552 = vpop.f32.mrb[0].mxu0
        %v2553 = vadd.f32 0.0, %v2552
        %v2554 = vpop.f32.mrb[0].mxu0
        %2555 = vmatprep.mubr.f32.mxu0 0.0
        %2556 = vmatmul.mubr.f32.gmra.mrb[0].mxu0 %v2479
        %v2557 = vpop.f32.mrb[0].mxu0
        %v2558 = vadd.f32 0.0, %v2557
        %v2559 = vpop.f32.mrb[0].mxu0
        %2560 = vdwg.mxu0
        %s2561 = scalar_lea.vmem %s8, 16
        %v2562 = vld [vmem:[%s2561] sm:$0xff]
        %v2564 = vsel %vm988, %v2548, 0
        %v2567 = vsel %vm988, %v2553, 0
        %v2570 = vsel %vm988, %v2558, 0
        %2572 = vmatprep.subr.mxu0 0.0
        %2573 = vmatpush1.msra.mxu0 %v2562
        %2574 = vmatprep.subr.mxu0 0.0
        %2575 = vmatpush1.msra.mxu0 0.0
        %2576 = vmatprep.subr.mxu0 0.0
        %2577 = vmatpush1.msra.mxu0 0.0
        %2578 = vmatprep.subr.mxu0 0.0
        %2579 = vmatpush1.msra.mxu0 0.0
        %2580 = vmatprep.subr.mxu0 0.0
        %2581 = vmatpush1.msra.mxu0 0.0
        %2582 = vmatprep.subr.mxu0 0.0
        %2583 = vmatpush1.msra.mxu0 0.0
        %2584 = vmatprep.subr.mxu0 0.0
        %2585 = vmatpush1.msra.mxu0 0.0
        %2586 = vmatprep.subr.mxu0 0.0
        %2587 = vmatpush1.msra.mxu0 0.0
        %2588 = vmatprep.subr.mxu0 0.0
        %2589 = vmatpush1.msra.mxu0 0.0
        %2590 = vmatprep.subr.mxu0 0.0
        %2591 = vmatpush1.msra.mxu0 0.0
        %2592 = vmatprep.subr.mxu0 0.0
        %2593 = vmatpush1.msra.mxu0 0.0
        %2594 = vmatprep.subr.mxu0 0.0
        %2595 = vmatpush1.msra.mxu0 0.0
        %2596 = vmatprep.subr.mxu0 0.0
        %2597 = vmatpush1.msra.mxu0 0.0
        %2598 = vmatprep.subr.mxu0 0.0
        %2599 = vmatpush1.msra.mxu0 0.0
        %2600 = vmatprep.subr.mxu0 0.0
        %2601 = vmatpush1.msra.mxu0 0.0
        %2602 = vmatprep.subr.mxu0 0.0
        %2603 = vmatpush1.msra.mxu0 0.0
        %2604 = vmatprep.subr.mxu0 0.0
        %2605 = vmatpush1.msra.mxu0 0.0
        %2606 = vmatprep.subr.mxu0 0.0
        %2607 = vmatpush1.msra.mxu0 0.0
        %2608 = vmatprep.subr.mxu0 0.0
        %2609 = vmatpush1.msra.mxu0 0.0
        %2610 = vmatprep.subr.mxu0 0.0
        %2611 = vmatpush1.msra.mxu0 0.0
        %2612 = vmatprep.subr.mxu0 0.0
        %2613 = vmatpush1.msra.mxu0 0.0
        %2614 = vmatprep.subr.mxu0 0.0
        %2615 = vmatpush1.msra.mxu0 0.0
        %2616 = vmatprep.subr.mxu0 0.0
        %2617 = vmatpush1.msra.mxu0 0.0
        %2618 = vmatprep.subr.mxu0 0.0
        %2619 = vmatpush1.msra.mxu0 0.0
        %2620 = vmatprep.subr.mxu0 0.0
        %2621 = vmatpush1.msra.mxu0 0.0
        %2622 = vmatprep.subr.mxu0 0.0
        %2623 = vmatpush1.msra.mxu0 0.0
        %2624 = vmatprep.subr.mxu0 0.0
        %2625 = vmatpush1.msra.mxu0 0.0
        %2626 = vmatprep.subr.mxu0 0.0
        %2627 = vmatpush1.msra.mxu0 0.0
        %2628 = vmatprep.subr.mxu0 0.0
        %2629 = vmatpush1.msra.mxu0 0.0
        %2630 = vmatprep.subr.mxu0 0.0
        %2631 = vmatpush1.msra.mxu0 0.0
        %2632 = vmatprep.subr.mxu0 0.0
        %2633 = vmatpush1.msra.mxu0 0.0
        %2634 = vmatprep.subr.mxu0 0.0
        %2635 = vmatpush1.msra.mxu0 0.0
        %2636 = vmatprep.mubr.f32.mxu0 0.0
        %2637 = vmatmul.mubr.f32.gmra.mrb[0].mxu0 %v2564
        %v2638 = vpop.f32.mrb[0].mxu0
        %v2639 = vadd.f32 0.0, %v2638
        %v2640 = vpop.f32.mrb[0].mxu0
        %2641 = vmatprep.mubr.f32.mxu0 0.0
        %2642 = vmatmul.mubr.f32.gmra.mrb[0].mxu0 %v2567
        %v2643 = vpop.f32.mrb[0].mxu0
        %v2644 = vadd.f32 0.0, %v2643
        %v2645 = vpop.f32.mrb[0].mxu0
        %2646 = vmatprep.mubr.f32.mxu0 0.0
        %2647 = vmatmul.mubr.f32.gmra.mrb[0].mxu0 %v2570
        %v2648 = vpop.f32.mrb[0].mxu0
        %v2649 = vadd.f32 0.0, %v2648
        %v2650 = vpop.f32.mrb[0].mxu0
        %2651 = vdwg.mxu0
        %v2652 = vadd.f32 %v2322, %v2639
        %v2653 = vadd.f32 %v2327, %v2644
        %v2654 = vadd.f32 %v2332, %v2649
        %v2655 = vmul.f32 %v2469, %v1572
        %v2656 = vmul.f32 %v2470, %v1577
        %v2657 = vmul.f32 %v2471, %v1582
        %v2658 = vsel %vm1787, %v2655, 0.0
        %2659 = vadd.xlane.f32.xlu0 %v2658
        %v2660 = vpop.xlane.xlu0 %2659
        %v2661 = vsel %vm1787, %v2656, 0.0
        %2662 = vadd.xlane.f32.xlu0 %v2661
        %v2663 = vpop.xlane.xlu0 %2662
        %v2664 = vsel %vm1787, %v2657, 0.0
        %2665 = vadd.xlane.f32.xlu0 %v2664
        %v2666 = vpop.xlane.xlu0 %2665
        %v2667 = vmul.f32 %v2469, %v1676
        %v2668 = vmul.f32 %v2470, %v1681
        %v2669 = vmul.f32 %v2471, %v1686
        %v2670 = vsel %vm1787, %v2667, 0.0
        %2671 = vadd.xlane.f32.xlu0 %v2670
        %v2672 = vpop.xlane.xlu0 %2671
        %v2673 = vsel %vm1787, %v2668, 0.0
        %2674 = vadd.xlane.f32.xlu0 %v2673
        %v2675 = vpop.xlane.xlu0 %2674
        %v2676 = vsel %vm1787, %v2669, 0.0
        %2677 = vadd.xlane.f32.xlu0 %v2676
        %v2678 = vpop.xlane.xlu0 %2677
        %2679 = vrot.lane.b32.xlu0 %v1465, 72
        %v2680 = vpop.permute.xlu0 %2679
        %2681 = vrot.lane.b32.xlu0 %v1470, 72
        %v2682 = vpop.permute.xlu0 %2681
        %2683 = vrot.lane.b32.xlu0 %v1475, 72
        %v2684 = vpop.permute.xlu0 %2683
        %2685 = vrot.lane.b32.xlu0 %v1465, 56
        %v2686 = vpop.permute.xlu0 %2685
        %2687 = vrot.lane.b32.xlu0 %v1470, 56
        %v2688 = vpop.permute.xlu0 %2687
        %2689 = vrot.lane.b32.xlu0 %v1475, 56
        %v2690 = vpop.permute.xlu0 %2689
        %v2691 = vsel %vm988, %v2680, 0
        %v2693 = vsel %vm988, %v2682, 0
        %v2695 = vsel %vm988, %v2684, 0
        %v2697 = vsel %vm988, %v2686, 0
        %v2699 = vsel %vm988, %v2688, 0
        %v2701 = vsel %vm988, %v2690, 0
        %2703 = vmatprep.subr.mxu0 0.0
        %2704 = vmatpush1.xpose.msra.mxu0 %v2697
        %2705 = vmatprep.subr.mxu0 0.0
        %2706 = vmatpush1.xpose.msra.mxu0 %v2699
        %2707 = vmatprep.subr.mxu0 0.0
        %2708 = vmatpush1.xpose.msra.mxu0 %v2701
        %2709 = vmatprep.subr.mxu0 0.0
        %2710 = vmatpush1.xpose.msra.mxu0 0.0
        %2711 = vmatprep.subr.mxu0 0.0
        %2712 = vmatpush1.xpose.msra.mxu0 0.0
        %2713 = vmatprep.subr.mxu0 0.0
        %2714 = vmatpush1.xpose.msra.mxu0 0.0
        %2715 = vmatprep.subr.mxu0 0.0
        %2716 = vmatpush1.xpose.msra.mxu0 0.0
        %2717 = vmatprep.subr.mxu0 0.0
        %2718 = vmatpush1.xpose.msra.mxu0 0.0
        %2719 = vmatprep.subr.mxu0 0.0
        %2720 = vmatpush1.xpose.msra.mxu0 0.0
        %2721 = vmatprep.subr.mxu0 0.0
        %2722 = vmatpush1.xpose.msra.mxu0 0.0
        %2723 = vmatprep.subr.mxu0 0.0
        %2724 = vmatpush1.xpose.msra.mxu0 0.0
        %2725 = vmatprep.subr.mxu0 0.0
        %2726 = vmatpush1.xpose.msra.mxu0 0.0
        %2727 = vmatprep.subr.mxu0 0.0
        %2728 = vmatpush1.xpose.msra.mxu0 0.0
        %2729 = vmatprep.subr.mxu0 0.0
        %2730 = vmatpush1.xpose.msra.mxu0 0.0
        %2731 = vmatprep.subr.mxu0 0.0
        %2732 = vmatpush1.xpose.msra.mxu0 0.0
        %2733 = vmatprep.subr.mxu0 0.0
        %2734 = vmatpush1.xpose.msra.mxu0 0.0
        %2735 = vmatprep.subr.mxu0 0.0
        %2736 = vmatpush1.xpose.msra.mxu0 0.0
        %2737 = vmatprep.subr.mxu0 0.0
        %2738 = vmatpush1.xpose.msra.mxu0 0.0
        %2739 = vmatprep.subr.mxu0 0.0
        %2740 = vmatpush1.xpose.msra.mxu0 0.0
        %2741 = vmatprep.subr.mxu0 0.0
        %2742 = vmatpush1.xpose.msra.mxu0 0.0
        %2743 = vmatprep.subr.mxu0 0.0
        %2744 = vmatpush1.xpose.msra.mxu0 0.0
        %2745 = vmatprep.subr.mxu0 0.0
        %2746 = vmatpush1.xpose.msra.mxu0 0.0
        %2747 = vmatprep.subr.mxu0 0.0
        %2748 = vmatpush1.xpose.msra.mxu0 0.0
        %2749 = vmatprep.subr.mxu0 0.0
        %2750 = vmatpush1.xpose.msra.mxu0 0.0
        %2751 = vmatprep.subr.mxu0 0.0
        %2752 = vmatpush1.xpose.msra.mxu0 0.0
        %2753 = vmatprep.subr.mxu0 0.0
        %2754 = vmatpush1.xpose.msra.mxu0 0.0
        %2755 = vmatprep.subr.mxu0 0.0
        %2756 = vmatpush1.xpose.msra.mxu0 0.0
        %2757 = vmatprep.subr.mxu0 0.0
        %2758 = vmatpush1.xpose.msra.mxu0 0.0
        %2759 = vmatprep.subr.mxu0 0.0
        %2760 = vmatpush1.xpose.msra.mxu0 0.0
        %2761 = vmatprep.subr.mxu0 0.0
        %2762 = vmatpush1.xpose.msra.mxu0 0.0
        %2763 = vmatprep.subr.mxu0 0.0
        %2764 = vmatpush1.xpose.msra.mxu0 0.0
        %2765 = vmatprep.subr.mxu0 0.0
        %2766 = vmatpush1.xpose.msra.mxu0 0.0
        %2767 = vmatprep.mubr.f32.mxu0 0.0
        %2768 = vmatmul.mubr.f32.gmra.mrb[0].mxu0 %v2691
        %v2769 = vpop.f32.mrb[0].mxu0
        %v2770 = vadd.f32 %v795, %v2769
        %v2771 = vpop.f32.mrb[0].mxu0
        %2772 = vmatprep.mubr.f32.mxu0 0.0
        %2773 = vmatmul.mubr.f32.gmra.mrb[0].mxu0 %v2693
        %v2774 = vpop.f32.mrb[0].mxu0
        %v2775 = vadd.f32 %v795, %v2774
        %v2776 = vpop.f32.mrb[0].mxu0
        %2777 = vmatprep.mubr.f32.mxu0 0.0
        %2778 = vmatmul.mubr.f32.gmra.mrb[0].mxu0 %v2695
        %v2779 = vpop.f32.mrb[0].mxu0
        %v2780 = vadd.f32 %v795, %v2779
        %v2781 = vpop.f32.mrb[0].mxu0
        %2782 = vdwg.mxu0
        %v2783 = vsel %vm1787, %v2770, -inf
        %2784 = vmax.xlane.f32.xlu0 %v2783
        %v2785 = vpop.xlane.xlu0 %2784
        %v2786 = vsel %vm1787, %v2775, -inf
        %2787 = vmax.xlane.f32.xlu0 %v2786
        %v2788 = vpop.xlane.xlu0 %2787
        %v2789 = vsel %vm1787, %v2780, -inf
        %2790 = vmax.xlane.f32.xlu0 %v2789
        %v2791 = vpop.xlane.xlu0 %2790
        %v2792 = vsub.f32 %v2770, %v2785
        %v2793 = vsub.f32 %v2775, %v2788
        %v2794 = vsub.f32 %v2780, %v2791
        %v2795 = vmul.f32 %v2792, 1.442695
        %v2796 = vpow.pop %v2795
        %v2797 = vmul.f32 %v2793, 1.442695
        %v2798 = vpow.pop %v2797
        %v2799 = vmul.f32 %v2794, 1.442695
        %v2800 = vpow.pop %v2799
        %v2801 = vsel %vm1787, %v2796, 0.0
        %2802 = vadd.xlane.f32.xlu0 %v2801
        %v2803 = vpop.xlane.xlu0 %2802
        %v2804 = vsel %vm1787, %v2798, 0.0
        %2805 = vadd.xlane.f32.xlu0 %v2804
        %v2806 = vpop.xlane.xlu0 %2805
        %v2807 = vsel %vm1787, %v2800, 0.0
        %2808 = vadd.xlane.f32.xlu0 %v2807
        %v2809 = vpop.xlane.xlu0 %2808
        %v2810 = vrcp.pop %v2803
        %v2811 = vrcp.pop %v2806
        %v2812 = vrcp.pop %v2809
        %v2813 = vmul.f32 %v2796, %v2810
        %v2814 = vmul.f32 %v2798, %v2811
        %v2815 = vmul.f32 %v2800, %v2812
        %2819 = vrot.lane.b32.xlu0 %v1319, 120
        %v2820 = vpop.permute.xlu0 %2819
        %2821 = vrot.lane.b32.xlu0 %v1324, 120
        %v2822 = vpop.permute.xlu0 %2821
        %2823 = vrot.lane.b32.xlu0 %v1329, 120
        %v2824 = vpop.permute.xlu0 %2823
        %v2829 = vsel %vm1787, %v2813, 0
        %v2832 = vsel %vm1787, %v2814, 0
        %v2835 = vsel %vm1787, %v2815, 0
        %2837 = vmatprep.subr.mxu0 0.0
        %2838 = vmatpush1.msra.mxu0 %v2820
        %2839 = vmatprep.subr.mxu0 0.0
        %2840 = vmatpush1.msra.mxu0 %v2822
        %2841 = vmatprep.subr.mxu0 0.0
        %2842 = vmatpush1.msra.mxu0 %v2824
        %2843 = vmatprep.subr.mxu0 0.0
        %2844 = vmatpush1.msra.mxu0 0.0
        %2845 = vmatprep.subr.mxu0 0.0
        %2846 = vmatpush1.msra.mxu0 0.0
        %2847 = vmatprep.subr.mxu0 0.0
        %2848 = vmatpush1.msra.mxu0 0.0
        %2849 = vmatprep.subr.mxu0 0.0
        %2850 = vmatpush1.msra.mxu0 0.0
        %2851 = vmatprep.subr.mxu0 0.0
        %2852 = vmatpush1.msra.mxu0 0.0
        %2853 = vmatprep.subr.mxu0 0.0
        %2854 = vmatpush1.msra.mxu0 0.0
        %2855 = vmatprep.subr.mxu0 0.0
        %2856 = vmatpush1.msra.mxu0 0.0
        %2857 = vmatprep.subr.mxu0 0.0
        %2858 = vmatpush1.msra.mxu0 0.0
        %2859 = vmatprep.subr.mxu0 0.0
        %2860 = vmatpush1.msra.mxu0 0.0
        %2861 = vmatprep.subr.mxu0 0.0
        %2862 = vmatpush1.msra.mxu0 0.0
        %2863 = vmatprep.subr.mxu0 0.0
        %2864 = vmatpush1.msra.mxu0 0.0
        %2865 = vmatprep.subr.mxu0 0.0
        %2866 = vmatpush1.msra.mxu0 0.0
        %2867 = vmatprep.subr.mxu0 0.0
        %2868 = vmatpush1.msra.mxu0 0.0
        %2869 = vmatprep.subr.mxu0 0.0
        %2870 = vmatpush1.msra.mxu0 0.0
        %2871 = vmatprep.subr.mxu0 0.0
        %2872 = vmatpush1.msra.mxu0 0.0
        %2873 = vmatprep.subr.mxu0 0.0
        %2874 = vmatpush1.msra.mxu0 0.0
        %2875 = vmatprep.subr.mxu0 0.0
        %2876 = vmatpush1.msra.mxu0 0.0
        %2877 = vmatprep.subr.mxu0 0.0
        %2878 = vmatpush1.msra.mxu0 0.0
        %2879 = vmatprep.subr.mxu0 0.0
        %2880 = vmatpush1.msra.mxu0 0.0
        %2881 = vmatprep.subr.mxu0 0.0
        %2882 = vmatpush1.msra.mxu0 0.0
        %2883 = vmatprep.subr.mxu0 0.0
        %2884 = vmatpush1.msra.mxu0 0.0
        %2885 = vmatprep.subr.mxu0 0.0
        %2886 = vmatpush1.msra.mxu0 0.0
        %2887 = vmatprep.subr.mxu0 0.0
        %2888 = vmatpush1.msra.mxu0 0.0
        %2889 = vmatprep.subr.mxu0 0.0
        %2890 = vmatpush1.msra.mxu0 0.0
        %2891 = vmatprep.subr.mxu0 0.0
        %2892 = vmatpush1.msra.mxu0 0.0
        %2893 = vmatprep.subr.mxu0 0.0
        %2894 = vmatpush1.msra.mxu0 0.0
        %2895 = vmatprep.subr.mxu0 0.0
        %2896 = vmatpush1.msra.mxu0 0.0
        %2897 = vmatprep.subr.mxu0 0.0
        %2898 = vmatpush1.msra.mxu0 0.0
        %2899 = vmatprep.subr.mxu0 0.0
        %2900 = vmatpush1.msra.mxu0 0.0
        %2901 = vmatprep.mubr.f32.mxu0 0.0
        %2902 = vmatmul.mubr.f32.gmra.mrb[0].mxu0 %v2829
        %v2903 = vpop.f32.mrb[0].mxu0
        %v2904 = vadd.f32 0.0, %v2903
        %v2905 = vpop.f32.mrb[0].mxu0
        %2906 = vmatprep.mubr.f32.mxu0 0.0
        %2907 = vmatmul.mubr.f32.gmra.mrb[0].mxu0 %v2832
        %v2908 = vpop.f32.mrb[0].mxu0
        %v2909 = vadd.f32 0.0, %v2908
        %v2910 = vpop.f32.mrb[0].mxu0
        %2911 = vmatprep.mubr.f32.mxu0 0.0
        %2912 = vmatmul.mubr.f32.gmra.mrb[0].mxu0 %v2835
        %v2913 = vpop.f32.mrb[0].mxu0
        %v2914 = vadd.f32 0.0, %v2913
        %v2915 = vpop.f32.mrb[0].mxu0
        %2916 = vdwg.mxu0
        %s2917 = scalar_lea.vmem %s8, 24
        %v2918 = vld [vmem:[%s2917] sm:$0xff]
        %v2920 = vsel %vm988, %v2904, 0
        %v2923 = vsel %vm988, %v2909, 0
        %v2926 = vsel %vm988, %v2914, 0
        %2928 = vmatprep.subr.mxu0 0.0
        %2929 = vmatpush1.msra.mxu0 %v2918
        %2930 = vmatprep.subr.mxu0 0.0
        %2931 = vmatpush1.msra.mxu0 0.0
        %2932 = vmatprep.subr.mxu0 0.0
        %2933 = vmatpush1.msra.mxu0 0.0
        %2934 = vmatprep.subr.mxu0 0.0
        %2935 = vmatpush1.msra.mxu0 0.0
        %2936 = vmatprep.subr.mxu0 0.0
        %2937 = vmatpush1.msra.mxu0 0.0
        %2938 = vmatprep.subr.mxu0 0.0
        %2939 = vmatpush1.msra.mxu0 0.0
        %2940 = vmatprep.subr.mxu0 0.0
        %2941 = vmatpush1.msra.mxu0 0.0
        %2942 = vmatprep.subr.mxu0 0.0
        %2943 = vmatpush1.msra.mxu0 0.0
        %2944 = vmatprep.subr.mxu0 0.0
        %2945 = vmatpush1.msra.mxu0 0.0
        %2946 = vmatprep.subr.mxu0 0.0
        %2947 = vmatpush1.msra.mxu0 0.0
        %2948 = vmatprep.subr.mxu0 0.0
        %2949 = vmatpush1.msra.mxu0 0.0
        %2950 = vmatprep.subr.mxu0 0.0
        %2951 = vmatpush1.msra.mxu0 0.0
        %2952 = vmatprep.subr.mxu0 0.0
        %2953 = vmatpush1.msra.mxu0 0.0
        %2954 = vmatprep.subr.mxu0 0.0
        %2955 = vmatpush1.msra.mxu0 0.0
        %2956 = vmatprep.subr.mxu0 0.0
        %2957 = vmatpush1.msra.mxu0 0.0
        %2958 = vmatprep.subr.mxu0 0.0
        %2959 = vmatpush1.msra.mxu0 0.0
        %2960 = vmatprep.subr.mxu0 0.0
        %2961 = vmatpush1.msra.mxu0 0.0
        %2962 = vmatprep.subr.mxu0 0.0
        %2963 = vmatpush1.msra.mxu0 0.0
        %2964 = vmatprep.subr.mxu0 0.0
        %2965 = vmatpush1.msra.mxu0 0.0
        %2966 = vmatprep.subr.mxu0 0.0
        %2967 = vmatpush1.msra.mxu0 0.0
        %2968 = vmatprep.subr.mxu0 0.0
        %2969 = vmatpush1.msra.mxu0 0.0
        %2970 = vmatprep.subr.mxu0 0.0
        %2971 = vmatpush1.msra.mxu0 0.0
        %2972 = vmatprep.subr.mxu0 0.0
        %2973 = vmatpush1.msra.mxu0 0.0
        %2974 = vmatprep.subr.mxu0 0.0
        %2975 = vmatpush1.msra.mxu0 0.0
        %2976 = vmatprep.subr.mxu0 0.0
        %2977 = vmatpush1.msra.mxu0 0.0
        %2978 = vmatprep.subr.mxu0 0.0
        %2979 = vmatpush1.msra.mxu0 0.0
        %2980 = vmatprep.subr.mxu0 0.0
        %2981 = vmatpush1.msra.mxu0 0.0
        %2982 = vmatprep.subr.mxu0 0.0
        %2983 = vmatpush1.msra.mxu0 0.0
        %2984 = vmatprep.subr.mxu0 0.0
        %2985 = vmatpush1.msra.mxu0 0.0
        %2986 = vmatprep.subr.mxu0 0.0
        %2987 = vmatpush1.msra.mxu0 0.0
        %2988 = vmatprep.subr.mxu0 0.0
        %2989 = vmatpush1.msra.mxu0 0.0
        %2990 = vmatprep.subr.mxu0 0.0
        %2991 = vmatpush1.msra.mxu0 0.0
        %2992 = vmatprep.mubr.f32.mxu0 0.0
        %2993 = vmatmul.mubr.f32.gmra.mrb[0].mxu0 %v2920
        %v2994 = vpop.f32.mrb[0].mxu0
        %v2995 = vadd.f32 0.0, %v2994
        %v2996 = vpop.f32.mrb[0].mxu0
        %2997 = vmatprep.mubr.f32.mxu0 0.0
        %2998 = vmatmul.mubr.f32.gmra.mrb[0].mxu0 %v2923
        %v2999 = vpop.f32.mrb[0].mxu0
        %v3000 = vadd.f32 0.0, %v2999
        %v3001 = vpop.f32.mrb[0].mxu0
        %3002 = vmatprep.mubr.f32.mxu0 0.0
        %3003 = vmatmul.mubr.f32.gmra.mrb[0].mxu0 %v2926
        %v3004 = vpop.f32.mrb[0].mxu0
        %v3005 = vadd.f32 0.0, %v3004
        %v3006 = vpop.f32.mrb[0].mxu0
        %3007 = vdwg.mxu0
        %v3008 = vadd.f32 %v2652, %v2995
        %v3009 = vadd.f32 %v2653, %v3000
        %v3010 = vadd.f32 %v2654, %v3005
        %v3011 = vmul.f32 %v2813, %v1572
        %v3012 = vmul.f32 %v2814, %v1577
        %v3013 = vmul.f32 %v2815, %v1582
        %v3014 = vsel %vm1787, %v3011, 0.0
        %3015 = vadd.xlane.f32.xlu0 %v3014
        %v3016 = vpop.xlane.xlu0 %3015
        %v3017 = vsel %vm1787, %v3012, 0.0
        %3018 = vadd.xlane.f32.xlu0 %v3017
        %v3019 = vpop.xlane.xlu0 %3018
        %v3020 = vsel %vm1787, %v3013, 0.0
        %3021 = vadd.xlane.f32.xlu0 %v3020
        %v3022 = vpop.xlane.xlu0 %3021
        %v3023 = vmul.f32 %v2813, %v1676
        %v3024 = vmul.f32 %v2814, %v1681
        %v3025 = vmul.f32 %v2815, %v1686
        %v3026 = vsel %vm1787, %v3023, 0.0
        %3027 = vadd.xlane.f32.xlu0 %v3026
        %v3028 = vpop.xlane.xlu0 %3027
        %v3029 = vsel %vm1787, %v3024, 0.0
        %3030 = vadd.xlane.f32.xlu0 %v3029
        %v3031 = vpop.xlane.xlu0 %3030
        %v3032 = vsel %vm1787, %v3025, 0.0
        %3033 = vadd.xlane.f32.xlu0 %v3032
        %v3034 = vpop.xlane.xlu0 %3033
        %vm3035 = vcmask 7168
        %v3036 = vsel %vm3035, %v2660, %v2672
        %v3037 = vsel %vm3035, %v2663, %v2675
        %v3038 = vsel %vm3035, %v2666, %v2678
        %vm3039 = vcmask 15360
        %v3040 = vsel %vm3039, %v3036, %v3016
        %v3041 = vsel %vm3039, %v3037, %v3019
        %v3042 = vsel %vm3039, %v3038, %v3022
        %vm3043 = vcmask 23552
        %v3044 = vsel %vm3043, %v3040, %v3028
        %v3045 = vsel %vm3043, %v3041, %v3031
        %v3046 = vsel %vm3043, %v3042, %v3034
        %v3047 = vld [vmem:[#allocation10] sm:$0xf]
        %vm3048 = vcmask 31744
        %v3050 = vsel %vm3048, %v3044, 0
        %v3053 = vsel %vm3048, %v3045, 0
        %v3056 = vsel %vm3048, %v3046, 0
        %vm3058 = vcmask 1043456
        %v3060 = vsel %vm3058, %v3047, 0
        %3062 = vmatprep.subr.mxu0 0.0
        %3063 = vmatpush1.msra.mxu0 %v3060
        %3064 = vmatprep.subr.mxu0 0.0
        %3065 = vmatpush1.msra.mxu0 0.0
        %3066 = vmatprep.subr.mxu0 0.0
        %3067 = vmatpush1.msra.mxu0 0.0
        %3068 = vmatprep.subr.mxu0 0.0
        %3069 = vmatpush1.msra.mxu0 0.0
        %3070 = vmatprep.subr.mxu0 0.0
        %3071 = vmatpush1.msra.mxu0 0.0
        %3072 = vmatprep.subr.mxu0 0.0
        %3073 = vmatpush1.msra.mxu0 0.0
        %3074 = vmatprep.subr.mxu0 0.0
        %3075 = vmatpush1.msra.mxu0 0.0
        %3076 = vmatprep.subr.mxu0 0.0
        %3077 = vmatpush1.msra.mxu0 0.0
        %3078 = vmatprep.subr.mxu0 0.0
        %3079 = vmatpush1.msra.mxu0 0.0
        %3080 = vmatprep.subr.mxu0 0.0
        %3081 = vmatpush1.msra.mxu0 0.0
        %3082 = vmatprep.subr.mxu0 0.0
        %3083 = vmatpush1.msra.mxu0 0.0
        %3084 = vmatprep.subr.mxu0 0.0
        %3085 = vmatpush1.msra.mxu0 0.0
        %3086 = vmatprep.subr.mxu0 0.0
        %3087 = vmatpush1.msra.mxu0 0.0
        %3088 = vmatprep.subr.mxu0 0.0
        %3089 = vmatpush1.msra.mxu0 0.0
        %3090 = vmatprep.subr.mxu0 0.0
        %3091 = vmatpush1.msra.mxu0 0.0
        %3092 = vmatprep.subr.mxu0 0.0
        %3093 = vmatpush1.msra.mxu0 0.0
        %3094 = vmatprep.subr.mxu0 0.0
        %3095 = vmatpush1.msra.mxu0 0.0
        %3096 = vmatprep.subr.mxu0 0.0
        %3097 = vmatpush1.msra.mxu0 0.0
        %3098 = vmatprep.subr.mxu0 0.0
        %3099 = vmatpush1.msra.mxu0 0.0
        %3100 = vmatprep.subr.mxu0 0.0
        %3101 = vmatpush1.msra.mxu0 0.0
        %3102 = vmatprep.subr.mxu0 0.0
        %3103 = vmatpush1.msra.mxu0 0.0
        %3104 = vmatprep.subr.mxu0 0.0
        %3105 = vmatpush1.msra.mxu0 0.0
        %3106 = vmatprep.subr.mxu0 0.0
        %3107 = vmatpush1.msra.mxu0 0.0
        %3108 = vmatprep.subr.mxu0 0.0
        %3109 = vmatpush1.msra.mxu0 0.0
        %3110 = vmatprep.subr.mxu0 0.0
        %3111 = vmatpush1.msra.mxu0 0.0
        %3112 = vmatprep.subr.mxu0 0.0
        %3113 = vmatpush1.msra.mxu0 0.0
        %3114 = vmatprep.subr.mxu0 0.0
        %3115 = vmatpush1.msra.mxu0 0.0
        %3116 = vmatprep.subr.mxu0 0.0
        %3117 = vmatpush1.msra.mxu0 0.0
        %3118 = vmatprep.subr.mxu0 0.0
        %3119 = vmatpush1.msra.mxu0 0.0
        %3120 = vmatprep.subr.mxu0 0.0
        %3121 = vmatpush1.msra.mxu0 0.0
        %3122 = vmatprep.subr.mxu0 0.0
        %3123 = vmatpush1.msra.mxu0 0.0
        %3124 = vmatprep.subr.mxu0 0.0
        %3125 = vmatpush1.msra.mxu0 0.0
        %3126 = vmatprep.mubr.f32.mxu0 0.0
        %3127 = vmatmul.mubr.f32.gmra.mrb[0].mxu0 %v3050
        %v3128 = vpop.f32.mrb[0].mxu0
        %v3129 = vadd.f32 0.0, %v3128
        %v3130 = vpop.f32.mrb[0].mxu0
        %3131 = vmatprep.mubr.f32.mxu0 0.0
        %3132 = vmatmul.mubr.f32.gmra.mrb[0].mxu0 %v3053
        %v3133 = vpop.f32.mrb[0].mxu0
        %v3134 = vadd.f32 0.0, %v3133
        %v3135 = vpop.f32.mrb[0].mxu0
        %3136 = vmatprep.mubr.f32.mxu0 0.0
        %3137 = vmatmul.mubr.f32.gmra.mrb[0].mxu0 %v3056
        %v3138 = vpop.f32.mrb[0].mxu0
        %v3139 = vadd.f32 0.0, %v3138
        %v3140 = vpop.f32.mrb[0].mxu0
        %3141 = vdwg.mxu0
        %v3142 = vadd.f32 %v789, %v3008
        %v3143 = vadd.f32 %v790, %v3009
        %v3144 = vadd.f32 %v791, %v3010
        %v3145 = vadd.f32 %v3142, %v3129
        %v3146 = vadd.f32 %v3143, %v3134
        %v3147 = vadd.f32 %v3144, %v3139
        %v3148 = vsel %vm712, %v3145, 0.0
        %3149 = vadd.xlane.f32.xlu0 %v3148
        %v3150 = vpop.xlane.xlu0 %3149
        %v3151 = vsel %vm712, %v3146, 0.0
        %3152 = vadd.xlane.f32.xlu0 %v3151
        %v3153 = vpop.xlane.xlu0 %3152
        %v3154 = vsel %vm712, %v3147, 0.0
        %3155 = vadd.xlane.f32.xlu0 %v3154
        %v3156 = vpop.xlane.xlu0 %3155
        %v3157 = vmul.f32 %v3150, %v722
        %v3158 = vmul.f32 %v3153, %v722
        %v3159 = vmul.f32 %v3156, %v722
        %v3160 = vsub.f32 %v3145, %v3157
        %v3161 = vsub.f32 %v3146, %v3158
        %v3162 = vsub.f32 %v3147, %v3159
        %v3163 = vmul.f32 %v3160, %v3160
        %v3164 = vmul.f32 %v3161, %v3161
        %v3165 = vmul.f32 %v3162, %v3162
        %v3166 = vsel %vm712, %v3163, 0.0
        %3167 = vadd.xlane.f32.xlu0 %v3166
        %v3168 = vpop.xlane.xlu0 %3167
        %v3169 = vsel %vm712, %v3164, 0.0
        %3170 = vadd.xlane.f32.xlu0 %v3169
        %v3171 = vpop.xlane.xlu0 %3170
        %v3172 = vsel %vm712, %v3165, 0.0
        %3173 = vadd.xlane.f32.xlu0 %v3172
        %v3174 = vpop.xlane.xlu0 %3173
        %v3175 = vmul.f32 %v3168, %v722
        %v3176 = vmul.f32 %v3171, %v722
        %v3177 = vmul.f32 %v3174, %v722
        %v3178 = vadd.f32 %v3175, 1e-05
        %v3179 = vadd.f32 %v3176, 1e-05
        %v3180 = vadd.f32 %v3177, 1e-05
        %v3181 = vrsqrt.pop %v3178
        %v3182 = vrsqrt.pop %v3179
        %v3183 = vrsqrt.pop %v3180
        %v3184 = vmul.f32 %v3160, %v3181
        %v3185 = vmul.f32 %v3161, %v3182
        %v3186 = vmul.f32 %v3162, %v3183
        %v3187 = vlaneseq
        %v3188 = vshrl.u32 %v3187, 7
        %v3189 = vsub.s32 2, %v3188
        %v3190 = vrot.slane %v801, %v3189
        %v3191 = vmul.f32 %v3184, %v3190
        %v3192 = vmul.f32 %v3185, %v3190
        %v3193 = vmul.f32 %v3186, %v3190
        %v3194 = vlaneseq
        %v3195 = vshrl.u32 %v3194, 7
        %v3196 = vsub.s32 3, %v3195
        %v3197 = vrot.slane %v801, %v3196
        %v3198 = vadd.f32 %v3191, %v3197
        %v3199 = vadd.f32 %v3192, %v3197
        %v3200 = vadd.f32 %v3193, %v3197
        %v3201 = vld [vmem:[%s10] sm:$0xff]
        %v3202 = vld [vmem:[%s10 + $0x8] sm:$0xff]
        %v3203 = vld [vmem:[%s10 + $0x10] sm:$0xff]
        %v3204 = vld [vmem:[%s10 + $0x18] sm:$0xff]
        %v3205 = vlaneseq
        %v3206 = vshrl.u32 %v3205, 7
        %v3207 = vsub.s32 4, %v3206
        %v3208 = vrot.slane %v801, %v3207
        %v3210 = vsel %vm712, %v3198, 0
        %v3213 = vsel %vm712, %v3199, 0
        %v3216 = vsel %vm712, %v3200, 0
        %3218 = vmatprep.subr.mxu0 0.0
        %3219 = vmatpush1.msra.mxu0 %v3201
        %3220 = vmatprep.subr.mxu0 0.0
        %3221 = vmatpush1.msra.mxu0 %v3202
        %3222 = vmatprep.subr.mxu0 0.0
        %3223 = vmatpush1.msra.mxu0 %v3203
        %3224 = vmatprep.subr.mxu0 0.0
        %3225 = vmatpush1.msra.mxu0 %v3204
        %3226 = vmatprep.subr.mxu0 0.0
        %3227 = vmatpush1.msra.mxu0 0.0
        %3228 = vmatprep.subr.mxu0 0.0
        %3229 = vmatpush1.msra.mxu0 0.0
        %3230 = vmatprep.subr.mxu0 0.0
        %3231 = vmatpush1.msra.mxu0 0.0
        %3232 = vmatprep.subr.mxu0 0.0
        %3233 = vmatpush1.msra.mxu0 0.0
        %3234 = vmatprep.subr.mxu0 0.0
        %3235 = vmatpush1.msra.mxu0 0.0
        %3236 = vmatprep.subr.mxu0 0.0
        %3237 = vmatpush1.msra.mxu0 0.0
        %3238 = vmatprep.subr.mxu0 0.0
        %3239 = vmatpush1.msra.mxu0 0.0
        %3240 = vmatprep.subr.mxu0 0.0
        %3241 = vmatpush1.msra.mxu0 0.0
        %3242 = vmatprep.subr.mxu0 0.0
        %3243 = vmatpush1.msra.mxu0 0.0
        %3244 = vmatprep.subr.mxu0 0.0
        %3245 = vmatpush1.msra.mxu0 0.0
        %3246 = vmatprep.subr.mxu0 0.0
        %3247 = vmatpush1.msra.mxu0 0.0
        %3248 = vmatprep.subr.mxu0 0.0
        %3249 = vmatpush1.msra.mxu0 0.0
        %3250 = vmatprep.subr.mxu0 0.0
        %3251 = vmatpush1.msra.mxu0 0.0
        %3252 = vmatprep.subr.mxu0 0.0
        %3253 = vmatpush1.msra.mxu0 0.0
        %3254 = vmatprep.subr.mxu0 0.0
        %3255 = vmatpush1.msra.mxu0 0.0
        %3256 = vmatprep.subr.mxu0 0.0
        %3257 = vmatpush1.msra.mxu0 0.0
        %3258 = vmatprep.subr.mxu0 0.0
        %3259 = vmatpush1.msra.mxu0 0.0
        %3260 = vmatprep.subr.mxu0 0.0
        %3261 = vmatpush1.msra.mxu0 0.0
        %3262 = vmatprep.subr.mxu0 0.0
        %3263 = vmatpush1.msra.mxu0 0.0
        %3264 = vmatprep.subr.mxu0 0.0
        %3265 = vmatpush1.msra.mxu0 0.0
        %3266 = vmatprep.subr.mxu0 0.0
        %3267 = vmatpush1.msra.mxu0 0.0
        %3268 = vmatprep.subr.mxu0 0.0
        %3269 = vmatpush1.msra.mxu0 0.0
        %3270 = vmatprep.subr.mxu0 0.0
        %3271 = vmatpush1.msra.mxu0 0.0
        %3272 = vmatprep.subr.mxu0 0.0
        %3273 = vmatpush1.msra.mxu0 0.0
        %3274 = vmatprep.subr.mxu0 0.0
        %3275 = vmatpush1.msra.mxu0 0.0
        %3276 = vmatprep.subr.mxu0 0.0
        %3277 = vmatpush1.msra.mxu0 0.0
        %3278 = vmatprep.subr.mxu0 0.0
        %3279 = vmatpush1.msra.mxu0 0.0
        %3280 = vmatprep.subr.mxu0 0.0
        %3281 = vmatpush1.msra.mxu0 0.0
        %3282 = vmatprep.mubr.f32.mxu0 0.0
        %3283 = vmatmul.mubr.f32.gmra.mrb[0].mxu0 %v3210
        %v3284 = vpop.f32.mrb[0].mxu0
        %v3285 = vadd.f32 %v3208, %v3284
        %v3286 = vpop.f32.mrb[0].mxu0
        %3287 = vmatprep.mubr.f32.mxu0 0.0
        %3288 = vmatmul.mubr.f32.gmra.mrb[0].mxu0 %v3213
        %v3289 = vpop.f32.mrb[0].mxu0
        %v3290 = vadd.f32 %v3208, %v3289
        %v3291 = vpop.f32.mrb[0].mxu0
        %3292 = vmatprep.mubr.f32.mxu0 0.0
        %3293 = vmatmul.mubr.f32.gmra.mrb[0].mxu0 %v3216
        %v3294 = vpop.f32.mrb[0].mxu0
        %v3295 = vadd.f32 %v3208, %v3294
        %v3296 = vpop.f32.mrb[0].mxu0
        %3297 = vdwg.mxu0
        %v3298 = vmax.f32 %v3285, 0.0
        %v3299 = vmax.f32 %v3290, 0.0
        %v3300 = vmax.f32 %v3295, 0.0
        %v3301 = vld [vmem:[%s11] sm:$0xff]
        %v3302 = vld [vmem:[%s11 + $0x8] sm:$0xff]
        %v3303 = vld [vmem:[%s11 + $0x10] sm:$0xff]
        %v3304 = vld [vmem:[%s11 + $0x18] sm:$0xff]
        %v3305 = vld [vmem:[%s11 + $0x20] sm:$0xff]
        %v3306 = vld [vmem:[%s11 + $0x28] sm:$0xff]
        %v3307 = vld [vmem:[%s11 + $0x30] sm:$0xff]
        %v3308 = vld [vmem:[%s11 + $0x38] sm:$0xff]
        %v3309 = vlaneseq
        %v3310 = vshrl.u32 %v3309, 7
        %v3311 = vsub.s32 5, %v3310
        %v3312 = vrot.slane %v801, %v3311
        %v3314 = vsel %vm556, %v3298, 0
        %v3317 = vsel %vm556, %v3299, 0
        %v3320 = vsel %vm556, %v3300, 0
        %3322 = vmatprep.subr.mxu0 0.0
        %3323 = vmatpush1.msra.mxu0 %v3301
        %3324 = vmatprep.subr.mxu0 0.0
        %3325 = vmatpush1.msra.mxu0 %v3302
        %3326 = vmatprep.subr.mxu0 0.0
        %3327 = vmatpush1.msra.mxu0 %v3303
        %3328 = vmatprep.subr.mxu0 0.0
        %3329 = vmatpush1.msra.mxu0 %v3304
        %3330 = vmatprep.subr.mxu0 0.0
        %3331 = vmatpush1.msra.mxu0 %v3305
        %3332 = vmatprep.subr.mxu0 0.0
        %3333 = vmatpush1.msra.mxu0 %v3306
        %3334 = vmatprep.subr.mxu0 0.0
        %3335 = vmatpush1.msra.mxu0 %v3307
        %3336 = vmatprep.subr.mxu0 0.0
        %3337 = vmatpush1.msra.mxu0 %v3308
        %3338 = vmatprep.subr.mxu0 0.0
        %3339 = vmatpush1.msra.mxu0 0.0
        %3340 = vmatprep.subr.mxu0 0.0
        %3341 = vmatpush1.msra.mxu0 0.0
        %3342 = vmatprep.subr.mxu0 0.0
        %3343 = vmatpush1.msra.mxu0 0.0
        %3344 = vmatprep.subr.mxu0 0.0
        %3345 = vmatpush1.msra.mxu0 0.0
        %3346 = vmatprep.subr.mxu0 0.0
        %3347 = vmatpush1.msra.mxu0 0.0
        %3348 = vmatprep.subr.mxu0 0.0
        %3349 = vmatpush1.msra.mxu0 0.0
        %3350 = vmatprep.subr.mxu0 0.0
        %3351 = vmatpush1.msra.mxu0 0.0
        %3352 = vmatprep.subr.mxu0 0.0
        %3353 = vmatpush1.msra.mxu0 0.0
        %3354 = vmatprep.subr.mxu0 0.0
        %3355 = vmatpush1.msra.mxu0 0.0
        %3356 = vmatprep.subr.mxu0 0.0
        %3357 = vmatpush1.msra.mxu0 0.0
        %3358 = vmatprep.subr.mxu0 0.0
        %3359 = vmatpush1.msra.mxu0 0.0
        %3360 = vmatprep.subr.mxu0 0.0
        %3361 = vmatpush1.msra.mxu0 0.0
        %3362 = vmatprep.subr.mxu0 0.0
        %3363 = vmatpush1.msra.mxu0 0.0
        %3364 = vmatprep.subr.mxu0 0.0
        %3365 = vmatpush1.msra.mxu0 0.0
        %3366 = vmatprep.subr.mxu0 0.0
        %3367 = vmatpush1.msra.mxu0 0.0
        %3368 = vmatprep.subr.mxu0 0.0
        %3369 = vmatpush1.msra.mxu0 0.0
        %3370 = vmatprep.subr.mxu0 0.0
        %3371 = vmatpush1.msra.mxu0 0.0
        %3372 = vmatprep.subr.mxu0 0.0
        %3373 = vmatpush1.msra.mxu0 0.0
        %3374 = vmatprep.subr.mxu0 0.0
        %3375 = vmatpush1.msra.mxu0 0.0
        %3376 = vmatprep.subr.mxu0 0.0
        %3377 = vmatpush1.msra.mxu0 0.0
        %3378 = vmatprep.subr.mxu0 0.0
        %3379 = vmatpush1.msra.mxu0 0.0
        %3380 = vmatprep.subr.mxu0 0.0
        %3381 = vmatpush1.msra.mxu0 0.0
        %3382 = vmatprep.subr.mxu0 0.0
        %3383 = vmatpush1.msra.mxu0 0.0
        %3384 = vmatprep.subr.mxu0 0.0
        %3385 = vmatpush1.msra.mxu0 0.0
        %3386 = vmatprep.mubr.f32.mxu0 0.0
        %3387 = vmatmul.mubr.f32.gmra.mrb[0].mxu0 %v3314
        %v3388 = vpop.f32.mrb[0].mxu0
        %v3389 = vadd.f32 %v3312, %v3388
        %v3390 = vpop.f32.mrb[0].mxu0
        %3391 = vmatprep.mubr.f32.mxu0 0.0
        %3392 = vmatmul.mubr.f32.gmra.mrb[0].mxu0 %v3317
        %v3393 = vpop.f32.mrb[0].mxu0
        %v3394 = vadd.f32 %v3312, %v3393
        %v3395 = vpop.f32.mrb[0].mxu0
        %3396 = vmatprep.mubr.f32.mxu0 0.0
        %3397 = vmatmul.mubr.f32.gmra.mrb[0].mxu0 %v3320
        %v3398 = vpop.f32.mrb[0].mxu0
        %v3399 = vadd.f32 %v3312, %v3398
        %v3400 = vpop.f32.mrb[0].mxu0
        %3401 = vdwg.mxu0
        %v3402 = vadd.f32 %v3145, %v3389
        %v3403 = vadd.f32 %v3146, %v3394
        %v3404 = vadd.f32 %v3147, %v3399
        %s3405 = scalar_lea.vmem %s12, 8
        %v3406 = vld [vmem:[%s3405] sm:$0x3f]
        %v3408 = vsel %vm712, %v3402, 0
        %v3411 = vsel %vm712, %v3403, 0
        %v3414 = vsel %vm712, %v3404, 0
        %3416 = vmatprep.subr.mxu0 0.0
        %3417 = vmatpush1.msra.mxu0 %v796
        %3418 = vmatprep.subr.mxu0 0.0
        %3419 = vmatpush1.msra.mxu0 %v797
        %3420 = vmatprep.subr.mxu0 0.0
        %3421 = vmatpush1.msra.mxu0 %v798
        %3422 = vmatprep.subr.mxu0 0.0
        %3423 = vmatpush1.msra.mxu0 %v799
        %3424 = vmatprep.subr.mxu0 0.0
        %3425 = vmatpush1.msra.mxu0 0.0
        %3426 = vmatprep.subr.mxu0 0.0
        %3427 = vmatpush1.msra.mxu0 0.0
        %3428 = vmatprep.subr.mxu0 0.0
        %3429 = vmatpush1.msra.mxu0 0.0
        %3430 = vmatprep.subr.mxu0 0.0
        %3431 = vmatpush1.msra.mxu0 0.0
        %3432 = vmatprep.subr.mxu0 0.0
        %3433 = vmatpush1.msra.mxu0 0.0
        %3434 = vmatprep.subr.mxu0 0.0
        %3435 = vmatpush1.msra.mxu0 0.0
        %3436 = vmatprep.subr.mxu0 0.0
        %3437 = vmatpush1.msra.mxu0 0.0
        %3438 = vmatprep.subr.mxu0 0.0
        %3439 = vmatpush1.msra.mxu0 0.0
        %3440 = vmatprep.subr.mxu0 0.0
        %3441 = vmatpush1.msra.mxu0 0.0
        %3442 = vmatprep.subr.mxu0 0.0
        %3443 = vmatpush1.msra.mxu0 0.0
        %3444 = vmatprep.subr.mxu0 0.0
        %3445 = vmatpush1.msra.mxu0 0.0
        %3446 = vmatprep.subr.mxu0 0.0
        %3447 = vmatpush1.msra.mxu0 0.0
        %3448 = vmatprep.subr.mxu0 0.0
        %3449 = vmatpush1.msra.mxu0 0.0
        %3450 = vmatprep.subr.mxu0 0.0
        %3451 = vmatpush1.msra.mxu0 0.0
        %3452 = vmatprep.subr.mxu0 0.0
        %3453 = vmatpush1.msra.mxu0 0.0
        %3454 = vmatprep.subr.mxu0 0.0
        %3455 = vmatpush1.msra.mxu0 0.0
        %3456 = vmatprep.subr.mxu0 0.0
        %3457 = vmatpush1.msra.mxu0 0.0
        %3458 = vmatprep.subr.mxu0 0.0
        %3459 = vmatpush1.msra.mxu0 0.0
        %3460 = vmatprep.subr.mxu0 0.0
        %3461 = vmatpush1.msra.mxu0 0.0
        %3462 = vmatprep.subr.mxu0 0.0
        %3463 = vmatpush1.msra.mxu0 0.0
        %3464 = vmatprep.subr.mxu0 0.0
        %3465 = vmatpush1.msra.mxu0 0.0
        %3466 = vmatprep.subr.mxu0 0.0
        %3467 = vmatpush1.msra.mxu0 0.0
        %3468 = vmatprep.subr.mxu0 0.0
        %3469 = vmatpush1.msra.mxu0 0.0
        %3470 = vmatprep.subr.mxu0 0.0
        %3471 = vmatpush1.msra.mxu0 0.0
        %3472 = vmatprep.subr.mxu0 0.0
        %3473 = vmatpush1.msra.mxu0 0.0
        %3474 = vmatprep.subr.mxu0 0.0
        %3475 = vmatpush1.msra.mxu0 0.0
        %3476 = vmatprep.subr.mxu0 0.0
        %3477 = vmatpush1.msra.mxu0 0.0
        %3478 = vmatprep.subr.mxu0 0.0
        %3479 = vmatpush1.msra.mxu0 0.0
        %3480 = vmatprep.mubr.f32.mxu0 0.0
        %3481 = vmatmul.mubr.f32.gmra.mrb[0].mxu0 %v3408
        %v3482 = vpop.f32.mrb[0].mxu0
        %v3483 = vadd.f32 %v805, %v3482
        %v3484 = vpop.f32.mrb[0].mxu0
        %3485 = vmatprep.mubr.f32.mxu0 0.0
        %3486 = vmatmul.mubr.f32.gmra.mrb[0].mxu0 %v3411
        %v3487 = vpop.f32.mrb[0].mxu0
        %v3488 = vadd.f32 %v805, %v3487
        %v3489 = vpop.f32.mrb[0].mxu0
        %3490 = vmatprep.mubr.f32.mxu0 0.0
        %3491 = vmatmul.mubr.f32.gmra.mrb[0].mxu0 %v3414
        %v3492 = vpop.f32.mrb[0].mxu0
        %v3493 = vadd.f32 %v805, %v3492
        %v3494 = vpop.f32.mrb[0].mxu0
        %3495 = vdwg.mxu0
        %v3497 = vsel %vm895, %v3483, 0
        %v3500 = vsel %vm895, %v3488, 0
        %v3503 = vsel %vm895, %v3493, 0
        %3505 = vmatprep.subr.mxu0 0.0
        %3506 = vmatpush1.xpose.msra.mxu0 %v906
        %3507 = vmatprep.subr.mxu0 0.0
        %3508 = vmatpush1.xpose.msra.mxu0 0.0
        %3509 = vmatprep.subr.mxu0 0.0
        %3510 = vmatpush1.xpose.msra.mxu0 0.0
        %3511 = vmatprep.subr.mxu0 0.0
        %3512 = vmatpush1.xpose.msra.mxu0 0.0
        %3513 = vmatprep.subr.mxu0 0.0
        %3514 = vmatpush1.xpose.msra.mxu0 0.0
        %3515 = vmatprep.subr.mxu0 0.0
        %3516 = vmatpush1.xpose.msra.mxu0 0.0
        %3517 = vmatprep.subr.mxu0 0.0
        %3518 = vmatpush1.xpose.msra.mxu0 0.0
        %3519 = vmatprep.subr.mxu0 0.0
        %3520 = vmatpush1.xpose.msra.mxu0 0.0
        %3521 = vmatprep.subr.mxu0 0.0
        %3522 = vmatpush1.xpose.msra.mxu0 0.0
        %3523 = vmatprep.subr.mxu0 0.0
        %3524 = vmatpush1.xpose.msra.mxu0 0.0
        %3525 = vmatprep.subr.mxu0 0.0
        %3526 = vmatpush1.xpose.msra.mxu0 0.0
        %3527 = vmatprep.subr.mxu0 0.0
        %3528 = vmatpush1.xpose.msra.mxu0 0.0
        %3529 = vmatprep.subr.mxu0 0.0
        %3530 = vmatpush1.xpose.msra.mxu0 0.0
        %3531 = vmatprep.subr.mxu0 0.0
        %3532 = vmatpush1.xpose.msra.mxu0 0.0
        %3533 = vmatprep.subr.mxu0 0.0
        %3534 = vmatpush1.xpose.msra.mxu0 0.0
        %3535 = vmatprep.subr.mxu0 0.0
        %3536 = vmatpush1.xpose.msra.mxu0 0.0
        %3537 = vmatprep.subr.mxu0 0.0
        %3538 = vmatpush1.xpose.msra.mxu0 0.0
        %3539 = vmatprep.subr.mxu0 0.0
        %3540 = vmatpush1.xpose.msra.mxu0 0.0
        %3541 = vmatprep.subr.mxu0 0.0
        %3542 = vmatpush1.xpose.msra.mxu0 0.0
        %3543 = vmatprep.subr.mxu0 0.0
        %3544 = vmatpush1.xpose.msra.mxu0 0.0
        %3545 = vmatprep.subr.mxu0 0.0
        %3546 = vmatpush1.xpose.msra.mxu0 0.0
        %3547 = vmatprep.subr.mxu0 0.0
        %3548 = vmatpush1.xpose.msra.mxu0 0.0
        %3549 = vmatprep.subr.mxu0 0.0
        %3550 = vmatpush1.xpose.msra.mxu0 0.0
        %3551 = vmatprep.subr.mxu0 0.0
        %3552 = vmatpush1.xpose.msra.mxu0 0.0
        %3553 = vmatprep.subr.mxu0 0.0
        %3554 = vmatpush1.xpose.msra.mxu0 0.0
        %3555 = vmatprep.subr.mxu0 0.0
        %3556 = vmatpush1.xpose.msra.mxu0 0.0
        %3557 = vmatprep.subr.mxu0 0.0
        %3558 = vmatpush1.xpose.msra.mxu0 0.0
        %3559 = vmatprep.subr.mxu0 0.0
        %3560 = vmatpush1.xpose.msra.mxu0 0.0
        %3561 = vmatprep.subr.mxu0 0.0
        %3562 = vmatpush1.xpose.msra.mxu0 0.0
        %3563 = vmatprep.subr.mxu0 0.0
        %3564 = vmatpush1.xpose.msra.mxu0 0.0
        %3565 = vmatprep.subr.mxu0 0.0
        %3566 = vmatpush1.xpose.msra.mxu0 0.0
        %3567 = vmatprep.subr.mxu0 0.0
        %3568 = vmatpush1.xpose.msra.mxu0 0.0
        %3569 = vmatprep.mubr.f32.mxu0 0.0
        %3570 = vmatmul.mubr.f32.gmra.mrb[0].mxu0 %v3497
        %v3571 = vpop.f32.mrb[0].mxu0
        %v3572 = vadd.f32 0.0, %v3571
        %v3573 = vpop.f32.mrb[0].mxu0
        %3574 = vmatprep.mubr.f32.mxu0 0.0
        %3575 = vmatmul.mubr.f32.gmra.mrb[0].mxu0 %v3500
        %v3576 = vpop.f32.mrb[0].mxu0
        %v3577 = vadd.f32 0.0, %v3576
        %v3578 = vpop.f32.mrb[0].mxu0
        %3579 = vmatprep.mubr.f32.mxu0 0.0
        %3580 = vmatmul.mubr.f32.gmra.mrb[0].mxu0 %v3503
        %v3581 = vpop.f32.mrb[0].mxu0
        %v3582 = vadd.f32 0.0, %v3581
        %v3583 = vpop.f32.mrb[0].mxu0
        %3584 = vdwg.mxu0
        %v3585 = vsel %vm988, %v3572, -inf
        %3586 = vmax.xlane.f32.xlu0 %v3585
        %v3587 = vpop.xlane.xlu0 %3586
        %v3588 = vsel %vm988, %v3577, -inf
        %3589 = vmax.xlane.f32.xlu0 %v3588
        %v3590 = vpop.xlane.xlu0 %3589
        %v3591 = vsel %vm988, %v3582, -inf
        %3592 = vmax.xlane.f32.xlu0 %v3591
        %v3593 = vpop.xlane.xlu0 %3592
        %v3594 = vsub.f32 %v3572, %v3587
        %v3595 = vsub.f32 %v3577, %v3590
        %v3596 = vsub.f32 %v3582, %v3593
        %v3597 = vmul.f32 %v3594, 1.442695
        %v3598 = vpow.pop %v3597
        %v3599 = vmul.f32 %v3595, 1.442695
        %v3600 = vpow.pop %v3599
        %v3601 = vmul.f32 %v3596, 1.442695
        %v3602 = vpow.pop %v3601
        %v3603 = vsel %vm988, %v3598, 0.0
        %3604 = vadd.xlane.f32.xlu0 %v3603
        %v3605 = vpop.xlane.xlu0 %3604
        %v3606 = vsel %vm988, %v3600, 0.0
        %3607 = vadd.xlane.f32.xlu0 %v3606
        %v3608 = vpop.xlane.xlu0 %3607
        %v3609 = vsel %vm988, %v3602, 0.0
        %3610 = vadd.xlane.f32.xlu0 %v3609
        %v3611 = vpop.xlane.xlu0 %3610
        %v3612 = vrcp.pop %v3605
        %v3613 = vrcp.pop %v3608
        %v3614 = vrcp.pop %v3611
        %v3615 = vmul.f32 %v3598, %v3612
        %v3616 = vmul.f32 %v3600, %v3613
        %v3617 = vmul.f32 %v3602, %v3614
        %s3618 = scalar_lea.vmem %s6, 16
        %v3619 = vld [vmem:[%s3618] sm:$0xff]
        %3620 = vrot.lane.b32.xlu0 %v3483, 112
        %v3621 = vpop.permute.xlu0 %3620
        %3622 = vrot.lane.b32.xlu0 %v3488, 112
        %v3623 = vpop.permute.xlu0 %3622
        %3624 = vrot.lane.b32.xlu0 %v3493, 112
        %v3625 = vpop.permute.xlu0 %3624
        %v3626 = vsel %vm895, %v3621, 0
        %v3628 = vsel %vm895, %v3623, 0
        %v3630 = vsel %vm895, %v3625, 0
        %3632 = vmatprep.subr.mxu0 0.0
        %3633 = vmatpush1.xpose.msra.mxu0 %v1037
        %3634 = vmatprep.subr.mxu0 0.0
        %3635 = vmatpush1.xpose.msra.mxu0 0.0
        %3636 = vmatprep.subr.mxu0 0.0
        %3637 = vmatpush1.xpose.msra.mxu0 0.0
        %3638 = vmatprep.subr.mxu0 0.0
        %3639 = vmatpush1.xpose.msra.mxu0 0.0
        %3640 = vmatprep.subr.mxu0 0.0
        %3641 = vmatpush1.xpose.msra.mxu0 0.0
        %3642 = vmatprep.subr.mxu0 0.0
        %3643 = vmatpush1.xpose.msra.mxu0 0.0
        %3644 = vmatprep.subr.mxu0 0.0
        %3645 = vmatpush1.xpose.msra.mxu0 0.0
        %3646 = vmatprep.subr.mxu0 0.0
        %3647 = vmatpush1.xpose.msra.mxu0 0.0
        %3648 = vmatprep.subr.mxu0 0.0
        %3649 = vmatpush1.xpose.msra.mxu0 0.0
        %3650 = vmatprep.subr.mxu0 0.0
        %3651 = vmatpush1.xpose.msra.mxu0 0.0
        %3652 = vmatprep.subr.mxu0 0.0
        %3653 = vmatpush1.xpose.msra.mxu0 0.0
        %3654 = vmatprep.subr.mxu0 0.0
        %3655 = vmatpush1.xpose.msra.mxu0 0.0
        %3656 = vmatprep.subr.mxu0 0.0
        %3657 = vmatpush1.xpose.msra.mxu0 0.0
        %3658 = vmatprep.subr.mxu0 0.0
        %3659 = vmatpush1.xpose.msra.mxu0 0.0
        %3660 = vmatprep.subr.mxu0 0.0
        %3661 = vmatpush1.xpose.msra.mxu0 0.0
        %3662 = vmatprep.subr.mxu0 0.0
        %3663 = vmatpush1.xpose.msra.mxu0 0.0
        %3664 = vmatprep.subr.mxu0 0.0
        %3665 = vmatpush1.xpose.msra.mxu0 0.0
        %3666 = vmatprep.subr.mxu0 0.0
        %3667 = vmatpush1.xpose.msra.mxu0 0.0
        %3668 = vmatprep.subr.mxu0 0.0
        %3669 = vmatpush1.xpose.msra.mxu0 0.0
        %3670 = vmatprep.subr.mxu0 0.0
        %3671 = vmatpush1.xpose.msra.mxu0 0.0
        %3672 = vmatprep.subr.mxu0 0.0
        %3673 = vmatpush1.xpose.msra.mxu0 0.0
        %3674 = vmatprep.subr.mxu0 0.0
        %3675 = vmatpush1.xpose.msra.mxu0 0.0
        %3676 = vmatprep.subr.mxu0 0.0
        %3677 = vmatpush1.xpose.msra.mxu0 0.0
        %3678 = vmatprep.subr.mxu0 0.0
        %3679 = vmatpush1.xpose.msra.mxu0 0.0
        %3680 = vmatprep.subr.mxu0 0.0
        %3681 = vmatpush1.xpose.msra.mxu0 0.0
        %3682 = vmatprep.subr.mxu0 0.0
        %3683 = vmatpush1.xpose.msra.mxu0 0.0
        %3684 = vmatprep.subr.mxu0 0.0
        %3685 = vmatpush1.xpose.msra.mxu0 0.0
        %3686 = vmatprep.subr.mxu0 0.0
        %3687 = vmatpush1.xpose.msra.mxu0 0.0
        %3688 = vmatprep.subr.mxu0 0.0
        %3689 = vmatpush1.xpose.msra.mxu0 0.0
        %3690 = vmatprep.subr.mxu0 0.0
        %3691 = vmatpush1.xpose.msra.mxu0 0.0
        %3692 = vmatprep.subr.mxu0 0.0
        %3693 = vmatpush1.xpose.msra.mxu0 0.0
        %3694 = vmatprep.subr.mxu0 0.0
        %3695 = vmatpush1.xpose.msra.mxu0 0.0
        %3696 = vmatprep.mubr.f32.mxu0 0.0
        %3697 = vmatmul.mubr.f32.gmra.mrb[0].mxu0 %v3626
        %v3698 = vpop.f32.mrb[0].mxu0
        %v3699 = vadd.f32 0.0, %v3698
        %v3700 = vpop.f32.mrb[0].mxu0
        %3701 = vmatprep.mubr.f32.mxu0 0.0
        %3702 = vmatmul.mubr.f32.gmra.mrb[0].mxu0 %v3628
        %v3703 = vpop.f32.mrb[0].mxu0
        %v3704 = vadd.f32 0.0, %v3703
        %v3705 = vpop.f32.mrb[0].mxu0
        %3706 = vmatprep.mubr.f32.mxu0 0.0
        %3707 = vmatmul.mubr.f32.gmra.mrb[0].mxu0 %v3630
        %v3708 = vpop.f32.mrb[0].mxu0
        %v3709 = vadd.f32 0.0, %v3708
        %v3710 = vpop.f32.mrb[0].mxu0
        %3711 = vdwg.mxu0
        %v3712 = vsel %vm988, %v3699, -inf
        %3713 = vmax.xlane.f32.xlu0 %v3712
        %v3714 = vpop.xlane.xlu0 %3713
        %v3715 = vsel %vm988, %v3704, -inf
        %3716 = vmax.xlane.f32.xlu0 %v3715
        %v3717 = vpop.xlane.xlu0 %3716
        %v3718 = vsel %vm988, %v3709, -inf
        %3719 = vmax.xlane.f32.xlu0 %v3718
        %v3720 = vpop.xlane.xlu0 %3719
        %v3721 = vsub.f32 %v3699, %v3714
        %v3722 = vsub.f32 %v3704, %v3717
        %v3723 = vsub.f32 %v3709, %v3720
        %v3724 = vmul.f32 %v3721, 1.442695
        %v3725 = vpow.pop %v3724
        %v3726 = vmul.f32 %v3722, 1.442695
        %v3727 = vpow.pop %v3726
        %v3728 = vmul.f32 %v3723, 1.442695
        %v3729 = vpow.pop %v3728
        %v3730 = vsel %vm988, %v3725, 0.0
        %3731 = vadd.xlane.f32.xlu0 %v3730
        %v3732 = vpop.xlane.xlu0 %3731
        %v3733 = vsel %vm988, %v3727, 0.0
        %3734 = vadd.xlane.f32.xlu0 %v3733
        %v3735 = vpop.xlane.xlu0 %3734
        %v3736 = vsel %vm988, %v3729, 0.0
        %3737 = vadd.xlane.f32.xlu0 %v3736
        %v3738 = vpop.xlane.xlu0 %3737
        %v3739 = vrcp.pop %v3732
        %v3740 = vrcp.pop %v3735
        %v3741 = vrcp.pop %v3738
        %v3742 = vmul.f32 %v3725, %v3739
        %v3743 = vmul.f32 %v3727, %v3740
        %v3744 = vmul.f32 %v3729, %v3741
        %s3745 = scalar_lea.vmem %s6, 24
        %v3746 = vld [vmem:[%s3745] sm:$0xff]
        %v3748 = vsel %vm988, %v3742, 0
        %v3751 = vsel %vm988, %v3743, 0
        %v3754 = vsel %vm988, %v3744, 0
        %3756 = vmatprep.subr.mxu0 0.0
        %3757 = vmatpush1.msra.mxu0 %v3746
        %3758 = vmatprep.subr.mxu0 0.0
        %3759 = vmatpush1.msra.mxu0 0.0
        %3760 = vmatprep.subr.mxu0 0.0
        %3761 = vmatpush1.msra.mxu0 0.0
        %3762 = vmatprep.subr.mxu0 0.0
        %3763 = vmatpush1.msra.mxu0 0.0
        %3764 = vmatprep.subr.mxu0 0.0
        %3765 = vmatpush1.msra.mxu0 0.0
        %3766 = vmatprep.subr.mxu0 0.0
        %3767 = vmatpush1.msra.mxu0 0.0
        %3768 = vmatprep.subr.mxu0 0.0
        %3769 = vmatpush1.msra.mxu0 0.0
        %3770 = vmatprep.subr.mxu0 0.0
        %3771 = vmatpush1.msra.mxu0 0.0
        %3772 = vmatprep.subr.mxu0 0.0
        %3773 = vmatpush1.msra.mxu0 0.0
        %3774 = vmatprep.subr.mxu0 0.0
        %3775 = vmatpush1.msra.mxu0 0.0
        %3776 = vmatprep.subr.mxu0 0.0
        %3777 = vmatpush1.msra.mxu0 0.0
        %3778 = vmatprep.subr.mxu0 0.0
        %3779 = vmatpush1.msra.mxu0 0.0
        %3780 = vmatprep.subr.mxu0 0.0
        %3781 = vmatpush1.msra.mxu0 0.0
        %3782 = vmatprep.subr.mxu0 0.0
        %3783 = vmatpush1.msra.mxu0 0.0
        %3784 = vmatprep.subr.mxu0 0.0
        %3785 = vmatpush1.msra.mxu0 0.0
        %3786 = vmatprep.subr.mxu0 0.0
        %3787 = vmatpush1.msra.mxu0 0.0
        %3788 = vmatprep.subr.mxu0 0.0
        %3789 = vmatpush1.msra.mxu0 0.0
        %3790 = vmatprep.subr.mxu0 0.0
        %3791 = vmatpush1.msra.mxu0 0.0
        %3792 = vmatprep.subr.mxu0 0.0
        %3793 = vmatpush1.msra.mxu0 0.0
        %3794 = vmatprep.subr.mxu0 0.0
        %3795 = vmatpush1.msra.mxu0 0.0
        %3796 = vmatprep.subr.mxu0 0.0
        %3797 = vmatpush1.msra.mxu0 0.0
        %3798 = vmatprep.subr.mxu0 0.0
        %3799 = vmatpush1.msra.mxu0 0.0
        %3800 = vmatprep.subr.mxu0 0.0
        %3801 = vmatpush1.msra.mxu0 0.0
        %3802 = vmatprep.subr.mxu0 0.0
        %3803 = vmatpush1.msra.mxu0 0.0
        %3804 = vmatprep.subr.mxu0 0.0
        %3805 = vmatpush1.msra.mxu0 0.0
        %3806 = vmatprep.subr.mxu0 0.0
        %3807 = vmatpush1.msra.mxu0 0.0
        %3808 = vmatprep.subr.mxu0 0.0
        %3809 = vmatpush1.msra.mxu0 0.0
        %3810 = vmatprep.subr.mxu0 0.0
        %3811 = vmatpush1.msra.mxu0 0.0
        %3812 = vmatprep.subr.mxu0 0.0
        %3813 = vmatpush1.msra.mxu0 0.0
        %3814 = vmatprep.subr.mxu0 0.0
        %3815 = vmatpush1.msra.mxu0 0.0
        %3816 = vmatprep.subr.mxu0 0.0
        %3817 = vmatpush1.msra.mxu0 0.0
        %3818 = vmatprep.subr.mxu0 0.0
        %3819 = vmatpush1.msra.mxu0 0.0
        %3820 = vmatprep.mubr.f32.mxu0 0.0
        %3821 = vmatmul.mubr.f32.gmra.mrb[0].mxu0 %v3748
        %v3822 = vpop.f32.mrb[0].mxu0
        %v3823 = vadd.f32 0.0, %v3822
        %v3824 = vpop.f32.mrb[0].mxu0
        %3825 = vmatprep.mubr.f32.mxu0 0.0
        %3826 = vmatmul.mubr.f32.gmra.mrb[0].mxu0 %v3751
        %v3827 = vpop.f32.mrb[0].mxu0
        %v3828 = vadd.f32 0.0, %v3827
        %v3829 = vpop.f32.mrb[0].mxu0
        %3830 = vmatprep.mubr.f32.mxu0 0.0
        %3831 = vmatmul.mubr.f32.gmra.mrb[0].mxu0 %v3754
        %v3832 = vpop.f32.mrb[0].mxu0
        %v3833 = vadd.f32 0.0, %v3832
        %v3834 = vpop.f32.mrb[0].mxu0
        %3835 = vdwg.mxu0
        %v3837 = vsel %vm988, %v3615, 0
        %v3840 = vsel %vm988, %v3616, 0
        %v3843 = vsel %vm988, %v3617, 0
        %3845 = vmatprep.subr.mxu0 0.0
        %3846 = vmatpush1.msra.mxu0 %v3619
        %3847 = vmatprep.subr.mxu0 0.0
        %3848 = vmatpush1.msra.mxu0 0.0
        %3849 = vmatprep.subr.mxu0 0.0
        %3850 = vmatpush1.msra.mxu0 0.0
        %3851 = vmatprep.subr.mxu0 0.0
        %3852 = vmatpush1.msra.mxu0 0.0
        %3853 = vmatprep.subr.mxu0 0.0
        %3854 = vmatpush1.msra.mxu0 0.0
        %3855 = vmatprep.subr.mxu0 0.0
        %3856 = vmatpush1.msra.mxu0 0.0
        %3857 = vmatprep.subr.mxu0 0.0
        %3858 = vmatpush1.msra.mxu0 0.0
        %3859 = vmatprep.subr.mxu0 0.0
        %3860 = vmatpush1.msra.mxu0 0.0
        %3861 = vmatprep.subr.mxu0 0.0
        %3862 = vmatpush1.msra.mxu0 0.0
        %3863 = vmatprep.subr.mxu0 0.0
        %3864 = vmatpush1.msra.mxu0 0.0
        %3865 = vmatprep.subr.mxu0 0.0
        %3866 = vmatpush1.msra.mxu0 0.0
        %3867 = vmatprep.subr.mxu0 0.0
        %3868 = vmatpush1.msra.mxu0 0.0
        %3869 = vmatprep.subr.mxu0 0.0
        %3870 = vmatpush1.msra.mxu0 0.0
        %3871 = vmatprep.subr.mxu0 0.0
        %3872 = vmatpush1.msra.mxu0 0.0
        %3873 = vmatprep.subr.mxu0 0.0
        %3874 = vmatpush1.msra.mxu0 0.0
        %3875 = vmatprep.subr.mxu0 0.0
        %3876 = vmatpush1.msra.mxu0 0.0
        %3877 = vmatprep.subr.mxu0 0.0
        %3878 = vmatpush1.msra.mxu0 0.0
        %3879 = vmatprep.subr.mxu0 0.0
        %3880 = vmatpush1.msra.mxu0 0.0
        %3881 = vmatprep.subr.mxu0 0.0
        %3882 = vmatpush1.msra.mxu0 0.0
        %3883 = vmatprep.subr.mxu0 0.0
        %3884 = vmatpush1.msra.mxu0 0.0
        %3885 = vmatprep.subr.mxu0 0.0
        %3886 = vmatpush1.msra.mxu0 0.0
        %3887 = vmatprep.subr.mxu0 0.0
        %3888 = vmatpush1.msra.mxu0 0.0
        %3889 = vmatprep.subr.mxu0 0.0
        %3890 = vmatpush1.msra.mxu0 0.0
        %3891 = vmatprep.subr.mxu0 0.0
        %3892 = vmatpush1.msra.mxu0 0.0
        %3893 = vmatprep.subr.mxu0 0.0
        %3894 = vmatpush1.msra.mxu0 0.0
        %3895 = vmatprep.subr.mxu0 0.0
        %3896 = vmatpush1.msra.mxu0 0.0
        %3897 = vmatprep.subr.mxu0 0.0
        %3898 = vmatpush1.msra.mxu0 0.0
        %3899 = vmatprep.subr.mxu0 0.0
        %3900 = vmatpush1.msra.mxu0 0.0
        %3901 = vmatprep.subr.mxu0 0.0
        %3902 = vmatpush1.msra.mxu0 0.0
        %3903 = vmatprep.subr.mxu0 0.0
        %3904 = vmatpush1.msra.mxu0 0.0
        %3905 = vmatprep.subr.mxu0 0.0
        %3906 = vmatpush1.msra.mxu0 0.0
        %3907 = vmatprep.subr.mxu0 0.0
        %3908 = vmatpush1.msra.mxu0 0.0
        %3909 = vmatprep.mubr.f32.mxu0 0.0
        %3910 = vmatmul.mubr.f32.gmra.mrb[0].mxu0 %v3837
        %v3911 = vpop.f32.mrb[0].mxu0
        %v3912 = vadd.f32 %v3823, %v3911
        %v3913 = vpop.f32.mrb[0].mxu0
        %3914 = vmatprep.mubr.f32.mxu0 0.0
        %3915 = vmatmul.mubr.f32.gmra.mrb[0].mxu0 %v3840
        %v3916 = vpop.f32.mrb[0].mxu0
        %v3917 = vadd.f32 %v3828, %v3916
        %v3918 = vpop.f32.mrb[0].mxu0
        %3919 = vmatprep.mubr.f32.mxu0 0.0
        %3920 = vmatmul.mubr.f32.gmra.mrb[0].mxu0 %v3843
        %v3921 = vpop.f32.mrb[0].mxu0
        %v3922 = vadd.f32 %v3833, %v3921
        %v3923 = vpop.f32.mrb[0].mxu0
        %3924 = vdwg.mxu0
        %v3925 = vsel %vm712, %v3402, 0.0
        %3926 = vadd.xlane.f32.xlu0 %v3925
        %v3927 = vpop.xlane.xlu0 %3926
        %v3928 = vsel %vm712, %v3403, 0.0
        %3929 = vadd.xlane.f32.xlu0 %v3928
        %v3930 = vpop.xlane.xlu0 %3929
        %v3931 = vsel %vm712, %v3404, 0.0
        %3932 = vadd.xlane.f32.xlu0 %v3931
        %v3933 = vpop.xlane.xlu0 %3932
        %v3934 = vmul.f32 %v3927, %v722
        %v3935 = vmul.f32 %v3930, %v722
        %v3936 = vmul.f32 %v3933, %v722
        %v3937 = vsub.f32 %v3402, %v3934
        %v3938 = vsub.f32 %v3403, %v3935
        %v3939 = vsub.f32 %v3404, %v3936
        %v3940 = vmul.f32 %v3937, %v3937
        %v3941 = vmul.f32 %v3938, %v3938
        %v3942 = vmul.f32 %v3939, %v3939
        %v3943 = vsel %vm712, %v3940, 0.0
        %3944 = vadd.xlane.f32.xlu0 %v3943
        %v3945 = vpop.xlane.xlu0 %3944
        %v3946 = vsel %vm712, %v3941, 0.0
        %3947 = vadd.xlane.f32.xlu0 %v3946
        %v3948 = vpop.xlane.xlu0 %3947
        %v3949 = vsel %vm712, %v3942, 0.0
        %3950 = vadd.xlane.f32.xlu0 %v3949
        %v3951 = vpop.xlane.xlu0 %3950
        %v3952 = vmul.f32 %v3945, %v722
        %v3953 = vmul.f32 %v3948, %v722
        %v3954 = vmul.f32 %v3951, %v722
        %v3955 = vadd.f32 %v3952, 1e-05
        %v3956 = vadd.f32 %v3953, 1e-05
        %v3957 = vadd.f32 %v3954, 1e-05
        %v3958 = vrsqrt.pop %v3955
        %v3959 = vrsqrt.pop %v3956
        %v3960 = vrsqrt.pop %v3957
        %v3961 = vmul.f32 %v3937, %v3958
        %v3962 = vmul.f32 %v3938, %v3959
        %v3963 = vmul.f32 %v3939, %v3960
        %v3964 = vlaneseq
        %v3965 = vshrl.u32 %v3964, 7
        %v3966 = vsub.s32 0, %v3965
        %v3967 = vrot.slane %v3406, %v3966
        %v3968 = vmul.f32 %v3961, %v3967
        %v3969 = vmul.f32 %v3962, %v3967
        %v3970 = vmul.f32 %v3963, %v3967
        %v3971 = vlaneseq
        %v3972 = vshrl.u32 %v3971, 7
        %v3973 = vsub.s32 1, %v3972
        %v3974 = vrot.slane %v3406, %v3973
        %v3975 = vadd.f32 %v3968, %v3974
        %v3976 = vadd.f32 %v3969, %v3974
        %v3977 = vadd.f32 %v3970, %v3974
        %s3978 = scalar_lea.vmem %s7, 32
        %v3979 = vld [vmem:[%s3978] sm:$0xff]
        %v3980 = vld [vmem:[%s3978 + $0x8] sm:$0xff]
        %v3981 = vld [vmem:[%s3978 + $0x10] sm:$0xff]
        %v3982 = vld [vmem:[%s3978 + $0x18] sm:$0xff]
        %v3984 = vsel %vm712, %v3975, 0
        %v3987 = vsel %vm712, %v3976, 0
        %v3990 = vsel %vm712, %v3977, 0
        %3992 = vmatprep.subr.mxu0 0.0
        %3993 = vmatpush1.msra.mxu0 %v3979
        %3994 = vmatprep.subr.mxu0 0.0
        %3995 = vmatpush1.msra.mxu0 %v3980
        %3996 = vmatprep.subr.mxu0 0.0
        %3997 = vmatpush1.msra.mxu0 %v3981
        %3998 = vmatprep.subr.mxu0 0.0
        %3999 = vmatpush1.msra.mxu0 %v3982
        %4000 = vmatprep.subr.mxu0 0.0
        %4001 = vmatpush1.msra.mxu0 0.0
        %4002 = vmatprep.subr.mxu0 0.0
        %4003 = vmatpush1.msra.mxu0 0.0
        %4004 = vmatprep.subr.mxu0 0.0
        %4005 = vmatpush1.msra.mxu0 0.0
        %4006 = vmatprep.subr.mxu0 0.0
        %4007 = vmatpush1.msra.mxu0 0.0
        %4008 = vmatprep.subr.mxu0 0.0
        %4009 = vmatpush1.msra.mxu0 0.0
        %4010 = vmatprep.subr.mxu0 0.0
        %4011 = vmatpush1.msra.mxu0 0.0
        %4012 = vmatprep.subr.mxu0 0.0
        %4013 = vmatpush1.msra.mxu0 0.0
        %4014 = vmatprep.subr.mxu0 0.0
        %4015 = vmatpush1.msra.mxu0 0.0
        %4016 = vmatprep.subr.mxu0 0.0
        %4017 = vmatpush1.msra.mxu0 0.0
        %4018 = vmatprep.subr.mxu0 0.0
        %4019 = vmatpush1.msra.mxu0 0.0
        %4020 = vmatprep.subr.mxu0 0.0
        %4021 = vmatpush1.msra.mxu0 0.0
        %4022 = vmatprep.subr.mxu0 0.0
        %4023 = vmatpush1.msra.mxu0 0.0
        %4024 = vmatprep.subr.mxu0 0.0
        %4025 = vmatpush1.msra.mxu0 0.0
        %4026 = vmatprep.subr.mxu0 0.0
        %4027 = vmatpush1.msra.mxu0 0.0
        %4028 = vmatprep.subr.mxu0 0.0
        %4029 = vmatpush1.msra.mxu0 0.0
        %4030 = vmatprep.subr.mxu0 0.0
        %4031 = vmatpush1.msra.mxu0 0.0
        %4032 = vmatprep.subr.mxu0 0.0
        %4033 = vmatpush1.msra.mxu0 0.0
        %4034 = vmatprep.subr.mxu0 0.0
        %4035 = vmatpush1.msra.mxu0 0.0
        %4036 = vmatprep.subr.mxu0 0.0
        %4037 = vmatpush1.msra.mxu0 0.0
        %4038 = vmatprep.subr.mxu0 0.0
        %4039 = vmatpush1.msra.mxu0 0.0
        %4040 = vmatprep.subr.mxu0 0.0
        %4041 = vmatpush1.msra.mxu0 0.0
        %4042 = vmatprep.subr.mxu0 0.0
        %4043 = vmatpush1.msra.mxu0 0.0
        %4044 = vmatprep.subr.mxu0 0.0
        %4045 = vmatpush1.msra.mxu0 0.0
        %4046 = vmatprep.subr.mxu0 0.0
        %4047 = vmatpush1.msra.mxu0 0.0
        %4048 = vmatprep.subr.mxu0 0.0
        %4049 = vmatpush1.msra.mxu0 0.0
        %4050 = vmatprep.subr.mxu0 0.0
        %4051 = vmatpush1.msra.mxu0 0.0
        %4052 = vmatprep.subr.mxu0 0.0
        %4053 = vmatpush1.msra.mxu0 0.0
        %4054 = vmatprep.subr.mxu0 0.0
        %4055 = vmatpush1.msra.mxu0 0.0
        %4056 = vmatprep.mubr.f32.mxu0 0.0
        %4057 = vmatmul.mubr.f32.gmra.mrb[0].mxu0 %v3984
        %v4058 = vpop.f32.mrb[0].mxu0
        %v4059 = vadd.f32 0.0, %v4058
        %v4060 = vpop.f32.mrb[0].mxu0
        %4061 = vmatprep.mubr.f32.mxu0 0.0
        %4062 = vmatmul.mubr.f32.gmra.mrb[0].mxu0 %v3987
        %v4063 = vpop.f32.mrb[0].mxu0
        %v4064 = vadd.f32 0.0, %v4063
        %v4065 = vpop.f32.mrb[0].mxu0
        %4066 = vmatprep.mubr.f32.mxu0 0.0
        %4067 = vmatmul.mubr.f32.gmra.mrb[0].mxu0 %v3990
        %v4068 = vpop.f32.mrb[0].mxu0
        %v4069 = vadd.f32 0.0, %v4068
        %v4070 = vpop.f32.mrb[0].mxu0
        %4071 = vdwg.mxu0
        %4075 = vrot.lane.b32.xlu0 %v4059, 48
        %v4076 = vpop.permute.xlu0 %4075
        %4077 = vrot.lane.b32.xlu0 %v4064, 48
        %v4078 = vpop.permute.xlu0 %4077
        %4079 = vrot.lane.b32.xlu0 %v4069, 48
        %v4080 = vpop.permute.xlu0 %4079
        %4081 = vrot.lane.b32.xlu0 %v4059, 32
        %v4082 = vpop.permute.xlu0 %4081
        %4083 = vrot.lane.b32.xlu0 %v4064, 32
        %v4084 = vpop.permute.xlu0 %4083
        %4085 = vrot.lane.b32.xlu0 %v4069, 32
        %v4086 = vpop.permute.xlu0 %4085
        %v4087 = vsel %vm988, %v4076, 0
        %v4089 = vsel %vm988, %v4078, 0
        %v4091 = vsel %vm988, %v4080, 0
        %v4093 = vsel %vm988, %v4082, 0
        %v4095 = vsel %vm988, %v4084, 0
        %v4097 = vsel %vm988, %v4086, 0
        %4099 = vmatprep.subr.mxu0 0.0
        %4100 = vmatpush1.xpose.msra.mxu0 %v4093
        %4101 = vmatprep.subr.mxu0 0.0
        %4102 = vmatpush1.xpose.msra.mxu0 %v4095
        %4103 = vmatprep.subr.mxu0 0.0
        %4104 = vmatpush1.xpose.msra.mxu0 %v4097
        %4105 = vmatprep.subr.mxu0 0.0
        %4106 = vmatpush1.xpose.msra.mxu0 0.0
        %4107 = vmatprep.subr.mxu0 0.0
        %4108 = vmatpush1.xpose.msra.mxu0 0.0
        %4109 = vmatprep.subr.mxu0 0.0
        %4110 = vmatpush1.xpose.msra.mxu0 0.0
        %4111 = vmatprep.subr.mxu0 0.0
        %4112 = vmatpush1.xpose.msra.mxu0 0.0
        %4113 = vmatprep.subr.mxu0 0.0
        %4114 = vmatpush1.xpose.msra.mxu0 0.0
        %4115 = vmatprep.subr.mxu0 0.0
        %4116 = vmatpush1.xpose.msra.mxu0 0.0
        %4117 = vmatprep.subr.mxu0 0.0
        %4118 = vmatpush1.xpose.msra.mxu0 0.0
        %4119 = vmatprep.subr.mxu0 0.0
        %4120 = vmatpush1.xpose.msra.mxu0 0.0
        %4121 = vmatprep.subr.mxu0 0.0
        %4122 = vmatpush1.xpose.msra.mxu0 0.0
        %4123 = vmatprep.subr.mxu0 0.0
        %4124 = vmatpush1.xpose.msra.mxu0 0.0
        %4125 = vmatprep.subr.mxu0 0.0
        %4126 = vmatpush1.xpose.msra.mxu0 0.0
        %4127 = vmatprep.subr.mxu0 0.0
        %4128 = vmatpush1.xpose.msra.mxu0 0.0
        %4129 = vmatprep.subr.mxu0 0.0
        %4130 = vmatpush1.xpose.msra.mxu0 0.0
        %4131 = vmatprep.subr.mxu0 0.0
        %4132 = vmatpush1.xpose.msra.mxu0 0.0
        %4133 = vmatprep.subr.mxu0 0.0
        %4134 = vmatpush1.xpose.msra.mxu0 0.0
        %4135 = vmatprep.subr.mxu0 0.0
        %4136 = vmatpush1.xpose.msra.mxu0 0.0
        %4137 = vmatprep.subr.mxu0 0.0
        %4138 = vmatpush1.xpose.msra.mxu0 0.0
        %4139 = vmatprep.subr.mxu0 0.0
        %4140 = vmatpush1.xpose.msra.mxu0 0.0
        %4141 = vmatprep.subr.mxu0 0.0
        %4142 = vmatpush1.xpose.msra.mxu0 0.0
        %4143 = vmatprep.subr.mxu0 0.0
        %4144 = vmatpush1.xpose.msra.mxu0 0.0
        %4145 = vmatprep.subr.mxu0 0.0
        %4146 = vmatpush1.xpose.msra.mxu0 0.0
        %4147 = vmatprep.subr.mxu0 0.0
        %4148 = vmatpush1.xpose.msra.mxu0 0.0
        %4149 = vmatprep.subr.mxu0 0.0
        %4150 = vmatpush1.xpose.msra.mxu0 0.0
        %4151 = vmatprep.subr.mxu0 0.0
        %4152 = vmatpush1.xpose.msra.mxu0 0.0
        %4153 = vmatprep.subr.mxu0 0.0
        %4154 = vmatpush1.xpose.msra.mxu0 0.0
        %4155 = vmatprep.subr.mxu0 0.0
        %4156 = vmatpush1.xpose.msra.mxu0 0.0
        %4157 = vmatprep.subr.mxu0 0.0
        %4158 = vmatpush1.xpose.msra.mxu0 0.0
        %4159 = vmatprep.subr.mxu0 0.0
        %4160 = vmatpush1.xpose.msra.mxu0 0.0
        %4161 = vmatprep.subr.mxu0 0.0
        %4162 = vmatpush1.xpose.msra.mxu0 0.0
        %4163 = vmatprep.mubr.f32.mxu0 0.0
        %4164 = vmatmul.mubr.f32.gmra.mrb[0].mxu0 %v4087
        %v4165 = vpop.f32.mrb[0].mxu0
        %v4166 = vadd.f32 0.0, %v4165
        %v4167 = vpop.f32.mrb[0].mxu0
        %4168 = vmatprep.mubr.f32.mxu0 0.0
        %4169 = vmatmul.mubr.f32.gmra.mrb[0].mxu0 %v4089
        %v4170 = vpop.f32.mrb[0].mxu0
        %v4171 = vadd.f32 0.0, %v4170
        %v4172 = vpop.f32.mrb[0].mxu0
        %4173 = vmatprep.mubr.f32.mxu0 0.0
        %4174 = vmatmul.mubr.f32.gmra.mrb[0].mxu0 %v4091
        %v4175 = vpop.f32.mrb[0].mxu0
        %v4176 = vadd.f32 0.0, %v4175
        %v4177 = vpop.f32.mrb[0].mxu0
        %4178 = vdwg.mxu0
        %4179 = vrot.lane.b32.xlu0 %v4059, 40
        %v4180 = vpop.permute.xlu0 %4179
        %4181 = vrot.lane.b32.xlu0 %v4064, 40
        %v4182 = vpop.permute.xlu0 %4181
        %4183 = vrot.lane.b32.xlu0 %v4069, 40
        %v4184 = vpop.permute.xlu0 %4183
        %4185 = vrot.lane.b32.xlu0 %v4059, 24
        %v4186 = vpop.permute.xlu0 %4185
        %4187 = vrot.lane.b32.xlu0 %v4064, 24
        %v4188 = vpop.permute.xlu0 %4187
        %4189 = vrot.lane.b32.xlu0 %v4069, 24
        %v4190 = vpop.permute.xlu0 %4189
        %v4191 = vsel %vm988, %v4180, 0
        %v4193 = vsel %vm988, %v4182, 0
        %v4195 = vsel %vm988, %v4184, 0
        %v4197 = vsel %vm988, %v4186, 0
        %v4199 = vsel %vm988, %v4188, 0
        %v4201 = vsel %vm988, %v4190, 0
        %4203 = vmatprep.subr.mxu0 0.0
        %4204 = vmatpush1.xpose.msra.mxu0 %v4197
        %4205 = vmatprep.subr.mxu0 0.0
        %4206 = vmatpush1.xpose.msra.mxu0 %v4199
        %4207 = vmatprep.subr.mxu0 0.0
        %4208 = vmatpush1.xpose.msra.mxu0 %v4201
        %4209 = vmatprep.subr.mxu0 0.0
        %4210 = vmatpush1.xpose.msra.mxu0 0.0
        %4211 = vmatprep.subr.mxu0 0.0
        %4212 = vmatpush1.xpose.msra.mxu0 0.0
        %4213 = vmatprep.subr.mxu0 0.0
        %4214 = vmatpush1.xpose.msra.mxu0 0.0
        %4215 = vmatprep.subr.mxu0 0.0
        %4216 = vmatpush1.xpose.msra.mxu0 0.0
        %4217 = vmatprep.subr.mxu0 0.0
        %4218 = vmatpush1.xpose.msra.mxu0 0.0
        %4219 = vmatprep.subr.mxu0 0.0
        %4220 = vmatpush1.xpose.msra.mxu0 0.0
        %4221 = vmatprep.subr.mxu0 0.0
        %4222 = vmatpush1.xpose.msra.mxu0 0.0
        %4223 = vmatprep.subr.mxu0 0.0
        %4224 = vmatpush1.xpose.msra.mxu0 0.0
        %4225 = vmatprep.subr.mxu0 0.0
        %4226 = vmatpush1.xpose.msra.mxu0 0.0
        %4227 = vmatprep.subr.mxu0 0.0
        %4228 = vmatpush1.xpose.msra.mxu0 0.0
        %4229 = vmatprep.subr.mxu0 0.0
        %4230 = vmatpush1.xpose.msra.mxu0 0.0
        %4231 = vmatprep.subr.mxu0 0.0
        %4232 = vmatpush1.xpose.msra.mxu0 0.0
        %4233 = vmatprep.subr.mxu0 0.0
        %4234 = vmatpush1.xpose.msra.mxu0 0.0
        %4235 = vmatprep.subr.mxu0 0.0
        %4236 = vmatpush1.xpose.msra.mxu0 0.0
        %4237 = vmatprep.subr.mxu0 0.0
        %4238 = vmatpush1.xpose.msra.mxu0 0.0
        %4239 = vmatprep.subr.mxu0 0.0
        %4240 = vmatpush1.xpose.msra.mxu0 0.0
        %4241 = vmatprep.subr.mxu0 0.0
        %4242 = vmatpush1.xpose.msra.mxu0 0.0
        %4243 = vmatprep.subr.mxu0 0.0
        %4244 = vmatpush1.xpose.msra.mxu0 0.0
        %4245 = vmatprep.subr.mxu0 0.0
        %4246 = vmatpush1.xpose.msra.mxu0 0.0
        %4247 = vmatprep.subr.mxu0 0.0
        %4248 = vmatpush1.xpose.msra.mxu0 0.0
        %4249 = vmatprep.subr.mxu0 0.0
        %4250 = vmatpush1.xpose.msra.mxu0 0.0
        %4251 = vmatprep.subr.mxu0 0.0
        %4252 = vmatpush1.xpose.msra.mxu0 0.0
        %4253 = vmatprep.subr.mxu0 0.0
        %4254 = vmatpush1.xpose.msra.mxu0 0.0
        %4255 = vmatprep.subr.mxu0 0.0
        %4256 = vmatpush1.xpose.msra.mxu0 0.0
        %4257 = vmatprep.subr.mxu0 0.0
        %4258 = vmatpush1.xpose.msra.mxu0 0.0
        %4259 = vmatprep.subr.mxu0 0.0
        %4260 = vmatpush1.xpose.msra.mxu0 0.0
        %4261 = vmatprep.subr.mxu0 0.0
        %4262 = vmatpush1.xpose.msra.mxu0 0.0
        %4263 = vmatprep.subr.mxu0 0.0
        %4264 = vmatpush1.xpose.msra.mxu0 0.0
        %4265 = vmatprep.subr.mxu0 0.0
        %4266 = vmatpush1.xpose.msra.mxu0 0.0
        %4267 = vmatprep.mubr.f32.mxu0 0.0
        %4268 = vmatmul.mubr.f32.gmra.mrb[0].mxu0 %v4191
        %v4269 = vpop.f32.mrb[0].mxu0
        %v4270 = vadd.f32 0.0, %v4269
        %v4271 = vpop.f32.mrb[0].mxu0
        %4272 = vmatprep.mubr.f32.mxu0 0.0
        %4273 = vmatmul.mubr.f32.gmra.mrb[0].mxu0 %v4193
        %v4274 = vpop.f32.mrb[0].mxu0
        %v4275 = vadd.f32 0.0, %v4274
        %v4276 = vpop.f32.mrb[0].mxu0
        %4277 = vmatprep.mubr.f32.mxu0 0.0
        %4278 = vmatmul.mubr.f32.gmra.mrb[0].mxu0 %v4195
        %v4279 = vpop.f32.mrb[0].mxu0
        %v4280 = vadd.f32 0.0, %v4279
        %v4281 = vpop.f32.mrb[0].mxu0
        %4282 = vdwg.mxu0
        %4283 = vrot.lane.b32.xlu0 %v4059, 112
        %v4284 = vpop.permute.xlu0 %4283
        %4285 = vrot.lane.b32.xlu0 %v4064, 112
        %v4286 = vpop.permute.xlu0 %4285
        %4287 = vrot.lane.b32.xlu0 %v4069, 112
        %v4288 = vpop.permute.xlu0 %4287
        %v4289 = vsel %vm988, %v4059, 0
        %v4291 = vsel %vm988, %v4064, 0
        %v4293 = vsel %vm988, %v4069, 0
        %v4295 = vsel %vm988, %v4284, 0
        %v4297 = vsel %vm988, %v4286, 0
        %v4299 = vsel %vm988, %v4288, 0
        %4301 = vmatprep.subr.mxu0 0.0
        %4302 = vmatpush1.xpose.msra.mxu0 %v4295
        %4303 = vmatprep.subr.mxu0 0.0
        %4304 = vmatpush1.xpose.msra.mxu0 %v4297
        %4305 = vmatprep.subr.mxu0 0.0
        %4306 = vmatpush1.xpose.msra.mxu0 %v4299
        %4307 = vmatprep.subr.mxu0 0.0
        %4308 = vmatpush1.xpose.msra.mxu0 0.0
        %4309 = vmatprep.subr.mxu0 0.0
        %4310 = vmatpush1.xpose.msra.mxu0 0.0
        %4311 = vmatprep.subr.mxu0 0.0
        %4312 = vmatpush1.xpose.msra.mxu0 0.0
        %4313 = vmatprep.subr.mxu0 0.0
        %4314 = vmatpush1.xpose.msra.mxu0 0.0
        %4315 = vmatprep.subr.mxu0 0.0
        %4316 = vmatpush1.xpose.msra.mxu0 0.0
        %4317 = vmatprep.subr.mxu0 0.0
        %4318 = vmatpush1.xpose.msra.mxu0 0.0
        %4319 = vmatprep.subr.mxu0 0.0
        %4320 = vmatpush1.xpose.msra.mxu0 0.0
        %4321 = vmatprep.subr.mxu0 0.0
        %4322 = vmatpush1.xpose.msra.mxu0 0.0
        %4323 = vmatprep.subr.mxu0 0.0
        %4324 = vmatpush1.xpose.msra.mxu0 0.0
        %4325 = vmatprep.subr.mxu0 0.0
        %4326 = vmatpush1.xpose.msra.mxu0 0.0
        %4327 = vmatprep.subr.mxu0 0.0
        %4328 = vmatpush1.xpose.msra.mxu0 0.0
        %4329 = vmatprep.subr.mxu0 0.0
        %4330 = vmatpush1.xpose.msra.mxu0 0.0
        %4331 = vmatprep.subr.mxu0 0.0
        %4332 = vmatpush1.xpose.msra.mxu0 0.0
        %4333 = vmatprep.subr.mxu0 0.0
        %4334 = vmatpush1.xpose.msra.mxu0 0.0
        %4335 = vmatprep.subr.mxu0 0.0
        %4336 = vmatpush1.xpose.msra.mxu0 0.0
        %4337 = vmatprep.subr.mxu0 0.0
        %4338 = vmatpush1.xpose.msra.mxu0 0.0
        %4339 = vmatprep.subr.mxu0 0.0
        %4340 = vmatpush1.xpose.msra.mxu0 0.0
        %4341 = vmatprep.subr.mxu0 0.0
        %4342 = vmatpush1.xpose.msra.mxu0 0.0
        %4343 = vmatprep.subr.mxu0 0.0
        %4344 = vmatpush1.xpose.msra.mxu0 0.0
        %4345 = vmatprep.subr.mxu0 0.0
        %4346 = vmatpush1.xpose.msra.mxu0 0.0
        %4347 = vmatprep.subr.mxu0 0.0
        %4348 = vmatpush1.xpose.msra.mxu0 0.0
        %4349 = vmatprep.subr.mxu0 0.0
        %4350 = vmatpush1.xpose.msra.mxu0 0.0
        %4351 = vmatprep.subr.mxu0 0.0
        %4352 = vmatpush1.xpose.msra.mxu0 0.0
        %4353 = vmatprep.subr.mxu0 0.0
        %4354 = vmatpush1.xpose.msra.mxu0 0.0
        %4355 = vmatprep.subr.mxu0 0.0
        %4356 = vmatpush1.xpose.msra.mxu0 0.0
        %4357 = vmatprep.subr.mxu0 0.0
        %4358 = vmatpush1.xpose.msra.mxu0 0.0
        %4359 = vmatprep.subr.mxu0 0.0
        %4360 = vmatpush1.xpose.msra.mxu0 0.0
        %4361 = vmatprep.subr.mxu0 0.0
        %4362 = vmatpush1.xpose.msra.mxu0 0.0
        %4363 = vmatprep.subr.mxu0 0.0
        %4364 = vmatpush1.xpose.msra.mxu0 0.0
        %4365 = vmatprep.mubr.f32.mxu0 0.0
        %4366 = vmatmul.mubr.f32.gmra.mrb[0].mxu0 %v4289
        %v4367 = vpop.f32.mrb[0].mxu0
        %v4368 = vadd.f32 %v795, %v4367
        %v4369 = vpop.f32.mrb[0].mxu0
        %4370 = vmatprep.mubr.f32.mxu0 0.0
        %4371 = vmatmul.mubr.f32.gmra.mrb[0].mxu0 %v4291
        %v4372 = vpop.f32.mrb[0].mxu0
        %v4373 = vadd.f32 %v795, %v4372
        %v4374 = vpop.f32.mrb[0].mxu0
        %4375 = vmatprep.mubr.f32.mxu0 0.0
        %4376 = vmatmul.mubr.f32.gmra.mrb[0].mxu0 %v4293
        %v4377 = vpop.f32.mrb[0].mxu0
        %v4378 = vadd.f32 %v795, %v4377
        %v4379 = vpop.f32.mrb[0].mxu0
        %4380 = vdwg.mxu0
        %v4381 = vsel %vm1787, %v4368, -inf
        %4382 = vmax.xlane.f32.xlu0 %v4381
        %v4383 = vpop.xlane.xlu0 %4382
        %v4384 = vsel %vm1787, %v4373, -inf
        %4385 = vmax.xlane.f32.xlu0 %v4384
        %v4386 = vpop.xlane.xlu0 %4385
        %v4387 = vsel %vm1787, %v4378, -inf
        %4388 = vmax.xlane.f32.xlu0 %v4387
        %v4389 = vpop.xlane.xlu0 %4388
        %v4390 = vsub.f32 %v4368, %v4383
        %v4391 = vsub.f32 %v4373, %v4386
        %v4392 = vsub.f32 %v4378, %v4389
        %v4393 = vmul.f32 %v4390, 1.442695
        %v4394 = vpow.pop %v4393
        %v4395 = vmul.f32 %v4391, 1.442695
        %v4396 = vpow.pop %v4395
        %v4397 = vmul.f32 %v4392, 1.442695
        %v4398 = vpow.pop %v4397
        %v4399 = vsel %vm1787, %v4394, 0.0
        %4400 = vadd.xlane.f32.xlu0 %v4399
        %v4401 = vpop.xlane.xlu0 %4400
        %v4402 = vsel %vm1787, %v4396, 0.0
        %4403 = vadd.xlane.f32.xlu0 %v4402
        %v4404 = vpop.xlane.xlu0 %4403
        %v4405 = vsel %vm1787, %v4398, 0.0
        %4406 = vadd.xlane.f32.xlu0 %v4405
        %v4407 = vpop.xlane.xlu0 %4406
        %v4408 = vrcp.pop %v4401
        %v4409 = vrcp.pop %v4404
        %v4410 = vrcp.pop %v4407
        %v4411 = vmul.f32 %v4394, %v4408
        %v4412 = vmul.f32 %v4396, %v4409
        %v4413 = vmul.f32 %v4398, %v4410
        %4414 = vrot.lane.b32.xlu0 %v4059, 96
        %v4415 = vpop.permute.xlu0 %4414
        %4416 = vrot.lane.b32.xlu0 %v4064, 96
        %v4417 = vpop.permute.xlu0 %4416
        %4418 = vrot.lane.b32.xlu0 %v4069, 96
        %v4419 = vpop.permute.xlu0 %4418
        %v4424 = vsel %vm1787, %v4411, 0
        %v4427 = vsel %vm1787, %v4412, 0
        %v4430 = vsel %vm1787, %v4413, 0
        %4432 = vmatprep.subr.mxu0 0.0
        %4433 = vmatpush1.msra.mxu0 %v4415
        %4434 = vmatprep.subr.mxu0 0.0
        %4435 = vmatpush1.msra.mxu0 %v4417
        %4436 = vmatprep.subr.mxu0 0.0
        %4437 = vmatpush1.msra.mxu0 %v4419
        %4438 = vmatprep.subr.mxu0 0.0
        %4439 = vmatpush1.msra.mxu0 0.0
        %4440 = vmatprep.subr.mxu0 0.0
        %4441 = vmatpush1.msra.mxu0 0.0
        %4442 = vmatprep.subr.mxu0 0.0
        %4443 = vmatpush1.msra.mxu0 0.0
        %4444 = vmatprep.subr.mxu0 0.0
        %4445 = vmatpush1.msra.mxu0 0.0
        %4446 = vmatprep.subr.mxu0 0.0
        %4447 = vmatpush1.msra.mxu0 0.0
        %4448 = vmatprep.subr.mxu0 0.0
        %4449 = vmatpush1.msra.mxu0 0.0
        %4450 = vmatprep.subr.mxu0 0.0
        %4451 = vmatpush1.msra.mxu0 0.0
        %4452 = vmatprep.subr.mxu0 0.0
        %4453 = vmatpush1.msra.mxu0 0.0
        %4454 = vmatprep.subr.mxu0 0.0
        %4455 = vmatpush1.msra.mxu0 0.0
        %4456 = vmatprep.subr.mxu0 0.0
        %4457 = vmatpush1.msra.mxu0 0.0
        %4458 = vmatprep.subr.mxu0 0.0
        %4459 = vmatpush1.msra.mxu0 0.0
        %4460 = vmatprep.subr.mxu0 0.0
        %4461 = vmatpush1.msra.mxu0 0.0
        %4462 = vmatprep.subr.mxu0 0.0
        %4463 = vmatpush1.msra.mxu0 0.0
        %4464 = vmatprep.subr.mxu0 0.0
        %4465 = vmatpush1.msra.mxu0 0.0
        %4466 = vmatprep.subr.mxu0 0.0
        %4467 = vmatpush1.msra.mxu0 0.0
        %4468 = vmatprep.subr.mxu0 0.0
        %4469 = vmatpush1.msra.mxu0 0.0
        %4470 = vmatprep.subr.mxu0 0.0
        %4471 = vmatpush1.msra.mxu0 0.0
        %4472 = vmatprep.subr.mxu0 0.0
        %4473 = vmatpush1.msra.mxu0 0.0
        %4474 = vmatprep.subr.mxu0 0.0
        %4475 = vmatpush1.msra.mxu0 0.0
        %4476 = vmatprep.subr.mxu0 0.0
        %4477 = vmatpush1.msra.mxu0 0.0
        %4478 = vmatprep.subr.mxu0 0.0
        %4479 = vmatpush1.msra.mxu0 0.0
        %4480 = vmatprep.subr.mxu0 0.0
        %4481 = vmatpush1.msra.mxu0 0.0
        %4482 = vmatprep.subr.mxu0 0.0
        %4483 = vmatpush1.msra.mxu0 0.0
        %4484 = vmatprep.subr.mxu0 0.0
        %4485 = vmatpush1.msra.mxu0 0.0
        %4486 = vmatprep.subr.mxu0 0.0
        %4487 = vmatpush1.msra.mxu0 0.0
        %4488 = vmatprep.subr.mxu0 0.0
        %4489 = vmatpush1.msra.mxu0 0.0
        %4490 = vmatprep.subr.mxu0 0.0
        %4491 = vmatpush1.msra.mxu0 0.0
        %4492 = vmatprep.subr.mxu0 0.0
        %4493 = vmatpush1.msra.mxu0 0.0
        %4494 = vmatprep.subr.mxu0 0.0
        %4495 = vmatpush1.msra.mxu0 0.0
        %4496 = vmatprep.mubr.f32.mxu0 0.0
        %4497 = vmatmul.mubr.f32.gmra.mrb[0].mxu0 %v4424
        %v4498 = vpop.f32.mrb[0].mxu0
        %v4499 = vadd.f32 0.0, %v4498
        %v4500 = vpop.f32.mrb[0].mxu0
        %4501 = vmatprep.mubr.f32.mxu0 0.0
        %4502 = vmatmul.mubr.f32.gmra.mrb[0].mxu0 %v4427
        %v4503 = vpop.f32.mrb[0].mxu0
        %v4504 = vadd.f32 0.0, %v4503
        %v4505 = vpop.f32.mrb[0].mxu0
        %4506 = vmatprep.mubr.f32.mxu0 0.0
        %4507 = vmatmul.mubr.f32.gmra.mrb[0].mxu0 %v4430
        %v4508 = vpop.f32.mrb[0].mxu0
        %v4509 = vadd.f32 0.0, %v4508
        %v4510 = vpop.f32.mrb[0].mxu0
        %4511 = vdwg.mxu0
        %s4512 = scalar_lea.vmem %s8, 32
        %v4513 = vld [vmem:[%s4512] sm:$0xff]
        %4514 = vrot.lane.b32.xlu0 %v4059, 120
        %v4515 = vpop.permute.xlu0 %4514
        %4516 = vrot.lane.b32.xlu0 %v4064, 120
        %v4517 = vpop.permute.xlu0 %4516
        %4518 = vrot.lane.b32.xlu0 %v4069, 120
        %v4519 = vpop.permute.xlu0 %4518
        %4520 = vrot.lane.b32.xlu0 %v4059, 104
        %v4521 = vpop.permute.xlu0 %4520
        %4522 = vrot.lane.b32.xlu0 %v4064, 104
        %v4523 = vpop.permute.xlu0 %4522
        %4524 = vrot.lane.b32.xlu0 %v4069, 104
        %v4525 = vpop.permute.xlu0 %4524
        %v4526 = vsel %vm988, %v4515, 0
        %v4528 = vsel %vm988, %v4517, 0
        %v4530 = vsel %vm988, %v4519, 0
        %v4532 = vsel %vm988, %v4521, 0
        %v4534 = vsel %vm988, %v4523, 0
        %v4536 = vsel %vm988, %v4525, 0
        %4538 = vmatprep.subr.mxu0 0.0
        %4539 = vmatpush1.xpose.msra.mxu0 %v4532
        %4540 = vmatprep.subr.mxu0 0.0
        %4541 = vmatpush1.xpose.msra.mxu0 %v4534
        %4542 = vmatprep.subr.mxu0 0.0
        %4543 = vmatpush1.xpose.msra.mxu0 %v4536
        %4544 = vmatprep.subr.mxu0 0.0
        %4545 = vmatpush1.xpose.msra.mxu0 0.0
        %4546 = vmatprep.subr.mxu0 0.0
        %4547 = vmatpush1.xpose.msra.mxu0 0.0
        %4548 = vmatprep.subr.mxu0 0.0
        %4549 = vmatpush1.xpose.msra.mxu0 0.0
        %4550 = vmatprep.subr.mxu0 0.0
        %4551 = vmatpush1.xpose.msra.mxu0 0.0
        %4552 = vmatprep.subr.mxu0 0.0
        %4553 = vmatpush1.xpose.msra.mxu0 0.0
        %4554 = vmatprep.subr.mxu0 0.0
        %4555 = vmatpush1.xpose.msra.mxu0 0.0
        %4556 = vmatprep.subr.mxu0 0.0
        %4557 = vmatpush1.xpose.msra.mxu0 0.0
        %4558 = vmatprep.subr.mxu0 0.0
        %4559 = vmatpush1.xpose.msra.mxu0 0.0
        %4560 = vmatprep.subr.mxu0 0.0
        %4561 = vmatpush1.xpose.msra.mxu0 0.0
        %4562 = vmatprep.subr.mxu0 0.0
        %4563 = vmatpush1.xpose.msra.mxu0 0.0
        %4564 = vmatprep.subr.mxu0 0.0
        %4565 = vmatpush1.xpose.msra.mxu0 0.0
        %4566 = vmatprep.subr.mxu0 0.0
        %4567 = vmatpush1.xpose.msra.mxu0 0.0
        %4568 = vmatprep.subr.mxu0 0.0
        %4569 = vmatpush1.xpose.msra.mxu0 0.0
        %4570 = vmatprep.subr.mxu0 0.0
        %4571 = vmatpush1.xpose.msra.mxu0 0.0
        %4572 = vmatprep.subr.mxu0 0.0
        %4573 = vmatpush1.xpose.msra.mxu0 0.0
        %4574 = vmatprep.subr.mxu0 0.0
        %4575 = vmatpush1.xpose.msra.mxu0 0.0
        %4576 = vmatprep.subr.mxu0 0.0
        %4577 = vmatpush1.xpose.msra.mxu0 0.0
        %4578 = vmatprep.subr.mxu0 0.0
        %4579 = vmatpush1.xpose.msra.mxu0 0.0
        %4580 = vmatprep.subr.mxu0 0.0
        %4581 = vmatpush1.xpose.msra.mxu0 0.0
        %4582 = vmatprep.subr.mxu0 0.0
        %4583 = vmatpush1.xpose.msra.mxu0 0.0
        %4584 = vmatprep.subr.mxu0 0.0
        %4585 = vmatpush1.xpose.msra.mxu0 0.0
        %4586 = vmatprep.subr.mxu0 0.0
        %4587 = vmatpush1.xpose.msra.mxu0 0.0
        %4588 = vmatprep.subr.mxu0 0.0
        %4589 = vmatpush1.xpose.msra.mxu0 0.0
        %4590 = vmatprep.subr.mxu0 0.0
        %4591 = vmatpush1.xpose.msra.mxu0 0.0
        %4592 = vmatprep.subr.mxu0 0.0
        %4593 = vmatpush1.xpose.msra.mxu0 0.0
        %4594 = vmatprep.subr.mxu0 0.0
        %4595 = vmatpush1.xpose.msra.mxu0 0.0
        %4596 = vmatprep.subr.mxu0 0.0
        %4597 = vmatpush1.xpose.msra.mxu0 0.0
        %4598 = vmatprep.subr.mxu0 0.0
        %4599 = vmatpush1.xpose.msra.mxu0 0.0
        %4600 = vmatprep.subr.mxu0 0.0
        %4601 = vmatpush1.xpose.msra.mxu0 0.0
        %4602 = vmatprep.mubr.f32.mxu0 0.0
        %4603 = vmatmul.mubr.f32.gmra.mrb[0].mxu0 %v4526
        %v4604 = vpop.f32.mrb[0].mxu0
        %v4605 = vadd.f32 %v795, %v4604
        %v4606 = vpop.f32.mrb[0].mxu0
        %4607 = vmatprep.mubr.f32.mxu0 0.0
        %4608 = vmatmul.mubr.f32.gmra.mrb[0].mxu0 %v4528
        %v4609 = vpop.f32.mrb[0].mxu0
        %v4610 = vadd.f32 %v795, %v4609
        %v4611 = vpop.f32.mrb[0].mxu0
        %4612 = vmatprep.mubr.f32.mxu0 0.0
        %4613 = vmatmul.mubr.f32.gmra.mrb[0].mxu0 %v4530
        %v4614 = vpop.f32.mrb[0].mxu0
        %v4615 = vadd.f32 %v795, %v4614
        %v4616 = vpop.f32.mrb[0].mxu0
        %4617 = vdwg.mxu0
        %v4618 = vsel %vm1787, %v4605, -inf
        %4619 = vmax.xlane.f32.xlu0 %v4618
        %v4620 = vpop.xlane.xlu0 %4619
        %v4621 = vsel %vm1787, %v4610, -inf
        %4622 = vmax.xlane.f32.xlu0 %v4621
        %v4623 = vpop.xlane.xlu0 %4622
        %v4624 = vsel %vm1787, %v4615, -inf
        %4625 = vmax.xlane.f32.xlu0 %v4624
        %v4626 = vpop.xlane.xlu0 %4625
        %v4627 = vsub.f32 %v4605, %v4620
        %v4628 = vsub.f32 %v4610, %v4623
        %v4629 = vsub.f32 %v4615, %v4626
        %v4630 = vmul.f32 %v4627, 1.442695
        %v4631 = vpow.pop %v4630
        %v4632 = vmul.f32 %v4628, 1.442695
        %v4633 = vpow.pop %v4632
        %v4634 = vmul.f32 %v4629, 1.442695
        %v4635 = vpow.pop %v4634
        %v4636 = vsel %vm1787, %v4631, 0.0
        %4637 = vadd.xlane.f32.xlu0 %v4636
        %v4638 = vpop.xlane.xlu0 %4637
        %v4639 = vsel %vm1787, %v4633, 0.0
        %4640 = vadd.xlane.f32.xlu0 %v4639
        %v4641 = vpop.xlane.xlu0 %4640
        %v4642 = vsel %vm1787, %v4635, 0.0
        %4643 = vadd.xlane.f32.xlu0 %v4642
        %v4644 = vpop.xlane.xlu0 %4643
        %v4645 = vrcp.pop %v4638
        %v4646 = vrcp.pop %v4641
        %v4647 = vrcp.pop %v4644
        %v4648 = vmul.f32 %v4631, %v4645
        %v4649 = vmul.f32 %v4633, %v4646
        %v4650 = vmul.f32 %v4635, %v4647
        %4651 = vrot.lane.b32.xlu0 %v4059, 88
        %v4652 = vpop.permute.xlu0 %4651
        %4653 = vrot.lane.b32.xlu0 %v4064, 88
        %v4654 = vpop.permute.xlu0 %4653
        %4655 = vrot.lane.b32.xlu0 %v4069, 88
        %v4656 = vpop.permute.xlu0 %4655
        %v4661 = vsel %vm1787, %v4648, 0
        %v4664 = vsel %vm1787, %v4649, 0
        %v4667 = vsel %vm1787, %v4650, 0
        %4669 = vmatprep.subr.mxu0 0.0
        %4670 = vmatpush1.msra.mxu0 %v4652
        %4671 = vmatprep.subr.mxu0 0.0
        %4672 = vmatpush1.msra.mxu0 %v4654
        %4673 = vmatprep.subr.mxu0 0.0
        %4674 = vmatpush1.msra.mxu0 %v4656
        %4675 = vmatprep.subr.mxu0 0.0
        %4676 = vmatpush1.msra.mxu0 0.0
        %4677 = vmatprep.subr.mxu0 0.0
        %4678 = vmatpush1.msra.mxu0 0.0
        %4679 = vmatprep.subr.mxu0 0.0
        %4680 = vmatpush1.msra.mxu0 0.0
        %4681 = vmatprep.subr.mxu0 0.0
        %4682 = vmatpush1.msra.mxu0 0.0
        %4683 = vmatprep.subr.mxu0 0.0
        %4684 = vmatpush1.msra.mxu0 0.0
        %4685 = vmatprep.subr.mxu0 0.0
        %4686 = vmatpush1.msra.mxu0 0.0
        %4687 = vmatprep.subr.mxu0 0.0
        %4688 = vmatpush1.msra.mxu0 0.0
        %4689 = vmatprep.subr.mxu0 0.0
        %4690 = vmatpush1.msra.mxu0 0.0
        %4691 = vmatprep.subr.mxu0 0.0
        %4692 = vmatpush1.msra.mxu0 0.0
        %4693 = vmatprep.subr.mxu0 0.0
        %4694 = vmatpush1.msra.mxu0 0.0
        %4695 = vmatprep.subr.mxu0 0.0
        %4696 = vmatpush1.msra.mxu0 0.0
        %4697 = vmatprep.subr.mxu0 0.0
        %4698 = vmatpush1.msra.mxu0 0.0
        %4699 = vmatprep.subr.mxu0 0.0
        %4700 = vmatpush1.msra.mxu0 0.0
        %4701 = vmatprep.subr.mxu0 0.0
        %4702 = vmatpush1.msra.mxu0 0.0
        %4703 = vmatprep.subr.mxu0 0.0
        %4704 = vmatpush1.msra.mxu0 0.0
        %4705 = vmatprep.subr.mxu0 0.0
        %4706 = vmatpush1.msra.mxu0 0.0
        %4707 = vmatprep.subr.mxu0 0.0
        %4708 = vmatpush1.msra.mxu0 0.0
        %4709 = vmatprep.subr.mxu0 0.0
        %4710 = vmatpush1.msra.mxu0 0.0
        %4711 = vmatprep.subr.mxu0 0.0
        %4712 = vmatpush1.msra.mxu0 0.0
        %4713 = vmatprep.subr.mxu0 0.0
        %4714 = vmatpush1.msra.mxu0 0.0
        %4715 = vmatprep.subr.mxu0 0.0
        %4716 = vmatpush1.msra.mxu0 0.0
        %4717 = vmatprep.subr.mxu0 0.0
        %4718 = vmatpush1.msra.mxu0 0.0
        %4719 = vmatprep.subr.mxu0 0.0
        %4720 = vmatpush1.msra.mxu0 0.0
        %4721 = vmatprep.subr.mxu0 0.0
        %4722 = vmatpush1.msra.mxu0 0.0
        %4723 = vmatprep.subr.mxu0 0.0
        %4724 = vmatpush1.msra.mxu0 0.0
        %4725 = vmatprep.subr.mxu0 0.0
        %4726 = vmatpush1.msra.mxu0 0.0
        %4727 = vmatprep.subr.mxu0 0.0
        %4728 = vmatpush1.msra.mxu0 0.0
        %4729 = vmatprep.subr.mxu0 0.0
        %4730 = vmatpush1.msra.mxu0 0.0
        %4731 = vmatprep.subr.mxu0 0.0
        %4732 = vmatpush1.msra.mxu0 0.0
        %4733 = vmatprep.mubr.f32.mxu0 0.0
        %4734 = vmatmul.mubr.f32.gmra.mrb[0].mxu0 %v4661
        %v4735 = vpop.f32.mrb[0].mxu0
        %v4736 = vadd.f32 0.0, %v4735
        %v4737 = vpop.f32.mrb[0].mxu0
        %4738 = vmatprep.mubr.f32.mxu0 0.0
        %4739 = vmatmul.mubr.f32.gmra.mrb[0].mxu0 %v4664
        %v4740 = vpop.f32.mrb[0].mxu0
        %v4741 = vadd.f32 0.0, %v4740
        %v4742 = vpop.f32.mrb[0].mxu0
        %4743 = vmatprep.mubr.f32.mxu0 0.0
        %4744 = vmatmul.mubr.f32.gmra.mrb[0].mxu0 %v4667
        %v4745 = vpop.f32.mrb[0].mxu0
        %v4746 = vadd.f32 0.0, %v4745
        %v4747 = vpop.f32.mrb[0].mxu0
        %4748 = vdwg.mxu0
        %s4749 = scalar_lea.vmem %s8, 40
        %v4750 = vld [vmem:[%s4749] sm:$0xff]
        %v4752 = vsel %vm988, %v4736, 0
        %v4755 = vsel %vm988, %v4741, 0
        %v4758 = vsel %vm988, %v4746, 0
        %4760 = vmatprep.subr.mxu0 0.0
        %4761 = vmatpush1.msra.mxu0 %v4750
        %4762 = vmatprep.subr.mxu0 0.0
        %4763 = vmatpush1.msra.mxu0 0.0
        %4764 = vmatprep.subr.mxu0 0.0
        %4765 = vmatpush1.msra.mxu0 0.0
        %4766 = vmatprep.subr.mxu0 0.0
        %4767 = vmatpush1.msra.mxu0 0.0
        %4768 = vmatprep.subr.mxu0 0.0
        %4769 = vmatpush1.msra.mxu0 0.0
        %4770 = vmatprep.subr.mxu0 0.0
        %4771 = vmatpush1.msra.mxu0 0.0
        %4772 = vmatprep.subr.mxu0 0.0
        %4773 = vmatpush1.msra.mxu0 0.0
        %4774 = vmatprep.subr.mxu0 0.0
        %4775 = vmatpush1.msra.mxu0 0.0
        %4776 = vmatprep.subr.mxu0 0.0
        %4777 = vmatpush1.msra.mxu0 0.0
        %4778 = vmatprep.subr.mxu0 0.0
        %4779 = vmatpush1.msra.mxu0 0.0
        %4780 = vmatprep.subr.mxu0 0.0
        %4781 = vmatpush1.msra.mxu0 0.0
        %4782 = vmatprep.subr.mxu0 0.0
        %4783 = vmatpush1.msra.mxu0 0.0
        %4784 = vmatprep.subr.mxu0 0.0
        %4785 = vmatpush1.msra.mxu0 0.0
        %4786 = vmatprep.subr.mxu0 0.0
        %4787 = vmatpush1.msra.mxu0 0.0
        %4788 = vmatprep.subr.mxu0 0.0
        %4789 = vmatpush1.msra.mxu0 0.0
        %4790 = vmatprep.subr.mxu0 0.0
        %4791 = vmatpush1.msra.mxu0 0.0
        %4792 = vmatprep.subr.mxu0 0.0
        %4793 = vmatpush1.msra.mxu0 0.0
        %4794 = vmatprep.subr.mxu0 0.0
        %4795 = vmatpush1.msra.mxu0 0.0
        %4796 = vmatprep.subr.mxu0 0.0
        %4797 = vmatpush1.msra.mxu0 0.0
        %4798 = vmatprep.subr.mxu0 0.0
        %4799 = vmatpush1.msra.mxu0 0.0
        %4800 = vmatprep.subr.mxu0 0.0
        %4801 = vmatpush1.msra.mxu0 0.0
        %4802 = vmatprep.subr.mxu0 0.0
        %4803 = vmatpush1.msra.mxu0 0.0
        %4804 = vmatprep.subr.mxu0 0.0
        %4805 = vmatpush1.msra.mxu0 0.0
        %4806 = vmatprep.subr.mxu0 0.0
        %4807 = vmatpush1.msra.mxu0 0.0
        %4808 = vmatprep.subr.mxu0 0.0
        %4809 = vmatpush1.msra.mxu0 0.0
        %4810 = vmatprep.subr.mxu0 0.0
        %4811 = vmatpush1.msra.mxu0 0.0
        %4812 = vmatprep.subr.mxu0 0.0
        %4813 = vmatpush1.msra.mxu0 0.0
        %4814 = vmatprep.subr.mxu0 0.0
        %4815 = vmatpush1.msra.mxu0 0.0
        %4816 = vmatprep.subr.mxu0 0.0
        %4817 = vmatpush1.msra.mxu0 0.0
        %4818 = vmatprep.subr.mxu0 0.0
        %4819 = vmatpush1.msra.mxu0 0.0
        %4820 = vmatprep.subr.mxu0 0.0
        %4821 = vmatpush1.msra.mxu0 0.0
        %4822 = vmatprep.subr.mxu0 0.0
        %4823 = vmatpush1.msra.mxu0 0.0
        %4824 = vmatprep.mubr.f32.mxu0 0.0
        %4825 = vmatmul.mubr.f32.gmra.mrb[0].mxu0 %v4752
        %v4826 = vpop.f32.mrb[0].mxu0
        %v4827 = vadd.f32 0.0, %v4826
        %v4828 = vpop.f32.mrb[0].mxu0
        %4829 = vmatprep.mubr.f32.mxu0 0.0
        %4830 = vmatmul.mubr.f32.gmra.mrb[0].mxu0 %v4755
        %v4831 = vpop.f32.mrb[0].mxu0
        %v4832 = vadd.f32 0.0, %v4831
        %v4833 = vpop.f32.mrb[0].mxu0
        %4834 = vmatprep.mubr.f32.mxu0 0.0
        %4835 = vmatmul.mubr.f32.gmra.mrb[0].mxu0 %v4758
        %v4836 = vpop.f32.mrb[0].mxu0
        %v4837 = vadd.f32 0.0, %v4836
        %v4838 = vpop.f32.mrb[0].mxu0
        %4839 = vdwg.mxu0
        %v4841 = vsel %vm988, %v4499, 0
        %v4844 = vsel %vm988, %v4504, 0
        %v4847 = vsel %vm988, %v4509, 0
        %4849 = vmatprep.subr.mxu0 0.0
        %4850 = vmatpush1.msra.mxu0 %v4513
        %4851 = vmatprep.subr.mxu0 0.0
        %4852 = vmatpush1.msra.mxu0 0.0
        %4853 = vmatprep.subr.mxu0 0.0
        %4854 = vmatpush1.msra.mxu0 0.0
        %4855 = vmatprep.subr.mxu0 0.0
        %4856 = vmatpush1.msra.mxu0 0.0
        %4857 = vmatprep.subr.mxu0 0.0
        %4858 = vmatpush1.msra.mxu0 0.0
        %4859 = vmatprep.subr.mxu0 0.0
        %4860 = vmatpush1.msra.mxu0 0.0
        %4861 = vmatprep.subr.mxu0 0.0
        %4862 = vmatpush1.msra.mxu0 0.0
        %4863 = vmatprep.subr.mxu0 0.0
        %4864 = vmatpush1.msra.mxu0 0.0
        %4865 = vmatprep.subr.mxu0 0.0
        %4866 = vmatpush1.msra.mxu0 0.0
        %4867 = vmatprep.subr.mxu0 0.0
        %4868 = vmatpush1.msra.mxu0 0.0
        %4869 = vmatprep.subr.mxu0 0.0
        %4870 = vmatpush1.msra.mxu0 0.0
        %4871 = vmatprep.subr.mxu0 0.0
        %4872 = vmatpush1.msra.mxu0 0.0
        %4873 = vmatprep.subr.mxu0 0.0
        %4874 = vmatpush1.msra.mxu0 0.0
        %4875 = vmatprep.subr.mxu0 0.0
        %4876 = vmatpush1.msra.mxu0 0.0
        %4877 = vmatprep.subr.mxu0 0.0
        %4878 = vmatpush1.msra.mxu0 0.0
        %4879 = vmatprep.subr.mxu0 0.0
        %4880 = vmatpush1.msra.mxu0 0.0
        %4881 = vmatprep.subr.mxu0 0.0
        %4882 = vmatpush1.msra.mxu0 0.0
        %4883 = vmatprep.subr.mxu0 0.0
        %4884 = vmatpush1.msra.mxu0 0.0
        %4885 = vmatprep.subr.mxu0 0.0
        %4886 = vmatpush1.msra.mxu0 0.0
        %4887 = vmatprep.subr.mxu0 0.0
        %4888 = vmatpush1.msra.mxu0 0.0
        %4889 = vmatprep.subr.mxu0 0.0
        %4890 = vmatpush1.msra.mxu0 0.0
        %4891 = vmatprep.subr.mxu0 0.0
        %4892 = vmatpush1.msra.mxu0 0.0
        %4893 = vmatprep.subr.mxu0 0.0
        %4894 = vmatpush1.msra.mxu0 0.0
        %4895 = vmatprep.subr.mxu0 0.0
        %4896 = vmatpush1.msra.mxu0 0.0
        %4897 = vmatprep.subr.mxu0 0.0
        %4898 = vmatpush1.msra.mxu0 0.0
        %4899 = vmatprep.subr.mxu0 0.0
        %4900 = vmatpush1.msra.mxu0 0.0
        %4901 = vmatprep.subr.mxu0 0.0
        %4902 = vmatpush1.msra.mxu0 0.0
        %4903 = vmatprep.subr.mxu0 0.0
        %4904 = vmatpush1.msra.mxu0 0.0
        %4905 = vmatprep.subr.mxu0 0.0
        %4906 = vmatpush1.msra.mxu0 0.0
        %4907 = vmatprep.subr.mxu0 0.0
        %4908 = vmatpush1.msra.mxu0 0.0
        %4909 = vmatprep.subr.mxu0 0.0
        %4910 = vmatpush1.msra.mxu0 0.0
        %4911 = vmatprep.subr.mxu0 0.0
        %4912 = vmatpush1.msra.mxu0 0.0
        %4913 = vmatprep.mubr.f32.mxu0 0.0
        %4914 = vmatmul.mubr.f32.gmra.mrb[0].mxu0 %v4841
        %v4915 = vpop.f32.mrb[0].mxu0
        %v4916 = vadd.f32 %v4827, %v4915
        %v4917 = vpop.f32.mrb[0].mxu0
        %4918 = vmatprep.mubr.f32.mxu0 0.0
        %4919 = vmatmul.mubr.f32.gmra.mrb[0].mxu0 %v4844
        %v4920 = vpop.f32.mrb[0].mxu0
        %v4921 = vadd.f32 %v4832, %v4920
        %v4922 = vpop.f32.mrb[0].mxu0
        %4923 = vmatprep.mubr.f32.mxu0 0.0
        %4924 = vmatmul.mubr.f32.gmra.mrb[0].mxu0 %v4847
        %v4925 = vpop.f32.mrb[0].mxu0
        %v4926 = vadd.f32 %v4837, %v4925
        %v4927 = vpop.f32.mrb[0].mxu0
        %4928 = vdwg.mxu0
        %4929 = vrot.lane.b32.xlu0 %v4059, 80
        %v4930 = vpop.permute.xlu0 %4929
        %4931 = vrot.lane.b32.xlu0 %v4064, 80
        %v4932 = vpop.permute.xlu0 %4931
        %4933 = vrot.lane.b32.xlu0 %v4069, 80
        %v4934 = vpop.permute.xlu0 %4933
        %4935 = vrot.lane.b32.xlu0 %v4059, 64
        %v4936 = vpop.permute.xlu0 %4935
        %4937 = vrot.lane.b32.xlu0 %v4064, 64
        %v4938 = vpop.permute.xlu0 %4937
        %4939 = vrot.lane.b32.xlu0 %v4069, 64
        %v4940 = vpop.permute.xlu0 %4939
        %v4941 = vsel %vm988, %v4930, 0
        %v4943 = vsel %vm988, %v4932, 0
        %v4945 = vsel %vm988, %v4934, 0
        %v4947 = vsel %vm988, %v4936, 0
        %v4949 = vsel %vm988, %v4938, 0
        %v4951 = vsel %vm988, %v4940, 0
        %4953 = vmatprep.subr.mxu0 0.0
        %4954 = vmatpush1.xpose.msra.mxu0 %v4947
        %4955 = vmatprep.subr.mxu0 0.0
        %4956 = vmatpush1.xpose.msra.mxu0 %v4949
        %4957 = vmatprep.subr.mxu0 0.0
        %4958 = vmatpush1.xpose.msra.mxu0 %v4951
        %4959 = vmatprep.subr.mxu0 0.0
        %4960 = vmatpush1.xpose.msra.mxu0 0.0
        %4961 = vmatprep.subr.mxu0 0.0
        %4962 = vmatpush1.xpose.msra.mxu0 0.0
        %4963 = vmatprep.subr.mxu0 0.0
        %4964 = vmatpush1.xpose.msra.mxu0 0.0
        %4965 = vmatprep.subr.mxu0 0.0
        %4966 = vmatpush1.xpose.msra.mxu0 0.0
        %4967 = vmatprep.subr.mxu0 0.0
        %4968 = vmatpush1.xpose.msra.mxu0 0.0
        %4969 = vmatprep.subr.mxu0 0.0
        %4970 = vmatpush1.xpose.msra.mxu0 0.0
        %4971 = vmatprep.subr.mxu0 0.0
        %4972 = vmatpush1.xpose.msra.mxu0 0.0
        %4973 = vmatprep.subr.mxu0 0.0
        %4974 = vmatpush1.xpose.msra.mxu0 0.0
        %4975 = vmatprep.subr.mxu0 0.0
        %4976 = vmatpush1.xpose.msra.mxu0 0.0
        %4977 = vmatprep.subr.mxu0 0.0
        %4978 = vmatpush1.xpose.msra.mxu0 0.0
        %4979 = vmatprep.subr.mxu0 0.0
        %4980 = vmatpush1.xpose.msra.mxu0 0.0
        %4981 = vmatprep.subr.mxu0 0.0
        %4982 = vmatpush1.xpose.msra.mxu0 0.0
        %4983 = vmatprep.subr.mxu0 0.0
        %4984 = vmatpush1.xpose.msra.mxu0 0.0
        %4985 = vmatprep.subr.mxu0 0.0
        %4986 = vmatpush1.xpose.msra.mxu0 0.0
        %4987 = vmatprep.subr.mxu0 0.0
        %4988 = vmatpush1.xpose.msra.mxu0 0.0
        %4989 = vmatprep.subr.mxu0 0.0
        %4990 = vmatpush1.xpose.msra.mxu0 0.0
        %4991 = vmatprep.subr.mxu0 0.0
        %4992 = vmatpush1.xpose.msra.mxu0 0.0
        %4993 = vmatprep.subr.mxu0 0.0
        %4994 = vmatpush1.xpose.msra.mxu0 0.0
        %4995 = vmatprep.subr.mxu0 0.0
        %4996 = vmatpush1.xpose.msra.mxu0 0.0
        %4997 = vmatprep.subr.mxu0 0.0
        %4998 = vmatpush1.xpose.msra.mxu0 0.0
        %4999 = vmatprep.subr.mxu0 0.0
        %5000 = vmatpush1.xpose.msra.mxu0 0.0
        %5001 = vmatprep.subr.mxu0 0.0
        %5002 = vmatpush1.xpose.msra.mxu0 0.0
        %5003 = vmatprep.subr.mxu0 0.0
        %5004 = vmatpush1.xpose.msra.mxu0 0.0
        %5005 = vmatprep.subr.mxu0 0.0
        %5006 = vmatpush1.xpose.msra.mxu0 0.0
        %5007 = vmatprep.subr.mxu0 0.0
        %5008 = vmatpush1.xpose.msra.mxu0 0.0
        %5009 = vmatprep.subr.mxu0 0.0
        %5010 = vmatpush1.xpose.msra.mxu0 0.0
        %5011 = vmatprep.subr.mxu0 0.0
        %5012 = vmatpush1.xpose.msra.mxu0 0.0
        %5013 = vmatprep.subr.mxu0 0.0
        %5014 = vmatpush1.xpose.msra.mxu0 0.0
        %5015 = vmatprep.subr.mxu0 0.0
        %5016 = vmatpush1.xpose.msra.mxu0 0.0
        %5017 = vmatprep.mubr.f32.mxu0 0.0
        %5018 = vmatmul.mubr.f32.gmra.mrb[0].mxu0 %v4941
        %v5019 = vpop.f32.mrb[0].mxu0
        %v5020 = vadd.f32 %v795, %v5019
        %v5021 = vpop.f32.mrb[0].mxu0
        %5022 = vmatprep.mubr.f32.mxu0 0.0
        %5023 = vmatmul.mubr.f32.gmra.mrb[0].mxu0 %v4943
        %v5024 = vpop.f32.mrb[0].mxu0
        %v5025 = vadd.f32 %v795, %v5024
        %v5026 = vpop.f32.mrb[0].mxu0
        %5027 = vmatprep.mubr.f32.mxu0 0.0
        %5028 = vmatmul.mubr.f32.gmra.mrb[0].mxu0 %v4945
        %v5029 = vpop.f32.mrb[0].mxu0
        %v5030 = vadd.f32 %v795, %v5029
        %v5031 = vpop.f32.mrb[0].mxu0
        %5032 = vdwg.mxu0
        %v5033 = vsel %vm1787, %v5020, -inf
        %5034 = vmax.xlane.f32.xlu0 %v5033
        %v5035 = vpop.xlane.xlu0 %5034
        %v5036 = vsel %vm1787, %v5025, -inf
        %5037 = vmax.xlane.f32.xlu0 %v5036
        %v5038 = vpop.xlane.xlu0 %5037
        %v5039 = vsel %vm1787, %v5030, -inf
        %5040 = vmax.xlane.f32.xlu0 %v5039
        %v5041 = vpop.xlane.xlu0 %5040
        %v5042 = vsub.f32 %v5020, %v5035
        %v5043 = vsub.f32 %v5025, %v5038
        %v5044 = vsub.f32 %v5030, %v5041
        %v5045 = vmul.f32 %v5042, 1.442695
        %v5046 = vpow.pop %v5045
        %v5047 = vmul.f32 %v5043, 1.442695
        %v5048 = vpow.pop %v5047
        %v5049 = vmul.f32 %v5044, 1.442695
        %v5050 = vpow.pop %v5049
        %v5051 = vsel %vm1787, %v5046, 0.0
        %5052 = vadd.xlane.f32.xlu0 %v5051
        %v5053 = vpop.xlane.xlu0 %5052
        %v5054 = vsel %vm1787, %v5048, 0.0
        %5055 = vadd.xlane.f32.xlu0 %v5054
        %v5056 = vpop.xlane.xlu0 %5055
        %v5057 = vsel %vm1787, %v5050, 0.0
        %5058 = vadd.xlane.f32.xlu0 %v5057
        %v5059 = vpop.xlane.xlu0 %5058
        %v5060 = vrcp.pop %v5053
        %v5061 = vrcp.pop %v5056
        %v5062 = vrcp.pop %v5059
        %v5063 = vmul.f32 %v5046, %v5060
        %v5064 = vmul.f32 %v5048, %v5061
        %v5065 = vmul.f32 %v5050, %v5062
        %v5067 = vsel %vm1787, %v5063, 0
        %v5070 = vsel %vm1787, %v5064, 0
        %v5073 = vsel %vm1787, %v5065, 0
        %5075 = vmatprep.subr.mxu0 0.0
        %5076 = vmatpush1.msra.mxu0 %v3912
        %5077 = vmatprep.subr.mxu0 0.0
        %5078 = vmatpush1.msra.mxu0 %v3917
        %5079 = vmatprep.subr.mxu0 0.0
        %5080 = vmatpush1.msra.mxu0 %v3922
        %5081 = vmatprep.subr.mxu0 0.0
        %5082 = vmatpush1.msra.mxu0 0.0
        %5083 = vmatprep.subr.mxu0 0.0
        %5084 = vmatpush1.msra.mxu0 0.0
        %5085 = vmatprep.subr.mxu0 0.0
        %5086 = vmatpush1.msra.mxu0 0.0
        %5087 = vmatprep.subr.mxu0 0.0
        %5088 = vmatpush1.msra.mxu0 0.0
        %5089 = vmatprep.subr.mxu0 0.0
        %5090 = vmatpush1.msra.mxu0 0.0
        %5091 = vmatprep.subr.mxu0 0.0
        %5092 = vmatpush1.msra.mxu0 0.0
        %5093 = vmatprep.subr.mxu0 0.0
        %5094 = vmatpush1.msra.mxu0 0.0
        %5095 = vmatprep.subr.mxu0 0.0
        %5096 = vmatpush1.msra.mxu0 0.0
        %5097 = vmatprep.subr.mxu0 0.0
        %5098 = vmatpush1.msra.mxu0 0.0
        %5099 = vmatprep.subr.mxu0 0.0
        %5100 = vmatpush1.msra.mxu0 0.0
        %5101 = vmatprep.subr.mxu0 0.0
        %5102 = vmatpush1.msra.mxu0 0.0
        %5103 = vmatprep.subr.mxu0 0.0
        %5104 = vmatpush1.msra.mxu0 0.0
        %5105 = vmatprep.subr.mxu0 0.0
        %5106 = vmatpush1.msra.mxu0 0.0
        %5107 = vmatprep.subr.mxu0 0.0
        %5108 = vmatpush1.msra.mxu0 0.0
        %5109 = vmatprep.subr.mxu0 0.0
        %5110 = vmatpush1.msra.mxu0 0.0
        %5111 = vmatprep.subr.mxu0 0.0
        %5112 = vmatpush1.msra.mxu0 0.0
        %5113 = vmatprep.subr.mxu0 0.0
        %5114 = vmatpush1.msra.mxu0 0.0
        %5115 = vmatprep.subr.mxu0 0.0
        %5116 = vmatpush1.msra.mxu0 0.0
        %5117 = vmatprep.subr.mxu0 0.0
        %5118 = vmatpush1.msra.mxu0 0.0
        %5119 = vmatprep.subr.mxu0 0.0
        %5120 = vmatpush1.msra.mxu0 0.0
        %5121 = vmatprep.subr.mxu0 0.0
        %5122 = vmatpush1.msra.mxu0 0.0
        %5123 = vmatprep.subr.mxu0 0.0
        %5124 = vmatpush1.msra.mxu0 0.0
        %5125 = vmatprep.subr.mxu0 0.0
        %5126 = vmatpush1.msra.mxu0 0.0
        %5127 = vmatprep.subr.mxu0 0.0
        %5128 = vmatpush1.msra.mxu0 0.0
        %5129 = vmatprep.subr.mxu0 0.0
        %5130 = vmatpush1.msra.mxu0 0.0
        %5131 = vmatprep.subr.mxu0 0.0
        %5132 = vmatpush1.msra.mxu0 0.0
        %5133 = vmatprep.subr.mxu0 0.0
        %5134 = vmatpush1.msra.mxu0 0.0
        %5135 = vmatprep.subr.mxu0 0.0
        %5136 = vmatpush1.msra.mxu0 0.0
        %5137 = vmatprep.subr.mxu0 0.0
        %5138 = vmatpush1.msra.mxu0 0.0
        %5139 = vmatprep.mubr.f32.mxu0 0.0
        %5140 = vmatmul.mubr.f32.gmra.mrb[0].mxu0 %v5067
        %v5141 = vpop.f32.mrb[0].mxu0
        %v5142 = vadd.f32 0.0, %v5141
        %v5143 = vpop.f32.mrb[0].mxu0
        %5144 = vmatprep.mubr.f32.mxu0 0.0
        %5145 = vmatmul.mubr.f32.gmra.mrb[0].mxu0 %v5070
        %v5146 = vpop.f32.mrb[0].mxu0
        %v5147 = vadd.f32 0.0, %v5146
        %v5148 = vpop.f32.mrb[0].mxu0
        %5149 = vmatprep.mubr.f32.mxu0 0.0
        %5150 = vmatmul.mubr.f32.gmra.mrb[0].mxu0 %v5073
        %v5151 = vpop.f32.mrb[0].mxu0
        %v5152 = vadd.f32 0.0, %v5151
        %v5153 = vpop.f32.mrb[0].mxu0
        %5154 = vdwg.mxu0
        %s5155 = scalar_lea.vmem %s8, 48
        %v5156 = vld [vmem:[%s5155] sm:$0xff]
        %v5158 = vsel %vm988, %v5142, 0
        %v5161 = vsel %vm988, %v5147, 0
        %v5164 = vsel %vm988, %v5152, 0
        %5166 = vmatprep.subr.mxu0 0.0
        %5167 = vmatpush1.msra.mxu0 %v5156
        %5168 = vmatprep.subr.mxu0 0.0
        %5169 = vmatpush1.msra.mxu0 0.0
        %5170 = vmatprep.subr.mxu0 0.0
        %5171 = vmatpush1.msra.mxu0 0.0
        %5172 = vmatprep.subr.mxu0 0.0
        %5173 = vmatpush1.msra.mxu0 0.0
        %5174 = vmatprep.subr.mxu0 0.0
        %5175 = vmatpush1.msra.mxu0 0.0
        %5176 = vmatprep.subr.mxu0 0.0
        %5177 = vmatpush1.msra.mxu0 0.0
        %5178 = vmatprep.subr.mxu0 0.0
        %5179 = vmatpush1.msra.mxu0 0.0
        %5180 = vmatprep.subr.mxu0 0.0
        %5181 = vmatpush1.msra.mxu0 0.0
        %5182 = vmatprep.subr.mxu0 0.0
        %5183 = vmatpush1.msra.mxu0 0.0
        %5184 = vmatprep.subr.mxu0 0.0
        %5185 = vmatpush1.msra.mxu0 0.0
        %5186 = vmatprep.subr.mxu0 0.0
        %5187 = vmatpush1.msra.mxu0 0.0
        %5188 = vmatprep.subr.mxu0 0.0
        %5189 = vmatpush1.msra.mxu0 0.0
        %5190 = vmatprep.subr.mxu0 0.0
        %5191 = vmatpush1.msra.mxu0 0.0
        %5192 = vmatprep.subr.mxu0 0.0
        %5193 = vmatpush1.msra.mxu0 0.0
        %5194 = vmatprep.subr.mxu0 0.0
        %5195 = vmatpush1.msra.mxu0 0.0
        %5196 = vmatprep.subr.mxu0 0.0
        %5197 = vmatpush1.msra.mxu0 0.0
        %5198 = vmatprep.subr.mxu0 0.0
        %5199 = vmatpush1.msra.mxu0 0.0
        %5200 = vmatprep.subr.mxu0 0.0
        %5201 = vmatpush1.msra.mxu0 0.0
        %5202 = vmatprep.subr.mxu0 0.0
        %5203 = vmatpush1.msra.mxu0 0.0
        %5204 = vmatprep.subr.mxu0 0.0
        %5205 = vmatpush1.msra.mxu0 0.0
        %5206 = vmatprep.subr.mxu0 0.0
        %5207 = vmatpush1.msra.mxu0 0.0
        %5208 = vmatprep.subr.mxu0 0.0
        %5209 = vmatpush1.msra.mxu0 0.0
        %5210 = vmatprep.subr.mxu0 0.0
        %5211 = vmatpush1.msra.mxu0 0.0
        %5212 = vmatprep.subr.mxu0 0.0
        %5213 = vmatpush1.msra.mxu0 0.0
        %5214 = vmatprep.subr.mxu0 0.0
        %5215 = vmatpush1.msra.mxu0 0.0
        %5216 = vmatprep.subr.mxu0 0.0
        %5217 = vmatpush1.msra.mxu0 0.0
        %5218 = vmatprep.subr.mxu0 0.0
        %5219 = vmatpush1.msra.mxu0 0.0
        %5220 = vmatprep.subr.mxu0 0.0
        %5221 = vmatpush1.msra.mxu0 0.0
        %5222 = vmatprep.subr.mxu0 0.0
        %5223 = vmatpush1.msra.mxu0 0.0
        %5224 = vmatprep.subr.mxu0 0.0
        %5225 = vmatpush1.msra.mxu0 0.0
        %5226 = vmatprep.subr.mxu0 0.0
        %5227 = vmatpush1.msra.mxu0 0.0
        %5228 = vmatprep.subr.mxu0 0.0
        %5229 = vmatpush1.msra.mxu0 0.0
        %5230 = vmatprep.mubr.f32.mxu0 0.0
        %5231 = vmatmul.mubr.f32.gmra.mrb[0].mxu0 %v5158
        %v5232 = vpop.f32.mrb[0].mxu0
        %v5233 = vadd.f32 0.0, %v5232
        %v5234 = vpop.f32.mrb[0].mxu0
        %5235 = vmatprep.mubr.f32.mxu0 0.0
        %5236 = vmatmul.mubr.f32.gmra.mrb[0].mxu0 %v5161
        %v5237 = vpop.f32.mrb[0].mxu0
        %v5238 = vadd.f32 0.0, %v5237
        %v5239 = vpop.f32.mrb[0].mxu0
        %5240 = vmatprep.mubr.f32.mxu0 0.0
        %5241 = vmatmul.mubr.f32.gmra.mrb[0].mxu0 %v5164
        %v5242 = vpop.f32.mrb[0].mxu0
        %v5243 = vadd.f32 0.0, %v5242
        %v5244 = vpop.f32.mrb[0].mxu0
        %5245 = vdwg.mxu0
        %v5246 = vadd.f32 %v4916, %v5233
        %v5247 = vadd.f32 %v4921, %v5238
        %v5248 = vadd.f32 %v4926, %v5243
        %v5249 = vmul.f32 %v5063, %v4166
        %v5250 = vmul.f32 %v5064, %v4171
        %v5251 = vmul.f32 %v5065, %v4176
        %v5252 = vsel %vm1787, %v5249, 0.0
        %5253 = vadd.xlane.f32.xlu0 %v5252
        %v5254 = vpop.xlane.xlu0 %5253
        %v5255 = vsel %vm1787, %v5250, 0.0
        %5256 = vadd.xlane.f32.xlu0 %v5255
        %v5257 = vpop.xlane.xlu0 %5256
        %v5258 = vsel %vm1787, %v5251, 0.0
        %5259 = vadd.xlane.f32.xlu0 %v5258
        %v5260 = vpop.xlane.xlu0 %5259
        %v5261 = vmul.f32 %v5063, %v4270
        %v5262 = vmul.f32 %v5064, %v4275
        %v5263 = vmul.f32 %v5065, %v4280
        %v5264 = vsel %vm1787, %v5261, 0.0
        %5265 = vadd.xlane.f32.xlu0 %v5264
        %v5266 = vpop.xlane.xlu0 %5265
        %v5267 = vsel %vm1787, %v5262, 0.0
        %5268 = vadd.xlane.f32.xlu0 %v5267
        %v5269 = vpop.xlane.xlu0 %5268
        %v5270 = vsel %vm1787, %v5263, 0.0
        %5271 = vadd.xlane.f32.xlu0 %v5270
        %v5272 = vpop.xlane.xlu0 %5271
        %5273 = vrot.lane.b32.xlu0 %v4059, 72
        %v5274 = vpop.permute.xlu0 %5273
        %5275 = vrot.lane.b32.xlu0 %v4064, 72
        %v5276 = vpop.permute.xlu0 %5275
        %5277 = vrot.lane.b32.xlu0 %v4069, 72
        %v5278 = vpop.permute.xlu0 %5277
        %5279 = vrot.lane.b32.xlu0 %v4059, 56
        %v5280 = vpop.permute.xlu0 %5279
        %5281 = vrot.lane.b32.xlu0 %v4064, 56
        %v5282 = vpop.permute.xlu0 %5281
        %5283 = vrot.lane.b32.xlu0 %v4069, 56
        %v5284 = vpop.permute.xlu0 %5283
        %v5285 = vsel %vm988, %v5274, 0
        %v5287 = vsel %vm988, %v5276, 0
        %v5289 = vsel %vm988, %v5278, 0
        %v5291 = vsel %vm988, %v5280, 0
        %v5293 = vsel %vm988, %v5282, 0
        %v5295 = vsel %vm988, %v5284, 0
        %5297 = vmatprep.subr.mxu0 0.0
        %5298 = vmatpush1.xpose.msra.mxu0 %v5291
        %5299 = vmatprep.subr.mxu0 0.0
        %5300 = vmatpush1.xpose.msra.mxu0 %v5293
        %5301 = vmatprep.subr.mxu0 0.0
        %5302 = vmatpush1.xpose.msra.mxu0 %v5295
        %5303 = vmatprep.subr.mxu0 0.0
        %5304 = vmatpush1.xpose.msra.mxu0 0.0
        %5305 = vmatprep.subr.mxu0 0.0
        %5306 = vmatpush1.xpose.msra.mxu0 0.0
        %5307 = vmatprep.subr.mxu0 0.0
        %5308 = vmatpush1.xpose.msra.mxu0 0.0
        %5309 = vmatprep.subr.mxu0 0.0
        %5310 = vmatpush1.xpose.msra.mxu0 0.0
        %5311 = vmatprep.subr.mxu0 0.0
        %5312 = vmatpush1.xpose.msra.mxu0 0.0
        %5313 = vmatprep.subr.mxu0 0.0
        %5314 = vmatpush1.xpose.msra.mxu0 0.0
        %5315 = vmatprep.subr.mxu0 0.0
        %5316 = vmatpush1.xpose.msra.mxu0 0.0
        %5317 = vmatprep.subr.mxu0 0.0
        %5318 = vmatpush1.xpose.msra.mxu0 0.0
        %5319 = vmatprep.subr.mxu0 0.0
        %5320 = vmatpush1.xpose.msra.mxu0 0.0
        %5321 = vmatprep.subr.mxu0 0.0
        %5322 = vmatpush1.xpose.msra.mxu0 0.0
        %5323 = vmatprep.subr.mxu0 0.0
        %5324 = vmatpush1.xpose.msra.mxu0 0.0
        %5325 = vmatprep.subr.mxu0 0.0
        %5326 = vmatpush1.xpose.msra.mxu0 0.0
        %5327 = vmatprep.subr.mxu0 0.0
        %5328 = vmatpush1.xpose.msra.mxu0 0.0
        %5329 = vmatprep.subr.mxu0 0.0
        %5330 = vmatpush1.xpose.msra.mxu0 0.0
        %5331 = vmatprep.subr.mxu0 0.0
        %5332 = vmatpush1.xpose.msra.mxu0 0.0
        %5333 = vmatprep.subr.mxu0 0.0
        %5334 = vmatpush1.xpose.msra.mxu0 0.0
        %5335 = vmatprep.subr.mxu0 0.0
        %5336 = vmatpush1.xpose.msra.mxu0 0.0
        %5337 = vmatprep.subr.mxu0 0.0
        %5338 = vmatpush1.xpose.msra.mxu0 0.0
        %5339 = vmatprep.subr.mxu0 0.0
        %5340 = vmatpush1.xpose.msra.mxu0 0.0
        %5341 = vmatprep.subr.mxu0 0.0
        %5342 = vmatpush1.xpose.msra.mxu0 0.0
        %5343 = vmatprep.subr.mxu0 0.0
        %5344 = vmatpush1.xpose.msra.mxu0 0.0
        %5345 = vmatprep.subr.mxu0 0.0
        %5346 = vmatpush1.xpose.msra.mxu0 0.0
        %5347 = vmatprep.subr.mxu0 0.0
        %5348 = vmatpush1.xpose.msra.mxu0 0.0
        %5349 = vmatprep.subr.mxu0 0.0
        %5350 = vmatpush1.xpose.msra.mxu0 0.0
        %5351 = vmatprep.subr.mxu0 0.0
        %5352 = vmatpush1.xpose.msra.mxu0 0.0
        %5353 = vmatprep.subr.mxu0 0.0
        %5354 = vmatpush1.xpose.msra.mxu0 0.0
        %5355 = vmatprep.subr.mxu0 0.0
        %5356 = vmatpush1.xpose.msra.mxu0 0.0
        %5357 = vmatprep.subr.mxu0 0.0
        %5358 = vmatpush1.xpose.msra.mxu0 0.0
        %5359 = vmatprep.subr.mxu0 0.0
        %5360 = vmatpush1.xpose.msra.mxu0 0.0
        %5361 = vmatprep.mubr.f32.mxu0 0.0
        %5362 = vmatmul.mubr.f32.gmra.mrb[0].mxu0 %v5285
        %v5363 = vpop.f32.mrb[0].mxu0
        %v5364 = vadd.f32 %v795, %v5363
        %v5365 = vpop.f32.mrb[0].mxu0
        %5366 = vmatprep.mubr.f32.mxu0 0.0
        %5367 = vmatmul.mubr.f32.gmra.mrb[0].mxu0 %v5287
        %v5368 = vpop.f32.mrb[0].mxu0
        %v5369 = vadd.f32 %v795, %v5368
        %v5370 = vpop.f32.mrb[0].mxu0
        %5371 = vmatprep.mubr.f32.mxu0 0.0
        %5372 = vmatmul.mubr.f32.gmra.mrb[0].mxu0 %v5289
        %v5373 = vpop.f32.mrb[0].mxu0
        %v5374 = vadd.f32 %v795, %v5373
        %v5375 = vpop.f32.mrb[0].mxu0
        %5376 = vdwg.mxu0
        %v5377 = vsel %vm1787, %v5364, -inf
        %5378 = vmax.xlane.f32.xlu0 %v5377
        %v5379 = vpop.xlane.xlu0 %5378
        %v5380 = vsel %vm1787, %v5369, -inf
        %5381 = vmax.xlane.f32.xlu0 %v5380
        %v5382 = vpop.xlane.xlu0 %5381
        %v5383 = vsel %vm1787, %v5374, -inf
        %5384 = vmax.xlane.f32.xlu0 %v5383
        %v5385 = vpop.xlane.xlu0 %5384
        %v5386 = vsub.f32 %v5364, %v5379
        %v5387 = vsub.f32 %v5369, %v5382
        %v5388 = vsub.f32 %v5374, %v5385
        %v5389 = vmul.f32 %v5386, 1.442695
        %v5390 = vpow.pop %v5389
        %v5391 = vmul.f32 %v5387, 1.442695
        %v5392 = vpow.pop %v5391
        %v5393 = vmul.f32 %v5388, 1.442695
        %v5394 = vpow.pop %v5393
        %v5395 = vsel %vm1787, %v5390, 0.0
        %5396 = vadd.xlane.f32.xlu0 %v5395
        %v5397 = vpop.xlane.xlu0 %5396
        %v5398 = vsel %vm1787, %v5392, 0.0
        %5399 = vadd.xlane.f32.xlu0 %v5398
        %v5400 = vpop.xlane.xlu0 %5399
        %v5401 = vsel %vm1787, %v5394, 0.0
        %5402 = vadd.xlane.f32.xlu0 %v5401
        %v5403 = vpop.xlane.xlu0 %5402
        %v5404 = vrcp.pop %v5397
        %v5405 = vrcp.pop %v5400
        %v5406 = vrcp.pop %v5403
        %v5407 = vmul.f32 %v5390, %v5404
        %v5408 = vmul.f32 %v5392, %v5405
        %v5409 = vmul.f32 %v5394, %v5406
        %5413 = vrot.lane.b32.xlu0 %v3912, 120
        %v5414 = vpop.permute.xlu0 %5413
        %5415 = vrot.lane.b32.xlu0 %v3917, 120
        %v5416 = vpop.permute.xlu0 %5415
        %5417 = vrot.lane.b32.xlu0 %v3922, 120
        %v5418 = vpop.permute.xlu0 %5417
        %v5423 = vsel %vm1787, %v5407, 0
        %v5426 = vsel %vm1787, %v5408, 0
        %v5429 = vsel %vm1787, %v5409, 0
        %5431 = vmatprep.subr.mxu0 0.0
        %5432 = vmatpush1.msra.mxu0 %v5414
        %5433 = vmatprep.subr.mxu0 0.0
        %5434 = vmatpush1.msra.mxu0 %v5416
        %5435 = vmatprep.subr.mxu0 0.0
        %5436 = vmatpush1.msra.mxu0 %v5418
        %5437 = vmatprep.subr.mxu0 0.0
        %5438 = vmatpush1.msra.mxu0 0.0
        %5439 = vmatprep.subr.mxu0 0.0
        %5440 = vmatpush1.msra.mxu0 0.0
        %5441 = vmatprep.subr.mxu0 0.0
        %5442 = vmatpush1.msra.mxu0 0.0
        %5443 = vmatprep.subr.mxu0 0.0
        %5444 = vmatpush1.msra.mxu0 0.0
        %5445 = vmatprep.subr.mxu0 0.0
        %5446 = vmatpush1.msra.mxu0 0.0
        %5447 = vmatprep.subr.mxu0 0.0
        %5448 = vmatpush1.msra.mxu0 0.0
        %5449 = vmatprep.subr.mxu0 0.0
        %5450 = vmatpush1.msra.mxu0 0.0
        %5451 = vmatprep.subr.mxu0 0.0
        %5452 = vmatpush1.msra.mxu0 0.0
        %5453 = vmatprep.subr.mxu0 0.0
        %5454 = vmatpush1.msra.mxu0 0.0
        %5455 = vmatprep.subr.mxu0 0.0
        %5456 = vmatpush1.msra.mxu0 0.0
        %5457 = vmatprep.subr.mxu0 0.0
        %5458 = vmatpush1.msra.mxu0 0.0
        %5459 = vmatprep.subr.mxu0 0.0
        %5460 = vmatpush1.msra.mxu0 0.0
        %5461 = vmatprep.subr.mxu0 0.0
        %5462 = vmatpush1.msra.mxu0 0.0
        %5463 = vmatprep.subr.mxu0 0.0
        %5464 = vmatpush1.msra.mxu0 0.0
        %5465 = vmatprep.subr.mxu0 0.0
        %5466 = vmatpush1.msra.mxu0 0.0
        %5467 = vmatprep.subr.mxu0 0.0
        %5468 = vmatpush1.msra.mxu0 0.0
        %5469 = vmatprep.subr.mxu0 0.0
        %5470 = vmatpush1.msra.mxu0 0.0
        %5471 = vmatprep.subr.mxu0 0.0
        %5472 = vmatpush1.msra.mxu0 0.0
        %5473 = vmatprep.subr.mxu0 0.0
        %5474 = vmatpush1.msra.mxu0 0.0
        %5475 = vmatprep.subr.mxu0 0.0
        %5476 = vmatpush1.msra.mxu0 0.0
        %5477 = vmatprep.subr.mxu0 0.0
        %5478 = vmatpush1.msra.mxu0 0.0
        %5479 = vmatprep.subr.mxu0 0.0
        %5480 = vmatpush1.msra.mxu0 0.0
        %5481 = vmatprep.subr.mxu0 0.0
        %5482 = vmatpush1.msra.mxu0 0.0
        %5483 = vmatprep.subr.mxu0 0.0
        %5484 = vmatpush1.msra.mxu0 0.0
        %5485 = vmatprep.subr.mxu0 0.0
        %5486 = vmatpush1.msra.mxu0 0.0
        %5487 = vmatprep.subr.mxu0 0.0
        %5488 = vmatpush1.msra.mxu0 0.0
        %5489 = vmatprep.subr.mxu0 0.0
        %5490 = vmatpush1.msra.mxu0 0.0
        %5491 = vmatprep.subr.mxu0 0.0
        %5492 = vmatpush1.msra.mxu0 0.0
        %5493 = vmatprep.subr.mxu0 0.0
        %5494 = vmatpush1.msra.mxu0 0.0
        %5495 = vmatprep.mubr.f32.mxu0 0.0
        %5496 = vmatmul.mubr.f32.gmra.mrb[0].mxu0 %v5423
        %v5497 = vpop.f32.mrb[0].mxu0
        %v5498 = vadd.f32 0.0, %v5497
        %v5499 = vpop.f32.mrb[0].mxu0
        %5500 = vmatprep.mubr.f32.mxu0 0.0
        %5501 = vmatmul.mubr.f32.gmra.mrb[0].mxu0 %v5426
        %v5502 = vpop.f32.mrb[0].mxu0
        %v5503 = vadd.f32 0.0, %v5502
        %v5504 = vpop.f32.mrb[0].mxu0
        %5505 = vmatprep.mubr.f32.mxu0 0.0
        %5506 = vmatmul.mubr.f32.gmra.mrb[0].mxu0 %v5429
        %v5507 = vpop.f32.mrb[0].mxu0
        %v5508 = vadd.f32 0.0, %v5507
        %v5509 = vpop.f32.mrb[0].mxu0
        %5510 = vdwg.mxu0
        %s5511 = scalar_lea.vmem %s8, 56
        %v5512 = vld [vmem:[%s5511] sm:$0xff]
        %v5514 = vsel %vm988, %v5498, 0
        %v5517 = vsel %vm988, %v5503, 0
        %v5520 = vsel %vm988, %v5508, 0
        %5522 = vmatprep.subr.mxu0 0.0
        %5523 = vmatpush1.msra.mxu0 %v5512
        %5524 = vmatprep.subr.mxu0 0.0
        %5525 = vmatpush1.msra.mxu0 0.0
        %5526 = vmatprep.subr.mxu0 0.0
        %5527 = vmatpush1.msra.mxu0 0.0
        %5528 = vmatprep.subr.mxu0 0.0
        %5529 = vmatpush1.msra.mxu0 0.0
        %5530 = vmatprep.subr.mxu0 0.0
        %5531 = vmatpush1.msra.mxu0 0.0
        %5532 = vmatprep.subr.mxu0 0.0
        %5533 = vmatpush1.msra.mxu0 0.0
        %5534 = vmatprep.subr.mxu0 0.0
        %5535 = vmatpush1.msra.mxu0 0.0
        %5536 = vmatprep.subr.mxu0 0.0
        %5537 = vmatpush1.msra.mxu0 0.0
        %5538 = vmatprep.subr.mxu0 0.0
        %5539 = vmatpush1.msra.mxu0 0.0
        %5540 = vmatprep.subr.mxu0 0.0
        %5541 = vmatpush1.msra.mxu0 0.0
        %5542 = vmatprep.subr.mxu0 0.0
        %5543 = vmatpush1.msra.mxu0 0.0
        %5544 = vmatprep.subr.mxu0 0.0
        %5545 = vmatpush1.msra.mxu0 0.0
        %5546 = vmatprep.subr.mxu0 0.0
        %5547 = vmatpush1.msra.mxu0 0.0
        %5548 = vmatprep.subr.mxu0 0.0
        %5549 = vmatpush1.msra.mxu0 0.0
        %5550 = vmatprep.subr.mxu0 0.0
        %5551 = vmatpush1.msra.mxu0 0.0
        %5552 = vmatprep.subr.mxu0 0.0
        %5553 = vmatpush1.msra.mxu0 0.0
        %5554 = vmatprep.subr.mxu0 0.0
        %5555 = vmatpush1.msra.mxu0 0.0
        %5556 = vmatprep.subr.mxu0 0.0
        %5557 = vmatpush1.msra.mxu0 0.0
        %5558 = vmatprep.subr.mxu0 0.0
        %5559 = vmatpush1.msra.mxu0 0.0
        %5560 = vmatprep.subr.mxu0 0.0
        %5561 = vmatpush1.msra.mxu0 0.0
        %5562 = vmatprep.subr.mxu0 0.0
        %5563 = vmatpush1.msra.mxu0 0.0
        %5564 = vmatprep.subr.mxu0 0.0
        %5565 = vmatpush1.msra.mxu0 0.0
        %5566 = vmatprep.subr.mxu0 0.0
        %5567 = vmatpush1.msra.mxu0 0.0
        %5568 = vmatprep.subr.mxu0 0.0
        %5569 = vmatpush1.msra.mxu0 0.0
        %5570 = vmatprep.subr.mxu0 0.0
        %5571 = vmatpush1.msra.mxu0 0.0
        %5572 = vmatprep.subr.mxu0 0.0
        %5573 = vmatpush1.msra.mxu0 0.0
        %5574 = vmatprep.subr.mxu0 0.0
        %5575 = vmatpush1.msra.mxu0 0.0
        %5576 = vmatprep.subr.mxu0 0.0
        %5577 = vmatpush1.msra.mxu0 0.0
        %5578 = vmatprep.subr.mxu0 0.0
        %5579 = vmatpush1.msra.mxu0 0.0
        %5580 = vmatprep.subr.mxu0 0.0
        %5581 = vmatpush1.msra.mxu0 0.0
        %5582 = vmatprep.subr.mxu0 0.0
        %5583 = vmatpush1.msra.mxu0 0.0
        %5584 = vmatprep.subr.mxu0 0.0
        %5585 = vmatpush1.msra.mxu0 0.0
        %5586 = vmatprep.mubr.f32.mxu0 0.0
        %5587 = vmatmul.mubr.f32.gmra.mrb[0].mxu0 %v5514
        %v5588 = vpop.f32.mrb[0].mxu0
        %v5589 = vadd.f32 0.0, %v5588
        %v5590 = vpop.f32.mrb[0].mxu0
        %5591 = vmatprep.mubr.f32.mxu0 0.0
        %5592 = vmatmul.mubr.f32.gmra.mrb[0].mxu0 %v5517
        %v5593 = vpop.f32.mrb[0].mxu0
        %v5594 = vadd.f32 0.0, %v5593
        %v5595 = vpop.f32.mrb[0].mxu0
        %5596 = vmatprep.mubr.f32.mxu0 0.0
        %5597 = vmatmul.mubr.f32.gmra.mrb[0].mxu0 %v5520
        %v5598 = vpop.f32.mrb[0].mxu0
        %v5599 = vadd.f32 0.0, %v5598
        %v5600 = vpop.f32.mrb[0].mxu0
        %5601 = vdwg.mxu0
        %v5602 = vadd.f32 %v5246, %v5589
        %v5603 = vadd.f32 %v5247, %v5594
        %v5604 = vadd.f32 %v5248, %v5599
        %v5605 = vmul.f32 %v5407, %v4166
        %v5606 = vmul.f32 %v5408, %v4171
        %v5607 = vmul.f32 %v5409, %v4176
        %v5608 = vsel %vm1787, %v5605, 0.0
        %5609 = vadd.xlane.f32.xlu0 %v5608
        %v5610 = vpop.xlane.xlu0 %5609
        %v5611 = vsel %vm1787, %v5606, 0.0
        %5612 = vadd.xlane.f32.xlu0 %v5611
        %v5613 = vpop.xlane.xlu0 %5612
        %v5614 = vsel %vm1787, %v5607, 0.0
        %5615 = vadd.xlane.f32.xlu0 %v5614
        %v5616 = vpop.xlane.xlu0 %5615
        %v5617 = vmul.f32 %v5407, %v4270
        %v5618 = vmul.f32 %v5408, %v4275
        %v5619 = vmul.f32 %v5409, %v4280
        %v5620 = vsel %vm1787, %v5617, 0.0
        %5621 = vadd.xlane.f32.xlu0 %v5620
        %v5622 = vpop.xlane.xlu0 %5621
        %v5623 = vsel %vm1787, %v5618, 0.0
        %5624 = vadd.xlane.f32.xlu0 %v5623
        %v5625 = vpop.xlane.xlu0 %5624
        %v5626 = vsel %vm1787, %v5619, 0.0
        %5627 = vadd.xlane.f32.xlu0 %v5626
        %v5628 = vpop.xlane.xlu0 %5627
        %v5629 = vsel %vm3035, %v5254, %v5266
        %v5630 = vsel %vm3035, %v5257, %v5269
        %v5631 = vsel %vm3035, %v5260, %v5272
        %v5632 = vsel %vm3039, %v5629, %v5610
        %v5633 = vsel %vm3039, %v5630, %v5613
        %v5634 = vsel %vm3039, %v5631, %v5616
        %v5635 = vsel %vm3043, %v5632, %v5622
        %v5636 = vsel %vm3043, %v5633, %v5625
        %v5637 = vsel %vm3043, %v5634, %v5628
        %s5638 = scalar_lea.vmem [#allocation10], 4
        %v5639 = vld [vmem:[%s5638] sm:$0xf]
        %v5641 = vsel %vm3048, %v5635, 0
        %v5644 = vsel %vm3048, %v5636, 0
        %v5647 = vsel %vm3048, %v5637, 0
        %v5650 = vsel %vm3058, %v5639, 0
        %5652 = vmatprep.subr.mxu0 0.0
        %5653 = vmatpush1.msra.mxu0 %v5650
        %5654 = vmatprep.subr.mxu0 0.0
        %5655 = vmatpush1.msra.mxu0 0.0
        %5656 = vmatprep.subr.mxu0 0.0
        %5657 = vmatpush1.msra.mxu0 0.0
        %5658 = vmatprep.subr.mxu0 0.0
        %5659 = vmatpush1.msra.mxu0 0.0
        %5660 = vmatprep.subr.mxu0 0.0
        %5661 = vmatpush1.msra.mxu0 0.0
        %5662 = vmatprep.subr.mxu0 0.0
        %5663 = vmatpush1.msra.mxu0 0.0
        %5664 = vmatprep.subr.mxu0 0.0
        %5665 = vmatpush1.msra.mxu0 0.0
        %5666 = vmatprep.subr.mxu0 0.0
        %5667 = vmatpush1.msra.mxu0 0.0
        %5668 = vmatprep.subr.mxu0 0.0
        %5669 = vmatpush1.msra.mxu0 0.0
        %5670 = vmatprep.subr.mxu0 0.0
        %5671 = vmatpush1.msra.mxu0 0.0
        %5672 = vmatprep.subr.mxu0 0.0
        %5673 = vmatpush1.msra.mxu0 0.0
        %5674 = vmatprep.subr.mxu0 0.0
        %5675 = vmatpush1.msra.mxu0 0.0
        %5676 = vmatprep.subr.mxu0 0.0
        %5677 = vmatpush1.msra.mxu0 0.0
        %5678 = vmatprep.subr.mxu0 0.0
        %5679 = vmatpush1.msra.mxu0 0.0
        %5680 = vmatprep.subr.mxu0 0.0
        %5681 = vmatpush1.msra.mxu0 0.0
        %5682 = vmatprep.subr.mxu0 0.0
        %5683 = vmatpush1.msra.mxu0 0.0
        %5684 = vmatprep.subr.mxu0 0.0
        %5685 = vmatpush1.msra.mxu0 0.0
        %5686 = vmatprep.subr.mxu0 0.0
        %5687 = vmatpush1.msra.mxu0 0.0
        %5688 = vmatprep.subr.mxu0 0.0
        %5689 = vmatpush1.msra.mxu0 0.0
        %5690 = vmatprep.subr.mxu0 0.0
        %5691 = vmatpush1.msra.mxu0 0.0
        %5692 = vmatprep.subr.mxu0 0.0
        %5693 = vmatpush1.msra.mxu0 0.0
        %5694 = vmatprep.subr.mxu0 0.0
        %5695 = vmatpush1.msra.mxu0 0.0
        %5696 = vmatprep.subr.mxu0 0.0
        %5697 = vmatpush1.msra.mxu0 0.0
        %5698 = vmatprep.subr.mxu0 0.0
        %5699 = vmatpush1.msra.mxu0 0.0
        %5700 = vmatprep.subr.mxu0 0.0
        %5701 = vmatpush1.msra.mxu0 0.0
        %5702 = vmatprep.subr.mxu0 0.0
        %5703 = vmatpush1.msra.mxu0 0.0
        %5704 = vmatprep.subr.mxu0 0.0
        %5705 = vmatpush1.msra.mxu0 0.0
        %5706 = vmatprep.subr.mxu0 0.0
        %5707 = vmatpush1.msra.mxu0 0.0
        %5708 = vmatprep.subr.mxu0 0.0
        %5709 = vmatpush1.msra.mxu0 0.0
        %5710 = vmatprep.subr.mxu0 0.0
        %5711 = vmatpush1.msra.mxu0 0.0
        %5712 = vmatprep.subr.mxu0 0.0
        %5713 = vmatpush1.msra.mxu0 0.0
        %5714 = vmatprep.subr.mxu0 0.0
        %5715 = vmatpush1.msra.mxu0 0.0
        %5716 = vmatprep.mubr.f32.mxu0 0.0
        %5717 = vmatmul.mubr.f32.gmra.mrb[0].mxu0 %v5641
        %v5718 = vpop.f32.mrb[0].mxu0
        %v5719 = vadd.f32 0.0, %v5718
        %v5720 = vpop.f32.mrb[0].mxu0
        %5721 = vmatprep.mubr.f32.mxu0 0.0
        %5722 = vmatmul.mubr.f32.gmra.mrb[0].mxu0 %v5644
        %v5723 = vpop.f32.mrb[0].mxu0
        %v5724 = vadd.f32 0.0, %v5723
        %v5725 = vpop.f32.mrb[0].mxu0
        %5726 = vmatprep.mubr.f32.mxu0 0.0
        %5727 = vmatmul.mubr.f32.gmra.mrb[0].mxu0 %v5647
        %v5728 = vpop.f32.mrb[0].mxu0
        %v5729 = vadd.f32 0.0, %v5728
        %v5730 = vpop.f32.mrb[0].mxu0
        %5731 = vdwg.mxu0
        %v5732 = vadd.f32 %v3402, %v5602
        %v5733 = vadd.f32 %v3403, %v5603
        %v5734 = vadd.f32 %v3404, %v5604
        %v5735 = vadd.f32 %v5732, %v5719
        %v5736 = vadd.f32 %v5733, %v5724
        %v5737 = vadd.f32 %v5734, %v5729
        %v5738 = vsel %vm712, %v5735, 0.0
        %5739 = vadd.xlane.f32.xlu0 %v5738
        %v5740 = vpop.xlane.xlu0 %5739
        %v5741 = vsel %vm712, %v5736, 0.0
        %5742 = vadd.xlane.f32.xlu0 %v5741
        %v5743 = vpop.xlane.xlu0 %5742
        %v5744 = vsel %vm712, %v5737, 0.0
        %5745 = vadd.xlane.f32.xlu0 %v5744
        %v5746 = vpop.xlane.xlu0 %5745
        %v5747 = vmul.f32 %v5740, %v722
        %v5748 = vmul.f32 %v5743, %v722
        %v5749 = vmul.f32 %v5746, %v722
        %v5750 = vsub.f32 %v5735, %v5747
        %v5751 = vsub.f32 %v5736, %v5748
        %v5752 = vsub.f32 %v5737, %v5749
        %v5753 = vmul.f32 %v5750, %v5750
        %v5754 = vmul.f32 %v5751, %v5751
        %v5755 = vmul.f32 %v5752, %v5752
        %v5756 = vsel %vm712, %v5753, 0.0
        %5757 = vadd.xlane.f32.xlu0 %v5756
        %v5758 = vpop.xlane.xlu0 %5757
        %v5759 = vsel %vm712, %v5754, 0.0
        %5760 = vadd.xlane.f32.xlu0 %v5759
        %v5761 = vpop.xlane.xlu0 %5760
        %v5762 = vsel %vm712, %v5755, 0.0
        %5763 = vadd.xlane.f32.xlu0 %v5762
        %v5764 = vpop.xlane.xlu0 %5763
        %v5765 = vmul.f32 %v5758, %v722
        %v5766 = vmul.f32 %v5761, %v722
        %v5767 = vmul.f32 %v5764, %v722
        %v5768 = vadd.f32 %v5765, 1e-05
        %v5769 = vadd.f32 %v5766, 1e-05
        %v5770 = vadd.f32 %v5767, 1e-05
        %v5771 = vrsqrt.pop %v5768
        %v5772 = vrsqrt.pop %v5769
        %v5773 = vrsqrt.pop %v5770
        %v5774 = vmul.f32 %v5750, %v5771
        %v5775 = vmul.f32 %v5751, %v5772
        %v5776 = vmul.f32 %v5752, %v5773
        %v5777 = vlaneseq
        %v5778 = vshrl.u32 %v5777, 7
        %v5779 = vsub.s32 2, %v5778
        %v5780 = vrot.slane %v3406, %v5779
        %v5781 = vmul.f32 %v5774, %v5780
        %v5782 = vmul.f32 %v5775, %v5780
        %v5783 = vmul.f32 %v5776, %v5780
        %v5784 = vlaneseq
        %v5785 = vshrl.u32 %v5784, 7
        %v5786 = vsub.s32 3, %v5785
        %v5787 = vrot.slane %v3406, %v5786
        %v5788 = vadd.f32 %v5781, %v5787
        %v5789 = vadd.f32 %v5782, %v5787
        %v5790 = vadd.f32 %v5783, %v5787
        %s5791 = scalar_lea.vmem %s10, 32
        %v5792 = vld [vmem:[%s5791] sm:$0xff]
        %v5793 = vld [vmem:[%s5791 + $0x8] sm:$0xff]
        %v5794 = vld [vmem:[%s5791 + $0x10] sm:$0xff]
        %v5795 = vld [vmem:[%s5791 + $0x18] sm:$0xff]
        %v5796 = vlaneseq
        %v5797 = vshrl.u32 %v5796, 7
        %v5798 = vsub.s32 4, %v5797
        %v5799 = vrot.slane %v3406, %v5798
        %v5801 = vsel %vm712, %v5788, 0
        %v5804 = vsel %vm712, %v5789, 0
        %v5807 = vsel %vm712, %v5790, 0
        %5809 = vmatprep.subr.mxu0 0.0
        %5810 = vmatpush1.msra.mxu0 %v5792
        %5811 = vmatprep.subr.mxu0 0.0
        %5812 = vmatpush1.msra.mxu0 %v5793
        %5813 = vmatprep.subr.mxu0 0.0
        %5814 = vmatpush1.msra.mxu0 %v5794
        %5815 = vmatprep.subr.mxu0 0.0
        %5816 = vmatpush1.msra.mxu0 %v5795
        %5817 = vmatprep.subr.mxu0 0.0
        %5818 = vmatpush1.msra.mxu0 0.0
        %5819 = vmatprep.subr.mxu0 0.0
        %5820 = vmatpush1.msra.mxu0 0.0
        %5821 = vmatprep.subr.mxu0 0.0
        %5822 = vmatpush1.msra.mxu0 0.0
        %5823 = vmatprep.subr.mxu0 0.0
        %5824 = vmatpush1.msra.mxu0 0.0
        %5825 = vmatprep.subr.mxu0 0.0
        %5826 = vmatpush1.msra.mxu0 0.0
        %5827 = vmatprep.subr.mxu0 0.0
        %5828 = vmatpush1.msra.mxu0 0.0
        %5829 = vmatprep.subr.mxu0 0.0
        %5830 = vmatpush1.msra.mxu0 0.0
        %5831 = vmatprep.subr.mxu0 0.0
        %5832 = vmatpush1.msra.mxu0 0.0
        %5833 = vmatprep.subr.mxu0 0.0
        %5834 = vmatpush1.msra.mxu0 0.0
        %5835 = vmatprep.subr.mxu0 0.0
        %5836 = vmatpush1.msra.mxu0 0.0
        %5837 = vmatprep.subr.mxu0 0.0
        %5838 = vmatpush1.msra.mxu0 0.0
        %5839 = vmatprep.subr.mxu0 0.0
        %5840 = vmatpush1.msra.mxu0 0.0
        %5841 = vmatprep.subr.mxu0 0.0
        %5842 = vmatpush1.msra.mxu0 0.0
        %5843 = vmatprep.subr.mxu0 0.0
        %5844 = vmatpush1.msra.mxu0 0.0
        %5845 = vmatprep.subr.mxu0 0.0
        %5846 = vmatpush1.msra.mxu0 0.0
        %5847 = vmatprep.subr.mxu0 0.0
        %5848 = vmatpush1.msra.mxu0 0.0
        %5849 = vmatprep.subr.mxu0 0.0
        %5850 = vmatpush1.msra.mxu0 0.0
        %5851 = vmatprep.subr.mxu0 0.0
        %5852 = vmatpush1.msra.mxu0 0.0
        %5853 = vmatprep.subr.mxu0 0.0
        %5854 = vmatpush1.msra.mxu0 0.0
        %5855 = vmatprep.subr.mxu0 0.0
        %5856 = vmatpush1.msra.mxu0 0.0
        %5857 = vmatprep.subr.mxu0 0.0
        %5858 = vmatpush1.msra.mxu0 0.0
        %5859 = vmatprep.subr.mxu0 0.0
        %5860 = vmatpush1.msra.mxu0 0.0
        %5861 = vmatprep.subr.mxu0 0.0
        %5862 = vmatpush1.msra.mxu0 0.0
        %5863 = vmatprep.subr.mxu0 0.0
        %5864 = vmatpush1.msra.mxu0 0.0
        %5865 = vmatprep.subr.mxu0 0.0
        %5866 = vmatpush1.msra.mxu0 0.0
        %5867 = vmatprep.subr.mxu0 0.0
        %5868 = vmatpush1.msra.mxu0 0.0
        %5869 = vmatprep.subr.mxu0 0.0
        %5870 = vmatpush1.msra.mxu0 0.0
        %5871 = vmatprep.subr.mxu0 0.0
        %5872 = vmatpush1.msra.mxu0 0.0
        %5873 = vmatprep.mubr.f32.mxu0 0.0
        %5874 = vmatmul.mubr.f32.gmra.mrb[0].mxu0 %v5801
        %v5875 = vpop.f32.mrb[0].mxu0
        %v5876 = vadd.f32 %v5799, %v5875
        %v5877 = vpop.f32.mrb[0].mxu0
        %5878 = vmatprep.mubr.f32.mxu0 0.0
        %5879 = vmatmul.mubr.f32.gmra.mrb[0].mxu0 %v5804
        %v5880 = vpop.f32.mrb[0].mxu0
        %v5881 = vadd.f32 %v5799, %v5880
        %v5882 = vpop.f32.mrb[0].mxu0
        %5883 = vmatprep.mubr.f32.mxu0 0.0
        %5884 = vmatmul.mubr.f32.gmra.mrb[0].mxu0 %v5807
        %v5885 = vpop.f32.mrb[0].mxu0
        %v5886 = vadd.f32 %v5799, %v5885
        %v5887 = vpop.f32.mrb[0].mxu0
        %5888 = vdwg.mxu0
        %v5889 = vmax.f32 %v5876, 0.0
        %v5890 = vmax.f32 %v5881, 0.0
        %v5891 = vmax.f32 %v5886, 0.0
        %s5892 = scalar_lea.vmem %s11, 64
        %v5893 = vld [vmem:[%s5892] sm:$0xff]
        %v5894 = vld [vmem:[%s5892 + $0x8] sm:$0xff]
        %v5895 = vld [vmem:[%s5892 + $0x10] sm:$0xff]
        %v5896 = vld [vmem:[%s5892 + $0x18] sm:$0xff]
        %v5897 = vld [vmem:[%s5892 + $0x20] sm:$0xff]
        %v5898 = vld [vmem:[%s5892 + $0x28] sm:$0xff]
        %v5899 = vld [vmem:[%s5892 + $0x30] sm:$0xff]
        %v5900 = vld [vmem:[%s5892 + $0x38] sm:$0xff]
        %v5901 = vlaneseq
        %v5902 = vshrl.u32 %v5901, 7
        %v5903 = vsub.s32 5, %v5902
        %v5904 = vrot.slane %v3406, %v5903
        %v5906 = vsel %vm556, %v5889, 0
        %v5909 = vsel %vm556, %v5890, 0
        %v5912 = vsel %vm556, %v5891, 0
        %5914 = vmatprep.subr.mxu0 0.0
        %5915 = vmatpush1.msra.mxu0 %v5893
        %5916 = vmatprep.subr.mxu0 0.0
        %5917 = vmatpush1.msra.mxu0 %v5894
        %5918 = vmatprep.subr.mxu0 0.0
        %5919 = vmatpush1.msra.mxu0 %v5895
        %5920 = vmatprep.subr.mxu0 0.0
        %5921 = vmatpush1.msra.mxu0 %v5896
        %5922 = vmatprep.subr.mxu0 0.0
        %5923 = vmatpush1.msra.mxu0 %v5897
        %5924 = vmatprep.subr.mxu0 0.0
        %5925 = vmatpush1.msra.mxu0 %v5898
        %5926 = vmatprep.subr.mxu0 0.0
        %5927 = vmatpush1.msra.mxu0 %v5899
        %5928 = vmatprep.subr.mxu0 0.0
        %5929 = vmatpush1.msra.mxu0 %v5900
        %5930 = vmatprep.subr.mxu0 0.0
        %5931 = vmatpush1.msra.mxu0 0.0
        %5932 = vmatprep.subr.mxu0 0.0
        %5933 = vmatpush1.msra.mxu0 0.0
        %5934 = vmatprep.subr.mxu0 0.0
        %5935 = vmatpush1.msra.mxu0 0.0
        %5936 = vmatprep.subr.mxu0 0.0
        %5937 = vmatpush1.msra.mxu0 0.0
        %5938 = vmatprep.subr.mxu0 0.0
        %5939 = vmatpush1.msra.mxu0 0.0
        %5940 = vmatprep.subr.mxu0 0.0
        %5941 = vmatpush1.msra.mxu0 0.0
        %5942 = vmatprep.subr.mxu0 0.0
        %5943 = vmatpush1.msra.mxu0 0.0
        %5944 = vmatprep.subr.mxu0 0.0
        %5945 = vmatpush1.msra.mxu0 0.0
        %5946 = vmatprep.subr.mxu0 0.0
        %5947 = vmatpush1.msra.mxu0 0.0
        %5948 = vmatprep.subr.mxu0 0.0
        %5949 = vmatpush1.msra.mxu0 0.0
        %5950 = vmatprep.subr.mxu0 0.0
        %5951 = vmatpush1.msra.mxu0 0.0
        %5952 = vmatprep.subr.mxu0 0.0
        %5953 = vmatpush1.msra.mxu0 0.0
        %5954 = vmatprep.subr.mxu0 0.0
        %5955 = vmatpush1.msra.mxu0 0.0
        %5956 = vmatprep.subr.mxu0 0.0
        %5957 = vmatpush1.msra.mxu0 0.0
        %5958 = vmatprep.subr.mxu0 0.0
        %5959 = vmatpush1.msra.mxu0 0.0
        %5960 = vmatprep.subr.mxu0 0.0
        %5961 = vmatpush1.msra.mxu0 0.0
        %5962 = vmatprep.subr.mxu0 0.0
        %5963 = vmatpush1.msra.mxu0 0.0
        %5964 = vmatprep.subr.mxu0 0.0
        %5965 = vmatpush1.msra.mxu0 0.0
        %5966 = vmatprep.subr.mxu0 0.0
        %5967 = vmatpush1.msra.mxu0 0.0
        %5968 = vmatprep.subr.mxu0 0.0
        %5969 = vmatpush1.msra.mxu0 0.0
        %5970 = vmatprep.subr.mxu0 0.0
        %5971 = vmatpush1.msra.mxu0 0.0
        %5972 = vmatprep.subr.mxu0 0.0
        %5973 = vmatpush1.msra.mxu0 0.0
        %5974 = vmatprep.subr.mxu0 0.0
        %5975 = vmatpush1.msra.mxu0 0.0
        %5976 = vmatprep.subr.mxu0 0.0
        %5977 = vmatpush1.msra.mxu0 0.0
        %5978 = vmatprep.mubr.f32.mxu0 0.0
        %5979 = vmatmul.mubr.f32.gmra.mrb[0].mxu0 %v5906
        %v5980 = vpop.f32.mrb[0].mxu0
        %v5981 = vadd.f32 %v5904, %v5980
        %v5982 = vpop.f32.mrb[0].mxu0
        %5983 = vmatprep.mubr.f32.mxu0 0.0
        %5984 = vmatmul.mubr.f32.gmra.mrb[0].mxu0 %v5909
        %v5985 = vpop.f32.mrb[0].mxu0
        %v5986 = vpop.f32.mrb[0].mxu0
        %5987 = vmatprep.mubr.f32.mxu0 0.0
        %5988 = vmatmul.mubr.f32.gmra.mrb[0].mxu0 %v5912
        %v5989 = vpop.f32.mrb[0].mxu0
        %v5990 = vpop.f32.mrb[0].mxu0
        %5991 = vdwg.mxu0
        %v5992 = vadd.f32 %v5735, %v5981
        %vm5993 = vcmask 253952
        %v5994 = vsel %vm5993, %v5992, 0.0
        %5995 = vadd.xlane.f32.xlu0 %v5994
        %v5996 = vpop.xlane.xlu0 %5995
        %v5997 = vmul.f32 %v5996, %v722
        %v5998 = vsub.f32 %v5992, %v5997
        %v5999 = vmul.f32 %v5998, %v5998
        %v6000 = vsel %vm5993, %v5999, 0.0
        %6001 = vadd.xlane.f32.xlu0 %v6000
        %v6002 = vpop.xlane.xlu0 %6001
        %v6003 = vmul.f32 %v6002, %v722
        %v6004 = vadd.f32 %v6003, 1e-05
        %v6005 = vrsqrt.pop %v6004
        %v6006 = vmul.f32 %v5998, %v6005
        %v6008 = vrot.slane %v551, 6
        %v6010 = vmul.f32 %v6006, %v6008
        %v6011 = vrot.slane %v551, 7
        %v6013 = vadd.f32 %v6010, %v6011
        %v6014 = vld [vmem:[#allocation11] sm:$0xff]
        %v6015 = vld [vmem:[#allocation11 + $0x8] sm:$0xff]
        %v6016 = vld [vmem:[#allocation11 + $0x10] sm:$0xff]
        %v6017 = vld [vmem:[#allocation11 + $0x18] sm:$0xff]
        %v6019 = vsel %vm712, %v6013, 0
        %6021 = vmatprep.subr.mxu0 0.0
        %6022 = vmatpush1.msra.mxu0 %v6014
        %6023 = vmatprep.subr.mxu0 0.0
        %6024 = vmatpush1.msra.mxu0 %v6015
        %6025 = vmatprep.subr.mxu0 0.0
        %6026 = vmatpush1.msra.mxu0 %v6016
        %6027 = vmatprep.subr.mxu0 0.0
        %6028 = vmatpush1.msra.mxu0 %v6017
        %6029 = vmatprep.subr.mxu0 0.0
        %6030 = vmatpush1.msra.mxu0 0.0
        %6031 = vmatprep.subr.mxu0 0.0
        %6032 = vmatpush1.msra.mxu0 0.0
        %6033 = vmatprep.subr.mxu0 0.0
        %6034 = vmatpush1.msra.mxu0 0.0
        %6035 = vmatprep.subr.mxu0 0.0
        %6036 = vmatpush1.msra.mxu0 0.0
        %6037 = vmatprep.subr.mxu0 0.0
        %6038 = vmatpush1.msra.mxu0 0.0
        %6039 = vmatprep.subr.mxu0 0.0
        %6040 = vmatpush1.msra.mxu0 0.0
        %6041 = vmatprep.subr.mxu0 0.0
        %6042 = vmatpush1.msra.mxu0 0.0
        %6043 = vmatprep.subr.mxu0 0.0
        %6044 = vmatpush1.msra.mxu0 0.0
        %6045 = vmatprep.subr.mxu0 0.0
        %6046 = vmatpush1.msra.mxu0 0.0
        %6047 = vmatprep.subr.mxu0 0.0
        %6048 = vmatpush1.msra.mxu0 0.0
        %6049 = vmatprep.subr.mxu0 0.0
        %6050 = vmatpush1.msra.mxu0 0.0
        %6051 = vmatprep.subr.mxu0 0.0
        %6052 = vmatpush1.msra.mxu0 0.0
        %6053 = vmatprep.subr.mxu0 0.0
        %6054 = vmatpush1.msra.mxu0 0.0
        %6055 = vmatprep.subr.mxu0 0.0
        %6056 = vmatpush1.msra.mxu0 0.0
        %6057 = vmatprep.subr.mxu0 0.0
        %6058 = vmatpush1.msra.mxu0 0.0
        %6059 = vmatprep.subr.mxu0 0.0
        %6060 = vmatpush1.msra.mxu0 0.0
        %6061 = vmatprep.subr.mxu0 0.0
        %6062 = vmatpush1.msra.mxu0 0.0
        %6063 = vmatprep.subr.mxu0 0.0
        %6064 = vmatpush1.msra.mxu0 0.0
        %6065 = vmatprep.subr.mxu0 0.0
        %6066 = vmatpush1.msra.mxu0 0.0
        %6067 = vmatprep.subr.mxu0 0.0
        %6068 = vmatpush1.msra.mxu0 0.0
        %6069 = vmatprep.subr.mxu0 0.0
        %6070 = vmatpush1.msra.mxu0 0.0
        %6071 = vmatprep.subr.mxu0 0.0
        %6072 = vmatpush1.msra.mxu0 0.0
        %6073 = vmatprep.subr.mxu0 0.0
        %6074 = vmatpush1.msra.mxu0 0.0
        %6075 = vmatprep.subr.mxu0 0.0
        %6076 = vmatpush1.msra.mxu0 0.0
        %6077 = vmatprep.subr.mxu0 0.0
        %6078 = vmatpush1.msra.mxu0 0.0
        %6079 = vmatprep.subr.mxu0 0.0
        %6080 = vmatpush1.msra.mxu0 0.0
        %6081 = vmatprep.subr.mxu0 0.0
        %6082 = vmatpush1.msra.mxu0 0.0
        %6083 = vmatprep.subr.mxu0 0.0
        %6084 = vmatpush1.msra.mxu0 0.0
        %6085 = vmatprep.mubr.f32.mxu0 0.0
        %6086 = vmatmul.mubr.f32.gmra.mrb[0].mxu0 %v6019
        %v6087 = vpop.f32.mrb[0].mxu0
        %v6088 = vadd.f32 %v552, %v6087
        %v6089 = vpop.f32.mrb[0].mxu0
        %6090 = vdwg.mxu0
        %6091 = vst [vmem:[%s545] sm:$0x1] %v6088
        %s6092 = sand.u32 %s339, 1
        %s6093 = scalar_lea.sflag [#allocation4], %s6092
        %s6094 = sand.u32 %s339, 1
        %s6095 = scalar_lea.vmem [#allocation13], %s6094
        // Predicated region
        $region101: #{tpu_custom_call.1} parent=75 // pred_check
          %p6096 = pneg %p349
        $region102: #{tpu_custom_call.1} parent=75 // pred_check_branch
          %6098 = sbr.rel (%p6096) target = $region104
        $region103: #{tpu_custom_call.1} parent=75 // pred_region
          %s6100 = ssub.s32 16, 16
          %6101 = vsyncadd %s6093, %s6100
          %s6102 = smul.addr %s32, 16
          %s6103 = scalar_lea.hbm %s14, %s6102
          %s6105 = sshll.u32 %s6095, 4
          %s6106 = int_to_ptr.vmem [resolvable:$true] %s6105
          %6108 = dma.vmem_to_hbm [thread:$0]  %s6106, 16, %s6103, %s6093
        $region104: #{tpu_custom_call.1} parent=75 // pred_fallthru
          _
      $region76: #{tpu_custom_call.1} parent=5 // pred_fallthru
        _
      %p6109 = scmp.le.s32.totalorder 2, %s27
      // Predicated region
      $region105: #{tpu_custom_call.1} parent=5 // pred_check
        %p6110 = pneg %p6109
      $region106: #{tpu_custom_call.1} parent=5 // pred_check_branch
        %6112 = sbr.rel (%p6110) target = $region108
      $region107: #{tpu_custom_call.1} parent=5 // pred_region
        %s6113 = ssub.s32 %s27, 2
        // Predicated region
        $region109: #{tpu_custom_call.1} parent=107 // pred_check
          %p6114 = pneg %p355
        $region110: #{tpu_custom_call.1} parent=107 // pred_check_branch
          %6116 = sbr.rel (%p6114) target = $region112
        $region111: #{tpu_custom_call.1} parent=107 // pred_region
          %s6117 = sand.u32 %s340, 1
          %s6118 = scalar_lea.sflag [#allocation4], %s6117
          %s6119 = sand.u32 %s340, 1
          %s6120 = scalar_lea.vmem [#allocation13], %s6119
          %6121 = dma.done %s6118, 16
        $region112: #{tpu_custom_call.1} parent=107 // pred_fallthru
          _
      $region108: #{tpu_custom_call.1} parent=5 // pred_fallthru
        _
    $region6: #{tpu_custom_call.1} parent=1 // loop_footer
      %s31 = sadd.s32 1, %s27
    $region7: #{tpu_custom_call.1} parent=1 // loop_footer_branch
      %26 = sbr.rel target = $region3
    $region8: #{tpu_custom_call.1} parent=1 // loop_exit
      _
    %6122 = vsyncpa [#allocation3], 1
    %s6123 = scalar_lea.sflag [#allocation3], 1
    %6124 = vsyncpa %s6123, 1
    %6125 = vsyncpa [#allocation6], 1
    %6126 = vsyncpa [#allocation9], 1
    %6127 = vsyncpa [#allocation12], 1
    %6128 = vsyncpa [#allocation4], 1
    %s6129 = scalar_lea.sflag [#allocation4], 1
    %6130 = vsyncpa %s6129, 1

</llo_original>
